<compile_context>
chip_gen: v6e
topology: v6e:2x2x1
jax: 0.10.0
libtpu: 0.0.40
codegen_flags: <defaults>
</compile_context>

<pallas_src>
import numpy as np

import jax
import jax.numpy as jnp
from jax.experimental import pallas as pl
from jax.experimental.pallas import tpu as pltpu

# ----- model hyper-parameters (small, consistent with the module) -----
N_LAYER = 2
N_HEAD = 4
D_KEY = 8
D_VALUE = 8
D_MODEL = 32
D_INNER = 64
BATCH = 2
SEQ = 8
LN_EPS = 1e-7
# Dropout probs set to 0.0 so the forward pass is deterministic.
# TODO(synk): attention_dropout / prepostprocess_dropout not implemented (identity, p=0).

# fused-QKV output width
D_QKV = N_HEAD * (2 * D_KEY + D_VALUE)      # 96

# weight slab per layer: columns = [ Wqkv | Wp | W1 ]  -> [D_MODEL, 192]
OFF_QKV = 0
OFF_P = D_QKV                               # 96
OFF_W1 = OFF_P + D_MODEL                    # 128
WA_COLS = OFF_W1 + D_INNER                  # 192

# bias / LayerNorm vector slab per layer: [8, 128], one vector per row
ROW_BQKV, ROW_BP, ROW_B1, ROW_B2 = 0, 1, 2, 3
ROW_G1, ROW_BE1, ROW_G2, ROW_BE2 = 4, 5, 6, 7
VEC_ROWS, VEC_LANES = 8, 128


def encoder_kernel(x_ref, ek_ref, ev_ref, bias_ref, wa_ref, w2_ref, vec_ref, out_ref):
    # x_ref   : [B*S, D_MODEL]
    # ek_ref  : [S, S, D_KEY]        (shared across batch & layers)
    # ev_ref  : [S, S, D_VALUE]
    # bias_ref: [B, H, S, S]
    # wa_ref  : [L, D_MODEL, 192]    (Wqkv | Wp | W1)
    # w2_ref  : [L, D_INNER, D_MODEL]
    # vec_ref : [L, 8, 128]          (biases / LN gamma,beta, one per row)
    x = x_ref[...]          # f32 [B*S, Dm]
    ek = ek_ref[...]        # [S, S, dk]
    ev = ev_ref[...]        # [S, S, dv]
    bias = bias_ref[...]    # [B, H, S, S]

    inv_sqrt_dk = np.float32(1.0 / np.sqrt(D_KEY))

    for layer in range(N_LAYER):            # static unroll: all layers fused
        wa = wa_ref[layer]                  # [Dm, 192]
        w2 = w2_ref[layer]                  # [D_INNER, Dm]
        vec = vec_ref[layer]                # [8, 128]

        wqkv = wa[:, OFF_QKV:OFF_QKV + D_QKV]       # [Dm, 96]
        wp = wa[:, OFF_P:OFF_P + D_MODEL]           # [Dm, Dm]
        w1 = wa[:, OFF_W1:OFF_W1 + D_INNER]         # [Dm, D_INNER]

        bqkv = vec[ROW_BQKV:ROW_BQKV + 1, :D_QKV]   # [1, 96]
        bp = vec[ROW_BP:ROW_BP + 1, :D_MODEL]
        b1 = vec[ROW_B1:ROW_B1 + 1, :D_INNER]
        b2 = vec[ROW_B2:ROW_B2 + 1, :D_MODEL]
        g1 = vec[ROW_G1:ROW_G1 + 1, :D_MODEL]
        be1 = vec[ROW_BE1:ROW_BE1 + 1, :D_MODEL]
        g2 = vec[ROW_G2:ROW_G2 + 1, :D_MODEL]
        be2 = vec[ROW_BE2:ROW_BE2 + 1, :D_MODEL]

        # ---- fused Q/K/V projection for all B*S positions (one MXU push) ----
        qkv = jnp.dot(x, wqkv, preferred_element_type=jnp.float32) + bqkv   # [B*S, 96]
        q = qkv[:, :N_HEAD * D_KEY]
        k = qkv[:, N_HEAD * D_KEY:2 * N_HEAD * D_KEY]
        v = qkv[:, 2 * N_HEAD * D_KEY:]

        # ---- relation-aware multi-head attention (all heads batched) ----
        ctx_rows = []
        for b in range(BATCH):              # static unroll (B=2)
            r0 = b * SEQ
            qb = q[r0:r0 + SEQ]             # [S, H*dk]
            kb = k[r0:r0 + SEQ]
            vb = v[r0:r0 + SEQ]

            qh = jnp.stack([qb[:, h * D_KEY:(h + 1) * D_KEY]
                            for h in range(N_HEAD)], axis=0)        # [H, S, dk]
            kh = jnp.stack([kb[:, h * D_KEY:(h + 1) * D_KEY]
                            for h in range(N_HEAD)], axis=0)        # [H, S, dk]
            vh = jnp.stack([vb[:, h * D_VALUE:(h + 1) * D_VALUE]
                            for h in range(N_HEAD)], axis=0)        # [H, S, dv]

            # content-content scores (batched over heads)
            s1 = jnp.einsum('hid,hjd->hij', qh, kh,
                            preferred_element_type=jnp.float32)     # [H, S, S]
            # content-edge scores, computed once for all heads:
            #   s2[h,i,j] = sum_d qh[h,i,d] * ek[i,j,d]
            s2 = jnp.sum(qh[:, :, None, :] * ek[None, :, :, :], axis=-1)  # [H, S, S]

            s = (s1 + s2) * inv_sqrt_dk + bias[b]

            # softmax over keys
            s = s - jnp.max(s, axis=-1, keepdims=True)
            e = jnp.exp(s)
            p = e * pl.reciprocal(jnp.sum(e, axis=-1, keepdims=True),
                                  approx=True)                      # [H, S, S]

            # content context (batched over heads)
            c1 = jnp.einsum('hij,hjd->hid', p, vh,
                            preferred_element_type=jnp.float32)     # [H, S, dv]
            # edge context, once for all heads:
            #   c2[h,i,d] = sum_j p[h,i,j] * ev[i,j,d]
            c2 = jnp.sum(p[:, :, :, None] * ev[None, :, :, :], axis=2)    # [H, S, dv]
            ctx = c1 + c2                                            # [H, S, dv]

            # heads back to [S, H*dv] (single lane-concat inside one tile)
            ctx_rows.append(jnp.concatenate([ctx[h] for h in range(N_HEAD)],
                                            axis=-1))                # [S, H*dv]

        ctx_all = jnp.concatenate(ctx_rows, axis=0)                  # [B*S, H*dv]
        attn_out = jnp.dot(ctx_all, wp, preferred_element_type=jnp.float32) + bp

        # ---- residual + LayerNorm1 ----
        y = x + attn_out
        mu = jnp.mean(y, axis=-1, keepdims=True)
        var = jnp.mean((y - mu) ** 2, axis=-1, keepdims=True)
        y = (y - mu) * jax.lax.rsqrt(var + LN_EPS) * g1 + be1

        # ---- position-wise feed forward ----
        h1 = jnp.dot(y, w1, preferred_element_type=jnp.float32) + b1
        # TODO(synk): PyTorch nn.GELU() is erf-exact; using tanh-approx GELU (EUP-friendly).
        h1 = jax.nn.gelu(h1, approximate=True)
        h2 = jnp.dot(h1, w2, preferred_element_type=jnp.float32) + b2

        # ---- residual + LayerNorm2 ----
        z = y + h2
        mu2 = jnp.mean(z, axis=-1, keepdims=True)
        var2 = jnp.mean((z - mu2) ** 2, axis=-1, keepdims=True)
        x = (z - mu2) * jax.lax.rsqrt(var2 + LN_EPS) * g2 + be2      # feed next layer

    out_ref[...] = x.astype(out_ref.dtype)


def encoder_forward(enc_input, edges_key, edges_value, attn_bias,
                    wa_all, w2_all, vec_all):
    B, S, Dm = enc_input.shape
    x2d = enc_input.reshape(B * S, Dm)
    out2d = pl.pallas_call(
        encoder_kernel,
        out_shape=jax.ShapeDtypeStruct((B * S, Dm), enc_input.dtype),
    )(x2d, edges_key, edges_value, attn_bias, wa_all, w2_all, vec_all)
    return out2d.reshape(B, S, Dm)


def trunc_normal(key, shape, std=0.02):
    # matches truncated_normal(): resample until within mean +/- 2*std
    return jax.random.truncated_normal(key, -2.0, 2.0, shape, jnp.float32) * std


def init_layer_slabs(key):
    """Initialize one layer's parameters directly in packed-slab form."""
    ks = jax.random.split(key, 6)
    # Linear weights stored as (in_features, out_features) == W^T of PyTorch layout.
    wq = trunc_normal(ks[0], (D_MODEL, N_HEAD * D_KEY))
    wk = trunc_normal(ks[1], (D_MODEL, N_HEAD * D_KEY))
    wv = trunc_normal(ks[2], (D_MODEL, N_HEAD * D_VALUE))
    wp = trunc_normal(ks[3], (N_HEAD * D_VALUE, D_MODEL))
    w1 = trunc_normal(ks[4], (D_MODEL, D_INNER))
    w2 = trunc_normal(ks[5], (D_INNER, D_MODEL))

    wa = jnp.concatenate([wq, wk, wv, wp, w1], axis=1)        # [D_MODEL, 192]
    assert wa.shape == (D_MODEL, WA_COLS)

    # biases are zero, LN gammas one, LN betas zero
    vec = jnp.zeros((VEC_ROWS, VEC_LANES), jnp.float32)
    vec = vec.at[ROW_G1, :D_MODEL].set(1.0)
    vec = vec.at[ROW_G2, :D_MODEL].set(1.0)
    return wa, w2, vec


if __name__ == "__main__":
    root = jax.random.PRNGKey(0)
    k_x, k_ek, k_ev, k_bias, k_params = jax.random.split(root, 5)

    enc_input = jax.random.normal(k_x, (BATCH, SEQ, D_MODEL), jnp.float32)
    edges_key = jax.random.normal(k_ek, (SEQ, SEQ, D_KEY), jnp.float32) * 0.1
    edges_value = jax.random.normal(k_ev, (SEQ, SEQ, D_VALUE), jnp.float32) * 0.1
    attn_bias = jax.random.normal(k_bias, (BATCH, N_HEAD, SEQ, SEQ), jnp.float32) * 0.1

    layer_keys = jax.random.split(k_params, N_LAYER)
    slabs = [init_layer_slabs(k) for k in layer_keys]
    wa_all = jnp.stack([s[0] for s in slabs], axis=0)    # [L, 32, 192]
    w2_all = jnp.stack([s[1] for s in slabs], axis=0)    # [L, 64, 32]
    vec_all = jnp.stack([s[2] for s in slabs], axis=0)   # [L, 8, 128]

    fwd = jax.jit(encoder_forward)
    out = fwd(enc_input, edges_key, edges_value, attn_bias, wa_all, w2_all, vec_all)
    jax.block_until_ready(out)

    assert out.shape == (BATCH, SEQ, D_MODEL)
    assert jnp.all(jnp.isfinite(out))
    print("KERNEL_OK")
</pallas_src>

<mosaic_0001>
module attributes {stable_mosaic.version = 11 : i64} {
  func.func @encoder_kernel(%arg0: memref<16x32xf32, #tpu.memory_space<vmem>>, %arg1: memref<8x8x8xf32, #tpu.memory_space<vmem>>, %arg2: memref<8x8x8xf32, #tpu.memory_space<vmem>>, %arg3: memref<2x4x8x8xf32, #tpu.memory_space<vmem>>, %arg4: memref<2x32x192xf32, #tpu.memory_space<vmem>>, %arg5: memref<2x64x32xf32, #tpu.memory_space<vmem>>, %arg6: memref<2x8x128xf32, #tpu.memory_space<vmem>>, %arg7: memref<16x32xf32, #tpu.memory_space<vmem>>) attributes {dimension_semantics = [], scalar_prefetch = 0 : i64, scratch_operands = 0 : i64, tpu.core_type = #tpu.core_type<tc>} {
    %c0 = arith.constant 0 : index
    %c0_0 = arith.constant 0 : index
    %0 = vector.load %arg0[%c0, %c0_0] : memref<16x32xf32, #tpu.memory_space<vmem>>, vector<16x32xf32>
    %c0_1 = arith.constant 0 : index
    %c0_2 = arith.constant 0 : index
    %c0_3 = arith.constant 0 : index
    %1 = vector.load %arg1[%c0_1, %c0_2, %c0_3] : memref<8x8x8xf32, #tpu.memory_space<vmem>>, vector<8x8x8xf32>
    %c0_4 = arith.constant 0 : index
    %c0_5 = arith.constant 0 : index
    %c0_6 = arith.constant 0 : index
    %2 = vector.load %arg2[%c0_4, %c0_5, %c0_6] : memref<8x8x8xf32, #tpu.memory_space<vmem>>, vector<8x8x8xf32>
    %c0_7 = arith.constant 0 : index
    %c0_8 = arith.constant 0 : index
    %c0_9 = arith.constant 0 : index
    %c0_10 = arith.constant 0 : index
    %3 = vector.load %arg3[%c0_7, %c0_8, %c0_9, %c0_10] : memref<2x4x8x8xf32, #tpu.memory_space<vmem>>, vector<2x4x8x8xf32>
    %c0_11 = arith.constant 0 : index
    %c0_12 = arith.constant 0 : index
    %c0_13 = arith.constant 0 : index
    %4 = vector.load %arg4[%c0_11, %c0_12, %c0_13] : memref<2x32x192xf32, #tpu.memory_space<vmem>>, vector<1x32x192xf32>
    %5 = vector.shape_cast %4 : vector<1x32x192xf32> to vector<32x192xf32>
    %c0_14 = arith.constant 0 : index
    %c0_15 = arith.constant 0 : index
    %c0_16 = arith.constant 0 : index
    %6 = vector.load %arg5[%c0_14, %c0_15, %c0_16] : memref<2x64x32xf32, #tpu.memory_space<vmem>>, vector<1x64x32xf32>
    %7 = vector.shape_cast %6 : vector<1x64x32xf32> to vector<64x32xf32>
    %c0_17 = arith.constant 0 : index
    %c0_18 = arith.constant 0 : index
    %c0_19 = arith.constant 0 : index
    %8 = vector.load %arg6[%c0_17, %c0_18, %c0_19] : memref<2x8x128xf32, #tpu.memory_space<vmem>>, vector<1x8x128xf32>
    %9 = vector.shape_cast %8 : vector<1x8x128xf32> to vector<8x128xf32>
    %10 = vector.extract_strided_slice %5 {offsets = [0, 0], sizes = [32, 96], strides = [1, 1]} : vector<32x192xf32> to vector<32x96xf32>
    %11 = vector.extract_strided_slice %5 {offsets = [0, 96], sizes = [32, 32], strides = [1, 1]} : vector<32x192xf32> to vector<32x32xf32>
    %12 = vector.extract_strided_slice %5 {offsets = [0, 128], sizes = [32, 64], strides = [1, 1]} : vector<32x192xf32> to vector<32x64xf32>
    %13 = vector.extract_strided_slice %9 {offsets = [0, 0], sizes = [1, 96], strides = [1, 1]} : vector<8x128xf32> to vector<1x96xf32>
    %14 = vector.extract_strided_slice %9 {offsets = [1, 0], sizes = [1, 32], strides = [1, 1]} : vector<8x128xf32> to vector<1x32xf32>
    %15 = vector.extract_strided_slice %9 {offsets = [2, 0], sizes = [1, 64], strides = [1, 1]} : vector<8x128xf32> to vector<1x64xf32>
    %16 = vector.extract_strided_slice %9 {offsets = [3, 0], sizes = [1, 32], strides = [1, 1]} : vector<8x128xf32> to vector<1x32xf32>
    %17 = vector.extract_strided_slice %9 {offsets = [4, 0], sizes = [1, 32], strides = [1, 1]} : vector<8x128xf32> to vector<1x32xf32>
    %18 = vector.extract_strided_slice %9 {offsets = [5, 0], sizes = [1, 32], strides = [1, 1]} : vector<8x128xf32> to vector<1x32xf32>
    %19 = vector.extract_strided_slice %9 {offsets = [6, 0], sizes = [1, 32], strides = [1, 1]} : vector<8x128xf32> to vector<1x32xf32>
    %20 = vector.extract_strided_slice %9 {offsets = [7, 0], sizes = [1, 32], strides = [1, 1]} : vector<8x128xf32> to vector<1x32xf32>
    %cst = arith.constant dense<0.000000e+00> : vector<16x96xf32>
    %21 = tpu.matmul %0, %10, %cst {dimension_numbers = #tpu.dot_dimension_numbers<[1], [0], [0], [1], [0, 0, 1, 1], [], []>} : vector<16x32xf32>, vector<32x96xf32>, vector<16x96xf32> -> vector<16x96xf32>
    %22 = vector.broadcast %13 : vector<1x96xf32> to vector<16x96xf32>
    %23 = arith.addf %21, %22 : vector<16x96xf32>
    %24 = vector.extract_strided_slice %23 {offsets = [0, 0], sizes = [16, 32], strides = [1, 1]} : vector<16x96xf32> to vector<16x32xf32>
    %25 = vector.extract_strided_slice %23 {offsets = [0, 32], sizes = [16, 32], strides = [1, 1]} : vector<16x96xf32> to vector<16x32xf32>
    %26 = vector.extract_strided_slice %23 {offsets = [0, 64], sizes = [16, 32], strides = [1, 1]} : vector<16x96xf32> to vector<16x32xf32>
    %27 = vector.extract_strided_slice %24 {offsets = [0, 0], sizes = [8, 32], strides = [1, 1]} : vector<16x32xf32> to vector<8x32xf32>
    %28 = vector.extract_strided_slice %25 {offsets = [0, 0], sizes = [8, 32], strides = [1, 1]} : vector<16x32xf32> to vector<8x32xf32>
    %29 = vector.extract_strided_slice %26 {offsets = [0, 0], sizes = [8, 32], strides = [1, 1]} : vector<16x32xf32> to vector<8x32xf32>
    %30 = vector.extract_strided_slice %27 {offsets = [0, 0], sizes = [8, 8], strides = [1, 1]} : vector<8x32xf32> to vector<8x8xf32>
    %31 = vector.extract_strided_slice %27 {offsets = [0, 8], sizes = [8, 8], strides = [1, 1]} : vector<8x32xf32> to vector<8x8xf32>
    %32 = vector.extract_strided_slice %27 {offsets = [0, 16], sizes = [8, 8], strides = [1, 1]} : vector<8x32xf32> to vector<8x8xf32>
    %33 = vector.extract_strided_slice %27 {offsets = [0, 24], sizes = [8, 8], strides = [1, 1]} : vector<8x32xf32> to vector<8x8xf32>
    %34 = vector.shape_cast %30 : vector<8x8xf32> to vector<1x8x8xf32>
    %35 = vector.shape_cast %31 : vector<8x8xf32> to vector<1x8x8xf32>
    %36 = vector.shape_cast %32 : vector<8x8xf32> to vector<1x8x8xf32>
    %37 = vector.shape_cast %33 : vector<8x8xf32> to vector<1x8x8xf32>
    %38 = tpu.concatenate %34, %35, %36, %37 in 0 : vector<1x8x8xf32>, vector<1x8x8xf32>, vector<1x8x8xf32>, vector<1x8x8xf32> -> vector<4x8x8xf32>
    %39 = vector.extract_strided_slice %28 {offsets = [0, 0], sizes = [8, 8], strides = [1, 1]} : vector<8x32xf32> to vector<8x8xf32>
    %40 = vector.extract_strided_slice %28 {offsets = [0, 8], sizes = [8, 8], strides = [1, 1]} : vector<8x32xf32> to vector<8x8xf32>
    %41 = vector.extract_strided_slice %28 {offsets = [0, 16], sizes = [8, 8], strides = [1, 1]} : vector<8x32xf32> to vector<8x8xf32>
    %42 = vector.extract_strided_slice %28 {offsets = [0, 24], sizes = [8, 8], strides = [1, 1]} : vector<8x32xf32> to vector<8x8xf32>
    %43 = vector.shape_cast %39 : vector<8x8xf32> to vector<1x8x8xf32>
    %44 = vector.shape_cast %40 : vector<8x8xf32> to vector<1x8x8xf32>
    %45 = vector.shape_cast %41 : vector<8x8xf32> to vector<1x8x8xf32>
    %46 = vector.shape_cast %42 : vector<8x8xf32> to vector<1x8x8xf32>
    %47 = tpu.concatenate %43, %44, %45, %46 in 0 : vector<1x8x8xf32>, vector<1x8x8xf32>, vector<1x8x8xf32>, vector<1x8x8xf32> -> vector<4x8x8xf32>
    %48 = vector.extract_strided_slice %29 {offsets = [0, 0], sizes = [8, 8], strides = [1, 1]} : vector<8x32xf32> to vector<8x8xf32>
    %49 = vector.extract_strided_slice %29 {offsets = [0, 8], sizes = [8, 8], strides = [1, 1]} : vector<8x32xf32> to vector<8x8xf32>
    %50 = vector.extract_strided_slice %29 {offsets = [0, 16], sizes = [8, 8], strides = [1, 1]} : vector<8x32xf32> to vector<8x8xf32>
    %51 = vector.extract_strided_slice %29 {offsets = [0, 24], sizes = [8, 8], strides = [1, 1]} : vector<8x32xf32> to vector<8x8xf32>
    %52 = vector.shape_cast %48 : vector<8x8xf32> to vector<1x8x8xf32>
    %53 = vector.shape_cast %49 : vector<8x8xf32> to vector<1x8x8xf32>
    %54 = vector.shape_cast %50 : vector<8x8xf32> to vector<1x8x8xf32>
    %55 = vector.shape_cast %51 : vector<8x8xf32> to vector<1x8x8xf32>
    %56 = tpu.concatenate %52, %53, %54, %55 in 0 : vector<1x8x8xf32>, vector<1x8x8xf32>, vector<1x8x8xf32>, vector<1x8x8xf32> -> vector<4x8x8xf32>
    "tpu.trace_start"() <{level = 10 : i32, message = "hid,hjd->hij"}> : () -> ()
    %cst_20 = arith.constant dense<0.000000e+00> : vector<4x8x8xf32>
    %57 = tpu.matmul %38, %47, %cst_20 {dimension_numbers = #tpu.dot_dimension_numbers<[2], [2], [1], [1], [0, 0, 0, 1, 1, 1], [0], [0]>} : vector<4x8x8xf32>, vector<4x8x8xf32>, vector<4x8x8xf32> -> vector<4x8x8xf32>
    "tpu.trace_stop"() : () -> ()
    %58 = vector.shape_cast %38 : vector<4x8x8xf32> to vector<4x8x1x8xf32>
    %59 = vector.shape_cast %1 : vector<8x8x8xf32> to vector<1x8x8x8xf32>
    %60 = vector.broadcast %58 : vector<4x8x1x8xf32> to vector<4x8x8x8xf32>
    %61 = vector.broadcast %59 : vector<1x8x8x8xf32> to vector<4x8x8x8xf32>
    %62 = arith.mulf %60, %61 : vector<4x8x8x8xf32>
    %cst_21 = arith.constant dense<0.000000e+00> : vector<4x8x8xf32>
    %63 = vector.multi_reduction <add>, %62, %cst_21 [3] : vector<4x8x8x8xf32> to vector<4x8x8xf32>
    %64 = arith.addf %57, %63 : vector<4x8x8xf32>
    %cst_22 = arith.constant 0.353553385 : f32
    %65 = vector.broadcast %cst_22 : f32 to vector<4x8x8xf32>
    %66 = arith.mulf %64, %65 : vector<4x8x8xf32>
    %67 = vector.extract_strided_slice %3 {offsets = [0, 0, 0, 0], sizes = [1, 4, 8, 8], strides = [1, 1, 1, 1]} : vector<2x4x8x8xf32> to vector<1x4x8x8xf32>
    %68 = vector.shape_cast %67 : vector<1x4x8x8xf32> to vector<4x8x8xf32>
    %69 = arith.addf %66, %68 : vector<4x8x8xf32>
    %cst_23 = arith.constant dense<0xFF800000> : vector<4x8xf32>
    %70 = vector.multi_reduction <maximumf>, %69, %cst_23 [2] : vector<4x8x8xf32> to vector<4x8xf32>
    %71 = vector.shape_cast %70 : vector<4x8xf32> to vector<4x8x1xf32>
    %72 = vector.broadcast %71 : vector<4x8x1xf32> to vector<4x8x8xf32>
    %73 = arith.subf %69, %72 : vector<4x8x8xf32>
    %74 = math.exp %73 : vector<4x8x8xf32>
    %cst_24 = arith.constant dense<0.000000e+00> : vector<4x8xf32>
    %75 = vector.multi_reduction <add>, %74, %cst_24 [2] : vector<4x8x8xf32> to vector<4x8xf32>
    %76 = vector.shape_cast %75 : vector<4x8xf32> to vector<4x8x1xf32>
    %77 = tpu.reciprocal %76 {approx = true} : vector<4x8x1xf32> -> vector<4x8x1xf32>
    %78 = vector.broadcast %77 : vector<4x8x1xf32> to vector<4x8x8xf32>
    %79 = arith.mulf %74, %78 : vector<4x8x8xf32>
    "tpu.trace_start"() <{level = 10 : i32, message = "hij,hjd->hid"}> : () -> ()
    %cst_25 = arith.constant dense<0.000000e+00> : vector<4x8x8xf32>
    %80 = tpu.matmul %79, %56, %cst_25 {dimension_numbers = #tpu.dot_dimension_numbers<[2], [1], [1], [2], [0, 0, 0, 1, 1, 2], [0], [0]>} : vector<4x8x8xf32>, vector<4x8x8xf32>, vector<4x8x8xf32> -> vector<4x8x8xf32>
    "tpu.trace_stop"() : () -> ()
    %81 = vector.shape_cast %79 : vector<4x8x8xf32> to vector<4x8x8x1xf32>
    %82 = vector.shape_cast %2 : vector<8x8x8xf32> to vector<1x8x8x8xf32>
    %83 = vector.broadcast %81 : vector<4x8x8x1xf32> to vector<4x8x8x8xf32>
    %84 = vector.broadcast %82 : vector<1x8x8x8xf32> to vector<4x8x8x8xf32>
    %85 = arith.mulf %83, %84 : vector<4x8x8x8xf32>
    %cst_26 = arith.constant dense<0.000000e+00> : vector<4x8x8xf32>
    %86 = vector.multi_reduction <add>, %85, %cst_26 [2] : vector<4x8x8x8xf32> to vector<4x8x8xf32>
    %87 = arith.addf %80, %86 : vector<4x8x8xf32>
    %88 = vector.extract_strided_slice %87 {offsets = [0, 0, 0], sizes = [1, 8, 8], strides = [1, 1, 1]} : vector<4x8x8xf32> to vector<1x8x8xf32>
    %89 = vector.shape_cast %88 : vector<1x8x8xf32> to vector<8x8xf32>
    %90 = vector.extract_strided_slice %87 {offsets = [1, 0, 0], sizes = [1, 8, 8], strides = [1, 1, 1]} : vector<4x8x8xf32> to vector<1x8x8xf32>
    %91 = vector.shape_cast %90 : vector<1x8x8xf32> to vector<8x8xf32>
    %92 = vector.extract_strided_slice %87 {offsets = [2, 0, 0], sizes = [1, 8, 8], strides = [1, 1, 1]} : vector<4x8x8xf32> to vector<1x8x8xf32>
    %93 = vector.shape_cast %92 : vector<1x8x8xf32> to vector<8x8xf32>
    %94 = vector.extract_strided_slice %87 {offsets = [3, 0, 0], sizes = [1, 8, 8], strides = [1, 1, 1]} : vector<4x8x8xf32> to vector<1x8x8xf32>
    %95 = vector.shape_cast %94 : vector<1x8x8xf32> to vector<8x8xf32>
    %96 = tpu.concatenate %89, %91, %93, %95 in 1 : vector<8x8xf32>, vector<8x8xf32>, vector<8x8xf32>, vector<8x8xf32> -> vector<8x32xf32>
    %97 = vector.extract_strided_slice %24 {offsets = [8, 0], sizes = [8, 32], strides = [1, 1]} : vector<16x32xf32> to vector<8x32xf32>
    %98 = vector.extract_strided_slice %25 {offsets = [8, 0], sizes = [8, 32], strides = [1, 1]} : vector<16x32xf32> to vector<8x32xf32>
    %99 = vector.extract_strided_slice %26 {offsets = [8, 0], sizes = [8, 32], strides = [1, 1]} : vector<16x32xf32> to vector<8x32xf32>
    %100 = vector.extract_strided_slice %97 {offsets = [0, 0], sizes = [8, 8], strides = [1, 1]} : vector<8x32xf32> to vector<8x8xf32>
    %101 = vector.extract_strided_slice %97 {offsets = [0, 8], sizes = [8, 8], strides = [1, 1]} : vector<8x32xf32> to vector<8x8xf32>
    %102 = vector.extract_strided_slice %97 {offsets = [0, 16], sizes = [8, 8], strides = [1, 1]} : vector<8x32xf32> to vector<8x8xf32>
    %103 = vector.extract_strided_slice %97 {offsets = [0, 24], sizes = [8, 8], strides = [1, 1]} : vector<8x32xf32> to vector<8x8xf32>
    %104 = vector.shape_cast %100 : vector<8x8xf32> to vector<1x8x8xf32>
    %105 = vector.shape_cast %101 : vector<8x8xf32> to vector<1x8x8xf32>
    %106 = vector.shape_cast %102 : vector<8x8xf32> to vector<1x8x8xf32>
    %107 = vector.shape_cast %103 : vector<8x8xf32> to vector<1x8x8xf32>
    %108 = tpu.concatenate %104, %105, %106, %107 in 0 : vector<1x8x8xf32>, vector<1x8x8xf32>, vector<1x8x8xf32>, vector<1x8x8xf32> -> vector<4x8x8xf32>
    %109 = vector.extract_strided_slice %98 {offsets = [0, 0], sizes = [8, 8], strides = [1, 1]} : vector<8x32xf32> to vector<8x8xf32>
    %110 = vector.extract_strided_slice %98 {offsets = [0, 8], sizes = [8, 8], strides = [1, 1]} : vector<8x32xf32> to vector<8x8xf32>
    %111 = vector.extract_strided_slice %98 {offsets = [0, 16], sizes = [8, 8], strides = [1, 1]} : vector<8x32xf32> to vector<8x8xf32>
    %112 = vector.extract_strided_slice %98 {offsets = [0, 24], sizes = [8, 8], strides = [1, 1]} : vector<8x32xf32> to vector<8x8xf32>
    %113 = vector.shape_cast %109 : vector<8x8xf32> to vector<1x8x8xf32>
    %114 = vector.shape_cast %110 : vector<8x8xf32> to vector<1x8x8xf32>
    %115 = vector.shape_cast %111 : vector<8x8xf32> to vector<1x8x8xf32>
    %116 = vector.shape_cast %112 : vector<8x8xf32> to vector<1x8x8xf32>
    %117 = tpu.concatenate %113, %114, %115, %116 in 0 : vector<1x8x8xf32>, vector<1x8x8xf32>, vector<1x8x8xf32>, vector<1x8x8xf32> -> vector<4x8x8xf32>
    %118 = vector.extract_strided_slice %99 {offsets = [0, 0], sizes = [8, 8], strides = [1, 1]} : vector<8x32xf32> to vector<8x8xf32>
    %119 = vector.extract_strided_slice %99 {offsets = [0, 8], sizes = [8, 8], strides = [1, 1]} : vector<8x32xf32> to vector<8x8xf32>
    %120 = vector.extract_strided_slice %99 {offsets = [0, 16], sizes = [8, 8], strides = [1, 1]} : vector<8x32xf32> to vector<8x8xf32>
    %121 = vector.extract_strided_slice %99 {offsets = [0, 24], sizes = [8, 8], strides = [1, 1]} : vector<8x32xf32> to vector<8x8xf32>
    %122 = vector.shape_cast %118 : vector<8x8xf32> to vector<1x8x8xf32>
    %123 = vector.shape_cast %119 : vector<8x8xf32> to vector<1x8x8xf32>
    %124 = vector.shape_cast %120 : vector<8x8xf32> to vector<1x8x8xf32>
    %125 = vector.shape_cast %121 : vector<8x8xf32> to vector<1x8x8xf32>
    %126 = tpu.concatenate %122, %123, %124, %125 in 0 : vector<1x8x8xf32>, vector<1x8x8xf32>, vector<1x8x8xf32>, vector<1x8x8xf32> -> vector<4x8x8xf32>
    "tpu.trace_start"() <{level = 10 : i32, message = "hid,hjd->hij"}> : () -> ()
    %cst_27 = arith.constant dense<0.000000e+00> : vector<4x8x8xf32>
    %127 = tpu.matmul %108, %117, %cst_27 {dimension_numbers = #tpu.dot_dimension_numbers<[2], [2], [1], [1], [0, 0, 0, 1, 1, 1], [0], [0]>} : vector<4x8x8xf32>, vector<4x8x8xf32>, vector<4x8x8xf32> -> vector<4x8x8xf32>
    "tpu.trace_stop"() : () -> ()
    %128 = vector.shape_cast %108 : vector<4x8x8xf32> to vector<4x8x1x8xf32>
    %129 = vector.shape_cast %1 : vector<8x8x8xf32> to vector<1x8x8x8xf32>
    %130 = vector.broadcast %128 : vector<4x8x1x8xf32> to vector<4x8x8x8xf32>
    %131 = vector.broadcast %129 : vector<1x8x8x8xf32> to vector<4x8x8x8xf32>
    %132 = arith.mulf %130, %131 : vector<4x8x8x8xf32>
    %cst_28 = arith.constant dense<0.000000e+00> : vector<4x8x8xf32>
    %133 = vector.multi_reduction <add>, %132, %cst_28 [3] : vector<4x8x8x8xf32> to vector<4x8x8xf32>
    %134 = arith.addf %127, %133 : vector<4x8x8xf32>
    %cst_29 = arith.constant 0.353553385 : f32
    %135 = vector.broadcast %cst_29 : f32 to vector<4x8x8xf32>
    %136 = arith.mulf %134, %135 : vector<4x8x8xf32>
    %137 = vector.extract_strided_slice %3 {offsets = [1, 0, 0, 0], sizes = [1, 4, 8, 8], strides = [1, 1, 1, 1]} : vector<2x4x8x8xf32> to vector<1x4x8x8xf32>
    %138 = vector.shape_cast %137 : vector<1x4x8x8xf32> to vector<4x8x8xf32>
    %139 = arith.addf %136, %138 : vector<4x8x8xf32>
    %cst_30 = arith.constant dense<0xFF800000> : vector<4x8xf32>
    %140 = vector.multi_reduction <maximumf>, %139, %cst_30 [2] : vector<4x8x8xf32> to vector<4x8xf32>
    %141 = vector.shape_cast %140 : vector<4x8xf32> to vector<4x8x1xf32>
    %142 = vector.broadcast %141 : vector<4x8x1xf32> to vector<4x8x8xf32>
    %143 = arith.subf %139, %142 : vector<4x8x8xf32>
    %144 = math.exp %143 : vector<4x8x8xf32>
    %cst_31 = arith.constant dense<0.000000e+00> : vector<4x8xf32>
    %145 = vector.multi_reduction <add>, %144, %cst_31 [2] : vector<4x8x8xf32> to vector<4x8xf32>
    %146 = vector.shape_cast %145 : vector<4x8xf32> to vector<4x8x1xf32>
    %147 = tpu.reciprocal %146 {approx = true} : vector<4x8x1xf32> -> vector<4x8x1xf32>
    %148 = vector.broadcast %147 : vector<4x8x1xf32> to vector<4x8x8xf32>
    %149 = arith.mulf %144, %148 : vector<4x8x8xf32>
    "tpu.trace_start"() <{level = 10 : i32, message = "hij,hjd->hid"}> : () -> ()
    %cst_32 = arith.constant dense<0.000000e+00> : vector<4x8x8xf32>
    %150 = tpu.matmul %149, %126, %cst_32 {dimension_numbers = #tpu.dot_dimension_numbers<[2], [1], [1], [2], [0, 0, 0, 1, 1, 2], [0], [0]>} : vector<4x8x8xf32>, vector<4x8x8xf32>, vector<4x8x8xf32> -> vector<4x8x8xf32>
    "tpu.trace_stop"() : () -> ()
    %151 = vector.shape_cast %149 : vector<4x8x8xf32> to vector<4x8x8x1xf32>
    %152 = vector.shape_cast %2 : vector<8x8x8xf32> to vector<1x8x8x8xf32>
    %153 = vector.broadcast %151 : vector<4x8x8x1xf32> to vector<4x8x8x8xf32>
    %154 = vector.broadcast %152 : vector<1x8x8x8xf32> to vector<4x8x8x8xf32>
    %155 = arith.mulf %153, %154 : vector<4x8x8x8xf32>
    %cst_33 = arith.constant dense<0.000000e+00> : vector<4x8x8xf32>
    %156 = vector.multi_reduction <add>, %155, %cst_33 [2] : vector<4x8x8x8xf32> to vector<4x8x8xf32>
    %157 = arith.addf %150, %156 : vector<4x8x8xf32>
    %158 = vector.extract_strided_slice %157 {offsets = [0, 0, 0], sizes = [1, 8, 8], strides = [1, 1, 1]} : vector<4x8x8xf32> to vector<1x8x8xf32>
    %159 = vector.shape_cast %158 : vector<1x8x8xf32> to vector<8x8xf32>
    %160 = vector.extract_strided_slice %157 {offsets = [1, 0, 0], sizes = [1, 8, 8], strides = [1, 1, 1]} : vector<4x8x8xf32> to vector<1x8x8xf32>
    %161 = vector.shape_cast %160 : vector<1x8x8xf32> to vector<8x8xf32>
    %162 = vector.extract_strided_slice %157 {offsets = [2, 0, 0], sizes = [1, 8, 8], strides = [1, 1, 1]} : vector<4x8x8xf32> to vector<1x8x8xf32>
    %163 = vector.shape_cast %162 : vector<1x8x8xf32> to vector<8x8xf32>
    %164 = vector.extract_strided_slice %157 {offsets = [3, 0, 0], sizes = [1, 8, 8], strides = [1, 1, 1]} : vector<4x8x8xf32> to vector<1x8x8xf32>
    %165 = vector.shape_cast %164 : vector<1x8x8xf32> to vector<8x8xf32>
    %166 = tpu.concatenate %159, %161, %163, %165 in 1 : vector<8x8xf32>, vector<8x8xf32>, vector<8x8xf32>, vector<8x8xf32> -> vector<8x32xf32>
    %167 = tpu.concatenate %96, %166 in 0 : vector<8x32xf32>, vector<8x32xf32> -> vector<16x32xf32>
    %cst_34 = arith.constant dense<0.000000e+00> : vector<16x32xf32>
    %168 = tpu.matmul %167, %11, %cst_34 {dimension_numbers = #tpu.dot_dimension_numbers<[1], [0], [0], [1], [0, 0, 1, 1], [], []>} : vector<16x32xf32>, vector<32x32xf32>, vector<16x32xf32> -> vector<16x32xf32>
    %169 = vector.broadcast %14 : vector<1x32xf32> to vector<16x32xf32>
    %170 = arith.addf %168, %169 : vector<16x32xf32>
    %171 = arith.addf %0, %170 : vector<16x32xf32>
    %cst_35 = arith.constant dense<0.000000e+00> : vector<16xf32>
    %172 = vector.multi_reduction <add>, %171, %cst_35 [1] : vector<16x32xf32> to vector<16xf32>
    %173 = vector.shape_cast %172 : vector<16xf32> to vector<16x1xf32>
    %cst_36 = arith.constant 3.200000e+01 : f32
    %174 = vector.broadcast %cst_36 : f32 to vector<16x1xf32>
    %175 = arith.divf %173, %174 : vector<16x1xf32>
    %176 = vector.broadcast %175 : vector<16x1xf32> to vector<16x32xf32>
    %177 = arith.subf %171, %176 : vector<16x32xf32>
    %178 = arith.mulf %177, %177 : vector<16x32xf32>
    %cst_37 = arith.constant dense<0.000000e+00> : vector<16xf32>
    %179 = vector.multi_reduction <add>, %178, %cst_37 [1] : vector<16x32xf32> to vector<16xf32>
    %180 = vector.shape_cast %179 : vector<16xf32> to vector<16x1xf32>
    %cst_38 = arith.constant 3.200000e+01 : f32
    %181 = vector.broadcast %cst_38 : f32 to vector<16x1xf32>
    %182 = arith.divf %180, %181 : vector<16x1xf32>
    %183 = vector.broadcast %175 : vector<16x1xf32> to vector<16x32xf32>
    %184 = arith.subf %171, %183 : vector<16x32xf32>
    %cst_39 = arith.constant 1.000000e-07 : f32
    %185 = vector.broadcast %cst_39 : f32 to vector<16x1xf32>
    %186 = arith.addf %182, %185 : vector<16x1xf32>
    %187 = math.rsqrt %186 : vector<16x1xf32>
    %188 = vector.broadcast %187 : vector<16x1xf32> to vector<16x32xf32>
    %189 = arith.mulf %184, %188 : vector<16x32xf32>
    %190 = vector.broadcast %17 : vector<1x32xf32> to vector<16x32xf32>
    %191 = arith.mulf %189, %190 : vector<16x32xf32>
    %192 = vector.broadcast %18 : vector<1x32xf32> to vector<16x32xf32>
    %193 = arith.addf %191, %192 : vector<16x32xf32>
    %cst_40 = arith.constant dense<0.000000e+00> : vector<16x64xf32>
    %194 = tpu.matmul %193, %12, %cst_40 {dimension_numbers = #tpu.dot_dimension_numbers<[1], [0], [0], [1], [0, 0, 1, 1], [], []>} : vector<16x32xf32>, vector<32x64xf32>, vector<16x64xf32> -> vector<16x64xf32>
    %195 = vector.broadcast %15 : vector<1x64xf32> to vector<16x64xf32>
    %196 = arith.addf %194, %195 : vector<16x64xf32>
    %197 = arith.mulf %196, %196 : vector<16x64xf32>
    %198 = arith.mulf %196, %197 : vector<16x64xf32>
    %cst_41 = arith.constant 4.471500e-02 : f32
    %199 = vector.broadcast %cst_41 : f32 to vector<16x64xf32>
    %200 = arith.mulf %199, %198 : vector<16x64xf32>
    %201 = arith.addf %196, %200 : vector<16x64xf32>
    %cst_42 = arith.constant 0.797884583 : f32
    %202 = vector.broadcast %cst_42 : f32 to vector<16x64xf32>
    %203 = arith.mulf %202, %201 : vector<16x64xf32>
    %204 = math.tanh %203 : vector<16x64xf32>
    %cst_43 = arith.constant 1.000000e+00 : f32
    %205 = vector.broadcast %cst_43 : f32 to vector<16x64xf32>
    %206 = arith.addf %205, %204 : vector<16x64xf32>
    %cst_44 = arith.constant 5.000000e-01 : f32
    %207 = vector.broadcast %cst_44 : f32 to vector<16x64xf32>
    %208 = arith.mulf %207, %206 : vector<16x64xf32>
    %209 = arith.mulf %196, %208 : vector<16x64xf32>
    %cst_45 = arith.constant dense<0.000000e+00> : vector<16x32xf32>
    %210 = tpu.matmul %209, %7, %cst_45 {dimension_numbers = #tpu.dot_dimension_numbers<[1], [0], [0], [1], [0, 0, 1, 1], [], []>} : vector<16x64xf32>, vector<64x32xf32>, vector<16x32xf32> -> vector<16x32xf32>
    %211 = vector.broadcast %16 : vector<1x32xf32> to vector<16x32xf32>
    %212 = arith.addf %210, %211 : vector<16x32xf32>
    %213 = arith.addf %193, %212 : vector<16x32xf32>
    %cst_46 = arith.constant dense<0.000000e+00> : vector<16xf32>
    %214 = vector.multi_reduction <add>, %213, %cst_46 [1] : vector<16x32xf32> to vector<16xf32>
    %215 = vector.shape_cast %214 : vector<16xf32> to vector<16x1xf32>
    %cst_47 = arith.constant 3.200000e+01 : f32
    %216 = vector.broadcast %cst_47 : f32 to vector<16x1xf32>
    %217 = arith.divf %215, %216 : vector<16x1xf32>
    %218 = vector.broadcast %217 : vector<16x1xf32> to vector<16x32xf32>
    %219 = arith.subf %213, %218 : vector<16x32xf32>
    %220 = arith.mulf %219, %219 : vector<16x32xf32>
    %cst_48 = arith.constant dense<0.000000e+00> : vector<16xf32>
    %221 = vector.multi_reduction <add>, %220, %cst_48 [1] : vector<16x32xf32> to vector<16xf32>
    %222 = vector.shape_cast %221 : vector<16xf32> to vector<16x1xf32>
    %cst_49 = arith.constant 3.200000e+01 : f32
    %223 = vector.broadcast %cst_49 : f32 to vector<16x1xf32>
    %224 = arith.divf %222, %223 : vector<16x1xf32>
    %225 = vector.broadcast %217 : vector<16x1xf32> to vector<16x32xf32>
    %226 = arith.subf %213, %225 : vector<16x32xf32>
    %cst_50 = arith.constant 1.000000e-07 : f32
    %227 = vector.broadcast %cst_50 : f32 to vector<16x1xf32>
    %228 = arith.addf %224, %227 : vector<16x1xf32>
    %229 = math.rsqrt %228 : vector<16x1xf32>
    %230 = vector.broadcast %229 : vector<16x1xf32> to vector<16x32xf32>
    %231 = arith.mulf %226, %230 : vector<16x32xf32>
    %232 = vector.broadcast %19 : vector<1x32xf32> to vector<16x32xf32>
    %233 = arith.mulf %231, %232 : vector<16x32xf32>
    %234 = vector.broadcast %20 : vector<1x32xf32> to vector<16x32xf32>
    %235 = arith.addf %233, %234 : vector<16x32xf32>
    %c1 = arith.constant 1 : index
    %c0_51 = arith.constant 0 : index
    %c0_52 = arith.constant 0 : index
    %236 = vector.load %arg4[%c1, %c0_51, %c0_52] : memref<2x32x192xf32, #tpu.memory_space<vmem>>, vector<1x32x192xf32>
    %237 = vector.shape_cast %236 : vector<1x32x192xf32> to vector<32x192xf32>
    %c1_53 = arith.constant 1 : index
    %c0_54 = arith.constant 0 : index
    %c0_55 = arith.constant 0 : index
    %238 = vector.load %arg5[%c1_53, %c0_54, %c0_55] : memref<2x64x32xf32, #tpu.memory_space<vmem>>, vector<1x64x32xf32>
    %239 = vector.shape_cast %238 : vector<1x64x32xf32> to vector<64x32xf32>
    %c1_56 = arith.constant 1 : index
    %c0_57 = arith.constant 0 : index
    %c0_58 = arith.constant 0 : index
    %240 = vector.load %arg6[%c1_56, %c0_57, %c0_58] : memref<2x8x128xf32, #tpu.memory_space<vmem>>, vector<1x8x128xf32>
    %241 = vector.shape_cast %240 : vector<1x8x128xf32> to vector<8x128xf32>
    %242 = vector.extract_strided_slice %237 {offsets = [0, 0], sizes = [32, 96], strides = [1, 1]} : vector<32x192xf32> to vector<32x96xf32>
    %243 = vector.extract_strided_slice %237 {offsets = [0, 96], sizes = [32, 32], strides = [1, 1]} : vector<32x192xf32> to vector<32x32xf32>
    %244 = vector.extract_strided_slice %237 {offsets = [0, 128], sizes = [32, 64], strides = [1, 1]} : vector<32x192xf32> to vector<32x64xf32>
    %245 = vector.extract_strided_slice %241 {offsets = [0, 0], sizes = [1, 96], strides = [1, 1]} : vector<8x128xf32> to vector<1x96xf32>
    %246 = vector.extract_strided_slice %241 {offsets = [1, 0], sizes = [1, 32], strides = [1, 1]} : vector<8x128xf32> to vector<1x32xf32>
    %247 = vector.extract_strided_slice %241 {offsets = [2, 0], sizes = [1, 64], strides = [1, 1]} : vector<8x128xf32> to vector<1x64xf32>
    %248 = vector.extract_strided_slice %241 {offsets = [3, 0], sizes = [1, 32], strides = [1, 1]} : vector<8x128xf32> to vector<1x32xf32>
    %249 = vector.extract_strided_slice %241 {offsets = [4, 0], sizes = [1, 32], strides = [1, 1]} : vector<8x128xf32> to vector<1x32xf32>
    %250 = vector.extract_strided_slice %241 {offsets = [5, 0], sizes = [1, 32], strides = [1, 1]} : vector<8x128xf32> to vector<1x32xf32>
    %251 = vector.extract_strided_slice %241 {offsets = [6, 0], sizes = [1, 32], strides = [1, 1]} : vector<8x128xf32> to vector<1x32xf32>
    %252 = vector.extract_strided_slice %241 {offsets = [7, 0], sizes = [1, 32], strides = [1, 1]} : vector<8x128xf32> to vector<1x32xf32>
    %cst_59 = arith.constant dense<0.000000e+00> : vector<16x96xf32>
    %253 = tpu.matmul %235, %242, %cst_59 {dimension_numbers = #tpu.dot_dimension_numbers<[1], [0], [0], [1], [0, 0, 1, 1], [], []>} : vector<16x32xf32>, vector<32x96xf32>, vector<16x96xf32> -> vector<16x96xf32>
    %254 = vector.broadcast %245 : vector<1x96xf32> to vector<16x96xf32>
    %255 = arith.addf %253, %254 : vector<16x96xf32>
    %256 = vector.extract_strided_slice %255 {offsets = [0, 0], sizes = [16, 32], strides = [1, 1]} : vector<16x96xf32> to vector<16x32xf32>
    %257 = vector.extract_strided_slice %255 {offsets = [0, 32], sizes = [16, 32], strides = [1, 1]} : vector<16x96xf32> to vector<16x32xf32>
    %258 = vector.extract_strided_slice %255 {offsets = [0, 64], sizes = [16, 32], strides = [1, 1]} : vector<16x96xf32> to vector<16x32xf32>
    %259 = vector.extract_strided_slice %256 {offsets = [0, 0], sizes = [8, 32], strides = [1, 1]} : vector<16x32xf32> to vector<8x32xf32>
    %260 = vector.extract_strided_slice %257 {offsets = [0, 0], sizes = [8, 32], strides = [1, 1]} : vector<16x32xf32> to vector<8x32xf32>
    %261 = vector.extract_strided_slice %258 {offsets = [0, 0], sizes = [8, 32], strides = [1, 1]} : vector<16x32xf32> to vector<8x32xf32>
    %262 = vector.extract_strided_slice %259 {offsets = [0, 0], sizes = [8, 8], strides = [1, 1]} : vector<8x32xf32> to vector<8x8xf32>
    %263 = vector.extract_strided_slice %259 {offsets = [0, 8], sizes = [8, 8], strides = [1, 1]} : vector<8x32xf32> to vector<8x8xf32>
    %264 = vector.extract_strided_slice %259 {offsets = [0, 16], sizes = [8, 8], strides = [1, 1]} : vector<8x32xf32> to vector<8x8xf32>
    %265 = vector.extract_strided_slice %259 {offsets = [0, 24], sizes = [8, 8], strides = [1, 1]} : vector<8x32xf32> to vector<8x8xf32>
    %266 = vector.shape_cast %262 : vector<8x8xf32> to vector<1x8x8xf32>
    %267 = vector.shape_cast %263 : vector<8x8xf32> to vector<1x8x8xf32>
    %268 = vector.shape_cast %264 : vector<8x8xf32> to vector<1x8x8xf32>
    %269 = vector.shape_cast %265 : vector<8x8xf32> to vector<1x8x8xf32>
    %270 = tpu.concatenate %266, %267, %268, %269 in 0 : vector<1x8x8xf32>, vector<1x8x8xf32>, vector<1x8x8xf32>, vector<1x8x8xf32> -> vector<4x8x8xf32>
    %271 = vector.extract_strided_slice %260 {offsets = [0, 0], sizes = [8, 8], strides = [1, 1]} : vector<8x32xf32> to vector<8x8xf32>
    %272 = vector.extract_strided_slice %260 {offsets = [0, 8], sizes = [8, 8], strides = [1, 1]} : vector<8x32xf32> to vector<8x8xf32>
    %273 = vector.extract_strided_slice %260 {offsets = [0, 16], sizes = [8, 8], strides = [1, 1]} : vector<8x32xf32> to vector<8x8xf32>
    %274 = vector.extract_strided_slice %260 {offsets = [0, 24], sizes = [8, 8], strides = [1, 1]} : vector<8x32xf32> to vector<8x8xf32>
    %275 = vector.shape_cast %271 : vector<8x8xf32> to vector<1x8x8xf32>
    %276 = vector.shape_cast %272 : vector<8x8xf32> to vector<1x8x8xf32>
    %277 = vector.shape_cast %273 : vector<8x8xf32> to vector<1x8x8xf32>
    %278 = vector.shape_cast %274 : vector<8x8xf32> to vector<1x8x8xf32>
    %279 = tpu.concatenate %275, %276, %277, %278 in 0 : vector<1x8x8xf32>, vector<1x8x8xf32>, vector<1x8x8xf32>, vector<1x8x8xf32> -> vector<4x8x8xf32>
    %280 = vector.extract_strided_slice %261 {offsets = [0, 0], sizes = [8, 8], strides = [1, 1]} : vector<8x32xf32> to vector<8x8xf32>
    %281 = vector.extract_strided_slice %261 {offsets = [0, 8], sizes = [8, 8], strides = [1, 1]} : vector<8x32xf32> to vector<8x8xf32>
    %282 = vector.extract_strided_slice %261 {offsets = [0, 16], sizes = [8, 8], strides = [1, 1]} : vector<8x32xf32> to vector<8x8xf32>
    %283 = vector.extract_strided_slice %261 {offsets = [0, 24], sizes = [8, 8], strides = [1, 1]} : vector<8x32xf32> to vector<8x8xf32>
    %284 = vector.shape_cast %280 : vector<8x8xf32> to vector<1x8x8xf32>
    %285 = vector.shape_cast %281 : vector<8x8xf32> to vector<1x8x8xf32>
    %286 = vector.shape_cast %282 : vector<8x8xf32> to vector<1x8x8xf32>
    %287 = vector.shape_cast %283 : vector<8x8xf32> to vector<1x8x8xf32>
    %288 = tpu.concatenate %284, %285, %286, %287 in 0 : vector<1x8x8xf32>, vector<1x8x8xf32>, vector<1x8x8xf32>, vector<1x8x8xf32> -> vector<4x8x8xf32>
    "tpu.trace_start"() <{level = 10 : i32, message = "hid,hjd->hij"}> : () -> ()
    %cst_60 = arith.constant dense<0.000000e+00> : vector<4x8x8xf32>
    %289 = tpu.matmul %270, %279, %cst_60 {dimension_numbers = #tpu.dot_dimension_numbers<[2], [2], [1], [1], [0, 0, 0, 1, 1, 1], [0], [0]>} : vector<4x8x8xf32>, vector<4x8x8xf32>, vector<4x8x8xf32> -> vector<4x8x8xf32>
    "tpu.trace_stop"() : () -> ()
    %290 = vector.shape_cast %270 : vector<4x8x8xf32> to vector<4x8x1x8xf32>
    %291 = vector.shape_cast %1 : vector<8x8x8xf32> to vector<1x8x8x8xf32>
    %292 = vector.broadcast %290 : vector<4x8x1x8xf32> to vector<4x8x8x8xf32>
    %293 = vector.broadcast %291 : vector<1x8x8x8xf32> to vector<4x8x8x8xf32>
    %294 = arith.mulf %292, %293 : vector<4x8x8x8xf32>
    %cst_61 = arith.constant dense<0.000000e+00> : vector<4x8x8xf32>
    %295 = vector.multi_reduction <add>, %294, %cst_61 [3] : vector<4x8x8x8xf32> to vector<4x8x8xf32>
    %296 = arith.addf %289, %295 : vector<4x8x8xf32>
    %cst_62 = arith.constant 0.353553385 : f32
    %297 = vector.broadcast %cst_62 : f32 to vector<4x8x8xf32>
    %298 = arith.mulf %296, %297 : vector<4x8x8xf32>
    %299 = vector.extract_strided_slice %3 {offsets = [0, 0, 0, 0], sizes = [1, 4, 8, 8], strides = [1, 1, 1, 1]} : vector<2x4x8x8xf32> to vector<1x4x8x8xf32>
    %300 = vector.shape_cast %299 : vector<1x4x8x8xf32> to vector<4x8x8xf32>
    %301 = arith.addf %298, %300 : vector<4x8x8xf32>
    %cst_63 = arith.constant dense<0xFF800000> : vector<4x8xf32>
    %302 = vector.multi_reduction <maximumf>, %301, %cst_63 [2] : vector<4x8x8xf32> to vector<4x8xf32>
    %303 = vector.shape_cast %302 : vector<4x8xf32> to vector<4x8x1xf32>
    %304 = vector.broadcast %303 : vector<4x8x1xf32> to vector<4x8x8xf32>
    %305 = arith.subf %301, %304 : vector<4x8x8xf32>
    %306 = math.exp %305 : vector<4x8x8xf32>
    %cst_64 = arith.constant dense<0.000000e+00> : vector<4x8xf32>
    %307 = vector.multi_reduction <add>, %306, %cst_64 [2] : vector<4x8x8xf32> to vector<4x8xf32>
    %308 = vector.shape_cast %307 : vector<4x8xf32> to vector<4x8x1xf32>
    %309 = tpu.reciprocal %308 {approx = true} : vector<4x8x1xf32> -> vector<4x8x1xf32>
    %310 = vector.broadcast %309 : vector<4x8x1xf32> to vector<4x8x8xf32>
    %311 = arith.mulf %306, %310 : vector<4x8x8xf32>
    "tpu.trace_start"() <{level = 10 : i32, message = "hij,hjd->hid"}> : () -> ()
    %cst_65 = arith.constant dense<0.000000e+00> : vector<4x8x8xf32>
    %312 = tpu.matmul %311, %288, %cst_65 {dimension_numbers = #tpu.dot_dimension_numbers<[2], [1], [1], [2], [0, 0, 0, 1, 1, 2], [0], [0]>} : vector<4x8x8xf32>, vector<4x8x8xf32>, vector<4x8x8xf32> -> vector<4x8x8xf32>
    "tpu.trace_stop"() : () -> ()
    %313 = vector.shape_cast %311 : vector<4x8x8xf32> to vector<4x8x8x1xf32>
    %314 = vector.shape_cast %2 : vector<8x8x8xf32> to vector<1x8x8x8xf32>
    %315 = vector.broadcast %313 : vector<4x8x8x1xf32> to vector<4x8x8x8xf32>
    %316 = vector.broadcast %314 : vector<1x8x8x8xf32> to vector<4x8x8x8xf32>
    %317 = arith.mulf %315, %316 : vector<4x8x8x8xf32>
    %cst_66 = arith.constant dense<0.000000e+00> : vector<4x8x8xf32>
    %318 = vector.multi_reduction <add>, %317, %cst_66 [2] : vector<4x8x8x8xf32> to vector<4x8x8xf32>
    %319 = arith.addf %312, %318 : vector<4x8x8xf32>
    %320 = vector.extract_strided_slice %319 {offsets = [0, 0, 0], sizes = [1, 8, 8], strides = [1, 1, 1]} : vector<4x8x8xf32> to vector<1x8x8xf32>
    %321 = vector.shape_cast %320 : vector<1x8x8xf32> to vector<8x8xf32>
    %322 = vector.extract_strided_slice %319 {offsets = [1, 0, 0], sizes = [1, 8, 8], strides = [1, 1, 1]} : vector<4x8x8xf32> to vector<1x8x8xf32>
    %323 = vector.shape_cast %322 : vector<1x8x8xf32> to vector<8x8xf32>
    %324 = vector.extract_strided_slice %319 {offsets = [2, 0, 0], sizes = [1, 8, 8], strides = [1, 1, 1]} : vector<4x8x8xf32> to vector<1x8x8xf32>
    %325 = vector.shape_cast %324 : vector<1x8x8xf32> to vector<8x8xf32>
    %326 = vector.extract_strided_slice %319 {offsets = [3, 0, 0], sizes = [1, 8, 8], strides = [1, 1, 1]} : vector<4x8x8xf32> to vector<1x8x8xf32>
    %327 = vector.shape_cast %326 : vector<1x8x8xf32> to vector<8x8xf32>
    %328 = tpu.concatenate %321, %323, %325, %327 in 1 : vector<8x8xf32>, vector<8x8xf32>, vector<8x8xf32>, vector<8x8xf32> -> vector<8x32xf32>
    %329 = vector.extract_strided_slice %256 {offsets = [8, 0], sizes = [8, 32], strides = [1, 1]} : vector<16x32xf32> to vector<8x32xf32>
    %330 = vector.extract_strided_slice %257 {offsets = [8, 0], sizes = [8, 32], strides = [1, 1]} : vector<16x32xf32> to vector<8x32xf32>
    %331 = vector.extract_strided_slice %258 {offsets = [8, 0], sizes = [8, 32], strides = [1, 1]} : vector<16x32xf32> to vector<8x32xf32>
    %332 = vector.extract_strided_slice %329 {offsets = [0, 0], sizes = [8, 8], strides = [1, 1]} : vector<8x32xf32> to vector<8x8xf32>
    %333 = vector.extract_strided_slice %329 {offsets = [0, 8], sizes = [8, 8], strides = [1, 1]} : vector<8x32xf32> to vector<8x8xf32>
    %334 = vector.extract_strided_slice %329 {offsets = [0, 16], sizes = [8, 8], strides = [1, 1]} : vector<8x32xf32> to vector<8x8xf32>
    %335 = vector.extract_strided_slice %329 {offsets = [0, 24], sizes = [8, 8], strides = [1, 1]} : vector<8x32xf32> to vector<8x8xf32>
    %336 = vector.shape_cast %332 : vector<8x8xf32> to vector<1x8x8xf32>
    %337 = vector.shape_cast %333 : vector<8x8xf32> to vector<1x8x8xf32>
    %338 = vector.shape_cast %334 : vector<8x8xf32> to vector<1x8x8xf32>
    %339 = vector.shape_cast %335 : vector<8x8xf32> to vector<1x8x8xf32>
    %340 = tpu.concatenate %336, %337, %338, %339 in 0 : vector<1x8x8xf32>, vector<1x8x8xf32>, vector<1x8x8xf32>, vector<1x8x8xf32> -> vector<4x8x8xf32>
    %341 = vector.extract_strided_slice %330 {offsets = [0, 0], sizes = [8, 8], strides = [1, 1]} : vector<8x32xf32> to vector<8x8xf32>
    %342 = vector.extract_strided_slice %330 {offsets = [0, 8], sizes = [8, 8], strides = [1, 1]} : vector<8x32xf32> to vector<8x8xf32>
    %343 = vector.extract_strided_slice %330 {offsets = [0, 16], sizes = [8, 8], strides = [1, 1]} : vector<8x32xf32> to vector<8x8xf32>
    %344 = vector.extract_strided_slice %330 {offsets = [0, 24], sizes = [8, 8], strides = [1, 1]} : vector<8x32xf32> to vector<8x8xf32>
    %345 = vector.shape_cast %341 : vector<8x8xf32> to vector<1x8x8xf32>
    %346 = vector.shape_cast %342 : vector<8x8xf32> to vector<1x8x8xf32>
    %347 = vector.shape_cast %343 : vector<8x8xf32> to vector<1x8x8xf32>
    %348 = vector.shape_cast %344 : vector<8x8xf32> to vector<1x8x8xf32>
    %349 = tpu.concatenate %345, %346, %347, %348 in 0 : vector<1x8x8xf32>, vector<1x8x8xf32>, vector<1x8x8xf32>, vector<1x8x8xf32> -> vector<4x8x8xf32>
    %350 = vector.extract_strided_slice %331 {offsets = [0, 0], sizes = [8, 8], strides = [1, 1]} : vector<8x32xf32> to vector<8x8xf32>
    %351 = vector.extract_strided_slice %331 {offsets = [0, 8], sizes = [8, 8], strides = [1, 1]} : vector<8x32xf32> to vector<8x8xf32>
    %352 = vector.extract_strided_slice %331 {offsets = [0, 16], sizes = [8, 8], strides = [1, 1]} : vector<8x32xf32> to vector<8x8xf32>
    %353 = vector.extract_strided_slice %331 {offsets = [0, 24], sizes = [8, 8], strides = [1, 1]} : vector<8x32xf32> to vector<8x8xf32>
    %354 = vector.shape_cast %350 : vector<8x8xf32> to vector<1x8x8xf32>
    %355 = vector.shape_cast %351 : vector<8x8xf32> to vector<1x8x8xf32>
    %356 = vector.shape_cast %352 : vector<8x8xf32> to vector<1x8x8xf32>
    %357 = vector.shape_cast %353 : vector<8x8xf32> to vector<1x8x8xf32>
    %358 = tpu.concatenate %354, %355, %356, %357 in 0 : vector<1x8x8xf32>, vector<1x8x8xf32>, vector<1x8x8xf32>, vector<1x8x8xf32> -> vector<4x8x8xf32>
    "tpu.trace_start"() <{level = 10 : i32, message = "hid,hjd->hij"}> : () -> ()
    %cst_67 = arith.constant dense<0.000000e+00> : vector<4x8x8xf32>
    %359 = tpu.matmul %340, %349, %cst_67 {dimension_numbers = #tpu.dot_dimension_numbers<[2], [2], [1], [1], [0, 0, 0, 1, 1, 1], [0], [0]>} : vector<4x8x8xf32>, vector<4x8x8xf32>, vector<4x8x8xf32> -> vector<4x8x8xf32>
    "tpu.trace_stop"() : () -> ()
    %360 = vector.shape_cast %340 : vector<4x8x8xf32> to vector<4x8x1x8xf32>
    %361 = vector.shape_cast %1 : vector<8x8x8xf32> to vector<1x8x8x8xf32>
    %362 = vector.broadcast %360 : vector<4x8x1x8xf32> to vector<4x8x8x8xf32>
    %363 = vector.broadcast %361 : vector<1x8x8x8xf32> to vector<4x8x8x8xf32>
    %364 = arith.mulf %362, %363 : vector<4x8x8x8xf32>
    %cst_68 = arith.constant dense<0.000000e+00> : vector<4x8x8xf32>
    %365 = vector.multi_reduction <add>, %364, %cst_68 [3] : vector<4x8x8x8xf32> to vector<4x8x8xf32>
    %366 = arith.addf %359, %365 : vector<4x8x8xf32>
    %cst_69 = arith.constant 0.353553385 : f32
    %367 = vector.broadcast %cst_69 : f32 to vector<4x8x8xf32>
    %368 = arith.mulf %366, %367 : vector<4x8x8xf32>
    %369 = vector.extract_strided_slice %3 {offsets = [1, 0, 0, 0], sizes = [1, 4, 8, 8], strides = [1, 1, 1, 1]} : vector<2x4x8x8xf32> to vector<1x4x8x8xf32>
    %370 = vector.shape_cast %369 : vector<1x4x8x8xf32> to vector<4x8x8xf32>
    %371 = arith.addf %368, %370 : vector<4x8x8xf32>
    %cst_70 = arith.constant dense<0xFF800000> : vector<4x8xf32>
    %372 = vector.multi_reduction <maximumf>, %371, %cst_70 [2] : vector<4x8x8xf32> to vector<4x8xf32>
    %373 = vector.shape_cast %372 : vector<4x8xf32> to vector<4x8x1xf32>
    %374 = vector.broadcast %373 : vector<4x8x1xf32> to vector<4x8x8xf32>
    %375 = arith.subf %371, %374 : vector<4x8x8xf32>
    %376 = math.exp %375 : vector<4x8x8xf32>
    %cst_71 = arith.constant dense<0.000000e+00> : vector<4x8xf32>
    %377 = vector.multi_reduction <add>, %376, %cst_71 [2] : vector<4x8x8xf32> to vector<4x8xf32>
    %378 = vector.shape_cast %377 : vector<4x8xf32> to vector<4x8x1xf32>
    %379 = tpu.reciprocal %378 {approx = true} : vector<4x8x1xf32> -> vector<4x8x1xf32>
    %380 = vector.broadcast %379 : vector<4x8x1xf32> to vector<4x8x8xf32>
    %381 = arith.mulf %376, %380 : vector<4x8x8xf32>
    "tpu.trace_start"() <{level = 10 : i32, message = "hij,hjd->hid"}> : () -> ()
    %cst_72 = arith.constant dense<0.000000e+00> : vector<4x8x8xf32>
    %382 = tpu.matmul %381, %358, %cst_72 {dimension_numbers = #tpu.dot_dimension_numbers<[2], [1], [1], [2], [0, 0, 0, 1, 1, 2], [0], [0]>} : vector<4x8x8xf32>, vector<4x8x8xf32>, vector<4x8x8xf32> -> vector<4x8x8xf32>
    "tpu.trace_stop"() : () -> ()
    %383 = vector.shape_cast %381 : vector<4x8x8xf32> to vector<4x8x8x1xf32>
    %384 = vector.shape_cast %2 : vector<8x8x8xf32> to vector<1x8x8x8xf32>
    %385 = vector.broadcast %383 : vector<4x8x8x1xf32> to vector<4x8x8x8xf32>
    %386 = vector.broadcast %384 : vector<1x8x8x8xf32> to vector<4x8x8x8xf32>
    %387 = arith.mulf %385, %386 : vector<4x8x8x8xf32>
    %cst_73 = arith.constant dense<0.000000e+00> : vector<4x8x8xf32>
    %388 = vector.multi_reduction <add>, %387, %cst_73 [2] : vector<4x8x8x8xf32> to vector<4x8x8xf32>
    %389 = arith.addf %382, %388 : vector<4x8x8xf32>
    %390 = vector.extract_strided_slice %389 {offsets = [0, 0, 0], sizes = [1, 8, 8], strides = [1, 1, 1]} : vector<4x8x8xf32> to vector<1x8x8xf32>
    %391 = vector.shape_cast %390 : vector<1x8x8xf32> to vector<8x8xf32>
    %392 = vector.extract_strided_slice %389 {offsets = [1, 0, 0], sizes = [1, 8, 8], strides = [1, 1, 1]} : vector<4x8x8xf32> to vector<1x8x8xf32>
    %393 = vector.shape_cast %392 : vector<1x8x8xf32> to vector<8x8xf32>
    %394 = vector.extract_strided_slice %389 {offsets = [2, 0, 0], sizes = [1, 8, 8], strides = [1, 1, 1]} : vector<4x8x8xf32> to vector<1x8x8xf32>
    %395 = vector.shape_cast %394 : vector<1x8x8xf32> to vector<8x8xf32>
    %396 = vector.extract_strided_slice %389 {offsets = [3, 0, 0], sizes = [1, 8, 8], strides = [1, 1, 1]} : vector<4x8x8xf32> to vector<1x8x8xf32>
    %397 = vector.shape_cast %396 : vector<1x8x8xf32> to vector<8x8xf32>
    %398 = tpu.concatenate %391, %393, %395, %397 in 1 : vector<8x8xf32>, vector<8x8xf32>, vector<8x8xf32>, vector<8x8xf32> -> vector<8x32xf32>
    %399 = tpu.concatenate %328, %398 in 0 : vector<8x32xf32>, vector<8x32xf32> -> vector<16x32xf32>
    %cst_74 = arith.constant dense<0.000000e+00> : vector<16x32xf32>
    %400 = tpu.matmul %399, %243, %cst_74 {dimension_numbers = #tpu.dot_dimension_numbers<[1], [0], [0], [1], [0, 0, 1, 1], [], []>} : vector<16x32xf32>, vector<32x32xf32>, vector<16x32xf32> -> vector<16x32xf32>
    %401 = vector.broadcast %246 : vector<1x32xf32> to vector<16x32xf32>
    %402 = arith.addf %400, %401 : vector<16x32xf32>
    %403 = arith.addf %235, %402 : vector<16x32xf32>
    %cst_75 = arith.constant dense<0.000000e+00> : vector<16xf32>
    %404 = vector.multi_reduction <add>, %403, %cst_75 [1] : vector<16x32xf32> to vector<16xf32>
    %405 = vector.shape_cast %404 : vector<16xf32> to vector<16x1xf32>
    %cst_76 = arith.constant 3.200000e+01 : f32
    %406 = vector.broadcast %cst_76 : f32 to vector<16x1xf32>
    %407 = arith.divf %405, %406 : vector<16x1xf32>
    %408 = vector.broadcast %407 : vector<16x1xf32> to vector<16x32xf32>
    %409 = arith.subf %403, %408 : vector<16x32xf32>
    %410 = arith.mulf %409, %409 : vector<16x32xf32>
    %cst_77 = arith.constant dense<0.000000e+00> : vector<16xf32>
    %411 = vector.multi_reduction <add>, %410, %cst_77 [1] : vector<16x32xf32> to vector<16xf32>
    %412 = vector.shape_cast %411 : vector<16xf32> to vector<16x1xf32>
    %cst_78 = arith.constant 3.200000e+01 : f32
    %413 = vector.broadcast %cst_78 : f32 to vector<16x1xf32>
    %414 = arith.divf %412, %413 : vector<16x1xf32>
    %415 = vector.broadcast %407 : vector<16x1xf32> to vector<16x32xf32>
    %416 = arith.subf %403, %415 : vector<16x32xf32>
    %cst_79 = arith.constant 1.000000e-07 : f32
    %417 = vector.broadcast %cst_79 : f32 to vector<16x1xf32>
    %418 = arith.addf %414, %417 : vector<16x1xf32>
    %419 = math.rsqrt %418 : vector<16x1xf32>
    %420 = vector.broadcast %419 : vector<16x1xf32> to vector<16x32xf32>
    %421 = arith.mulf %416, %420 : vector<16x32xf32>
    %422 = vector.broadcast %249 : vector<1x32xf32> to vector<16x32xf32>
    %423 = arith.mulf %421, %422 : vector<16x32xf32>
    %424 = vector.broadcast %250 : vector<1x32xf32> to vector<16x32xf32>
    %425 = arith.addf %423, %424 : vector<16x32xf32>
    %cst_80 = arith.constant dense<0.000000e+00> : vector<16x64xf32>
    %426 = tpu.matmul %425, %244, %cst_80 {dimension_numbers = #tpu.dot_dimension_numbers<[1], [0], [0], [1], [0, 0, 1, 1], [], []>} : vector<16x32xf32>, vector<32x64xf32>, vector<16x64xf32> -> vector<16x64xf32>
    %427 = vector.broadcast %247 : vector<1x64xf32> to vector<16x64xf32>
    %428 = arith.addf %426, %427 : vector<16x64xf32>
    %429 = arith.mulf %428, %428 : vector<16x64xf32>
    %430 = arith.mulf %428, %429 : vector<16x64xf32>
    %cst_81 = arith.constant 4.471500e-02 : f32
    %431 = vector.broadcast %cst_81 : f32 to vector<16x64xf32>
    %432 = arith.mulf %431, %430 : vector<16x64xf32>
    %433 = arith.addf %428, %432 : vector<16x64xf32>
    %cst_82 = arith.constant 0.797884583 : f32
    %434 = vector.broadcast %cst_82 : f32 to vector<16x64xf32>
    %435 = arith.mulf %434, %433 : vector<16x64xf32>
    %436 = math.tanh %435 : vector<16x64xf32>
    %cst_83 = arith.constant 1.000000e+00 : f32
    %437 = vector.broadcast %cst_83 : f32 to vector<16x64xf32>
    %438 = arith.addf %437, %436 : vector<16x64xf32>
    %cst_84 = arith.constant 5.000000e-01 : f32
    %439 = vector.broadcast %cst_84 : f32 to vector<16x64xf32>
    %440 = arith.mulf %439, %438 : vector<16x64xf32>
    %441 = arith.mulf %428, %440 : vector<16x64xf32>
    %cst_85 = arith.constant dense<0.000000e+00> : vector<16x32xf32>
    %442 = tpu.matmul %441, %239, %cst_85 {dimension_numbers = #tpu.dot_dimension_numbers<[1], [0], [0], [1], [0, 0, 1, 1], [], []>} : vector<16x64xf32>, vector<64x32xf32>, vector<16x32xf32> -> vector<16x32xf32>
    %443 = vector.broadcast %248 : vector<1x32xf32> to vector<16x32xf32>
    %444 = arith.addf %442, %443 : vector<16x32xf32>
    %445 = arith.addf %425, %444 : vector<16x32xf32>
    %cst_86 = arith.constant dense<0.000000e+00> : vector<16xf32>
    %446 = vector.multi_reduction <add>, %445, %cst_86 [1] : vector<16x32xf32> to vector<16xf32>
    %447 = vector.shape_cast %446 : vector<16xf32> to vector<16x1xf32>
    %cst_87 = arith.constant 3.200000e+01 : f32
    %448 = vector.broadcast %cst_87 : f32 to vector<16x1xf32>
    %449 = arith.divf %447, %448 : vector<16x1xf32>
    %450 = vector.broadcast %449 : vector<16x1xf32> to vector<16x32xf32>
    %451 = arith.subf %445, %450 : vector<16x32xf32>
    %452 = arith.mulf %451, %451 : vector<16x32xf32>
    %cst_88 = arith.constant dense<0.000000e+00> : vector<16xf32>
    %453 = vector.multi_reduction <add>, %452, %cst_88 [1] : vector<16x32xf32> to vector<16xf32>
    %454 = vector.shape_cast %453 : vector<16xf32> to vector<16x1xf32>
    %cst_89 = arith.constant 3.200000e+01 : f32
    %455 = vector.broadcast %cst_89 : f32 to vector<16x1xf32>
    %456 = arith.divf %454, %455 : vector<16x1xf32>
    %457 = vector.broadcast %449 : vector<16x1xf32> to vector<16x32xf32>
    %458 = arith.subf %445, %457 : vector<16x32xf32>
    %cst_90 = arith.constant 1.000000e-07 : f32
    %459 = vector.broadcast %cst_90 : f32 to vector<16x1xf32>
    %460 = arith.addf %456, %459 : vector<16x1xf32>
    %461 = math.rsqrt %460 : vector<16x1xf32>
    %462 = vector.broadcast %461 : vector<16x1xf32> to vector<16x32xf32>
    %463 = arith.mulf %458, %462 : vector<16x32xf32>
    %464 = vector.broadcast %251 : vector<1x32xf32> to vector<16x32xf32>
    %465 = arith.mulf %463, %464 : vector<16x32xf32>
    %466 = vector.broadcast %252 : vector<1x32xf32> to vector<16x32xf32>
    %467 = arith.addf %465, %466 : vector<16x32xf32>
    %c0_91 = arith.constant 0 : index
    %c0_92 = arith.constant 0 : index
    %468 = vector.load %arg7[%c0_91, %c0_92] : memref<16x32xf32, #tpu.memory_space<vmem>>, vector<16x32xf32>
    tpu.vector_store %arg7[%c0_91, %c0_92], %467 {strides = array<i32>} : memref<16x32xf32, #tpu.memory_space<vmem>>, vector<16x32xf32>,
    return
  }
}

</mosaic_0001>

<llo_original>
// kernel: encoder_forward.1
$region0: #{encoder_forward.1}
  #allocation0 [shape = 'u32[]', space=smem, size = 0x4, offset = 0x4, fixed_abs, tag = 'smem constant byte address 0x4 - core index']
  #allocation1 [shape = 'u32[144,128]{1,0:T(1,128)}', space=vmem, size = 0x12000, scoped, tag = 'internal scratch']
  %s0 = inlined_call_operand.hbm [shape: f32[16,32], index: 0, kind: input, shape index: {}]
  %s1 = inlined_call_operand.vmem [shape: f32[8,8,8], index: 1, kind: input, shape index: {}]
  %s2 = inlined_call_operand.hbm [shape: f32[8,8,8], index: 2, kind: input, shape index: {}]
  %s3 = inlined_call_operand.hbm [shape: f32[2,4,8,8], index: 3, kind: input, shape index: {}]
  %s4 = inlined_call_operand.vmem [shape: f32[2,32,192], index: 4, kind: input, shape index: {}]
  %s5 = inlined_call_operand.vmem [shape: f32[2,64,32], index: 5, kind: input, shape index: {}]
  %s6 = inlined_call_operand.hbm [shape: f32[2,8,128], index: 6, kind: input, shape index: {}]
  %s7 = inlined_call_operand.hbm [shape: f32[16,32], index: 7, kind: output, shape index: {}]
  %s8 = sld [smem:[#allocation0]]
  $region54: #{encoder_forward.1} parent=0
    _
  %s10 = ssub.s32 1, %s8
  %s11 = scalar_select 0, %s10, %s8
  $region1: #{encoder_forward.1} parent=0
    #allocation2 [shape = 'u8[8192]{0}', space=vmem, size = 0x2000, scoped, tag = 'input window, operand 0, single buffered']
    #allocation3 [shape = 's32[1]{0}', space=sflag, size = 0x4, scoped, tag = 'scoped memory for encoder_forward.1']
    #allocation4 [shape = 's32[1]{0}', space=sflag, size = 0x4, scoped, tag = 'scoped memory for encoder_forward.1']
    #allocation5 [shape = 'u8[32768]{0}', space=vmem, size = 0x8000, scoped, tag = 'input window, operand 2, single buffered']
    #allocation6 [shape = 's32[1]{0}', space=sflag, size = 0x4, scoped, tag = 'scoped memory for encoder_forward.1']
    #allocation7 [shape = 'u8[32768]{0}', space=vmem, size = 0x8000, scoped, tag = 'input window, operand 3, single buffered']
    #allocation8 [shape = 'u8[8192]{0}', space=vmem, size = 0x2000, scoped, tag = 'input window, operand 6, single buffered']
    #allocation9 [shape = 's32[1]{0}', space=sflag, size = 0x4, scoped, tag = 'scoped memory for encoder_forward.1']
    #allocation10 [shape = 'u8[8192]{0}', space=vmem, size = 0x2000, scoped, tag = 'output window, operand 0, single buffered']
    %12 = vsyncpa [#allocation3], 0
    %13 = vsyncpa [#allocation6], 0
    %14 = vsyncpa [#allocation9], 0
    %15 = vsyncpa [#allocation4], 0
    // Predicated region
    $region2: #{encoder_forward.1} parent=1 // pred_check
      _
    $region3: #{encoder_forward.1} parent=1 // pred_check_branch
      %17 = sbr.rel (0) target = $region5
    $region4: #{encoder_forward.1} parent=1 // pred_region
      %s19 = ssub.s32 256, 256
      %20 = vsyncadd [#allocation3], %s19
      %s21 = sshll.u32 [#allocation2], 4
      %s22 = int_to_ptr.vmem [resolvable:$true] %s21
      %27 = dma.hbm_to_vmem [thread:$0]  %s0, 256, %s22, [#allocation3], 128, 128, 8
    $region5: #{encoder_forward.1} parent=1 // pred_fallthru
      _
    // Predicated region
    $region6: #{encoder_forward.1} parent=1 // pred_check
      _
    $region7: #{encoder_forward.1} parent=1 // pred_check_branch
      %29 = sbr.rel (0) target = $region9
    $region8: #{encoder_forward.1} parent=1 // pred_region
      _
    $region9: #{encoder_forward.1} parent=1 // pred_fallthru
      _
    // Predicated region
    $region10: #{encoder_forward.1} parent=1 // pred_check
      _
    $region11: #{encoder_forward.1} parent=1 // pred_check_branch
      %31 = sbr.rel (0) target = $region13
    $region12: #{encoder_forward.1} parent=1 // pred_region
      %s33 = ssub.s32 1024, 1024
      %34 = vsyncadd [#allocation6], %s33
      %s35 = sshll.u32 [#allocation5], 4
      %s36 = int_to_ptr.vmem [resolvable:$true] %s35
      %41 = dma.hbm_to_vmem [thread:$0]  %s2, 1024, %s36, [#allocation6], 128, 128, 8
    $region13: #{encoder_forward.1} parent=1 // pred_fallthru
      _
    // Predicated region
    $region14: #{encoder_forward.1} parent=1 // pred_check
      _
    $region15: #{encoder_forward.1} parent=1 // pred_check_branch
      %43 = sbr.rel (0) target = $region17
    $region16: #{encoder_forward.1} parent=1 // pred_region
      %s45 = ssub.s32 1024, 1024
      %46 = vsyncadd [#allocation6], %s45
      %s47 = sshll.u32 [#allocation7], 4
      %s48 = int_to_ptr.vmem [resolvable:$true] %s47
      %53 = dma.hbm_to_vmem [thread:$0]  %s3, 1024, %s48, [#allocation6], 128, 128, 8
    $region17: #{encoder_forward.1} parent=1 // pred_fallthru
      _
    // Predicated region
    $region18: #{encoder_forward.1} parent=1 // pred_check
      _
    $region19: #{encoder_forward.1} parent=1 // pred_check_branch
      %55 = sbr.rel (0) target = $region21
    $region20: #{encoder_forward.1} parent=1 // pred_region
      _
    $region21: #{encoder_forward.1} parent=1 // pred_fallthru
      _
    // Predicated region
    $region22: #{encoder_forward.1} parent=1 // pred_check
      _
    $region23: #{encoder_forward.1} parent=1 // pred_check_branch
      %57 = sbr.rel (0) target = $region25
    $region24: #{encoder_forward.1} parent=1 // pred_region
      _
    $region25: #{encoder_forward.1} parent=1 // pred_fallthru
      _
    // Predicated region
    $region26: #{encoder_forward.1} parent=1 // pred_check
      _
    $region27: #{encoder_forward.1} parent=1 // pred_check_branch
      %59 = sbr.rel (0) target = $region29
    $region28: #{encoder_forward.1} parent=1 // pred_region
      %s61 = ssub.s32 256, 256
      %62 = vsyncadd [#allocation9], %s61
      %s63 = sshll.u32 [#allocation8], 4
      %s64 = int_to_ptr.vmem [resolvable:$true] %s63
      %69 = dma.hbm_to_vmem [thread:$0]  %s6, 256, %s64, [#allocation9], 128, 128, 8
    $region29: #{encoder_forward.1} parent=1 // pred_fallthru
      _
    // Predicated region
    $region30: #{encoder_forward.1} parent=1 // pred_check
      _
    $region31: #{encoder_forward.1} parent=1 // pred_check_branch
      %71 = sbr.rel (0) target = $region33
    $region32: #{encoder_forward.1} parent=1 // pred_region
      %72 = dma.done [#allocation3], 256
    $region33: #{encoder_forward.1} parent=1 // pred_fallthru
      _
    // Predicated region
    $region34: #{encoder_forward.1} parent=1 // pred_check
      _
    $region35: #{encoder_forward.1} parent=1 // pred_check_branch
      %74 = sbr.rel (0) target = $region37
    $region36: #{encoder_forward.1} parent=1 // pred_region
      %75 = dma.done [#allocation6], 1024
    $region37: #{encoder_forward.1} parent=1 // pred_fallthru
      _
    // Predicated region
    $region38: #{encoder_forward.1} parent=1 // pred_check
      _
    $region39: #{encoder_forward.1} parent=1 // pred_check_branch
      %77 = sbr.rel (0) target = $region41
    $region40: #{encoder_forward.1} parent=1 // pred_region
      %78 = dma.done [#allocation6], 1024
    $region41: #{encoder_forward.1} parent=1 // pred_fallthru
      _
    // Predicated region
    $region42: #{encoder_forward.1} parent=1 // pred_check
      _
    $region43: #{encoder_forward.1} parent=1 // pred_check_branch
      %80 = sbr.rel (0) target = $region45
    $region44: #{encoder_forward.1} parent=1 // pred_region
      %81 = dma.done [#allocation9], 256
    $region45: #{encoder_forward.1} parent=1 // pred_fallthru
      _
    %v82 = vld [vmem:[#allocation2] sm:$0xff]
    %v83 = vld [vmem:[#allocation2 + $0x8] sm:$0xff]
    %v84 = vld [vmem:[%s1] sm:$0xff]
    %v85 = vld [vmem:[%s1 + $0x8] sm:$0xff]
    %v86 = vld [vmem:[%s1 + $0x10] sm:$0xff]
    %v87 = vld [vmem:[%s1 + $0x18] sm:$0xff]
    %v88 = vld [vmem:[%s1 + $0x20] sm:$0xff]
    %v89 = vld [vmem:[%s1 + $0x28] sm:$0xff]
    %v90 = vld [vmem:[%s1 + $0x30] sm:$0xff]
    %v91 = vld [vmem:[%s1 + $0x38] sm:$0xff]
    %v92 = vld [vmem:[#allocation5] sm:$0xff]
    %v93 = vld [vmem:[#allocation5 + $0x8] sm:$0xff]
    %v94 = vld [vmem:[#allocation5 + $0x10] sm:$0xff]
    %v95 = vld [vmem:[#allocation5 + $0x18] sm:$0xff]
    %v96 = vld [vmem:[#allocation5 + $0x20] sm:$0xff]
    %v97 = vld [vmem:[#allocation5 + $0x28] sm:$0xff]
    %v98 = vld [vmem:[#allocation5 + $0x30] sm:$0xff]
    %v99 = vld [vmem:[#allocation5 + $0x38] sm:$0xff]
    %v100 = vld [vmem:[#allocation7] sm:$0xff]
    %v101 = vld [vmem:[#allocation7 + $0x8] sm:$0xff]
    %v102 = vld [vmem:[#allocation7 + $0x10] sm:$0xff]
    %v103 = vld [vmem:[#allocation7 + $0x18] sm:$0xff]
    %v104 = vld [vmem:[#allocation7 + $0x20] sm:$0xff]
    %v105 = vld [vmem:[#allocation7 + $0x28] sm:$0xff]
    %v106 = vld [vmem:[#allocation7 + $0x30] sm:$0xff]
    %v107 = vld [vmem:[#allocation7 + $0x38] sm:$0xff]
    %v108 = vld [vmem:[%s4] sm:$0xff]
    %v109 = vld [vmem:[%s4 + $0x8] sm:$0xff]
    %v110 = vld [vmem:[%s4 + $0x10] sm:$0xff]
    %v111 = vld [vmem:[%s4 + $0x18] sm:$0xff]
    %v112 = vld [vmem:[%s4 + $0x20] sm:$0xff]
    %v113 = vld [vmem:[%s4 + $0x28] sm:$0xff]
    %v114 = vld [vmem:[%s4 + $0x30] sm:$0xff]
    %v115 = vld [vmem:[%s4 + $0x38] sm:$0xff]
    %v116 = vld [vmem:[%s5] sm:$0xff]
    %v117 = vld [vmem:[%s5 + $0x8] sm:$0xff]
    %v118 = vld [vmem:[%s5 + $0x10] sm:$0xff]
    %v119 = vld [vmem:[%s5 + $0x18] sm:$0xff]
    %v120 = vld [vmem:[%s5 + $0x20] sm:$0xff]
    %v121 = vld [vmem:[%s5 + $0x28] sm:$0xff]
    %v122 = vld [vmem:[%s5 + $0x30] sm:$0xff]
    %v123 = vld [vmem:[%s5 + $0x38] sm:$0xff]
    %v124 = vld [vmem:[#allocation8] sm:$0xff]
    %v125 = vlaneseq
    %v126 = vshrl.u32 %v125, 7
    %v127 = vsub.s32 0, %v126
    %v128 = vrot.slane %v124, %v127
    %vm129 = vcmask 261120
    %v131 = vsel %vm129, %v82, 0
    %v134 = vsel %vm129, %v83, 0
    %136 = vmatprep.subr.mxu0 0.0
    %137 = vmatpush1.msra.mxu0 0.0
    %138 = vmatprep.subr.mxu0 0.0
    %139 = vmatpush1.msra.mxu0 0.0
    %140 = vmatprep.subr.mxu0 0.0
    %141 = vmatpush1.msra.mxu0 0.0
    %142 = vmatprep.subr.mxu0 0.0
    %143 = vmatpush1.msra.mxu0 0.0
    %144 = vmatprep.subr.mxu0 0.0
    %145 = vmatpush1.msra.mxu0 0.0
    %146 = vmatprep.subr.mxu0 0.0
    %147 = vmatpush1.msra.mxu0 0.0
    %148 = vmatprep.subr.mxu0 0.0
    %149 = vmatpush1.msra.mxu0 0.0
    %150 = vmatprep.subr.mxu0 0.0
    %151 = vmatpush1.msra.mxu0 0.0
    %152 = vmatprep.subr.mxu0 0.0
    %153 = vmatpush1.msra.mxu0 0.0
    %154 = vmatprep.subr.mxu0 0.0
    %155 = vmatpush1.msra.mxu0 0.0
    %156 = vmatprep.subr.mxu0 0.0
    %157 = vmatpush1.msra.mxu0 0.0
    %158 = vmatprep.subr.mxu0 0.0
    %159 = vmatpush1.msra.mxu0 0.0
    %160 = vmatprep.subr.mxu0 0.0
    %161 = vmatpush1.msra.mxu0 %v114
    %162 = vmatprep.subr.mxu0 0.0
    %163 = vmatpush1.msra.mxu0 %v112
    %164 = vmatprep.subr.mxu0 0.0
    %165 = vmatpush1.msra.mxu0 %v110
    %166 = vmatprep.subr.mxu0 0.0
    %167 = vmatpush1.msra.mxu0 %v108
    %168 = vmatprep.subr.mxu0 0.0
    %169 = vmatpush2.msra.mxu0 0.0
    %170 = vmatprep.subr.mxu0 0.0
    %171 = vmatpush2.msra.mxu0 0.0
    %172 = vmatprep.subr.mxu0 0.0
    %173 = vmatpush2.msra.mxu0 0.0
    %174 = vmatprep.subr.mxu0 0.0
    %175 = vmatpush2.msra.mxu0 0.0
    %176 = vmatprep.subr.mxu0 0.0
    %177 = vmatpush2.msra.mxu0 0.0
    %178 = vmatprep.subr.mxu0 0.0
    %179 = vmatpush2.msra.mxu0 0.0
    %180 = vmatprep.subr.mxu0 0.0
    %181 = vmatpush2.msra.mxu0 0.0
    %182 = vmatprep.subr.mxu0 0.0
    %183 = vmatpush2.msra.mxu0 0.0
    %184 = vmatprep.subr.mxu0 0.0
    %185 = vmatpush2.msra.mxu0 0.0
    %186 = vmatprep.subr.mxu0 0.0
    %187 = vmatpush2.msra.mxu0 0.0
    %188 = vmatprep.subr.mxu0 0.0
    %189 = vmatpush2.msra.mxu0 0.0
    %190 = vmatprep.subr.mxu0 0.0
    %191 = vmatpush2.msra.mxu0 0.0
    %192 = vmatprep.subr.mxu0 0.0
    %193 = vmatpush2.msra.mxu0 0.0
    %194 = vmatprep.subr.mxu0 0.0
    %195 = vmatpush2.msra.mxu0 0.0
    %196 = vmatprep.subr.mxu0 0.0
    %197 = vmatpush2.msra.mxu0 0.0
    %198 = vmatprep.subr.mxu0 0.0
    %199 = vmatpush2.msra.mxu0 0.0
    %200 = vmatprep.mubr.f32.mxu0 0.0
    %201 = vmatmul.mubr.f32.gmra.mxu0 %v131
    %v202 = vpop.f32.mrf.mxu0
    %v203 = vadd.f32 %v128, %v202
    %v204 = vpop.f32.mrf.mxu0
    %205 = vmatprep.mubr.f32.mxu0 0.0
    %206 = vmatmul.mubr.f32.gmra.mxu0 %v134
    %v207 = vpop.f32.mrf.mxu0
    %v208 = vadd.f32 %v128, %v207
    %v209 = vpop.f32.mrf.mxu0
    %210 = vdwg.mxu0
    %212 = vrot.lane.b32.xlu0 %v203, 120
    %v213 = vpop.permute.xlu0 %212
    %214 = vrot.lane.b32.xlu0 %v203, 112
    %v215 = vpop.permute.xlu0 %214
    %216 = vrot.lane.b32.xlu0 %v203, 104
    %v217 = vpop.permute.xlu0 %216
    %v218 = vcombine.high %v203, %v203
    %v220 = vunpack.c.l.s4 1966171168
    %v221 = vunpack.c.0.s8 %v220
    %v222 = vlaneseq
    %v223 = vshrl.u32 %v222, 7
    %v224 = vsub.s32 %v221, %v223
    %v225 = vrot.slane %v203, %v224
    %v227 = vunpack.c.l.s4 1966171168
    %v228 = vunpack.c.0.s8 %v227
    %v229 = vlaneseq
    %v230 = vshrl.u32 %v229, 7
    %v231 = vsub.s32 %v228, %v230
    %v232 = vrot.slane %v218, %v231
    %v233 = vcombine.high %v225, %v225
    %v234 = vcombine.high %v232, %v232
    %v236 = vunpack.c.l.s4 1966171168
    %v237 = vunpack.c.0.s8 %v236
    %v238 = vlaneseq
    %v239 = vshrl.u32 %v238, 7
    %v240 = vsub.s32 %v237, %v239
    %v241 = vrot.slane %v225, %v240
    %v243 = vunpack.c.l.s4 1966171168
    %v244 = vunpack.c.0.s8 %v243
    %v245 = vlaneseq
    %v246 = vshrl.u32 %v245, 7
    %v247 = vsub.s32 %v244, %v246
    %v248 = vrot.slane %v232, %v247
    %v250 = vunpack.c.l.s4 1966171168
    %v251 = vunpack.c.0.s8 %v250
    %v252 = vlaneseq
    %v253 = vshrl.u32 %v252, 7
    %v254 = vsub.s32 %v251, %v253
    %v255 = vrot.slane %v233, %v254
    %v257 = vunpack.c.l.s4 1966171168
    %v258 = vunpack.c.0.s8 %v257
    %v259 = vlaneseq
    %v260 = vshrl.u32 %v259, 7
    %v261 = vsub.s32 %v258, %v260
    %v262 = vrot.slane %v234, %v261
    %v263 = vcombine.high %v241, %v241
    %v264 = vcombine.high %v248, %v248
    %v265 = vcombine.high %v255, %v255
    %v266 = vcombine.high %v262, %v262
    %v267 = vcombine.high %v213, %v213
    %v269 = vunpack.c.l.s4 1966171168
    %v270 = vunpack.c.0.s8 %v269
    %v271 = vlaneseq
    %v272 = vshrl.u32 %v271, 7
    %v273 = vsub.s32 %v270, %v272
    %v274 = vrot.slane %v213, %v273
    %v276 = vunpack.c.l.s4 1966171168
    %v277 = vunpack.c.0.s8 %v276
    %v278 = vlaneseq
    %v279 = vshrl.u32 %v278, 7
    %v280 = vsub.s32 %v277, %v279
    %v281 = vrot.slane %v267, %v280
    %v282 = vcombine.high %v274, %v274
    %v283 = vcombine.high %v281, %v281
    %v285 = vunpack.c.l.s4 1966171168
    %v286 = vunpack.c.0.s8 %v285
    %v287 = vlaneseq
    %v288 = vshrl.u32 %v287, 7
    %v289 = vsub.s32 %v286, %v288
    %v290 = vrot.slane %v274, %v289
    %v292 = vunpack.c.l.s4 1966171168
    %v293 = vunpack.c.0.s8 %v292
    %v294 = vlaneseq
    %v295 = vshrl.u32 %v294, 7
    %v296 = vsub.s32 %v293, %v295
    %v297 = vrot.slane %v281, %v296
    %v299 = vunpack.c.l.s4 1966171168
    %v300 = vunpack.c.0.s8 %v299
    %v301 = vlaneseq
    %v302 = vshrl.u32 %v301, 7
    %v303 = vsub.s32 %v300, %v302
    %v304 = vrot.slane %v282, %v303
    %v306 = vunpack.c.l.s4 1966171168
    %v307 = vunpack.c.0.s8 %v306
    %v308 = vlaneseq
    %v309 = vshrl.u32 %v308, 7
    %v310 = vsub.s32 %v307, %v309
    %v311 = vrot.slane %v283, %v310
    %v312 = vcombine.high %v290, %v290
    %v313 = vcombine.high %v297, %v297
    %v314 = vcombine.high %v304, %v304
    %v315 = vcombine.high %v311, %v311
    %v316 = vcombine.high %v215, %v215
    %v318 = vunpack.c.l.s4 1966171168
    %v319 = vunpack.c.0.s8 %v318
    %v320 = vlaneseq
    %v321 = vshrl.u32 %v320, 7
    %v322 = vsub.s32 %v319, %v321
    %v323 = vrot.slane %v215, %v322
    %v325 = vunpack.c.l.s4 1966171168
    %v326 = vunpack.c.0.s8 %v325
    %v327 = vlaneseq
    %v328 = vshrl.u32 %v327, 7
    %v329 = vsub.s32 %v326, %v328
    %v330 = vrot.slane %v316, %v329
    %v331 = vcombine.high %v323, %v323
    %v332 = vcombine.high %v330, %v330
    %v334 = vunpack.c.l.s4 1966171168
    %v335 = vunpack.c.0.s8 %v334
    %v336 = vlaneseq
    %v337 = vshrl.u32 %v336, 7
    %v338 = vsub.s32 %v335, %v337
    %v339 = vrot.slane %v323, %v338
    %v341 = vunpack.c.l.s4 1966171168
    %v342 = vunpack.c.0.s8 %v341
    %v343 = vlaneseq
    %v344 = vshrl.u32 %v343, 7
    %v345 = vsub.s32 %v342, %v344
    %v346 = vrot.slane %v330, %v345
    %v348 = vunpack.c.l.s4 1966171168
    %v349 = vunpack.c.0.s8 %v348
    %v350 = vlaneseq
    %v351 = vshrl.u32 %v350, 7
    %v352 = vsub.s32 %v349, %v351
    %v353 = vrot.slane %v331, %v352
    %v355 = vunpack.c.l.s4 1966171168
    %v356 = vunpack.c.0.s8 %v355
    %v357 = vlaneseq
    %v358 = vshrl.u32 %v357, 7
    %v359 = vsub.s32 %v356, %v358
    %v360 = vrot.slane %v332, %v359
    %v361 = vcombine.high %v339, %v339
    %v362 = vcombine.high %v346, %v346
    %v363 = vcombine.high %v353, %v353
    %v364 = vcombine.high %v360, %v360
    %v365 = vcombine.high %v217, %v217
    %v367 = vunpack.c.l.s4 1966171168
    %v368 = vunpack.c.0.s8 %v367
    %v369 = vlaneseq
    %v370 = vshrl.u32 %v369, 7
    %v371 = vsub.s32 %v368, %v370
    %v372 = vrot.slane %v217, %v371
    %v374 = vunpack.c.l.s4 1966171168
    %v375 = vunpack.c.0.s8 %v374
    %v376 = vlaneseq
    %v377 = vshrl.u32 %v376, 7
    %v378 = vsub.s32 %v375, %v377
    %v379 = vrot.slane %v365, %v378
    %v380 = vcombine.high %v372, %v372
    %v381 = vcombine.high %v379, %v379
    %v383 = vunpack.c.l.s4 1966171168
    %v384 = vunpack.c.0.s8 %v383
    %v385 = vlaneseq
    %v386 = vshrl.u32 %v385, 7
    %v387 = vsub.s32 %v384, %v386
    %v388 = vrot.slane %v372, %v387
    %v390 = vunpack.c.l.s4 1966171168
    %v391 = vunpack.c.0.s8 %v390
    %v392 = vlaneseq
    %v393 = vshrl.u32 %v392, 7
    %v394 = vsub.s32 %v391, %v393
    %v395 = vrot.slane %v379, %v394
    %v397 = vunpack.c.l.s4 1966171168
    %v398 = vunpack.c.0.s8 %v397
    %v399 = vlaneseq
    %v400 = vshrl.u32 %v399, 7
    %v401 = vsub.s32 %v398, %v400
    %v402 = vrot.slane %v380, %v401
    %v404 = vunpack.c.l.s4 1966171168
    %v405 = vunpack.c.0.s8 %v404
    %v406 = vlaneseq
    %v407 = vshrl.u32 %v406, 7
    %v408 = vsub.s32 %v405, %v407
    %v409 = vrot.slane %v381, %v408
    %v410 = vcombine.high %v388, %v388
    %v411 = vcombine.high %v395, %v395
    %v412 = vcombine.high %v402, %v402
    %v413 = vcombine.high %v409, %v409
    %v414 = vlaneseq
    %v415 = vshrl.u32 %v414, 7
    %v416 = vsub.s32 0, %v415
    %v417 = vrot.slane %v241, %v416
    %v418 = vlaneseq
    %v419 = vshrl.u32 %v418, 7
    %v420 = vsub.s32 0, %v419
    %v421 = vrot.slane %v255, %v420
    %v422 = vlaneseq
    %v423 = vshrl.u32 %v422, 7
    %v424 = vsub.s32 0, %v423
    %v425 = vrot.slane %v263, %v424
    %v426 = vlaneseq
    %v427 = vshrl.u32 %v426, 7
    %v428 = vsub.s32 0, %v427
    %v429 = vrot.slane %v265, %v428
    %v430 = vlaneseq
    %v431 = vshrl.u32 %v430, 7
    %v432 = vsub.s32 0, %v431
    %v433 = vrot.slane %v248, %v432
    %v434 = vlaneseq
    %v435 = vshrl.u32 %v434, 7
    %v436 = vsub.s32 0, %v435
    %v437 = vrot.slane %v262, %v436
    %v438 = vlaneseq
    %v439 = vshrl.u32 %v438, 7
    %v440 = vsub.s32 0, %v439
    %v441 = vrot.slane %v264, %v440
    %v442 = vlaneseq
    %v443 = vshrl.u32 %v442, 7
    %v444 = vsub.s32 0, %v443
    %v445 = vrot.slane %v266, %v444
    %v446 = vlaneseq
    %v447 = vshrl.u32 %v446, 7
    %v448 = vsub.s32 0, %v447
    %v449 = vrot.slane %v290, %v448
    %v450 = vlaneseq
    %v451 = vshrl.u32 %v450, 7
    %v452 = vsub.s32 0, %v451
    %v453 = vrot.slane %v304, %v452
    %v454 = vlaneseq
    %v455 = vshrl.u32 %v454, 7
    %v456 = vsub.s32 0, %v455
    %v457 = vrot.slane %v312, %v456
    %v458 = vlaneseq
    %v459 = vshrl.u32 %v458, 7
    %v460 = vsub.s32 0, %v459
    %v461 = vrot.slane %v314, %v460
    %v462 = vlaneseq
    %v463 = vshrl.u32 %v462, 7
    %v464 = vsub.s32 0, %v463
    %v465 = vrot.slane %v297, %v464
    %v466 = vlaneseq
    %v467 = vshrl.u32 %v466, 7
    %v468 = vsub.s32 0, %v467
    %v469 = vrot.slane %v311, %v468
    %v470 = vlaneseq
    %v471 = vshrl.u32 %v470, 7
    %v472 = vsub.s32 0, %v471
    %v473 = vrot.slane %v313, %v472
    %v474 = vlaneseq
    %v475 = vshrl.u32 %v474, 7
    %v476 = vsub.s32 0, %v475
    %v477 = vrot.slane %v315, %v476
    %v478 = vlaneseq
    %v479 = vshrl.u32 %v478, 7
    %v480 = vsub.s32 0, %v479
    %v481 = vrot.slane %v339, %v480
    %v482 = vlaneseq
    %v483 = vshrl.u32 %v482, 7
    %v484 = vsub.s32 0, %v483
    %v485 = vrot.slane %v353, %v484
    %v486 = vlaneseq
    %v487 = vshrl.u32 %v486, 7
    %v488 = vsub.s32 0, %v487
    %v489 = vrot.slane %v361, %v488
    %v490 = vlaneseq
    %v491 = vshrl.u32 %v490, 7
    %v492 = vsub.s32 0, %v491
    %v493 = vrot.slane %v363, %v492
    %v494 = vlaneseq
    %v495 = vshrl.u32 %v494, 7
    %v496 = vsub.s32 0, %v495
    %v497 = vrot.slane %v346, %v496
    %v498 = vlaneseq
    %v499 = vshrl.u32 %v498, 7
    %v500 = vsub.s32 0, %v499
    %v501 = vrot.slane %v360, %v500
    %v502 = vlaneseq
    %v503 = vshrl.u32 %v502, 7
    %v504 = vsub.s32 0, %v503
    %v505 = vrot.slane %v362, %v504
    %v506 = vlaneseq
    %v507 = vshrl.u32 %v506, 7
    %v508 = vsub.s32 0, %v507
    %v509 = vrot.slane %v364, %v508
    %v510 = vlaneseq
    %v511 = vshrl.u32 %v510, 7
    %v512 = vsub.s32 0, %v511
    %v513 = vrot.slane %v388, %v512
    %v514 = vlaneseq
    %v515 = vshrl.u32 %v514, 7
    %v516 = vsub.s32 0, %v515
    %v517 = vrot.slane %v402, %v516
    %v518 = vlaneseq
    %v519 = vshrl.u32 %v518, 7
    %v520 = vsub.s32 0, %v519
    %v521 = vrot.slane %v410, %v520
    %v522 = vlaneseq
    %v523 = vshrl.u32 %v522, 7
    %v524 = vsub.s32 0, %v523
    %v525 = vrot.slane %v412, %v524
    %v526 = vlaneseq
    %v527 = vshrl.u32 %v526, 7
    %v528 = vsub.s32 0, %v527
    %v529 = vrot.slane %v395, %v528
    %v530 = vlaneseq
    %v531 = vshrl.u32 %v530, 7
    %v532 = vsub.s32 0, %v531
    %v533 = vrot.slane %v409, %v532
    %v534 = vlaneseq
    %v535 = vshrl.u32 %v534, 7
    %v536 = vsub.s32 0, %v535
    %v537 = vrot.slane %v411, %v536
    %v538 = vlaneseq
    %v539 = vshrl.u32 %v538, 7
    %v540 = vsub.s32 0, %v539
    %v541 = vrot.slane %v413, %v540
    %v574 = vmul.f32 %v417, %v84
    %v575 = vmul.f32 %v421, %v85
    %v576 = vmul.f32 %v425, %v86
    %v577 = vmul.f32 %v429, %v87
    %v578 = vmul.f32 %v433, %v88
    %v579 = vmul.f32 %v437, %v89
    %v580 = vmul.f32 %v441, %v90
    %v581 = vmul.f32 %v445, %v91
    %v582 = vmul.f32 %v449, %v84
    %v583 = vmul.f32 %v453, %v85
    %v584 = vmul.f32 %v457, %v86
    %v585 = vmul.f32 %v461, %v87
    %v586 = vmul.f32 %v465, %v88
    %v587 = vmul.f32 %v469, %v89
    %v588 = vmul.f32 %v473, %v90
    %v589 = vmul.f32 %v477, %v91
    %v590 = vmul.f32 %v481, %v84
    %v591 = vmul.f32 %v485, %v85
    %v592 = vmul.f32 %v489, %v86
    %v593 = vmul.f32 %v493, %v87
    %v594 = vmul.f32 %v497, %v88
    %v595 = vmul.f32 %v501, %v89
    %v596 = vmul.f32 %v505, %v90
    %v597 = vmul.f32 %v509, %v91
    %v598 = vmul.f32 %v513, %v84
    %v599 = vmul.f32 %v517, %v85
    %v600 = vmul.f32 %v521, %v86
    %v601 = vmul.f32 %v525, %v87
    %v602 = vmul.f32 %v529, %v88
    %v603 = vmul.f32 %v533, %v89
    %v604 = vmul.f32 %v537, %v90
    %v605 = vmul.f32 %v541, %v91
    %vm606 = vcmask 64512
    %v607 = vsel %vm606, %v574, 0.0
    %608 = vadd.xlane.f32.xlu0 %v607
    %v609 = vpop.xlane.xlu0 %608
    %v610 = vsel %vm606, %v575, 0.0
    %611 = vadd.xlane.f32.xlu0 %v610
    %v612 = vpop.xlane.xlu0 %611
    %v613 = vsel %vm606, %v576, 0.0
    %614 = vadd.xlane.f32.xlu0 %v613
    %v615 = vpop.xlane.xlu0 %614
    %v616 = vsel %vm606, %v577, 0.0
    %617 = vadd.xlane.f32.xlu0 %v616
    %v618 = vpop.xlane.xlu0 %617
    %v619 = vsel %vm606, %v578, 0.0
    %620 = vadd.xlane.f32.xlu0 %v619
    %v621 = vpop.xlane.xlu0 %620
    %v622 = vsel %vm606, %v579, 0.0
    %623 = vadd.xlane.f32.xlu0 %v622
    %v624 = vpop.xlane.xlu0 %623
    %v625 = vsel %vm606, %v580, 0.0
    %626 = vadd.xlane.f32.xlu0 %v625
    %v627 = vpop.xlane.xlu0 %626
    %v628 = vsel %vm606, %v581, 0.0
    %629 = vadd.xlane.f32.xlu0 %v628
    %v630 = vpop.xlane.xlu0 %629
    %v631 = vsel %vm606, %v582, 0.0
    %632 = vadd.xlane.f32.xlu0 %v631
    %v633 = vpop.xlane.xlu0 %632
    %v634 = vsel %vm606, %v583, 0.0
    %635 = vadd.xlane.f32.xlu0 %v634
    %v636 = vpop.xlane.xlu0 %635
    %v637 = vsel %vm606, %v584, 0.0
    %638 = vadd.xlane.f32.xlu0 %v637
    %v639 = vpop.xlane.xlu0 %638
    %v640 = vsel %vm606, %v585, 0.0
    %641 = vadd.xlane.f32.xlu0 %v640
    %v642 = vpop.xlane.xlu0 %641
    %v643 = vsel %vm606, %v586, 0.0
    %644 = vadd.xlane.f32.xlu0 %v643
    %v645 = vpop.xlane.xlu0 %644
    %v646 = vsel %vm606, %v587, 0.0
    %647 = vadd.xlane.f32.xlu0 %v646
    %v648 = vpop.xlane.xlu0 %647
    %v649 = vsel %vm606, %v588, 0.0
    %650 = vadd.xlane.f32.xlu0 %v649
    %v651 = vpop.xlane.xlu0 %650
    %v652 = vsel %vm606, %v589, 0.0
    %653 = vadd.xlane.f32.xlu0 %v652
    %v654 = vpop.xlane.xlu0 %653
    %v655 = vsel %vm606, %v590, 0.0
    %656 = vadd.xlane.f32.xlu0 %v655
    %v657 = vpop.xlane.xlu0 %656
    %v658 = vsel %vm606, %v591, 0.0
    %659 = vadd.xlane.f32.xlu0 %v658
    %v660 = vpop.xlane.xlu0 %659
    %v661 = vsel %vm606, %v592, 0.0
    %662 = vadd.xlane.f32.xlu0 %v661
    %v663 = vpop.xlane.xlu0 %662
    %v664 = vsel %vm606, %v593, 0.0
    %665 = vadd.xlane.f32.xlu0 %v664
    %v666 = vpop.xlane.xlu0 %665
    %v667 = vsel %vm606, %v594, 0.0
    %668 = vadd.xlane.f32.xlu0 %v667
    %v669 = vpop.xlane.xlu0 %668
    %v670 = vsel %vm606, %v595, 0.0
    %671 = vadd.xlane.f32.xlu0 %v670
    %v672 = vpop.xlane.xlu0 %671
    %v673 = vsel %vm606, %v596, 0.0
    %674 = vadd.xlane.f32.xlu0 %v673
    %v675 = vpop.xlane.xlu0 %674
    %v676 = vsel %vm606, %v597, 0.0
    %677 = vadd.xlane.f32.xlu0 %v676
    %v678 = vpop.xlane.xlu0 %677
    %v679 = vsel %vm606, %v598, 0.0
    %680 = vadd.xlane.f32.xlu0 %v679
    %v681 = vpop.xlane.xlu0 %680
    %v682 = vsel %vm606, %v599, 0.0
    %683 = vadd.xlane.f32.xlu0 %v682
    %v684 = vpop.xlane.xlu0 %683
    %v685 = vsel %vm606, %v600, 0.0
    %686 = vadd.xlane.f32.xlu0 %v685
    %v687 = vpop.xlane.xlu0 %686
    %v688 = vsel %vm606, %v601, 0.0
    %689 = vadd.xlane.f32.xlu0 %v688
    %v690 = vpop.xlane.xlu0 %689
    %v691 = vsel %vm606, %v602, 0.0
    %692 = vadd.xlane.f32.xlu0 %v691
    %v693 = vpop.xlane.xlu0 %692
    %v694 = vsel %vm606, %v603, 0.0
    %695 = vadd.xlane.f32.xlu0 %v694
    %v696 = vpop.xlane.xlu0 %695
    %v697 = vsel %vm606, %v604, 0.0
    %698 = vadd.xlane.f32.xlu0 %v697
    %v699 = vpop.xlane.xlu0 %698
    %v700 = vsel %vm606, %v605, 0.0
    %701 = vadd.xlane.f32.xlu0 %v700
    %v702 = vpop.xlane.xlu0 %701
    %703 = vrot.lane.b32.xlu0 %v203, 96
    %v704 = vpop.permute.xlu0 %703
    %v713 = vlaneseq
    %v714 = vand.u32 %v713, 127
    %v715 = vlaneseq
    %v716 = vshrl.u32 %v715, 7
    %v717 = vsub.s32 %v714, %v716
    %v718 = vrot.slane %v609, %v717
    %v719 = vlaneseq
    %v720 = vshrl.u32 %v719, 7
    %v721 = vsub.s32 %v714, %v720
    %v722 = vrot.slane %v612, %v721
    %v723 = vlaneseq
    %v724 = vshrl.u32 %v723, 7
    %v725 = vsub.s32 %v714, %v724
    %v726 = vrot.slane %v615, %v725
    %v727 = vlaneseq
    %v728 = vshrl.u32 %v727, 7
    %v729 = vsub.s32 %v714, %v728
    %v730 = vrot.slane %v618, %v729
    %v731 = vlaneseq
    %v732 = vshrl.u32 %v731, 7
    %v733 = vsub.s32 %v714, %v732
    %v734 = vrot.slane %v621, %v733
    %v735 = vlaneseq
    %v736 = vshrl.u32 %v735, 7
    %v737 = vsub.s32 %v714, %v736
    %v738 = vrot.slane %v624, %v737
    %v739 = vlaneseq
    %v740 = vshrl.u32 %v739, 7
    %v741 = vsub.s32 %v714, %v740
    %v742 = vrot.slane %v627, %v741
    %v743 = vlaneseq
    %v744 = vshrl.u32 %v743, 7
    %v745 = vsub.s32 %v714, %v744
    %v746 = vrot.slane %v630, %v745
    %vm747 = vcmask 1041409
    %v748 = vsel %vm747, %v722, %v718
    %vm749 = vcmask 1042434
    %v750 = vsel %vm749, %v726, %v748
    %vm751 = vcmask 1043459
    %v752 = vsel %vm751, %v730, %v750
    %vm753 = vcmask 1044484
    %v754 = vsel %vm753, %v734, %v752
    %vm755 = vcmask 1045509
    %v756 = vsel %vm755, %v738, %v754
    %vm757 = vcmask 1046534
    %v758 = vsel %vm757, %v742, %v756
    %vm759 = vcmask 1047559
    %v760 = vsel %vm759, %v746, %v758
    %v762 = vsel %vm606, %v203, 0
    %v764 = vsel %vm606, %v704, 0
    %766 = vmatprep.subr.mxu0 0.0
    %767 = vmatpush1.xpose.msra.mxu0 0.0
    %768 = vmatprep.subr.mxu0 0.0
    %769 = vmatpush1.xpose.msra.mxu0 0.0
    %770 = vmatprep.subr.mxu0 0.0
    %771 = vmatpush1.xpose.msra.mxu0 0.0
    %772 = vmatprep.subr.mxu0 0.0
    %773 = vmatpush1.xpose.msra.mxu0 0.0
    %774 = vmatprep.subr.mxu0 0.0
    %775 = vmatpush1.xpose.msra.mxu0 0.0
    %776 = vmatprep.subr.mxu0 0.0
    %777 = vmatpush1.xpose.msra.mxu0 0.0
    %778 = vmatprep.subr.mxu0 0.0
    %779 = vmatpush1.xpose.msra.mxu0 0.0
    %780 = vmatprep.subr.mxu0 0.0
    %781 = vmatpush1.xpose.msra.mxu0 0.0
    %782 = vmatprep.subr.mxu0 0.0
    %783 = vmatpush1.xpose.msra.mxu0 0.0
    %784 = vmatprep.subr.mxu0 0.0
    %785 = vmatpush1.xpose.msra.mxu0 0.0
    %786 = vmatprep.subr.mxu0 0.0
    %787 = vmatpush1.xpose.msra.mxu0 0.0
    %788 = vmatprep.subr.mxu0 0.0
    %789 = vmatpush1.xpose.msra.mxu0 0.0
    %790 = vmatprep.subr.mxu0 0.0
    %791 = vmatpush1.xpose.msra.mxu0 0.0
    %792 = vmatprep.subr.mxu0 0.0
    %793 = vmatpush1.xpose.msra.mxu0 0.0
    %794 = vmatprep.subr.mxu0 0.0
    %795 = vmatpush1.xpose.msra.mxu0 0.0
    %796 = vmatprep.subr.mxu0 0.0
    %797 = vmatpush1.xpose.msra.mxu0 %v764
    %798 = vmatprep.subr.mxu0 0.0
    %799 = vmatpush2.xpose.msra.mxu0 0.0
    %800 = vmatprep.subr.mxu0 0.0
    %801 = vmatpush2.xpose.msra.mxu0 0.0
    %802 = vmatprep.subr.mxu0 0.0
    %803 = vmatpush2.xpose.msra.mxu0 0.0
    %804 = vmatprep.subr.mxu0 0.0
    %805 = vmatpush2.xpose.msra.mxu0 0.0
    %806 = vmatprep.subr.mxu0 0.0
    %807 = vmatpush2.xpose.msra.mxu0 0.0
    %808 = vmatprep.subr.mxu0 0.0
    %809 = vmatpush2.xpose.msra.mxu0 0.0
    %810 = vmatprep.subr.mxu0 0.0
    %811 = vmatpush2.xpose.msra.mxu0 0.0
    %812 = vmatprep.subr.mxu0 0.0
    %813 = vmatpush2.xpose.msra.mxu0 0.0
    %814 = vmatprep.subr.mxu0 0.0
    %815 = vmatpush2.xpose.msra.mxu0 0.0
    %816 = vmatprep.subr.mxu0 0.0
    %817 = vmatpush2.xpose.msra.mxu0 0.0
    %818 = vmatprep.subr.mxu0 0.0
    %819 = vmatpush2.xpose.msra.mxu0 0.0
    %820 = vmatprep.subr.mxu0 0.0
    %821 = vmatpush2.xpose.msra.mxu0 0.0
    %822 = vmatprep.subr.mxu0 0.0
    %823 = vmatpush2.xpose.msra.mxu0 0.0
    %824 = vmatprep.subr.mxu0 0.0
    %825 = vmatpush2.xpose.msra.mxu0 0.0
    %826 = vmatprep.subr.mxu0 0.0
    %827 = vmatpush2.xpose.msra.mxu0 0.0
    %828 = vmatprep.subr.mxu0 0.0
    %829 = vmatpush2.xpose.msra.mxu0 0.0
    %830 = vmatprep.mubr.f32.mxu0 0.0
    %831 = vmatmul.mubr.f32.gmra.mxu0 %v762
    %v832 = vpop.f32.mrf.mxu0
    %v833 = vadd.f32 %v760, %v832
    %v834 = vpop.f32.mrf.mxu0
    %835 = vdwg.mxu0
    %836 = vrot.lane.b32.xlu0 %v213, 96
    %v837 = vpop.permute.xlu0 %836
    %v846 = vlaneseq
    %v847 = vshrl.u32 %v846, 7
    %v848 = vsub.s32 %v714, %v847
    %v849 = vrot.slane %v633, %v848
    %v850 = vlaneseq
    %v851 = vshrl.u32 %v850, 7
    %v852 = vsub.s32 %v714, %v851
    %v853 = vrot.slane %v636, %v852
    %v854 = vlaneseq
    %v855 = vshrl.u32 %v854, 7
    %v856 = vsub.s32 %v714, %v855
    %v857 = vrot.slane %v639, %v856
    %v858 = vlaneseq
    %v859 = vshrl.u32 %v858, 7
    %v860 = vsub.s32 %v714, %v859
    %v861 = vrot.slane %v642, %v860
    %v862 = vlaneseq
    %v863 = vshrl.u32 %v862, 7
    %v864 = vsub.s32 %v714, %v863
    %v865 = vrot.slane %v645, %v864
    %v866 = vlaneseq
    %v867 = vshrl.u32 %v866, 7
    %v868 = vsub.s32 %v714, %v867
    %v869 = vrot.slane %v648, %v868
    %v870 = vlaneseq
    %v871 = vshrl.u32 %v870, 7
    %v872 = vsub.s32 %v714, %v871
    %v873 = vrot.slane %v651, %v872
    %v874 = vlaneseq
    %v875 = vshrl.u32 %v874, 7
    %v876 = vsub.s32 %v714, %v875
    %v877 = vrot.slane %v654, %v876
    %v878 = vsel %vm747, %v853, %v849
    %v879 = vsel %vm749, %v857, %v878
    %v880 = vsel %vm751, %v861, %v879
    %v881 = vsel %vm753, %v865, %v880
    %v882 = vsel %vm755, %v869, %v881
    %v883 = vsel %vm757, %v873, %v882
    %v884 = vsel %vm759, %v877, %v883
    %v886 = vsel %vm606, %v213, 0
    %v888 = vsel %vm606, %v837, 0
    %890 = vmatprep.subr.mxu0 0.0
    %891 = vmatpush1.xpose.msra.mxu0 0.0
    %892 = vmatprep.subr.mxu0 0.0
    %893 = vmatpush1.xpose.msra.mxu0 0.0
    %894 = vmatprep.subr.mxu0 0.0
    %895 = vmatpush1.xpose.msra.mxu0 0.0
    %896 = vmatprep.subr.mxu0 0.0
    %897 = vmatpush1.xpose.msra.mxu0 0.0
    %898 = vmatprep.subr.mxu0 0.0
    %899 = vmatpush1.xpose.msra.mxu0 0.0
    %900 = vmatprep.subr.mxu0 0.0
    %901 = vmatpush1.xpose.msra.mxu0 0.0
    %902 = vmatprep.subr.mxu0 0.0
    %903 = vmatpush1.xpose.msra.mxu0 0.0
    %904 = vmatprep.subr.mxu0 0.0
    %905 = vmatpush1.xpose.msra.mxu0 0.0
    %906 = vmatprep.subr.mxu0 0.0
    %907 = vmatpush1.xpose.msra.mxu0 0.0
    %908 = vmatprep.subr.mxu0 0.0
    %909 = vmatpush1.xpose.msra.mxu0 0.0
    %910 = vmatprep.subr.mxu0 0.0
    %911 = vmatpush1.xpose.msra.mxu0 0.0
    %912 = vmatprep.subr.mxu0 0.0
    %913 = vmatpush1.xpose.msra.mxu0 0.0
    %914 = vmatprep.subr.mxu0 0.0
    %915 = vmatpush1.xpose.msra.mxu0 0.0
    %916 = vmatprep.subr.mxu0 0.0
    %917 = vmatpush1.xpose.msra.mxu0 0.0
    %918 = vmatprep.subr.mxu0 0.0
    %919 = vmatpush1.xpose.msra.mxu0 0.0
    %920 = vmatprep.subr.mxu0 0.0
    %921 = vmatpush1.xpose.msra.mxu0 %v888
    %922 = vmatprep.subr.mxu0 0.0
    %923 = vmatpush2.xpose.msra.mxu0 0.0
    %924 = vmatprep.subr.mxu0 0.0
    %925 = vmatpush2.xpose.msra.mxu0 0.0
    %926 = vmatprep.subr.mxu0 0.0
    %927 = vmatpush2.xpose.msra.mxu0 0.0
    %928 = vmatprep.subr.mxu0 0.0
    %929 = vmatpush2.xpose.msra.mxu0 0.0
    %930 = vmatprep.subr.mxu0 0.0
    %931 = vmatpush2.xpose.msra.mxu0 0.0
    %932 = vmatprep.subr.mxu0 0.0
    %933 = vmatpush2.xpose.msra.mxu0 0.0
    %934 = vmatprep.subr.mxu0 0.0
    %935 = vmatpush2.xpose.msra.mxu0 0.0
    %936 = vmatprep.subr.mxu0 0.0
    %937 = vmatpush2.xpose.msra.mxu0 0.0
    %938 = vmatprep.subr.mxu0 0.0
    %939 = vmatpush2.xpose.msra.mxu0 0.0
    %940 = vmatprep.subr.mxu0 0.0
    %941 = vmatpush2.xpose.msra.mxu0 0.0
    %942 = vmatprep.subr.mxu0 0.0
    %943 = vmatpush2.xpose.msra.mxu0 0.0
    %944 = vmatprep.subr.mxu0 0.0
    %945 = vmatpush2.xpose.msra.mxu0 0.0
    %946 = vmatprep.subr.mxu0 0.0
    %947 = vmatpush2.xpose.msra.mxu0 0.0
    %948 = vmatprep.subr.mxu0 0.0
    %949 = vmatpush2.xpose.msra.mxu0 0.0
    %950 = vmatprep.subr.mxu0 0.0
    %951 = vmatpush2.xpose.msra.mxu0 0.0
    %952 = vmatprep.subr.mxu0 0.0
    %953 = vmatpush2.xpose.msra.mxu0 0.0
    %954 = vmatprep.mubr.f32.mxu0 0.0
    %955 = vmatmul.mubr.f32.gmra.mxu0 %v886
    %v956 = vpop.f32.mrf.mxu0
    %v957 = vadd.f32 %v884, %v956
    %v958 = vpop.f32.mrf.mxu0
    %959 = vdwg.mxu0
    %960 = vrot.lane.b32.xlu0 %v215, 96
    %v961 = vpop.permute.xlu0 %960
    %v970 = vlaneseq
    %v971 = vshrl.u32 %v970, 7
    %v972 = vsub.s32 %v714, %v971
    %v973 = vrot.slane %v657, %v972
    %v974 = vlaneseq
    %v975 = vshrl.u32 %v974, 7
    %v976 = vsub.s32 %v714, %v975
    %v977 = vrot.slane %v660, %v976
    %v978 = vlaneseq
    %v979 = vshrl.u32 %v978, 7
    %v980 = vsub.s32 %v714, %v979
    %v981 = vrot.slane %v663, %v980
    %v982 = vlaneseq
    %v983 = vshrl.u32 %v982, 7
    %v984 = vsub.s32 %v714, %v983
    %v985 = vrot.slane %v666, %v984
    %v986 = vlaneseq
    %v987 = vshrl.u32 %v986, 7
    %v988 = vsub.s32 %v714, %v987
    %v989 = vrot.slane %v669, %v988
    %v990 = vlaneseq
    %v991 = vshrl.u32 %v990, 7
    %v992 = vsub.s32 %v714, %v991
    %v993 = vrot.slane %v672, %v992
    %v994 = vlaneseq
    %v995 = vshrl.u32 %v994, 7
    %v996 = vsub.s32 %v714, %v995
    %v997 = vrot.slane %v675, %v996
    %v998 = vlaneseq
    %v999 = vshrl.u32 %v998, 7
    %v1000 = vsub.s32 %v714, %v999
    %v1001 = vrot.slane %v678, %v1000
    %v1002 = vsel %vm747, %v977, %v973
    %v1003 = vsel %vm749, %v981, %v1002
    %v1004 = vsel %vm751, %v985, %v1003
    %v1005 = vsel %vm753, %v989, %v1004
    %v1006 = vsel %vm755, %v993, %v1005
    %v1007 = vsel %vm757, %v997, %v1006
    %v1008 = vsel %vm759, %v1001, %v1007
    %v1010 = vsel %vm606, %v215, 0
    %v1012 = vsel %vm606, %v961, 0
    %1014 = vmatprep.subr.mxu0 0.0
    %1015 = vmatpush1.xpose.msra.mxu0 0.0
    %1016 = vmatprep.subr.mxu0 0.0
    %1017 = vmatpush1.xpose.msra.mxu0 0.0
    %1018 = vmatprep.subr.mxu0 0.0
    %1019 = vmatpush1.xpose.msra.mxu0 0.0
    %1020 = vmatprep.subr.mxu0 0.0
    %1021 = vmatpush1.xpose.msra.mxu0 0.0
    %1022 = vmatprep.subr.mxu0 0.0
    %1023 = vmatpush1.xpose.msra.mxu0 0.0
    %1024 = vmatprep.subr.mxu0 0.0
    %1025 = vmatpush1.xpose.msra.mxu0 0.0
    %1026 = vmatprep.subr.mxu0 0.0
    %1027 = vmatpush1.xpose.msra.mxu0 0.0
    %1028 = vmatprep.subr.mxu0 0.0
    %1029 = vmatpush1.xpose.msra.mxu0 0.0
    %1030 = vmatprep.subr.mxu0 0.0
    %1031 = vmatpush1.xpose.msra.mxu0 0.0
    %1032 = vmatprep.subr.mxu0 0.0
    %1033 = vmatpush1.xpose.msra.mxu0 0.0
    %1034 = vmatprep.subr.mxu0 0.0
    %1035 = vmatpush1.xpose.msra.mxu0 0.0
    %1036 = vmatprep.subr.mxu0 0.0
    %1037 = vmatpush1.xpose.msra.mxu0 0.0
    %1038 = vmatprep.subr.mxu0 0.0
    %1039 = vmatpush1.xpose.msra.mxu0 0.0
    %1040 = vmatprep.subr.mxu0 0.0
    %1041 = vmatpush1.xpose.msra.mxu0 0.0
    %1042 = vmatprep.subr.mxu0 0.0
    %1043 = vmatpush1.xpose.msra.mxu0 0.0
    %1044 = vmatprep.subr.mxu0 0.0
    %1045 = vmatpush1.xpose.msra.mxu0 %v1012
    %1046 = vmatprep.subr.mxu0 0.0
    %1047 = vmatpush2.xpose.msra.mxu0 0.0
    %1048 = vmatprep.subr.mxu0 0.0
    %1049 = vmatpush2.xpose.msra.mxu0 0.0
    %1050 = vmatprep.subr.mxu0 0.0
    %1051 = vmatpush2.xpose.msra.mxu0 0.0
    %1052 = vmatprep.subr.mxu0 0.0
    %1053 = vmatpush2.xpose.msra.mxu0 0.0
    %1054 = vmatprep.subr.mxu0 0.0
    %1055 = vmatpush2.xpose.msra.mxu0 0.0
    %1056 = vmatprep.subr.mxu0 0.0
    %1057 = vmatpush2.xpose.msra.mxu0 0.0
    %1058 = vmatprep.subr.mxu0 0.0
    %1059 = vmatpush2.xpose.msra.mxu0 0.0
    %1060 = vmatprep.subr.mxu0 0.0
    %1061 = vmatpush2.xpose.msra.mxu0 0.0
    %1062 = vmatprep.subr.mxu0 0.0
    %1063 = vmatpush2.xpose.msra.mxu0 0.0
    %1064 = vmatprep.subr.mxu0 0.0
    %1065 = vmatpush2.xpose.msra.mxu0 0.0
    %1066 = vmatprep.subr.mxu0 0.0
    %1067 = vmatpush2.xpose.msra.mxu0 0.0
    %1068 = vmatprep.subr.mxu0 0.0
    %1069 = vmatpush2.xpose.msra.mxu0 0.0
    %1070 = vmatprep.subr.mxu0 0.0
    %1071 = vmatpush2.xpose.msra.mxu0 0.0
    %1072 = vmatprep.subr.mxu0 0.0
    %1073 = vmatpush2.xpose.msra.mxu0 0.0
    %1074 = vmatprep.subr.mxu0 0.0
    %1075 = vmatpush2.xpose.msra.mxu0 0.0
    %1076 = vmatprep.subr.mxu0 0.0
    %1077 = vmatpush2.xpose.msra.mxu0 0.0
    %1078 = vmatprep.mubr.f32.mxu0 0.0
    %1079 = vmatmul.mubr.f32.gmra.mxu0 %v1010
    %v1080 = vpop.f32.mrf.mxu0
    %v1081 = vadd.f32 %v1008, %v1080
    %v1082 = vpop.f32.mrf.mxu0
    %1083 = vdwg.mxu0
    %1084 = vrot.lane.b32.xlu0 %v217, 96
    %v1085 = vpop.permute.xlu0 %1084
    %v1094 = vlaneseq
    %v1095 = vshrl.u32 %v1094, 7
    %v1096 = vsub.s32 %v714, %v1095
    %v1097 = vrot.slane %v681, %v1096
    %v1098 = vlaneseq
    %v1099 = vshrl.u32 %v1098, 7
    %v1100 = vsub.s32 %v714, %v1099
    %v1101 = vrot.slane %v684, %v1100
    %v1102 = vlaneseq
    %v1103 = vshrl.u32 %v1102, 7
    %v1104 = vsub.s32 %v714, %v1103
    %v1105 = vrot.slane %v687, %v1104
    %v1106 = vlaneseq
    %v1107 = vshrl.u32 %v1106, 7
    %v1108 = vsub.s32 %v714, %v1107
    %v1109 = vrot.slane %v690, %v1108
    %v1110 = vlaneseq
    %v1111 = vshrl.u32 %v1110, 7
    %v1112 = vsub.s32 %v714, %v1111
    %v1113 = vrot.slane %v693, %v1112
    %v1114 = vlaneseq
    %v1115 = vshrl.u32 %v1114, 7
    %v1116 = vsub.s32 %v714, %v1115
    %v1117 = vrot.slane %v696, %v1116
    %v1118 = vlaneseq
    %v1119 = vshrl.u32 %v1118, 7
    %v1120 = vsub.s32 %v714, %v1119
    %v1121 = vrot.slane %v699, %v1120
    %v1122 = vlaneseq
    %v1123 = vshrl.u32 %v1122, 7
    %v1124 = vsub.s32 %v714, %v1123
    %v1125 = vrot.slane %v702, %v1124
    %v1126 = vsel %vm747, %v1101, %v1097
    %v1127 = vsel %vm749, %v1105, %v1126
    %v1128 = vsel %vm751, %v1109, %v1127
    %v1129 = vsel %vm753, %v1113, %v1128
    %v1130 = vsel %vm755, %v1117, %v1129
    %v1131 = vsel %vm757, %v1121, %v1130
    %v1132 = vsel %vm759, %v1125, %v1131
    %v1134 = vsel %vm606, %v217, 0
    %v1136 = vsel %vm606, %v1085, 0
    %1138 = vmatprep.subr.mxu0 0.0
    %1139 = vmatpush1.xpose.msra.mxu0 0.0
    %1140 = vmatprep.subr.mxu0 0.0
    %1141 = vmatpush1.xpose.msra.mxu0 0.0
    %1142 = vmatprep.subr.mxu0 0.0
    %1143 = vmatpush1.xpose.msra.mxu0 0.0
    %1144 = vmatprep.subr.mxu0 0.0
    %1145 = vmatpush1.xpose.msra.mxu0 0.0
    %1146 = vmatprep.subr.mxu0 0.0
    %1147 = vmatpush1.xpose.msra.mxu0 0.0
    %1148 = vmatprep.subr.mxu0 0.0
    %1149 = vmatpush1.xpose.msra.mxu0 0.0
    %1150 = vmatprep.subr.mxu0 0.0
    %1151 = vmatpush1.xpose.msra.mxu0 0.0
    %1152 = vmatprep.subr.mxu0 0.0
    %1153 = vmatpush1.xpose.msra.mxu0 0.0
    %1154 = vmatprep.subr.mxu0 0.0
    %1155 = vmatpush1.xpose.msra.mxu0 0.0
    %1156 = vmatprep.subr.mxu0 0.0
    %1157 = vmatpush1.xpose.msra.mxu0 0.0
    %1158 = vmatprep.subr.mxu0 0.0
    %1159 = vmatpush1.xpose.msra.mxu0 0.0
    %1160 = vmatprep.subr.mxu0 0.0
    %1161 = vmatpush1.xpose.msra.mxu0 0.0
    %1162 = vmatprep.subr.mxu0 0.0
    %1163 = vmatpush1.xpose.msra.mxu0 0.0
    %1164 = vmatprep.subr.mxu0 0.0
    %1165 = vmatpush1.xpose.msra.mxu0 0.0
    %1166 = vmatprep.subr.mxu0 0.0
    %1167 = vmatpush1.xpose.msra.mxu0 0.0
    %1168 = vmatprep.subr.mxu0 0.0
    %1169 = vmatpush1.xpose.msra.mxu0 %v1136
    %1170 = vmatprep.subr.mxu0 0.0
    %1171 = vmatpush2.xpose.msra.mxu0 0.0
    %1172 = vmatprep.subr.mxu0 0.0
    %1173 = vmatpush2.xpose.msra.mxu0 0.0
    %1174 = vmatprep.subr.mxu0 0.0
    %1175 = vmatpush2.xpose.msra.mxu0 0.0
    %1176 = vmatprep.subr.mxu0 0.0
    %1177 = vmatpush2.xpose.msra.mxu0 0.0
    %1178 = vmatprep.subr.mxu0 0.0
    %1179 = vmatpush2.xpose.msra.mxu0 0.0
    %1180 = vmatprep.subr.mxu0 0.0
    %1181 = vmatpush2.xpose.msra.mxu0 0.0
    %1182 = vmatprep.subr.mxu0 0.0
    %1183 = vmatpush2.xpose.msra.mxu0 0.0
    %1184 = vmatprep.subr.mxu0 0.0
    %1185 = vmatpush2.xpose.msra.mxu0 0.0
    %1186 = vmatprep.subr.mxu0 0.0
    %1187 = vmatpush2.xpose.msra.mxu0 0.0
    %1188 = vmatprep.subr.mxu0 0.0
    %1189 = vmatpush2.xpose.msra.mxu0 0.0
    %1190 = vmatprep.subr.mxu0 0.0
    %1191 = vmatpush2.xpose.msra.mxu0 0.0
    %1192 = vmatprep.subr.mxu0 0.0
    %1193 = vmatpush2.xpose.msra.mxu0 0.0
    %1194 = vmatprep.subr.mxu0 0.0
    %1195 = vmatpush2.xpose.msra.mxu0 0.0
    %1196 = vmatprep.subr.mxu0 0.0
    %1197 = vmatpush2.xpose.msra.mxu0 0.0
    %1198 = vmatprep.subr.mxu0 0.0
    %1199 = vmatpush2.xpose.msra.mxu0 0.0
    %1200 = vmatprep.subr.mxu0 0.0
    %1201 = vmatpush2.xpose.msra.mxu0 0.0
    %1202 = vmatprep.mubr.f32.mxu0 0.0
    %1203 = vmatmul.mubr.f32.gmra.mxu0 %v1134
    %v1204 = vpop.f32.mrf.mxu0
    %v1205 = vadd.f32 %v1132, %v1204
    %v1206 = vpop.f32.mrf.mxu0
    %1207 = vdwg.mxu0
    %v1208 = vmul.f32 %v833, 0.35355338
    %v1209 = vmul.f32 %v957, 0.35355338
    %v1210 = vmul.f32 %v1081, 0.35355338
    %v1211 = vmul.f32 %v1205, 0.35355338
    %v1212 = vadd.f32 %v1208, %v100
    %v1213 = vadd.f32 %v1209, %v101
    %v1214 = vadd.f32 %v1210, %v102
    %v1215 = vadd.f32 %v1211, %v103
    %v1216 = vsel %vm606, %v1212, -inf
    %1217 = vmax.xlane.f32.xlu0 %v1216
    %v1218 = vpop.xlane.xlu0 %1217
    %v1219 = vsel %vm606, %v1213, -inf
    %1220 = vmax.xlane.f32.xlu0 %v1219
    %v1221 = vpop.xlane.xlu0 %1220
    %v1222 = vsel %vm606, %v1214, -inf
    %1223 = vmax.xlane.f32.xlu0 %v1222
    %v1224 = vpop.xlane.xlu0 %1223
    %v1225 = vsel %vm606, %v1215, -inf
    %1226 = vmax.xlane.f32.xlu0 %v1225
    %v1227 = vpop.xlane.xlu0 %1226
    %v1228 = vsub.f32 %v1212, %v1218
    %v1229 = vsub.f32 %v1213, %v1221
    %v1230 = vsub.f32 %v1214, %v1224
    %v1231 = vsub.f32 %v1215, %v1227
    %v1232 = vmul.f32 %v1228, 1.442695
    %v1233 = vpow.pop %v1232
    %v1234 = vmul.f32 %v1229, 1.442695
    %v1235 = vpow.pop %v1234
    %v1236 = vmul.f32 %v1230, 1.442695
    %v1237 = vpow.pop %v1236
    %v1238 = vmul.f32 %v1231, 1.442695
    %v1239 = vpow.pop %v1238
    %v1240 = vsel %vm606, %v1233, 0.0
    %1241 = vadd.xlane.f32.xlu0 %v1240
    %v1242 = vpop.xlane.xlu0 %1241
    %v1243 = vsel %vm606, %v1235, 0.0
    %1244 = vadd.xlane.f32.xlu0 %v1243
    %v1245 = vpop.xlane.xlu0 %1244
    %v1246 = vsel %vm606, %v1237, 0.0
    %1247 = vadd.xlane.f32.xlu0 %v1246
    %v1248 = vpop.xlane.xlu0 %1247
    %v1249 = vsel %vm606, %v1239, 0.0
    %1250 = vadd.xlane.f32.xlu0 %v1249
    %v1251 = vpop.xlane.xlu0 %1250
    %v1252 = vrcp.pop %v1242
    %v1253 = vrcp.pop %v1245
    %v1254 = vrcp.pop %v1248
    %v1255 = vrcp.pop %v1251
    %v1256 = vmul.f32 %v1233, %v1252
    %v1257 = vmul.f32 %v1235, %v1253
    %v1258 = vmul.f32 %v1237, %v1254
    %v1259 = vmul.f32 %v1239, %v1255
    %v1260 = vlaneseq
    %v1261 = vshrl.u32 %v1260, 7
    %v1262 = vsub.s32 0, %v1261
    %v1263 = vrot.slane %v1256, %v1262
    %1265 = vbcast.lane.b32.xlu0 %v1263, 256
    %v1266 = vpop.permute.xlu0 %1265
    %v1267 = vlaneseq
    %v1268 = vshrl.u32 %v1267, 7
    %v1269 = vsub.s32 1, %v1268
    %v1270 = vrot.slane %v1256, %v1269
    %1272 = vbcast.lane.b32.xlu0 %v1270, 256
    %v1273 = vpop.permute.xlu0 %1272
    %v1274 = vlaneseq
    %v1275 = vshrl.u32 %v1274, 7
    %v1276 = vsub.s32 2, %v1275
    %v1277 = vrot.slane %v1256, %v1276
    %1279 = vbcast.lane.b32.xlu0 %v1277, 256
    %v1280 = vpop.permute.xlu0 %1279
    %v1281 = vlaneseq
    %v1282 = vshrl.u32 %v1281, 7
    %v1283 = vsub.s32 3, %v1282
    %v1284 = vrot.slane %v1256, %v1283
    %1286 = vbcast.lane.b32.xlu0 %v1284, 256
    %v1287 = vpop.permute.xlu0 %1286
    %v1288 = vlaneseq
    %v1289 = vshrl.u32 %v1288, 7
    %v1290 = vsub.s32 4, %v1289
    %v1291 = vrot.slane %v1256, %v1290
    %1293 = vbcast.lane.b32.xlu0 %v1291, 256
    %v1294 = vpop.permute.xlu0 %1293
    %v1295 = vlaneseq
    %v1296 = vshrl.u32 %v1295, 7
    %v1297 = vsub.s32 5, %v1296
    %v1298 = vrot.slane %v1256, %v1297
    %1300 = vbcast.lane.b32.xlu0 %v1298, 256
    %v1301 = vpop.permute.xlu0 %1300
    %v1302 = vlaneseq
    %v1303 = vshrl.u32 %v1302, 7
    %v1304 = vsub.s32 6, %v1303
    %v1305 = vrot.slane %v1256, %v1304
    %1307 = vbcast.lane.b32.xlu0 %v1305, 256
    %v1308 = vpop.permute.xlu0 %1307
    %v1309 = vlaneseq
    %v1310 = vshrl.u32 %v1309, 7
    %v1311 = vsub.s32 7, %v1310
    %v1312 = vrot.slane %v1256, %v1311
    %1314 = vbcast.lane.b32.xlu0 %v1312, 256
    %v1315 = vpop.permute.xlu0 %1314
    %v1316 = vlaneseq
    %v1317 = vshrl.u32 %v1316, 7
    %v1318 = vsub.s32 0, %v1317
    %v1319 = vrot.slane %v1257, %v1318
    %1321 = vbcast.lane.b32.xlu0 %v1319, 256
    %v1322 = vpop.permute.xlu0 %1321
    %v1323 = vlaneseq
    %v1324 = vshrl.u32 %v1323, 7
    %v1325 = vsub.s32 1, %v1324
    %v1326 = vrot.slane %v1257, %v1325
    %1328 = vbcast.lane.b32.xlu0 %v1326, 256
    %v1329 = vpop.permute.xlu0 %1328
    %v1330 = vlaneseq
    %v1331 = vshrl.u32 %v1330, 7
    %v1332 = vsub.s32 2, %v1331
    %v1333 = vrot.slane %v1257, %v1332
    %1335 = vbcast.lane.b32.xlu0 %v1333, 256
    %v1336 = vpop.permute.xlu0 %1335
    %v1337 = vlaneseq
    %v1338 = vshrl.u32 %v1337, 7
    %v1339 = vsub.s32 3, %v1338
    %v1340 = vrot.slane %v1257, %v1339
    %1342 = vbcast.lane.b32.xlu0 %v1340, 256
    %v1343 = vpop.permute.xlu0 %1342
    %v1344 = vlaneseq
    %v1345 = vshrl.u32 %v1344, 7
    %v1346 = vsub.s32 4, %v1345
    %v1347 = vrot.slane %v1257, %v1346
    %1349 = vbcast.lane.b32.xlu0 %v1347, 256
    %v1350 = vpop.permute.xlu0 %1349
    %v1351 = vlaneseq
    %v1352 = vshrl.u32 %v1351, 7
    %v1353 = vsub.s32 5, %v1352
    %v1354 = vrot.slane %v1257, %v1353
    %1356 = vbcast.lane.b32.xlu0 %v1354, 256
    %v1357 = vpop.permute.xlu0 %1356
    %v1358 = vlaneseq
    %v1359 = vshrl.u32 %v1358, 7
    %v1360 = vsub.s32 6, %v1359
    %v1361 = vrot.slane %v1257, %v1360
    %1363 = vbcast.lane.b32.xlu0 %v1361, 256
    %v1364 = vpop.permute.xlu0 %1363
    %v1365 = vlaneseq
    %v1366 = vshrl.u32 %v1365, 7
    %v1367 = vsub.s32 7, %v1366
    %v1368 = vrot.slane %v1257, %v1367
    %1370 = vbcast.lane.b32.xlu0 %v1368, 256
    %v1371 = vpop.permute.xlu0 %1370
    %v1372 = vlaneseq
    %v1373 = vshrl.u32 %v1372, 7
    %v1374 = vsub.s32 0, %v1373
    %v1375 = vrot.slane %v1258, %v1374
    %1377 = vbcast.lane.b32.xlu0 %v1375, 256
    %v1378 = vpop.permute.xlu0 %1377
    %v1379 = vlaneseq
    %v1380 = vshrl.u32 %v1379, 7
    %v1381 = vsub.s32 1, %v1380
    %v1382 = vrot.slane %v1258, %v1381
    %1384 = vbcast.lane.b32.xlu0 %v1382, 256
    %v1385 = vpop.permute.xlu0 %1384
    %v1386 = vlaneseq
    %v1387 = vshrl.u32 %v1386, 7
    %v1388 = vsub.s32 2, %v1387
    %v1389 = vrot.slane %v1258, %v1388
    %1391 = vbcast.lane.b32.xlu0 %v1389, 256
    %v1392 = vpop.permute.xlu0 %1391
    %v1393 = vlaneseq
    %v1394 = vshrl.u32 %v1393, 7
    %v1395 = vsub.s32 3, %v1394
    %v1396 = vrot.slane %v1258, %v1395
    %1398 = vbcast.lane.b32.xlu0 %v1396, 256
    %v1399 = vpop.permute.xlu0 %1398
    %v1400 = vlaneseq
    %v1401 = vshrl.u32 %v1400, 7
    %v1402 = vsub.s32 4, %v1401
    %v1403 = vrot.slane %v1258, %v1402
    %1405 = vbcast.lane.b32.xlu0 %v1403, 256
    %v1406 = vpop.permute.xlu0 %1405
    %v1407 = vlaneseq
    %v1408 = vshrl.u32 %v1407, 7
    %v1409 = vsub.s32 5, %v1408
    %v1410 = vrot.slane %v1258, %v1409
    %1412 = vbcast.lane.b32.xlu0 %v1410, 256
    %v1413 = vpop.permute.xlu0 %1412
    %v1414 = vlaneseq
    %v1415 = vshrl.u32 %v1414, 7
    %v1416 = vsub.s32 6, %v1415
    %v1417 = vrot.slane %v1258, %v1416
    %1419 = vbcast.lane.b32.xlu0 %v1417, 256
    %v1420 = vpop.permute.xlu0 %1419
    %v1421 = vlaneseq
    %v1422 = vshrl.u32 %v1421, 7
    %v1423 = vsub.s32 7, %v1422
    %v1424 = vrot.slane %v1258, %v1423
    %1426 = vbcast.lane.b32.xlu0 %v1424, 256
    %v1427 = vpop.permute.xlu0 %1426
    %v1428 = vlaneseq
    %v1429 = vshrl.u32 %v1428, 7
    %v1430 = vsub.s32 0, %v1429
    %v1431 = vrot.slane %v1259, %v1430
    %1433 = vbcast.lane.b32.xlu0 %v1431, 256
    %v1434 = vpop.permute.xlu0 %1433
    %v1435 = vlaneseq
    %v1436 = vshrl.u32 %v1435, 7
    %v1437 = vsub.s32 1, %v1436
    %v1438 = vrot.slane %v1259, %v1437
    %1440 = vbcast.lane.b32.xlu0 %v1438, 256
    %v1441 = vpop.permute.xlu0 %1440
    %v1442 = vlaneseq
    %v1443 = vshrl.u32 %v1442, 7
    %v1444 = vsub.s32 2, %v1443
    %v1445 = vrot.slane %v1259, %v1444
    %1447 = vbcast.lane.b32.xlu0 %v1445, 256
    %v1448 = vpop.permute.xlu0 %1447
    %v1449 = vlaneseq
    %v1450 = vshrl.u32 %v1449, 7
    %v1451 = vsub.s32 3, %v1450
    %v1452 = vrot.slane %v1259, %v1451
    %1454 = vbcast.lane.b32.xlu0 %v1452, 256
    %v1455 = vpop.permute.xlu0 %1454
    %v1456 = vlaneseq
    %v1457 = vshrl.u32 %v1456, 7
    %v1458 = vsub.s32 4, %v1457
    %v1459 = vrot.slane %v1259, %v1458
    %1461 = vbcast.lane.b32.xlu0 %v1459, 256
    %v1462 = vpop.permute.xlu0 %1461
    %v1463 = vlaneseq
    %v1464 = vshrl.u32 %v1463, 7
    %v1465 = vsub.s32 5, %v1464
    %v1466 = vrot.slane %v1259, %v1465
    %1468 = vbcast.lane.b32.xlu0 %v1466, 256
    %v1469 = vpop.permute.xlu0 %1468
    %v1470 = vlaneseq
    %v1471 = vshrl.u32 %v1470, 7
    %v1472 = vsub.s32 6, %v1471
    %v1473 = vrot.slane %v1259, %v1472
    %1475 = vbcast.lane.b32.xlu0 %v1473, 256
    %v1476 = vpop.permute.xlu0 %1475
    %v1477 = vlaneseq
    %v1478 = vshrl.u32 %v1477, 7
    %v1479 = vsub.s32 7, %v1478
    %v1480 = vrot.slane %v1259, %v1479
    %1482 = vbcast.lane.b32.xlu0 %v1480, 256
    %v1483 = vpop.permute.xlu0 %1482
    %v1484 = vmul.f32 %v1266, %v92
    %v1485 = vmul.f32 %v1273, %v93
    %v1486 = vmul.f32 %v1280, %v94
    %v1487 = vmul.f32 %v1287, %v95
    %v1488 = vmul.f32 %v1294, %v96
    %v1489 = vmul.f32 %v1301, %v97
    %v1490 = vmul.f32 %v1308, %v98
    %v1491 = vmul.f32 %v1315, %v99
    %v1492 = vmul.f32 %v1322, %v92
    %v1493 = vmul.f32 %v1329, %v93
    %v1494 = vmul.f32 %v1336, %v94
    %v1495 = vmul.f32 %v1343, %v95
    %v1496 = vmul.f32 %v1350, %v96
    %v1497 = vmul.f32 %v1357, %v97
    %v1498 = vmul.f32 %v1364, %v98
    %v1499 = vmul.f32 %v1371, %v99
    %v1500 = vmul.f32 %v1378, %v92
    %v1501 = vmul.f32 %v1385, %v93
    %v1502 = vmul.f32 %v1392, %v94
    %v1503 = vmul.f32 %v1399, %v95
    %v1504 = vmul.f32 %v1406, %v96
    %v1505 = vmul.f32 %v1413, %v97
    %v1506 = vmul.f32 %v1420, %v98
    %v1507 = vmul.f32 %v1427, %v99
    %v1508 = vmul.f32 %v1434, %v92
    %v1509 = vmul.f32 %v1441, %v93
    %v1510 = vmul.f32 %v1448, %v94
    %v1511 = vmul.f32 %v1455, %v95
    %v1512 = vmul.f32 %v1462, %v96
    %v1513 = vmul.f32 %v1469, %v97
    %v1514 = vmul.f32 %v1476, %v98
    %v1515 = vmul.f32 %v1483, %v99
    %v1516 = vsel %vm606, %v1484, 0.0
    %v1517 = vrot.slane %v1516, 4
    %v1518 = vadd.f32 %v1516, %v1517
    %v1519 = vrot.slane %v1518, 2
    %v1520 = vadd.f32 %v1518, %v1519
    %v1521 = vrot.slane %v1520, 1
    %v1522 = vadd.f32 %v1520, %v1521
    %v1523 = vsel %vm606, %v1485, 0.0
    %v1524 = vrot.slane %v1523, 4
    %v1525 = vadd.f32 %v1523, %v1524
    %v1526 = vrot.slane %v1525, 2
    %v1527 = vadd.f32 %v1525, %v1526
    %v1528 = vrot.slane %v1527, 1
    %v1529 = vadd.f32 %v1527, %v1528
    %v1530 = vsel %vm606, %v1486, 0.0
    %v1531 = vrot.slane %v1530, 4
    %v1532 = vadd.f32 %v1530, %v1531
    %v1533 = vrot.slane %v1532, 2
    %v1534 = vadd.f32 %v1532, %v1533
    %v1535 = vrot.slane %v1534, 1
    %v1536 = vadd.f32 %v1534, %v1535
    %v1537 = vsel %vm606, %v1487, 0.0
    %v1538 = vrot.slane %v1537, 4
    %v1539 = vadd.f32 %v1537, %v1538
    %v1540 = vrot.slane %v1539, 2
    %v1541 = vadd.f32 %v1539, %v1540
    %v1542 = vrot.slane %v1541, 1
    %v1543 = vadd.f32 %v1541, %v1542
    %v1544 = vsel %vm606, %v1488, 0.0
    %v1545 = vrot.slane %v1544, 4
    %v1546 = vadd.f32 %v1544, %v1545
    %v1547 = vrot.slane %v1546, 2
    %v1548 = vadd.f32 %v1546, %v1547
    %v1549 = vrot.slane %v1548, 1
    %v1550 = vadd.f32 %v1548, %v1549
    %v1551 = vsel %vm606, %v1489, 0.0
    %v1552 = vrot.slane %v1551, 4
    %v1553 = vadd.f32 %v1551, %v1552
    %v1554 = vrot.slane %v1553, 2
    %v1555 = vadd.f32 %v1553, %v1554
    %v1556 = vrot.slane %v1555, 1
    %v1557 = vadd.f32 %v1555, %v1556
    %v1558 = vsel %vm606, %v1490, 0.0
    %v1559 = vrot.slane %v1558, 4
    %v1560 = vadd.f32 %v1558, %v1559
    %v1561 = vrot.slane %v1560, 2
    %v1562 = vadd.f32 %v1560, %v1561
    %v1563 = vrot.slane %v1562, 1
    %v1564 = vadd.f32 %v1562, %v1563
    %v1565 = vsel %vm606, %v1491, 0.0
    %v1566 = vrot.slane %v1565, 4
    %v1567 = vadd.f32 %v1565, %v1566
    %v1568 = vrot.slane %v1567, 2
    %v1569 = vadd.f32 %v1567, %v1568
    %v1570 = vrot.slane %v1569, 1
    %v1571 = vadd.f32 %v1569, %v1570
    %v1572 = vsel %vm606, %v1492, 0.0
    %v1573 = vrot.slane %v1572, 4
    %v1574 = vadd.f32 %v1572, %v1573
    %v1575 = vrot.slane %v1574, 2
    %v1576 = vadd.f32 %v1574, %v1575
    %v1577 = vrot.slane %v1576, 1
    %v1578 = vadd.f32 %v1576, %v1577
    %v1579 = vsel %vm606, %v1493, 0.0
    %v1580 = vrot.slane %v1579, 4
    %v1581 = vadd.f32 %v1579, %v1580
    %v1582 = vrot.slane %v1581, 2
    %v1583 = vadd.f32 %v1581, %v1582
    %v1584 = vrot.slane %v1583, 1
    %v1585 = vadd.f32 %v1583, %v1584
    %v1586 = vsel %vm606, %v1494, 0.0
    %v1587 = vrot.slane %v1586, 4
    %v1588 = vadd.f32 %v1586, %v1587
    %v1589 = vrot.slane %v1588, 2
    %v1590 = vadd.f32 %v1588, %v1589
    %v1591 = vrot.slane %v1590, 1
    %v1592 = vadd.f32 %v1590, %v1591
    %v1593 = vsel %vm606, %v1495, 0.0
    %v1594 = vrot.slane %v1593, 4
    %v1595 = vadd.f32 %v1593, %v1594
    %v1596 = vrot.slane %v1595, 2
    %v1597 = vadd.f32 %v1595, %v1596
    %v1598 = vrot.slane %v1597, 1
    %v1599 = vadd.f32 %v1597, %v1598
    %v1600 = vsel %vm606, %v1496, 0.0
    %v1601 = vrot.slane %v1600, 4
    %v1602 = vadd.f32 %v1600, %v1601
    %v1603 = vrot.slane %v1602, 2
    %v1604 = vadd.f32 %v1602, %v1603
    %v1605 = vrot.slane %v1604, 1
    %v1606 = vadd.f32 %v1604, %v1605
    %v1607 = vsel %vm606, %v1497, 0.0
    %v1608 = vrot.slane %v1607, 4
    %v1609 = vadd.f32 %v1607, %v1608
    %v1610 = vrot.slane %v1609, 2
    %v1611 = vadd.f32 %v1609, %v1610
    %v1612 = vrot.slane %v1611, 1
    %v1613 = vadd.f32 %v1611, %v1612
    %v1614 = vsel %vm606, %v1498, 0.0
    %v1615 = vrot.slane %v1614, 4
    %v1616 = vadd.f32 %v1614, %v1615
    %v1617 = vrot.slane %v1616, 2
    %v1618 = vadd.f32 %v1616, %v1617
    %v1619 = vrot.slane %v1618, 1
    %v1620 = vadd.f32 %v1618, %v1619
    %v1621 = vsel %vm606, %v1499, 0.0
    %v1622 = vrot.slane %v1621, 4
    %v1623 = vadd.f32 %v1621, %v1622
    %v1624 = vrot.slane %v1623, 2
    %v1625 = vadd.f32 %v1623, %v1624
    %v1626 = vrot.slane %v1625, 1
    %v1627 = vadd.f32 %v1625, %v1626
    %v1628 = vsel %vm606, %v1500, 0.0
    %v1629 = vrot.slane %v1628, 4
    %v1630 = vadd.f32 %v1628, %v1629
    %v1631 = vrot.slane %v1630, 2
    %v1632 = vadd.f32 %v1630, %v1631
    %v1633 = vrot.slane %v1632, 1
    %v1634 = vadd.f32 %v1632, %v1633
    %v1635 = vsel %vm606, %v1501, 0.0
    %v1636 = vrot.slane %v1635, 4
    %v1637 = vadd.f32 %v1635, %v1636
    %v1638 = vrot.slane %v1637, 2
    %v1639 = vadd.f32 %v1637, %v1638
    %v1640 = vrot.slane %v1639, 1
    %v1641 = vadd.f32 %v1639, %v1640
    %v1642 = vsel %vm606, %v1502, 0.0
    %v1643 = vrot.slane %v1642, 4
    %v1644 = vadd.f32 %v1642, %v1643
    %v1645 = vrot.slane %v1644, 2
    %v1646 = vadd.f32 %v1644, %v1645
    %v1647 = vrot.slane %v1646, 1
    %v1648 = vadd.f32 %v1646, %v1647
    %v1649 = vsel %vm606, %v1503, 0.0
    %v1650 = vrot.slane %v1649, 4
    %v1651 = vadd.f32 %v1649, %v1650
    %v1652 = vrot.slane %v1651, 2
    %v1653 = vadd.f32 %v1651, %v1652
    %v1654 = vrot.slane %v1653, 1
    %v1655 = vadd.f32 %v1653, %v1654
    %v1656 = vsel %vm606, %v1504, 0.0
    %v1657 = vrot.slane %v1656, 4
    %v1658 = vadd.f32 %v1656, %v1657
    %v1659 = vrot.slane %v1658, 2
    %v1660 = vadd.f32 %v1658, %v1659
    %v1661 = vrot.slane %v1660, 1
    %v1662 = vadd.f32 %v1660, %v1661
    %v1663 = vsel %vm606, %v1505, 0.0
    %v1664 = vrot.slane %v1663, 4
    %v1665 = vadd.f32 %v1663, %v1664
    %v1666 = vrot.slane %v1665, 2
    %v1667 = vadd.f32 %v1665, %v1666
    %v1668 = vrot.slane %v1667, 1
    %v1669 = vadd.f32 %v1667, %v1668
    %v1670 = vsel %vm606, %v1506, 0.0
    %v1671 = vrot.slane %v1670, 4
    %v1672 = vadd.f32 %v1670, %v1671
    %v1673 = vrot.slane %v1672, 2
    %v1674 = vadd.f32 %v1672, %v1673
    %v1675 = vrot.slane %v1674, 1
    %v1676 = vadd.f32 %v1674, %v1675
    %v1677 = vsel %vm606, %v1507, 0.0
    %v1678 = vrot.slane %v1677, 4
    %v1679 = vadd.f32 %v1677, %v1678
    %v1680 = vrot.slane %v1679, 2
    %v1681 = vadd.f32 %v1679, %v1680
    %v1682 = vrot.slane %v1681, 1
    %v1683 = vadd.f32 %v1681, %v1682
    %v1684 = vsel %vm606, %v1508, 0.0
    %v1685 = vrot.slane %v1684, 4
    %v1686 = vadd.f32 %v1684, %v1685
    %v1687 = vrot.slane %v1686, 2
    %v1688 = vadd.f32 %v1686, %v1687
    %v1689 = vrot.slane %v1688, 1
    %v1690 = vadd.f32 %v1688, %v1689
    %v1691 = vsel %vm606, %v1509, 0.0
    %v1692 = vrot.slane %v1691, 4
    %v1693 = vadd.f32 %v1691, %v1692
    %v1694 = vrot.slane %v1693, 2
    %v1695 = vadd.f32 %v1693, %v1694
    %v1696 = vrot.slane %v1695, 1
    %v1697 = vadd.f32 %v1695, %v1696
    %v1698 = vsel %vm606, %v1510, 0.0
    %v1699 = vrot.slane %v1698, 4
    %v1700 = vadd.f32 %v1698, %v1699
    %v1701 = vrot.slane %v1700, 2
    %v1702 = vadd.f32 %v1700, %v1701
    %v1703 = vrot.slane %v1702, 1
    %v1704 = vadd.f32 %v1702, %v1703
    %v1705 = vsel %vm606, %v1511, 0.0
    %v1706 = vrot.slane %v1705, 4
    %v1707 = vadd.f32 %v1705, %v1706
    %v1708 = vrot.slane %v1707, 2
    %v1709 = vadd.f32 %v1707, %v1708
    %v1710 = vrot.slane %v1709, 1
    %v1711 = vadd.f32 %v1709, %v1710
    %v1712 = vsel %vm606, %v1512, 0.0
    %v1713 = vrot.slane %v1712, 4
    %v1714 = vadd.f32 %v1712, %v1713
    %v1715 = vrot.slane %v1714, 2
    %v1716 = vadd.f32 %v1714, %v1715
    %v1717 = vrot.slane %v1716, 1
    %v1718 = vadd.f32 %v1716, %v1717
    %v1719 = vsel %vm606, %v1513, 0.0
    %v1720 = vrot.slane %v1719, 4
    %v1721 = vadd.f32 %v1719, %v1720
    %v1722 = vrot.slane %v1721, 2
    %v1723 = vadd.f32 %v1721, %v1722
    %v1724 = vrot.slane %v1723, 1
    %v1725 = vadd.f32 %v1723, %v1724
    %v1726 = vsel %vm606, %v1514, 0.0
    %v1727 = vrot.slane %v1726, 4
    %v1728 = vadd.f32 %v1726, %v1727
    %v1729 = vrot.slane %v1728, 2
    %v1730 = vadd.f32 %v1728, %v1729
    %v1731 = vrot.slane %v1730, 1
    %v1732 = vadd.f32 %v1730, %v1731
    %v1733 = vsel %vm606, %v1515, 0.0
    %v1734 = vrot.slane %v1733, 4
    %v1735 = vadd.f32 %v1733, %v1734
    %v1736 = vrot.slane %v1735, 2
    %v1737 = vadd.f32 %v1735, %v1736
    %v1738 = vrot.slane %v1737, 1
    %v1739 = vadd.f32 %v1737, %v1738
    %1740 = vrot.lane.b32.xlu0 %v203, 64
    %v1741 = vpop.permute.xlu0 %1740
    %v1751 = vsel %vm747, %v1529, %v1522
    %v1752 = vsel %vm749, %v1536, %v1751
    %v1753 = vsel %vm751, %v1543, %v1752
    %v1754 = vsel %vm753, %v1550, %v1753
    %v1755 = vsel %vm755, %v1557, %v1754
    %v1756 = vsel %vm757, %v1564, %v1755
    %v1757 = vsel %vm759, %v1571, %v1756
    %v1760 = vsel %vm606, %v1256, 0
    %1762 = vmatprep.subr.mxu0 0.0
    %1763 = vmatpush1.msra.mxu0 0.0
    %1764 = vmatprep.subr.mxu0 0.0
    %1765 = vmatpush1.msra.mxu0 0.0
    %1766 = vmatprep.subr.mxu0 0.0
    %1767 = vmatpush1.msra.mxu0 0.0
    %1768 = vmatprep.subr.mxu0 0.0
    %1769 = vmatpush1.msra.mxu0 0.0
    %1770 = vmatprep.subr.mxu0 0.0
    %1771 = vmatpush1.msra.mxu0 0.0
    %1772 = vmatprep.subr.mxu0 0.0
    %1773 = vmatpush1.msra.mxu0 0.0
    %1774 = vmatprep.subr.mxu0 0.0
    %1775 = vmatpush1.msra.mxu0 0.0
    %1776 = vmatprep.subr.mxu0 0.0
    %1777 = vmatpush1.msra.mxu0 0.0
    %1778 = vmatprep.subr.mxu0 0.0
    %1779 = vmatpush1.msra.mxu0 0.0
    %1780 = vmatprep.subr.mxu0 0.0
    %1781 = vmatpush1.msra.mxu0 0.0
    %1782 = vmatprep.subr.mxu0 0.0
    %1783 = vmatpush1.msra.mxu0 0.0
    %1784 = vmatprep.subr.mxu0 0.0
    %1785 = vmatpush1.msra.mxu0 0.0
    %1786 = vmatprep.subr.mxu0 0.0
    %1787 = vmatpush1.msra.mxu0 0.0
    %1788 = vmatprep.subr.mxu0 0.0
    %1789 = vmatpush1.msra.mxu0 0.0
    %1790 = vmatprep.subr.mxu0 0.0
    %1791 = vmatpush1.msra.mxu0 0.0
    %1792 = vmatprep.subr.mxu0 0.0
    %1793 = vmatpush1.msra.mxu0 %v1741
    %1794 = vmatprep.subr.mxu0 0.0
    %1795 = vmatpush2.msra.mxu0 0.0
    %1796 = vmatprep.subr.mxu0 0.0
    %1797 = vmatpush2.msra.mxu0 0.0
    %1798 = vmatprep.subr.mxu0 0.0
    %1799 = vmatpush2.msra.mxu0 0.0
    %1800 = vmatprep.subr.mxu0 0.0
    %1801 = vmatpush2.msra.mxu0 0.0
    %1802 = vmatprep.subr.mxu0 0.0
    %1803 = vmatpush2.msra.mxu0 0.0
    %1804 = vmatprep.subr.mxu0 0.0
    %1805 = vmatpush2.msra.mxu0 0.0
    %1806 = vmatprep.subr.mxu0 0.0
    %1807 = vmatpush2.msra.mxu0 0.0
    %1808 = vmatprep.subr.mxu0 0.0
    %1809 = vmatpush2.msra.mxu0 0.0
    %1810 = vmatprep.subr.mxu0 0.0
    %1811 = vmatpush2.msra.mxu0 0.0
    %1812 = vmatprep.subr.mxu0 0.0
    %1813 = vmatpush2.msra.mxu0 0.0
    %1814 = vmatprep.subr.mxu0 0.0
    %1815 = vmatpush2.msra.mxu0 0.0
    %1816 = vmatprep.subr.mxu0 0.0
    %1817 = vmatpush2.msra.mxu0 0.0
    %1818 = vmatprep.subr.mxu0 0.0
    %1819 = vmatpush2.msra.mxu0 0.0
    %1820 = vmatprep.subr.mxu0 0.0
    %1821 = vmatpush2.msra.mxu0 0.0
    %1822 = vmatprep.subr.mxu0 0.0
    %1823 = vmatpush2.msra.mxu0 0.0
    %1824 = vmatprep.subr.mxu0 0.0
    %1825 = vmatpush2.msra.mxu0 0.0
    %1826 = vmatprep.mubr.f32.mxu0 0.0
    %1827 = vmatmul.mubr.f32.gmra.mxu0 %v1760
    %v1828 = vpop.f32.mrf.mxu0
    %v1829 = vadd.f32 %v1757, %v1828
    %v1830 = vpop.f32.mrf.mxu0
    %1831 = vdwg.mxu0
    %1832 = vrot.lane.b32.xlu0 %v213, 64
    %v1833 = vpop.permute.xlu0 %1832
    %v1843 = vsel %vm747, %v1585, %v1578
    %v1844 = vsel %vm749, %v1592, %v1843
    %v1845 = vsel %vm751, %v1599, %v1844
    %v1846 = vsel %vm753, %v1606, %v1845
    %v1847 = vsel %vm755, %v1613, %v1846
    %v1848 = vsel %vm757, %v1620, %v1847
    %v1849 = vsel %vm759, %v1627, %v1848
    %v1852 = vsel %vm606, %v1257, 0
    %1854 = vmatprep.subr.mxu0 0.0
    %1855 = vmatpush1.msra.mxu0 0.0
    %1856 = vmatprep.subr.mxu0 0.0
    %1857 = vmatpush1.msra.mxu0 0.0
    %1858 = vmatprep.subr.mxu0 0.0
    %1859 = vmatpush1.msra.mxu0 0.0
    %1860 = vmatprep.subr.mxu0 0.0
    %1861 = vmatpush1.msra.mxu0 0.0
    %1862 = vmatprep.subr.mxu0 0.0
    %1863 = vmatpush1.msra.mxu0 0.0
    %1864 = vmatprep.subr.mxu0 0.0
    %1865 = vmatpush1.msra.mxu0 0.0
    %1866 = vmatprep.subr.mxu0 0.0
    %1867 = vmatpush1.msra.mxu0 0.0
    %1868 = vmatprep.subr.mxu0 0.0
    %1869 = vmatpush1.msra.mxu0 0.0
    %1870 = vmatprep.subr.mxu0 0.0
    %1871 = vmatpush1.msra.mxu0 0.0
    %1872 = vmatprep.subr.mxu0 0.0
    %1873 = vmatpush1.msra.mxu0 0.0
    %1874 = vmatprep.subr.mxu0 0.0
    %1875 = vmatpush1.msra.mxu0 0.0
    %1876 = vmatprep.subr.mxu0 0.0
    %1877 = vmatpush1.msra.mxu0 0.0
    %1878 = vmatprep.subr.mxu0 0.0
    %1879 = vmatpush1.msra.mxu0 0.0
    %1880 = vmatprep.subr.mxu0 0.0
    %1881 = vmatpush1.msra.mxu0 0.0
    %1882 = vmatprep.subr.mxu0 0.0
    %1883 = vmatpush1.msra.mxu0 0.0
    %1884 = vmatprep.subr.mxu0 0.0
    %1885 = vmatpush1.msra.mxu0 %v1833
    %1886 = vmatprep.subr.mxu0 0.0
    %1887 = vmatpush2.msra.mxu0 0.0
    %1888 = vmatprep.subr.mxu0 0.0
    %1889 = vmatpush2.msra.mxu0 0.0
    %1890 = vmatprep.subr.mxu0 0.0
    %1891 = vmatpush2.msra.mxu0 0.0
    %1892 = vmatprep.subr.mxu0 0.0
    %1893 = vmatpush2.msra.mxu0 0.0
    %1894 = vmatprep.subr.mxu0 0.0
    %1895 = vmatpush2.msra.mxu0 0.0
    %1896 = vmatprep.subr.mxu0 0.0
    %1897 = vmatpush2.msra.mxu0 0.0
    %1898 = vmatprep.subr.mxu0 0.0
    %1899 = vmatpush2.msra.mxu0 0.0
    %1900 = vmatprep.subr.mxu0 0.0
    %1901 = vmatpush2.msra.mxu0 0.0
    %1902 = vmatprep.subr.mxu0 0.0
    %1903 = vmatpush2.msra.mxu0 0.0
    %1904 = vmatprep.subr.mxu0 0.0
    %1905 = vmatpush2.msra.mxu0 0.0
    %1906 = vmatprep.subr.mxu0 0.0
    %1907 = vmatpush2.msra.mxu0 0.0
    %1908 = vmatprep.subr.mxu0 0.0
    %1909 = vmatpush2.msra.mxu0 0.0
    %1910 = vmatprep.subr.mxu0 0.0
    %1911 = vmatpush2.msra.mxu0 0.0
    %1912 = vmatprep.subr.mxu0 0.0
    %1913 = vmatpush2.msra.mxu0 0.0
    %1914 = vmatprep.subr.mxu0 0.0
    %1915 = vmatpush2.msra.mxu0 0.0
    %1916 = vmatprep.subr.mxu0 0.0
    %1917 = vmatpush2.msra.mxu0 0.0
    %1918 = vmatprep.mubr.f32.mxu0 0.0
    %1919 = vmatmul.mubr.f32.gmra.mxu0 %v1852
    %v1920 = vpop.f32.mrf.mxu0
    %v1921 = vadd.f32 %v1849, %v1920
    %v1922 = vpop.f32.mrf.mxu0
    %1923 = vdwg.mxu0
    %1924 = vrot.lane.b32.xlu0 %v215, 64
    %v1925 = vpop.permute.xlu0 %1924
    %v1935 = vsel %vm747, %v1641, %v1634
    %v1936 = vsel %vm749, %v1648, %v1935
    %v1937 = vsel %vm751, %v1655, %v1936
    %v1938 = vsel %vm753, %v1662, %v1937
    %v1939 = vsel %vm755, %v1669, %v1938
    %v1940 = vsel %vm757, %v1676, %v1939
    %v1941 = vsel %vm759, %v1683, %v1940
    %v1944 = vsel %vm606, %v1258, 0
    %1946 = vmatprep.subr.mxu0 0.0
    %1947 = vmatpush1.msra.mxu0 0.0
    %1948 = vmatprep.subr.mxu0 0.0
    %1949 = vmatpush1.msra.mxu0 0.0
    %1950 = vmatprep.subr.mxu0 0.0
    %1951 = vmatpush1.msra.mxu0 0.0
    %1952 = vmatprep.subr.mxu0 0.0
    %1953 = vmatpush1.msra.mxu0 0.0
    %1954 = vmatprep.subr.mxu0 0.0
    %1955 = vmatpush1.msra.mxu0 0.0
    %1956 = vmatprep.subr.mxu0 0.0
    %1957 = vmatpush1.msra.mxu0 0.0
    %1958 = vmatprep.subr.mxu0 0.0
    %1959 = vmatpush1.msra.mxu0 0.0
    %1960 = vmatprep.subr.mxu0 0.0
    %1961 = vmatpush1.msra.mxu0 0.0
    %1962 = vmatprep.subr.mxu0 0.0
    %1963 = vmatpush1.msra.mxu0 0.0
    %1964 = vmatprep.subr.mxu0 0.0
    %1965 = vmatpush1.msra.mxu0 0.0
    %1966 = vmatprep.subr.mxu0 0.0
    %1967 = vmatpush1.msra.mxu0 0.0
    %1968 = vmatprep.subr.mxu0 0.0
    %1969 = vmatpush1.msra.mxu0 0.0
    %1970 = vmatprep.subr.mxu0 0.0
    %1971 = vmatpush1.msra.mxu0 0.0
    %1972 = vmatprep.subr.mxu0 0.0
    %1973 = vmatpush1.msra.mxu0 0.0
    %1974 = vmatprep.subr.mxu0 0.0
    %1975 = vmatpush1.msra.mxu0 0.0
    %1976 = vmatprep.subr.mxu0 0.0
    %1977 = vmatpush1.msra.mxu0 %v1925
    %1978 = vmatprep.subr.mxu0 0.0
    %1979 = vmatpush2.msra.mxu0 0.0
    %1980 = vmatprep.subr.mxu0 0.0
    %1981 = vmatpush2.msra.mxu0 0.0
    %1982 = vmatprep.subr.mxu0 0.0
    %1983 = vmatpush2.msra.mxu0 0.0
    %1984 = vmatprep.subr.mxu0 0.0
    %1985 = vmatpush2.msra.mxu0 0.0
    %1986 = vmatprep.subr.mxu0 0.0
    %1987 = vmatpush2.msra.mxu0 0.0
    %1988 = vmatprep.subr.mxu0 0.0
    %1989 = vmatpush2.msra.mxu0 0.0
    %1990 = vmatprep.subr.mxu0 0.0
    %1991 = vmatpush2.msra.mxu0 0.0
    %1992 = vmatprep.subr.mxu0 0.0
    %1993 = vmatpush2.msra.mxu0 0.0
    %1994 = vmatprep.subr.mxu0 0.0
    %1995 = vmatpush2.msra.mxu0 0.0
    %1996 = vmatprep.subr.mxu0 0.0
    %1997 = vmatpush2.msra.mxu0 0.0
    %1998 = vmatprep.subr.mxu0 0.0
    %1999 = vmatpush2.msra.mxu0 0.0
    %2000 = vmatprep.subr.mxu0 0.0
    %2001 = vmatpush2.msra.mxu0 0.0
    %2002 = vmatprep.subr.mxu0 0.0
    %2003 = vmatpush2.msra.mxu0 0.0
    %2004 = vmatprep.subr.mxu0 0.0
    %2005 = vmatpush2.msra.mxu0 0.0
    %2006 = vmatprep.subr.mxu0 0.0
    %2007 = vmatpush2.msra.mxu0 0.0
    %2008 = vmatprep.subr.mxu0 0.0
    %2009 = vmatpush2.msra.mxu0 0.0
    %2010 = vmatprep.mubr.f32.mxu0 0.0
    %2011 = vmatmul.mubr.f32.gmra.mxu0 %v1944
    %v2012 = vpop.f32.mrf.mxu0
    %v2013 = vadd.f32 %v1941, %v2012
    %v2014 = vpop.f32.mrf.mxu0
    %2015 = vdwg.mxu0
    %2016 = vrot.lane.b32.xlu0 %v217, 64
    %v2017 = vpop.permute.xlu0 %2016
    %v2027 = vsel %vm747, %v1697, %v1690
    %v2028 = vsel %vm749, %v1704, %v2027
    %v2029 = vsel %vm751, %v1711, %v2028
    %v2030 = vsel %vm753, %v1718, %v2029
    %v2031 = vsel %vm755, %v1725, %v2030
    %v2032 = vsel %vm757, %v1732, %v2031
    %v2033 = vsel %vm759, %v1739, %v2032
    %v2036 = vsel %vm606, %v1259, 0
    %2038 = vmatprep.subr.mxu0 0.0
    %2039 = vmatpush1.msra.mxu0 0.0
    %2040 = vmatprep.subr.mxu0 0.0
    %2041 = vmatpush1.msra.mxu0 0.0
    %2042 = vmatprep.subr.mxu0 0.0
    %2043 = vmatpush1.msra.mxu0 0.0
    %2044 = vmatprep.subr.mxu0 0.0
    %2045 = vmatpush1.msra.mxu0 0.0
    %2046 = vmatprep.subr.mxu0 0.0
    %2047 = vmatpush1.msra.mxu0 0.0
    %2048 = vmatprep.subr.mxu0 0.0
    %2049 = vmatpush1.msra.mxu0 0.0
    %2050 = vmatprep.subr.mxu0 0.0
    %2051 = vmatpush1.msra.mxu0 0.0
    %2052 = vmatprep.subr.mxu0 0.0
    %2053 = vmatpush1.msra.mxu0 0.0
    %2054 = vmatprep.subr.mxu0 0.0
    %2055 = vmatpush1.msra.mxu0 0.0
    %2056 = vmatprep.subr.mxu0 0.0
    %2057 = vmatpush1.msra.mxu0 0.0
    %2058 = vmatprep.subr.mxu0 0.0
    %2059 = vmatpush1.msra.mxu0 0.0
    %2060 = vmatprep.subr.mxu0 0.0
    %2061 = vmatpush1.msra.mxu0 0.0
    %2062 = vmatprep.subr.mxu0 0.0
    %2063 = vmatpush1.msra.mxu0 0.0
    %2064 = vmatprep.subr.mxu0 0.0
    %2065 = vmatpush1.msra.mxu0 0.0
    %2066 = vmatprep.subr.mxu0 0.0
    %2067 = vmatpush1.msra.mxu0 0.0
    %2068 = vmatprep.subr.mxu0 0.0
    %2069 = vmatpush1.msra.mxu0 %v2017
    %2070 = vmatprep.subr.mxu0 0.0
    %2071 = vmatpush2.msra.mxu0 0.0
    %2072 = vmatprep.subr.mxu0 0.0
    %2073 = vmatpush2.msra.mxu0 0.0
    %2074 = vmatprep.subr.mxu0 0.0
    %2075 = vmatpush2.msra.mxu0 0.0
    %2076 = vmatprep.subr.mxu0 0.0
    %2077 = vmatpush2.msra.mxu0 0.0
    %2078 = vmatprep.subr.mxu0 0.0
    %2079 = vmatpush2.msra.mxu0 0.0
    %2080 = vmatprep.subr.mxu0 0.0
    %2081 = vmatpush2.msra.mxu0 0.0
    %2082 = vmatprep.subr.mxu0 0.0
    %2083 = vmatpush2.msra.mxu0 0.0
    %2084 = vmatprep.subr.mxu0 0.0
    %2085 = vmatpush2.msra.mxu0 0.0
    %2086 = vmatprep.subr.mxu0 0.0
    %2087 = vmatpush2.msra.mxu0 0.0
    %2088 = vmatprep.subr.mxu0 0.0
    %2089 = vmatpush2.msra.mxu0 0.0
    %2090 = vmatprep.subr.mxu0 0.0
    %2091 = vmatpush2.msra.mxu0 0.0
    %2092 = vmatprep.subr.mxu0 0.0
    %2093 = vmatpush2.msra.mxu0 0.0
    %2094 = vmatprep.subr.mxu0 0.0
    %2095 = vmatpush2.msra.mxu0 0.0
    %2096 = vmatprep.subr.mxu0 0.0
    %2097 = vmatpush2.msra.mxu0 0.0
    %2098 = vmatprep.subr.mxu0 0.0
    %2099 = vmatpush2.msra.mxu0 0.0
    %2100 = vmatprep.subr.mxu0 0.0
    %2101 = vmatpush2.msra.mxu0 0.0
    %2102 = vmatprep.mubr.f32.mxu0 0.0
    %2103 = vmatmul.mubr.f32.gmra.mxu0 %v2036
    %v2104 = vpop.f32.mrf.mxu0
    %v2105 = vadd.f32 %v2033, %v2104
    %v2106 = vpop.f32.mrf.mxu0
    %2107 = vdwg.mxu0
    %2109 = vrot.lane.b32.xlu0 %v1921, 8
    %v2110 = vpop.permute.xlu0 %2109
    %2113 = vrot.lane.b32.xlu0 %v2013, 16
    %v2114 = vpop.permute.xlu0 %2113
    %2117 = vrot.lane.b32.xlu0 %v2105, 24
    %v2118 = vpop.permute.xlu0 %2117
    %v2120 = vsel %vm606, %v1829, %v2110
    %vm2121 = vcmask 130048
    %v2122 = vsel %vm2121, %v2120, %v2114
    %vm2123 = vcmask 195584
    %v2124 = vsel %vm2123, %v2122, %v2118
    %2126 = vrot.lane.b32.xlu0 %v208, 120
    %v2127 = vpop.permute.xlu0 %2126
    %2128 = vrot.lane.b32.xlu0 %v208, 112
    %v2129 = vpop.permute.xlu0 %2128
    %2130 = vrot.lane.b32.xlu0 %v208, 104
    %v2131 = vpop.permute.xlu0 %2130
    %v2132 = vcombine.high %v208, %v208
    %v2134 = vunpack.c.l.s4 1966171168
    %v2135 = vunpack.c.0.s8 %v2134
    %v2136 = vlaneseq
    %v2137 = vshrl.u32 %v2136, 7
    %v2138 = vsub.s32 %v2135, %v2137
    %v2139 = vrot.slane %v208, %v2138
    %v2141 = vunpack.c.l.s4 1966171168
    %v2142 = vunpack.c.0.s8 %v2141
    %v2143 = vlaneseq
    %v2144 = vshrl.u32 %v2143, 7
    %v2145 = vsub.s32 %v2142, %v2144
    %v2146 = vrot.slane %v2132, %v2145
    %v2147 = vcombine.high %v2139, %v2139
    %v2148 = vcombine.high %v2146, %v2146
    %v2150 = vunpack.c.l.s4 1966171168
    %v2151 = vunpack.c.0.s8 %v2150
    %v2152 = vlaneseq
    %v2153 = vshrl.u32 %v2152, 7
    %v2154 = vsub.s32 %v2151, %v2153
    %v2155 = vrot.slane %v2139, %v2154
    %v2157 = vunpack.c.l.s4 1966171168
    %v2158 = vunpack.c.0.s8 %v2157
    %v2159 = vlaneseq
    %v2160 = vshrl.u32 %v2159, 7
    %v2161 = vsub.s32 %v2158, %v2160
    %v2162 = vrot.slane %v2146, %v2161
    %v2164 = vunpack.c.l.s4 1966171168
    %v2165 = vunpack.c.0.s8 %v2164
    %v2166 = vlaneseq
    %v2167 = vshrl.u32 %v2166, 7
    %v2168 = vsub.s32 %v2165, %v2167
    %v2169 = vrot.slane %v2147, %v2168
    %v2171 = vunpack.c.l.s4 1966171168
    %v2172 = vunpack.c.0.s8 %v2171
    %v2173 = vlaneseq
    %v2174 = vshrl.u32 %v2173, 7
    %v2175 = vsub.s32 %v2172, %v2174
    %v2176 = vrot.slane %v2148, %v2175
    %v2177 = vcombine.high %v2155, %v2155
    %v2178 = vcombine.high %v2162, %v2162
    %v2179 = vcombine.high %v2169, %v2169
    %v2180 = vcombine.high %v2176, %v2176
    %v2181 = vcombine.high %v2127, %v2127
    %v2183 = vunpack.c.l.s4 1966171168
    %v2184 = vunpack.c.0.s8 %v2183
    %v2185 = vlaneseq
    %v2186 = vshrl.u32 %v2185, 7
    %v2187 = vsub.s32 %v2184, %v2186
    %v2188 = vrot.slane %v2127, %v2187
    %v2190 = vunpack.c.l.s4 1966171168
    %v2191 = vunpack.c.0.s8 %v2190
    %v2192 = vlaneseq
    %v2193 = vshrl.u32 %v2192, 7
    %v2194 = vsub.s32 %v2191, %v2193
    %v2195 = vrot.slane %v2181, %v2194
    %v2196 = vcombine.high %v2188, %v2188
    %v2197 = vcombine.high %v2195, %v2195
    %v2199 = vunpack.c.l.s4 1966171168
    %v2200 = vunpack.c.0.s8 %v2199
    %v2201 = vlaneseq
    %v2202 = vshrl.u32 %v2201, 7
    %v2203 = vsub.s32 %v2200, %v2202
    %v2204 = vrot.slane %v2188, %v2203
    %v2206 = vunpack.c.l.s4 1966171168
    %v2207 = vunpack.c.0.s8 %v2206
    %v2208 = vlaneseq
    %v2209 = vshrl.u32 %v2208, 7
    %v2210 = vsub.s32 %v2207, %v2209
    %v2211 = vrot.slane %v2195, %v2210
    %v2213 = vunpack.c.l.s4 1966171168
    %v2214 = vunpack.c.0.s8 %v2213
    %v2215 = vlaneseq
    %v2216 = vshrl.u32 %v2215, 7
    %v2217 = vsub.s32 %v2214, %v2216
    %v2218 = vrot.slane %v2196, %v2217
    %v2220 = vunpack.c.l.s4 1966171168
    %v2221 = vunpack.c.0.s8 %v2220
    %v2222 = vlaneseq
    %v2223 = vshrl.u32 %v2222, 7
    %v2224 = vsub.s32 %v2221, %v2223
    %v2225 = vrot.slane %v2197, %v2224
    %v2226 = vcombine.high %v2204, %v2204
    %v2227 = vcombine.high %v2211, %v2211
    %v2228 = vcombine.high %v2218, %v2218
    %v2229 = vcombine.high %v2225, %v2225
    %v2230 = vcombine.high %v2129, %v2129
    %v2232 = vunpack.c.l.s4 1966171168
    %v2233 = vunpack.c.0.s8 %v2232
    %v2234 = vlaneseq
    %v2235 = vshrl.u32 %v2234, 7
    %v2236 = vsub.s32 %v2233, %v2235
    %v2237 = vrot.slane %v2129, %v2236
    %v2239 = vunpack.c.l.s4 1966171168
    %v2240 = vunpack.c.0.s8 %v2239
    %v2241 = vlaneseq
    %v2242 = vshrl.u32 %v2241, 7
    %v2243 = vsub.s32 %v2240, %v2242
    %v2244 = vrot.slane %v2230, %v2243
    %v2245 = vcombine.high %v2237, %v2237
    %v2246 = vcombine.high %v2244, %v2244
    %v2248 = vunpack.c.l.s4 1966171168
    %v2249 = vunpack.c.0.s8 %v2248
    %v2250 = vlaneseq
    %v2251 = vshrl.u32 %v2250, 7
    %v2252 = vsub.s32 %v2249, %v2251
    %v2253 = vrot.slane %v2237, %v2252
    %v2255 = vunpack.c.l.s4 1966171168
    %v2256 = vunpack.c.0.s8 %v2255
    %v2257 = vlaneseq
    %v2258 = vshrl.u32 %v2257, 7
    %v2259 = vsub.s32 %v2256, %v2258
    %v2260 = vrot.slane %v2244, %v2259
    %v2262 = vunpack.c.l.s4 1966171168
    %v2263 = vunpack.c.0.s8 %v2262
    %v2264 = vlaneseq
    %v2265 = vshrl.u32 %v2264, 7
    %v2266 = vsub.s32 %v2263, %v2265
    %v2267 = vrot.slane %v2245, %v2266
    %v2269 = vunpack.c.l.s4 1966171168
    %v2270 = vunpack.c.0.s8 %v2269
    %v2271 = vlaneseq
    %v2272 = vshrl.u32 %v2271, 7
    %v2273 = vsub.s32 %v2270, %v2272
    %v2274 = vrot.slane %v2246, %v2273
    %v2275 = vcombine.high %v2253, %v2253
    %v2276 = vcombine.high %v2260, %v2260
    %v2277 = vcombine.high %v2267, %v2267
    %v2278 = vcombine.high %v2274, %v2274
    %v2279 = vcombine.high %v2131, %v2131
    %v2281 = vunpack.c.l.s4 1966171168
    %v2282 = vunpack.c.0.s8 %v2281
    %v2283 = vlaneseq
    %v2284 = vshrl.u32 %v2283, 7
    %v2285 = vsub.s32 %v2282, %v2284
    %v2286 = vrot.slane %v2131, %v2285
    %v2288 = vunpack.c.l.s4 1966171168
    %v2289 = vunpack.c.0.s8 %v2288
    %v2290 = vlaneseq
    %v2291 = vshrl.u32 %v2290, 7
    %v2292 = vsub.s32 %v2289, %v2291
    %v2293 = vrot.slane %v2279, %v2292
    %v2294 = vcombine.high %v2286, %v2286
    %v2295 = vcombine.high %v2293, %v2293
    %v2297 = vunpack.c.l.s4 1966171168
    %v2298 = vunpack.c.0.s8 %v2297
    %v2299 = vlaneseq
    %v2300 = vshrl.u32 %v2299, 7
    %v2301 = vsub.s32 %v2298, %v2300
    %v2302 = vrot.slane %v2286, %v2301
    %v2304 = vunpack.c.l.s4 1966171168
    %v2305 = vunpack.c.0.s8 %v2304
    %v2306 = vlaneseq
    %v2307 = vshrl.u32 %v2306, 7
    %v2308 = vsub.s32 %v2305, %v2307
    %v2309 = vrot.slane %v2293, %v2308
    %v2311 = vunpack.c.l.s4 1966171168
    %v2312 = vunpack.c.0.s8 %v2311
    %v2313 = vlaneseq
    %v2314 = vshrl.u32 %v2313, 7
    %v2315 = vsub.s32 %v2312, %v2314
    %v2316 = vrot.slane %v2294, %v2315
    %v2318 = vunpack.c.l.s4 1966171168
    %v2319 = vunpack.c.0.s8 %v2318
    %v2320 = vlaneseq
    %v2321 = vshrl.u32 %v2320, 7
    %v2322 = vsub.s32 %v2319, %v2321
    %v2323 = vrot.slane %v2295, %v2322
    %v2324 = vcombine.high %v2302, %v2302
    %v2325 = vcombine.high %v2309, %v2309
    %v2326 = vcombine.high %v2316, %v2316
    %v2327 = vcombine.high %v2323, %v2323
    %v2328 = vlaneseq
    %v2329 = vshrl.u32 %v2328, 7
    %v2330 = vsub.s32 0, %v2329
    %v2331 = vrot.slane %v2155, %v2330
    %v2332 = vlaneseq
    %v2333 = vshrl.u32 %v2332, 7
    %v2334 = vsub.s32 0, %v2333
    %v2335 = vrot.slane %v2169, %v2334
    %v2336 = vlaneseq
    %v2337 = vshrl.u32 %v2336, 7
    %v2338 = vsub.s32 0, %v2337
    %v2339 = vrot.slane %v2177, %v2338
    %v2340 = vlaneseq
    %v2341 = vshrl.u32 %v2340, 7
    %v2342 = vsub.s32 0, %v2341
    %v2343 = vrot.slane %v2179, %v2342
    %v2344 = vlaneseq
    %v2345 = vshrl.u32 %v2344, 7
    %v2346 = vsub.s32 0, %v2345
    %v2347 = vrot.slane %v2162, %v2346
    %v2348 = vlaneseq
    %v2349 = vshrl.u32 %v2348, 7
    %v2350 = vsub.s32 0, %v2349
    %v2351 = vrot.slane %v2176, %v2350
    %v2352 = vlaneseq
    %v2353 = vshrl.u32 %v2352, 7
    %v2354 = vsub.s32 0, %v2353
    %v2355 = vrot.slane %v2178, %v2354
    %v2356 = vlaneseq
    %v2357 = vshrl.u32 %v2356, 7
    %v2358 = vsub.s32 0, %v2357
    %v2359 = vrot.slane %v2180, %v2358
    %v2360 = vlaneseq
    %v2361 = vshrl.u32 %v2360, 7
    %v2362 = vsub.s32 0, %v2361
    %v2363 = vrot.slane %v2204, %v2362
    %v2364 = vlaneseq
    %v2365 = vshrl.u32 %v2364, 7
    %v2366 = vsub.s32 0, %v2365
    %v2367 = vrot.slane %v2218, %v2366
    %v2368 = vlaneseq
    %v2369 = vshrl.u32 %v2368, 7
    %v2370 = vsub.s32 0, %v2369
    %v2371 = vrot.slane %v2226, %v2370
    %v2372 = vlaneseq
    %v2373 = vshrl.u32 %v2372, 7
    %v2374 = vsub.s32 0, %v2373
    %v2375 = vrot.slane %v2228, %v2374
    %v2376 = vlaneseq
    %v2377 = vshrl.u32 %v2376, 7
    %v2378 = vsub.s32 0, %v2377
    %v2379 = vrot.slane %v2211, %v2378
    %v2380 = vlaneseq
    %v2381 = vshrl.u32 %v2380, 7
    %v2382 = vsub.s32 0, %v2381
    %v2383 = vrot.slane %v2225, %v2382
    %v2384 = vlaneseq
    %v2385 = vshrl.u32 %v2384, 7
    %v2386 = vsub.s32 0, %v2385
    %v2387 = vrot.slane %v2227, %v2386
    %v2388 = vlaneseq
    %v2389 = vshrl.u32 %v2388, 7
    %v2390 = vsub.s32 0, %v2389
    %v2391 = vrot.slane %v2229, %v2390
    %v2392 = vlaneseq
    %v2393 = vshrl.u32 %v2392, 7
    %v2394 = vsub.s32 0, %v2393
    %v2395 = vrot.slane %v2253, %v2394
    %v2396 = vlaneseq
    %v2397 = vshrl.u32 %v2396, 7
    %v2398 = vsub.s32 0, %v2397
    %v2399 = vrot.slane %v2267, %v2398
    %v2400 = vlaneseq
    %v2401 = vshrl.u32 %v2400, 7
    %v2402 = vsub.s32 0, %v2401
    %v2403 = vrot.slane %v2275, %v2402
    %v2404 = vlaneseq
    %v2405 = vshrl.u32 %v2404, 7
    %v2406 = vsub.s32 0, %v2405
    %v2407 = vrot.slane %v2277, %v2406
    %v2408 = vlaneseq
    %v2409 = vshrl.u32 %v2408, 7
    %v2410 = vsub.s32 0, %v2409
    %v2411 = vrot.slane %v2260, %v2410
    %v2412 = vlaneseq
    %v2413 = vshrl.u32 %v2412, 7
    %v2414 = vsub.s32 0, %v2413
    %v2415 = vrot.slane %v2274, %v2414
    %v2416 = vlaneseq
    %v2417 = vshrl.u32 %v2416, 7
    %v2418 = vsub.s32 0, %v2417
    %v2419 = vrot.slane %v2276, %v2418
    %v2420 = vlaneseq
    %v2421 = vshrl.u32 %v2420, 7
    %v2422 = vsub.s32 0, %v2421
    %v2423 = vrot.slane %v2278, %v2422
    %v2424 = vlaneseq
    %v2425 = vshrl.u32 %v2424, 7
    %v2426 = vsub.s32 0, %v2425
    %v2427 = vrot.slane %v2302, %v2426
    %v2428 = vlaneseq
    %v2429 = vshrl.u32 %v2428, 7
    %v2430 = vsub.s32 0, %v2429
    %v2431 = vrot.slane %v2316, %v2430
    %v2432 = vlaneseq
    %v2433 = vshrl.u32 %v2432, 7
    %v2434 = vsub.s32 0, %v2433
    %v2435 = vrot.slane %v2324, %v2434
    %v2436 = vlaneseq
    %v2437 = vshrl.u32 %v2436, 7
    %v2438 = vsub.s32 0, %v2437
    %v2439 = vrot.slane %v2326, %v2438
    %v2440 = vlaneseq
    %v2441 = vshrl.u32 %v2440, 7
    %v2442 = vsub.s32 0, %v2441
    %v2443 = vrot.slane %v2309, %v2442
    %v2444 = vlaneseq
    %v2445 = vshrl.u32 %v2444, 7
    %v2446 = vsub.s32 0, %v2445
    %v2447 = vrot.slane %v2323, %v2446
    %v2448 = vlaneseq
    %v2449 = vshrl.u32 %v2448, 7
    %v2450 = vsub.s32 0, %v2449
    %v2451 = vrot.slane %v2325, %v2450
    %v2452 = vlaneseq
    %v2453 = vshrl.u32 %v2452, 7
    %v2454 = vsub.s32 0, %v2453
    %v2455 = vrot.slane %v2327, %v2454
    %v2488 = vmul.f32 %v2331, %v84
    %v2489 = vmul.f32 %v2335, %v85
    %v2490 = vmul.f32 %v2339, %v86
    %v2491 = vmul.f32 %v2343, %v87
    %v2492 = vmul.f32 %v2347, %v88
    %v2493 = vmul.f32 %v2351, %v89
    %v2494 = vmul.f32 %v2355, %v90
    %v2495 = vmul.f32 %v2359, %v91
    %v2496 = vmul.f32 %v2363, %v84
    %v2497 = vmul.f32 %v2367, %v85
    %v2498 = vmul.f32 %v2371, %v86
    %v2499 = vmul.f32 %v2375, %v87
    %v2500 = vmul.f32 %v2379, %v88
    %v2501 = vmul.f32 %v2383, %v89
    %v2502 = vmul.f32 %v2387, %v90
    %v2503 = vmul.f32 %v2391, %v91
    %v2504 = vmul.f32 %v2395, %v84
    %v2505 = vmul.f32 %v2399, %v85
    %v2506 = vmul.f32 %v2403, %v86
    %v2507 = vmul.f32 %v2407, %v87
    %v2508 = vmul.f32 %v2411, %v88
    %v2509 = vmul.f32 %v2415, %v89
    %v2510 = vmul.f32 %v2419, %v90
    %v2511 = vmul.f32 %v2423, %v91
    %v2512 = vmul.f32 %v2427, %v84
    %v2513 = vmul.f32 %v2431, %v85
    %v2514 = vmul.f32 %v2435, %v86
    %v2515 = vmul.f32 %v2439, %v87
    %v2516 = vmul.f32 %v2443, %v88
    %v2517 = vmul.f32 %v2447, %v89
    %v2518 = vmul.f32 %v2451, %v90
    %v2519 = vmul.f32 %v2455, %v91
    %v2520 = vsel %vm606, %v2488, 0.0
    %2521 = vadd.xlane.f32.xlu0 %v2520
    %v2522 = vpop.xlane.xlu0 %2521
    %v2523 = vsel %vm606, %v2489, 0.0
    %2524 = vadd.xlane.f32.xlu0 %v2523
    %v2525 = vpop.xlane.xlu0 %2524
    %v2526 = vsel %vm606, %v2490, 0.0
    %2527 = vadd.xlane.f32.xlu0 %v2526
    %v2528 = vpop.xlane.xlu0 %2527
    %v2529 = vsel %vm606, %v2491, 0.0
    %2530 = vadd.xlane.f32.xlu0 %v2529
    %v2531 = vpop.xlane.xlu0 %2530
    %v2532 = vsel %vm606, %v2492, 0.0
    %2533 = vadd.xlane.f32.xlu0 %v2532
    %v2534 = vpop.xlane.xlu0 %2533
    %v2535 = vsel %vm606, %v2493, 0.0
    %2536 = vadd.xlane.f32.xlu0 %v2535
    %v2537 = vpop.xlane.xlu0 %2536
    %v2538 = vsel %vm606, %v2494, 0.0
    %2539 = vadd.xlane.f32.xlu0 %v2538
    %v2540 = vpop.xlane.xlu0 %2539
    %v2541 = vsel %vm606, %v2495, 0.0
    %2542 = vadd.xlane.f32.xlu0 %v2541
    %v2543 = vpop.xlane.xlu0 %2542
    %v2544 = vsel %vm606, %v2496, 0.0
    %2545 = vadd.xlane.f32.xlu0 %v2544
    %v2546 = vpop.xlane.xlu0 %2545
    %v2547 = vsel %vm606, %v2497, 0.0
    %2548 = vadd.xlane.f32.xlu0 %v2547
    %v2549 = vpop.xlane.xlu0 %2548
    %v2550 = vsel %vm606, %v2498, 0.0
    %2551 = vadd.xlane.f32.xlu0 %v2550
    %v2552 = vpop.xlane.xlu0 %2551
    %v2553 = vsel %vm606, %v2499, 0.0
    %2554 = vadd.xlane.f32.xlu0 %v2553
    %v2555 = vpop.xlane.xlu0 %2554
    %v2556 = vsel %vm606, %v2500, 0.0
    %2557 = vadd.xlane.f32.xlu0 %v2556
    %v2558 = vpop.xlane.xlu0 %2557
    %v2559 = vsel %vm606, %v2501, 0.0
    %2560 = vadd.xlane.f32.xlu0 %v2559
    %v2561 = vpop.xlane.xlu0 %2560
    %v2562 = vsel %vm606, %v2502, 0.0
    %2563 = vadd.xlane.f32.xlu0 %v2562
    %v2564 = vpop.xlane.xlu0 %2563
    %v2565 = vsel %vm606, %v2503, 0.0
    %2566 = vadd.xlane.f32.xlu0 %v2565
    %v2567 = vpop.xlane.xlu0 %2566
    %v2568 = vsel %vm606, %v2504, 0.0
    %2569 = vadd.xlane.f32.xlu0 %v2568
    %v2570 = vpop.xlane.xlu0 %2569
    %v2571 = vsel %vm606, %v2505, 0.0
    %2572 = vadd.xlane.f32.xlu0 %v2571
    %v2573 = vpop.xlane.xlu0 %2572
    %v2574 = vsel %vm606, %v2506, 0.0
    %2575 = vadd.xlane.f32.xlu0 %v2574
    %v2576 = vpop.xlane.xlu0 %2575
    %v2577 = vsel %vm606, %v2507, 0.0
    %2578 = vadd.xlane.f32.xlu0 %v2577
    %v2579 = vpop.xlane.xlu0 %2578
    %v2580 = vsel %vm606, %v2508, 0.0
    %2581 = vadd.xlane.f32.xlu0 %v2580
    %v2582 = vpop.xlane.xlu0 %2581
    %v2583 = vsel %vm606, %v2509, 0.0
    %2584 = vadd.xlane.f32.xlu0 %v2583
    %v2585 = vpop.xlane.xlu0 %2584
    %v2586 = vsel %vm606, %v2510, 0.0
    %2587 = vadd.xlane.f32.xlu0 %v2586
    %v2588 = vpop.xlane.xlu0 %2587
    %v2589 = vsel %vm606, %v2511, 0.0
    %2590 = vadd.xlane.f32.xlu0 %v2589
    %v2591 = vpop.xlane.xlu0 %2590
    %v2592 = vsel %vm606, %v2512, 0.0
    %2593 = vadd.xlane.f32.xlu0 %v2592
    %v2594 = vpop.xlane.xlu0 %2593
    %v2595 = vsel %vm606, %v2513, 0.0
    %2596 = vadd.xlane.f32.xlu0 %v2595
    %v2597 = vpop.xlane.xlu0 %2596
    %v2598 = vsel %vm606, %v2514, 0.0
    %2599 = vadd.xlane.f32.xlu0 %v2598
    %v2600 = vpop.xlane.xlu0 %2599
    %v2601 = vsel %vm606, %v2515, 0.0
    %2602 = vadd.xlane.f32.xlu0 %v2601
    %v2603 = vpop.xlane.xlu0 %2602
    %v2604 = vsel %vm606, %v2516, 0.0
    %2605 = vadd.xlane.f32.xlu0 %v2604
    %v2606 = vpop.xlane.xlu0 %2605
    %v2607 = vsel %vm606, %v2517, 0.0
    %2608 = vadd.xlane.f32.xlu0 %v2607
    %v2609 = vpop.xlane.xlu0 %2608
    %v2610 = vsel %vm606, %v2518, 0.0
    %2611 = vadd.xlane.f32.xlu0 %v2610
    %v2612 = vpop.xlane.xlu0 %2611
    %v2613 = vsel %vm606, %v2519, 0.0
    %2614 = vadd.xlane.f32.xlu0 %v2613
    %v2615 = vpop.xlane.xlu0 %2614
    %2616 = vrot.lane.b32.xlu0 %v208, 96
    %v2617 = vpop.permute.xlu0 %2616
    %v2626 = vlaneseq
    %v2627 = vshrl.u32 %v2626, 7
    %v2628 = vsub.s32 %v714, %v2627
    %v2629 = vrot.slane %v2522, %v2628
    %v2630 = vlaneseq
    %v2631 = vshrl.u32 %v2630, 7
    %v2632 = vsub.s32 %v714, %v2631
    %v2633 = vrot.slane %v2525, %v2632
    %v2634 = vlaneseq
    %v2635 = vshrl.u32 %v2634, 7
    %v2636 = vsub.s32 %v714, %v2635
    %v2637 = vrot.slane %v2528, %v2636
    %v2638 = vlaneseq
    %v2639 = vshrl.u32 %v2638, 7
    %v2640 = vsub.s32 %v714, %v2639
    %v2641 = vrot.slane %v2531, %v2640
    %v2642 = vlaneseq
    %v2643 = vshrl.u32 %v2642, 7
    %v2644 = vsub.s32 %v714, %v2643
    %v2645 = vrot.slane %v2534, %v2644
    %v2646 = vlaneseq
    %v2647 = vshrl.u32 %v2646, 7
    %v2648 = vsub.s32 %v714, %v2647
    %v2649 = vrot.slane %v2537, %v2648
    %v2650 = vlaneseq
    %v2651 = vshrl.u32 %v2650, 7
    %v2652 = vsub.s32 %v714, %v2651
    %v2653 = vrot.slane %v2540, %v2652
    %v2654 = vlaneseq
    %v2655 = vshrl.u32 %v2654, 7
    %v2656 = vsub.s32 %v714, %v2655
    %v2657 = vrot.slane %v2543, %v2656
    %v2658 = vsel %vm747, %v2633, %v2629
    %v2659 = vsel %vm749, %v2637, %v2658
    %v2660 = vsel %vm751, %v2641, %v2659
    %v2661 = vsel %vm753, %v2645, %v2660
    %v2662 = vsel %vm755, %v2649, %v2661
    %v2663 = vsel %vm757, %v2653, %v2662
    %v2664 = vsel %vm759, %v2657, %v2663
    %v2666 = vsel %vm606, %v208, 0
    %v2668 = vsel %vm606, %v2617, 0
    %2670 = vmatprep.subr.mxu0 0.0
    %2671 = vmatpush1.xpose.msra.mxu0 0.0
    %2672 = vmatprep.subr.mxu0 0.0
    %2673 = vmatpush1.xpose.msra.mxu0 0.0
    %2674 = vmatprep.subr.mxu0 0.0
    %2675 = vmatpush1.xpose.msra.mxu0 0.0
    %2676 = vmatprep.subr.mxu0 0.0
    %2677 = vmatpush1.xpose.msra.mxu0 0.0
    %2678 = vmatprep.subr.mxu0 0.0
    %2679 = vmatpush1.xpose.msra.mxu0 0.0
    %2680 = vmatprep.subr.mxu0 0.0
    %2681 = vmatpush1.xpose.msra.mxu0 0.0
    %2682 = vmatprep.subr.mxu0 0.0
    %2683 = vmatpush1.xpose.msra.mxu0 0.0
    %2684 = vmatprep.subr.mxu0 0.0
    %2685 = vmatpush1.xpose.msra.mxu0 0.0
    %2686 = vmatprep.subr.mxu0 0.0
    %2687 = vmatpush1.xpose.msra.mxu0 0.0
    %2688 = vmatprep.subr.mxu0 0.0
    %2689 = vmatpush1.xpose.msra.mxu0 0.0
    %2690 = vmatprep.subr.mxu0 0.0
    %2691 = vmatpush1.xpose.msra.mxu0 0.0
    %2692 = vmatprep.subr.mxu0 0.0
    %2693 = vmatpush1.xpose.msra.mxu0 0.0
    %2694 = vmatprep.subr.mxu0 0.0
    %2695 = vmatpush1.xpose.msra.mxu0 0.0
    %2696 = vmatprep.subr.mxu0 0.0
    %2697 = vmatpush1.xpose.msra.mxu0 0.0
    %2698 = vmatprep.subr.mxu0 0.0
    %2699 = vmatpush1.xpose.msra.mxu0 0.0
    %2700 = vmatprep.subr.mxu0 0.0
    %2701 = vmatpush1.xpose.msra.mxu0 %v2668
    %2702 = vmatprep.subr.mxu0 0.0
    %2703 = vmatpush2.xpose.msra.mxu0 0.0
    %2704 = vmatprep.subr.mxu0 0.0
    %2705 = vmatpush2.xpose.msra.mxu0 0.0
    %2706 = vmatprep.subr.mxu0 0.0
    %2707 = vmatpush2.xpose.msra.mxu0 0.0
    %2708 = vmatprep.subr.mxu0 0.0
    %2709 = vmatpush2.xpose.msra.mxu0 0.0
    %2710 = vmatprep.subr.mxu0 0.0
    %2711 = vmatpush2.xpose.msra.mxu0 0.0
    %2712 = vmatprep.subr.mxu0 0.0
    %2713 = vmatpush2.xpose.msra.mxu0 0.0
    %2714 = vmatprep.subr.mxu0 0.0
    %2715 = vmatpush2.xpose.msra.mxu0 0.0
    %2716 = vmatprep.subr.mxu0 0.0
    %2717 = vmatpush2.xpose.msra.mxu0 0.0
    %2718 = vmatprep.subr.mxu0 0.0
    %2719 = vmatpush2.xpose.msra.mxu0 0.0
    %2720 = vmatprep.subr.mxu0 0.0
    %2721 = vmatpush2.xpose.msra.mxu0 0.0
    %2722 = vmatprep.subr.mxu0 0.0
    %2723 = vmatpush2.xpose.msra.mxu0 0.0
    %2724 = vmatprep.subr.mxu0 0.0
    %2725 = vmatpush2.xpose.msra.mxu0 0.0
    %2726 = vmatprep.subr.mxu0 0.0
    %2727 = vmatpush2.xpose.msra.mxu0 0.0
    %2728 = vmatprep.subr.mxu0 0.0
    %2729 = vmatpush2.xpose.msra.mxu0 0.0
    %2730 = vmatprep.subr.mxu0 0.0
    %2731 = vmatpush2.xpose.msra.mxu0 0.0
    %2732 = vmatprep.subr.mxu0 0.0
    %2733 = vmatpush2.xpose.msra.mxu0 0.0
    %2734 = vmatprep.mubr.f32.mxu0 0.0
    %2735 = vmatmul.mubr.f32.gmra.mxu0 %v2666
    %v2736 = vpop.f32.mrf.mxu0
    %v2737 = vadd.f32 %v2664, %v2736
    %v2738 = vpop.f32.mrf.mxu0
    %2739 = vdwg.mxu0
    %2740 = vrot.lane.b32.xlu0 %v2127, 96
    %v2741 = vpop.permute.xlu0 %2740
    %v2750 = vlaneseq
    %v2751 = vshrl.u32 %v2750, 7
    %v2752 = vsub.s32 %v714, %v2751
    %v2753 = vrot.slane %v2546, %v2752
    %v2754 = vlaneseq
    %v2755 = vshrl.u32 %v2754, 7
    %v2756 = vsub.s32 %v714, %v2755
    %v2757 = vrot.slane %v2549, %v2756
    %v2758 = vlaneseq
    %v2759 = vshrl.u32 %v2758, 7
    %v2760 = vsub.s32 %v714, %v2759
    %v2761 = vrot.slane %v2552, %v2760
    %v2762 = vlaneseq
    %v2763 = vshrl.u32 %v2762, 7
    %v2764 = vsub.s32 %v714, %v2763
    %v2765 = vrot.slane %v2555, %v2764
    %v2766 = vlaneseq
    %v2767 = vshrl.u32 %v2766, 7
    %v2768 = vsub.s32 %v714, %v2767
    %v2769 = vrot.slane %v2558, %v2768
    %v2770 = vlaneseq
    %v2771 = vshrl.u32 %v2770, 7
    %v2772 = vsub.s32 %v714, %v2771
    %v2773 = vrot.slane %v2561, %v2772
    %v2774 = vlaneseq
    %v2775 = vshrl.u32 %v2774, 7
    %v2776 = vsub.s32 %v714, %v2775
    %v2777 = vrot.slane %v2564, %v2776
    %v2778 = vlaneseq
    %v2779 = vshrl.u32 %v2778, 7
    %v2780 = vsub.s32 %v714, %v2779
    %v2781 = vrot.slane %v2567, %v2780
    %v2782 = vsel %vm747, %v2757, %v2753
    %v2783 = vsel %vm749, %v2761, %v2782
    %v2784 = vsel %vm751, %v2765, %v2783
    %v2785 = vsel %vm753, %v2769, %v2784
    %v2786 = vsel %vm755, %v2773, %v2785
    %v2787 = vsel %vm757, %v2777, %v2786
    %v2788 = vsel %vm759, %v2781, %v2787
    %v2790 = vsel %vm606, %v2127, 0
    %v2792 = vsel %vm606, %v2741, 0
    %2794 = vmatprep.subr.mxu0 0.0
    %2795 = vmatpush1.xpose.msra.mxu0 0.0
    %2796 = vmatprep.subr.mxu0 0.0
    %2797 = vmatpush1.xpose.msra.mxu0 0.0
    %2798 = vmatprep.subr.mxu0 0.0
    %2799 = vmatpush1.xpose.msra.mxu0 0.0
    %2800 = vmatprep.subr.mxu0 0.0
    %2801 = vmatpush1.xpose.msra.mxu0 0.0
    %2802 = vmatprep.subr.mxu0 0.0
    %2803 = vmatpush1.xpose.msra.mxu0 0.0
    %2804 = vmatprep.subr.mxu0 0.0
    %2805 = vmatpush1.xpose.msra.mxu0 0.0
    %2806 = vmatprep.subr.mxu0 0.0
    %2807 = vmatpush1.xpose.msra.mxu0 0.0
    %2808 = vmatprep.subr.mxu0 0.0
    %2809 = vmatpush1.xpose.msra.mxu0 0.0
    %2810 = vmatprep.subr.mxu0 0.0
    %2811 = vmatpush1.xpose.msra.mxu0 0.0
    %2812 = vmatprep.subr.mxu0 0.0
    %2813 = vmatpush1.xpose.msra.mxu0 0.0
    %2814 = vmatprep.subr.mxu0 0.0
    %2815 = vmatpush1.xpose.msra.mxu0 0.0
    %2816 = vmatprep.subr.mxu0 0.0
    %2817 = vmatpush1.xpose.msra.mxu0 0.0
    %2818 = vmatprep.subr.mxu0 0.0
    %2819 = vmatpush1.xpose.msra.mxu0 0.0
    %2820 = vmatprep.subr.mxu0 0.0
    %2821 = vmatpush1.xpose.msra.mxu0 0.0
    %2822 = vmatprep.subr.mxu0 0.0
    %2823 = vmatpush1.xpose.msra.mxu0 0.0
    %2824 = vmatprep.subr.mxu0 0.0
    %2825 = vmatpush1.xpose.msra.mxu0 %v2792
    %2826 = vmatprep.subr.mxu0 0.0
    %2827 = vmatpush2.xpose.msra.mxu0 0.0
    %2828 = vmatprep.subr.mxu0 0.0
    %2829 = vmatpush2.xpose.msra.mxu0 0.0
    %2830 = vmatprep.subr.mxu0 0.0
    %2831 = vmatpush2.xpose.msra.mxu0 0.0
    %2832 = vmatprep.subr.mxu0 0.0
    %2833 = vmatpush2.xpose.msra.mxu0 0.0
    %2834 = vmatprep.subr.mxu0 0.0
    %2835 = vmatpush2.xpose.msra.mxu0 0.0
    %2836 = vmatprep.subr.mxu0 0.0
    %2837 = vmatpush2.xpose.msra.mxu0 0.0
    %2838 = vmatprep.subr.mxu0 0.0
    %2839 = vmatpush2.xpose.msra.mxu0 0.0
    %2840 = vmatprep.subr.mxu0 0.0
    %2841 = vmatpush2.xpose.msra.mxu0 0.0
    %2842 = vmatprep.subr.mxu0 0.0
    %2843 = vmatpush2.xpose.msra.mxu0 0.0
    %2844 = vmatprep.subr.mxu0 0.0
    %2845 = vmatpush2.xpose.msra.mxu0 0.0
    %2846 = vmatprep.subr.mxu0 0.0
    %2847 = vmatpush2.xpose.msra.mxu0 0.0
    %2848 = vmatprep.subr.mxu0 0.0
    %2849 = vmatpush2.xpose.msra.mxu0 0.0
    %2850 = vmatprep.subr.mxu0 0.0
    %2851 = vmatpush2.xpose.msra.mxu0 0.0
    %2852 = vmatprep.subr.mxu0 0.0
    %2853 = vmatpush2.xpose.msra.mxu0 0.0
    %2854 = vmatprep.subr.mxu0 0.0
    %2855 = vmatpush2.xpose.msra.mxu0 0.0
    %2856 = vmatprep.subr.mxu0 0.0
    %2857 = vmatpush2.xpose.msra.mxu0 0.0
    %2858 = vmatprep.mubr.f32.mxu0 0.0
    %2859 = vmatmul.mubr.f32.gmra.mxu0 %v2790
    %v2860 = vpop.f32.mrf.mxu0
    %v2861 = vadd.f32 %v2788, %v2860
    %v2862 = vpop.f32.mrf.mxu0
    %2863 = vdwg.mxu0
    %2864 = vrot.lane.b32.xlu0 %v2129, 96
    %v2865 = vpop.permute.xlu0 %2864
    %v2874 = vlaneseq
    %v2875 = vshrl.u32 %v2874, 7
    %v2876 = vsub.s32 %v714, %v2875
    %v2877 = vrot.slane %v2570, %v2876
    %v2878 = vlaneseq
    %v2879 = vshrl.u32 %v2878, 7
    %v2880 = vsub.s32 %v714, %v2879
    %v2881 = vrot.slane %v2573, %v2880
    %v2882 = vlaneseq
    %v2883 = vshrl.u32 %v2882, 7
    %v2884 = vsub.s32 %v714, %v2883
    %v2885 = vrot.slane %v2576, %v2884
    %v2886 = vlaneseq
    %v2887 = vshrl.u32 %v2886, 7
    %v2888 = vsub.s32 %v714, %v2887
    %v2889 = vrot.slane %v2579, %v2888
    %v2890 = vlaneseq
    %v2891 = vshrl.u32 %v2890, 7
    %v2892 = vsub.s32 %v714, %v2891
    %v2893 = vrot.slane %v2582, %v2892
    %v2894 = vlaneseq
    %v2895 = vshrl.u32 %v2894, 7
    %v2896 = vsub.s32 %v714, %v2895
    %v2897 = vrot.slane %v2585, %v2896
    %v2898 = vlaneseq
    %v2899 = vshrl.u32 %v2898, 7
    %v2900 = vsub.s32 %v714, %v2899
    %v2901 = vrot.slane %v2588, %v2900
    %v2902 = vlaneseq
    %v2903 = vshrl.u32 %v2902, 7
    %v2904 = vsub.s32 %v714, %v2903
    %v2905 = vrot.slane %v2591, %v2904
    %v2906 = vsel %vm747, %v2881, %v2877
    %v2907 = vsel %vm749, %v2885, %v2906
    %v2908 = vsel %vm751, %v2889, %v2907
    %v2909 = vsel %vm753, %v2893, %v2908
    %v2910 = vsel %vm755, %v2897, %v2909
    %v2911 = vsel %vm757, %v2901, %v2910
    %v2912 = vsel %vm759, %v2905, %v2911
    %v2914 = vsel %vm606, %v2129, 0
    %v2916 = vsel %vm606, %v2865, 0
    %2918 = vmatprep.subr.mxu0 0.0
    %2919 = vmatpush1.xpose.msra.mxu0 0.0
    %2920 = vmatprep.subr.mxu0 0.0
    %2921 = vmatpush1.xpose.msra.mxu0 0.0
    %2922 = vmatprep.subr.mxu0 0.0
    %2923 = vmatpush1.xpose.msra.mxu0 0.0
    %2924 = vmatprep.subr.mxu0 0.0
    %2925 = vmatpush1.xpose.msra.mxu0 0.0
    %2926 = vmatprep.subr.mxu0 0.0
    %2927 = vmatpush1.xpose.msra.mxu0 0.0
    %2928 = vmatprep.subr.mxu0 0.0
    %2929 = vmatpush1.xpose.msra.mxu0 0.0
    %2930 = vmatprep.subr.mxu0 0.0
    %2931 = vmatpush1.xpose.msra.mxu0 0.0
    %2932 = vmatprep.subr.mxu0 0.0
    %2933 = vmatpush1.xpose.msra.mxu0 0.0
    %2934 = vmatprep.subr.mxu0 0.0
    %2935 = vmatpush1.xpose.msra.mxu0 0.0
    %2936 = vmatprep.subr.mxu0 0.0
    %2937 = vmatpush1.xpose.msra.mxu0 0.0
    %2938 = vmatprep.subr.mxu0 0.0
    %2939 = vmatpush1.xpose.msra.mxu0 0.0
    %2940 = vmatprep.subr.mxu0 0.0
    %2941 = vmatpush1.xpose.msra.mxu0 0.0
    %2942 = vmatprep.subr.mxu0 0.0
    %2943 = vmatpush1.xpose.msra.mxu0 0.0
    %2944 = vmatprep.subr.mxu0 0.0
    %2945 = vmatpush1.xpose.msra.mxu0 0.0
    %2946 = vmatprep.subr.mxu0 0.0
    %2947 = vmatpush1.xpose.msra.mxu0 0.0
    %2948 = vmatprep.subr.mxu0 0.0
    %2949 = vmatpush1.xpose.msra.mxu0 %v2916
    %2950 = vmatprep.subr.mxu0 0.0
    %2951 = vmatpush2.xpose.msra.mxu0 0.0
    %2952 = vmatprep.subr.mxu0 0.0
    %2953 = vmatpush2.xpose.msra.mxu0 0.0
    %2954 = vmatprep.subr.mxu0 0.0
    %2955 = vmatpush2.xpose.msra.mxu0 0.0
    %2956 = vmatprep.subr.mxu0 0.0
    %2957 = vmatpush2.xpose.msra.mxu0 0.0
    %2958 = vmatprep.subr.mxu0 0.0
    %2959 = vmatpush2.xpose.msra.mxu0 0.0
    %2960 = vmatprep.subr.mxu0 0.0
    %2961 = vmatpush2.xpose.msra.mxu0 0.0
    %2962 = vmatprep.subr.mxu0 0.0
    %2963 = vmatpush2.xpose.msra.mxu0 0.0
    %2964 = vmatprep.subr.mxu0 0.0
    %2965 = vmatpush2.xpose.msra.mxu0 0.0
    %2966 = vmatprep.subr.mxu0 0.0
    %2967 = vmatpush2.xpose.msra.mxu0 0.0
    %2968 = vmatprep.subr.mxu0 0.0
    %2969 = vmatpush2.xpose.msra.mxu0 0.0
    %2970 = vmatprep.subr.mxu0 0.0
    %2971 = vmatpush2.xpose.msra.mxu0 0.0
    %2972 = vmatprep.subr.mxu0 0.0
    %2973 = vmatpush2.xpose.msra.mxu0 0.0
    %2974 = vmatprep.subr.mxu0 0.0
    %2975 = vmatpush2.xpose.msra.mxu0 0.0
    %2976 = vmatprep.subr.mxu0 0.0
    %2977 = vmatpush2.xpose.msra.mxu0 0.0
    %2978 = vmatprep.subr.mxu0 0.0
    %2979 = vmatpush2.xpose.msra.mxu0 0.0
    %2980 = vmatprep.subr.mxu0 0.0
    %2981 = vmatpush2.xpose.msra.mxu0 0.0
    %2982 = vmatprep.mubr.f32.mxu0 0.0
    %2983 = vmatmul.mubr.f32.gmra.mxu0 %v2914
    %v2984 = vpop.f32.mrf.mxu0
    %v2985 = vadd.f32 %v2912, %v2984
    %v2986 = vpop.f32.mrf.mxu0
    %2987 = vdwg.mxu0
    %2988 = vrot.lane.b32.xlu0 %v2131, 96
    %v2989 = vpop.permute.xlu0 %2988
    %v2998 = vlaneseq
    %v2999 = vshrl.u32 %v2998, 7
    %v3000 = vsub.s32 %v714, %v2999
    %v3001 = vrot.slane %v2594, %v3000
    %v3002 = vlaneseq
    %v3003 = vshrl.u32 %v3002, 7
    %v3004 = vsub.s32 %v714, %v3003
    %v3005 = vrot.slane %v2597, %v3004
    %v3006 = vlaneseq
    %v3007 = vshrl.u32 %v3006, 7
    %v3008 = vsub.s32 %v714, %v3007
    %v3009 = vrot.slane %v2600, %v3008
    %v3010 = vlaneseq
    %v3011 = vshrl.u32 %v3010, 7
    %v3012 = vsub.s32 %v714, %v3011
    %v3013 = vrot.slane %v2603, %v3012
    %v3014 = vlaneseq
    %v3015 = vshrl.u32 %v3014, 7
    %v3016 = vsub.s32 %v714, %v3015
    %v3017 = vrot.slane %v2606, %v3016
    %v3018 = vlaneseq
    %v3019 = vshrl.u32 %v3018, 7
    %v3020 = vsub.s32 %v714, %v3019
    %v3021 = vrot.slane %v2609, %v3020
    %v3022 = vlaneseq
    %v3023 = vshrl.u32 %v3022, 7
    %v3024 = vsub.s32 %v714, %v3023
    %v3025 = vrot.slane %v2612, %v3024
    %v3026 = vlaneseq
    %v3027 = vshrl.u32 %v3026, 7
    %v3028 = vsub.s32 %v714, %v3027
    %v3029 = vrot.slane %v2615, %v3028
    %v3030 = vsel %vm747, %v3005, %v3001
    %v3031 = vsel %vm749, %v3009, %v3030
    %v3032 = vsel %vm751, %v3013, %v3031
    %v3033 = vsel %vm753, %v3017, %v3032
    %v3034 = vsel %vm755, %v3021, %v3033
    %v3035 = vsel %vm757, %v3025, %v3034
    %v3036 = vsel %vm759, %v3029, %v3035
    %v3038 = vsel %vm606, %v2131, 0
    %v3040 = vsel %vm606, %v2989, 0
    %3042 = vmatprep.subr.mxu0 0.0
    %3043 = vmatpush1.xpose.msra.mxu0 0.0
    %3044 = vmatprep.subr.mxu0 0.0
    %3045 = vmatpush1.xpose.msra.mxu0 0.0
    %3046 = vmatprep.subr.mxu0 0.0
    %3047 = vmatpush1.xpose.msra.mxu0 0.0
    %3048 = vmatprep.subr.mxu0 0.0
    %3049 = vmatpush1.xpose.msra.mxu0 0.0
    %3050 = vmatprep.subr.mxu0 0.0
    %3051 = vmatpush1.xpose.msra.mxu0 0.0
    %3052 = vmatprep.subr.mxu0 0.0
    %3053 = vmatpush1.xpose.msra.mxu0 0.0
    %3054 = vmatprep.subr.mxu0 0.0
    %3055 = vmatpush1.xpose.msra.mxu0 0.0
    %3056 = vmatprep.subr.mxu0 0.0
    %3057 = vmatpush1.xpose.msra.mxu0 0.0
    %3058 = vmatprep.subr.mxu0 0.0
    %3059 = vmatpush1.xpose.msra.mxu0 0.0
    %3060 = vmatprep.subr.mxu0 0.0
    %3061 = vmatpush1.xpose.msra.mxu0 0.0
    %3062 = vmatprep.subr.mxu0 0.0
    %3063 = vmatpush1.xpose.msra.mxu0 0.0
    %3064 = vmatprep.subr.mxu0 0.0
    %3065 = vmatpush1.xpose.msra.mxu0 0.0
    %3066 = vmatprep.subr.mxu0 0.0
    %3067 = vmatpush1.xpose.msra.mxu0 0.0
    %3068 = vmatprep.subr.mxu0 0.0
    %3069 = vmatpush1.xpose.msra.mxu0 0.0
    %3070 = vmatprep.subr.mxu0 0.0
    %3071 = vmatpush1.xpose.msra.mxu0 0.0
    %3072 = vmatprep.subr.mxu0 0.0
    %3073 = vmatpush1.xpose.msra.mxu0 %v3040
    %3074 = vmatprep.subr.mxu0 0.0
    %3075 = vmatpush2.xpose.msra.mxu0 0.0
    %3076 = vmatprep.subr.mxu0 0.0
    %3077 = vmatpush2.xpose.msra.mxu0 0.0
    %3078 = vmatprep.subr.mxu0 0.0
    %3079 = vmatpush2.xpose.msra.mxu0 0.0
    %3080 = vmatprep.subr.mxu0 0.0
    %3081 = vmatpush2.xpose.msra.mxu0 0.0
    %3082 = vmatprep.subr.mxu0 0.0
    %3083 = vmatpush2.xpose.msra.mxu0 0.0
    %3084 = vmatprep.subr.mxu0 0.0
    %3085 = vmatpush2.xpose.msra.mxu0 0.0
    %3086 = vmatprep.subr.mxu0 0.0
    %3087 = vmatpush2.xpose.msra.mxu0 0.0
    %3088 = vmatprep.subr.mxu0 0.0
    %3089 = vmatpush2.xpose.msra.mxu0 0.0
    %3090 = vmatprep.subr.mxu0 0.0
    %3091 = vmatpush2.xpose.msra.mxu0 0.0
    %3092 = vmatprep.subr.mxu0 0.0
    %3093 = vmatpush2.xpose.msra.mxu0 0.0
    %3094 = vmatprep.subr.mxu0 0.0
    %3095 = vmatpush2.xpose.msra.mxu0 0.0
    %3096 = vmatprep.subr.mxu0 0.0
    %3097 = vmatpush2.xpose.msra.mxu0 0.0
    %3098 = vmatprep.subr.mxu0 0.0
    %3099 = vmatpush2.xpose.msra.mxu0 0.0
    %3100 = vmatprep.subr.mxu0 0.0
    %3101 = vmatpush2.xpose.msra.mxu0 0.0
    %3102 = vmatprep.subr.mxu0 0.0
    %3103 = vmatpush2.xpose.msra.mxu0 0.0
    %3104 = vmatprep.subr.mxu0 0.0
    %3105 = vmatpush2.xpose.msra.mxu0 0.0
    %3106 = vmatprep.mubr.f32.mxu0 0.0
    %3107 = vmatmul.mubr.f32.gmra.mxu0 %v3038
    %v3108 = vpop.f32.mrf.mxu0
    %v3109 = vadd.f32 %v3036, %v3108
    %v3110 = vpop.f32.mrf.mxu0
    %3111 = vdwg.mxu0
    %v3112 = vmul.f32 %v2737, 0.35355338
    %v3113 = vmul.f32 %v2861, 0.35355338
    %v3114 = vmul.f32 %v2985, 0.35355338
    %v3115 = vmul.f32 %v3109, 0.35355338
    %v3116 = vadd.f32 %v3112, %v104
    %v3117 = vadd.f32 %v3113, %v105
    %v3118 = vadd.f32 %v3114, %v106
    %v3119 = vadd.f32 %v3115, %v107
    %v3120 = vsel %vm606, %v3116, -inf
    %3121 = vmax.xlane.f32.xlu0 %v3120
    %v3122 = vpop.xlane.xlu0 %3121
    %v3123 = vsel %vm606, %v3117, -inf
    %3124 = vmax.xlane.f32.xlu0 %v3123
    %v3125 = vpop.xlane.xlu0 %3124
    %v3126 = vsel %vm606, %v3118, -inf
    %3127 = vmax.xlane.f32.xlu0 %v3126
    %v3128 = vpop.xlane.xlu0 %3127
    %v3129 = vsel %vm606, %v3119, -inf
    %3130 = vmax.xlane.f32.xlu0 %v3129
    %v3131 = vpop.xlane.xlu0 %3130
    %v3132 = vsub.f32 %v3116, %v3122
    %v3133 = vsub.f32 %v3117, %v3125
    %v3134 = vsub.f32 %v3118, %v3128
    %v3135 = vsub.f32 %v3119, %v3131
    %v3136 = vmul.f32 %v3132, 1.442695
    %v3137 = vpow.pop %v3136
    %v3138 = vmul.f32 %v3133, 1.442695
    %v3139 = vpow.pop %v3138
    %v3140 = vmul.f32 %v3134, 1.442695
    %v3141 = vpow.pop %v3140
    %v3142 = vmul.f32 %v3135, 1.442695
    %v3143 = vpow.pop %v3142
    %v3144 = vsel %vm606, %v3137, 0.0
    %3145 = vadd.xlane.f32.xlu0 %v3144
    %v3146 = vpop.xlane.xlu0 %3145
    %v3147 = vsel %vm606, %v3139, 0.0
    %3148 = vadd.xlane.f32.xlu0 %v3147
    %v3149 = vpop.xlane.xlu0 %3148
    %v3150 = vsel %vm606, %v3141, 0.0
    %3151 = vadd.xlane.f32.xlu0 %v3150
    %v3152 = vpop.xlane.xlu0 %3151
    %v3153 = vsel %vm606, %v3143, 0.0
    %3154 = vadd.xlane.f32.xlu0 %v3153
    %v3155 = vpop.xlane.xlu0 %3154
    %v3156 = vrcp.pop %v3146
    %v3157 = vrcp.pop %v3149
    %v3158 = vrcp.pop %v3152
    %v3159 = vrcp.pop %v3155
    %v3160 = vmul.f32 %v3137, %v3156
    %v3161 = vmul.f32 %v3139, %v3157
    %v3162 = vmul.f32 %v3141, %v3158
    %v3163 = vmul.f32 %v3143, %v3159
    %v3164 = vlaneseq
    %v3165 = vshrl.u32 %v3164, 7
    %v3166 = vsub.s32 0, %v3165
    %v3167 = vrot.slane %v3160, %v3166
    %3169 = vbcast.lane.b32.xlu0 %v3167, 256
    %v3170 = vpop.permute.xlu0 %3169
    %v3171 = vlaneseq
    %v3172 = vshrl.u32 %v3171, 7
    %v3173 = vsub.s32 1, %v3172
    %v3174 = vrot.slane %v3160, %v3173
    %3176 = vbcast.lane.b32.xlu0 %v3174, 256
    %v3177 = vpop.permute.xlu0 %3176
    %v3178 = vlaneseq
    %v3179 = vshrl.u32 %v3178, 7
    %v3180 = vsub.s32 2, %v3179
    %v3181 = vrot.slane %v3160, %v3180
    %3183 = vbcast.lane.b32.xlu0 %v3181, 256
    %v3184 = vpop.permute.xlu0 %3183
    %v3185 = vlaneseq
    %v3186 = vshrl.u32 %v3185, 7
    %v3187 = vsub.s32 3, %v3186
    %v3188 = vrot.slane %v3160, %v3187
    %3190 = vbcast.lane.b32.xlu0 %v3188, 256
    %v3191 = vpop.permute.xlu0 %3190
    %v3192 = vlaneseq
    %v3193 = vshrl.u32 %v3192, 7
    %v3194 = vsub.s32 4, %v3193
    %v3195 = vrot.slane %v3160, %v3194
    %3197 = vbcast.lane.b32.xlu0 %v3195, 256
    %v3198 = vpop.permute.xlu0 %3197
    %v3199 = vlaneseq
    %v3200 = vshrl.u32 %v3199, 7
    %v3201 = vsub.s32 5, %v3200
    %v3202 = vrot.slane %v3160, %v3201
    %3204 = vbcast.lane.b32.xlu0 %v3202, 256
    %v3205 = vpop.permute.xlu0 %3204
    %v3206 = vlaneseq
    %v3207 = vshrl.u32 %v3206, 7
    %v3208 = vsub.s32 6, %v3207
    %v3209 = vrot.slane %v3160, %v3208
    %3211 = vbcast.lane.b32.xlu0 %v3209, 256
    %v3212 = vpop.permute.xlu0 %3211
    %v3213 = vlaneseq
    %v3214 = vshrl.u32 %v3213, 7
    %v3215 = vsub.s32 7, %v3214
    %v3216 = vrot.slane %v3160, %v3215
    %3218 = vbcast.lane.b32.xlu0 %v3216, 256
    %v3219 = vpop.permute.xlu0 %3218
    %v3220 = vlaneseq
    %v3221 = vshrl.u32 %v3220, 7
    %v3222 = vsub.s32 0, %v3221
    %v3223 = vrot.slane %v3161, %v3222
    %3225 = vbcast.lane.b32.xlu0 %v3223, 256
    %v3226 = vpop.permute.xlu0 %3225
    %v3227 = vlaneseq
    %v3228 = vshrl.u32 %v3227, 7
    %v3229 = vsub.s32 1, %v3228
    %v3230 = vrot.slane %v3161, %v3229
    %3232 = vbcast.lane.b32.xlu0 %v3230, 256
    %v3233 = vpop.permute.xlu0 %3232
    %v3234 = vlaneseq
    %v3235 = vshrl.u32 %v3234, 7
    %v3236 = vsub.s32 2, %v3235
    %v3237 = vrot.slane %v3161, %v3236
    %3239 = vbcast.lane.b32.xlu0 %v3237, 256
    %v3240 = vpop.permute.xlu0 %3239
    %v3241 = vlaneseq
    %v3242 = vshrl.u32 %v3241, 7
    %v3243 = vsub.s32 3, %v3242
    %v3244 = vrot.slane %v3161, %v3243
    %3246 = vbcast.lane.b32.xlu0 %v3244, 256
    %v3247 = vpop.permute.xlu0 %3246
    %v3248 = vlaneseq
    %v3249 = vshrl.u32 %v3248, 7
    %v3250 = vsub.s32 4, %v3249
    %v3251 = vrot.slane %v3161, %v3250
    %3253 = vbcast.lane.b32.xlu0 %v3251, 256
    %v3254 = vpop.permute.xlu0 %3253
    %v3255 = vlaneseq
    %v3256 = vshrl.u32 %v3255, 7
    %v3257 = vsub.s32 5, %v3256
    %v3258 = vrot.slane %v3161, %v3257
    %3260 = vbcast.lane.b32.xlu0 %v3258, 256
    %v3261 = vpop.permute.xlu0 %3260
    %v3262 = vlaneseq
    %v3263 = vshrl.u32 %v3262, 7
    %v3264 = vsub.s32 6, %v3263
    %v3265 = vrot.slane %v3161, %v3264
    %3267 = vbcast.lane.b32.xlu0 %v3265, 256
    %v3268 = vpop.permute.xlu0 %3267
    %v3269 = vlaneseq
    %v3270 = vshrl.u32 %v3269, 7
    %v3271 = vsub.s32 7, %v3270
    %v3272 = vrot.slane %v3161, %v3271
    %3274 = vbcast.lane.b32.xlu0 %v3272, 256
    %v3275 = vpop.permute.xlu0 %3274
    %v3276 = vlaneseq
    %v3277 = vshrl.u32 %v3276, 7
    %v3278 = vsub.s32 0, %v3277
    %v3279 = vrot.slane %v3162, %v3278
    %3281 = vbcast.lane.b32.xlu0 %v3279, 256
    %v3282 = vpop.permute.xlu0 %3281
    %v3283 = vlaneseq
    %v3284 = vshrl.u32 %v3283, 7
    %v3285 = vsub.s32 1, %v3284
    %v3286 = vrot.slane %v3162, %v3285
    %3288 = vbcast.lane.b32.xlu0 %v3286, 256
    %v3289 = vpop.permute.xlu0 %3288
    %v3290 = vlaneseq
    %v3291 = vshrl.u32 %v3290, 7
    %v3292 = vsub.s32 2, %v3291
    %v3293 = vrot.slane %v3162, %v3292
    %3295 = vbcast.lane.b32.xlu0 %v3293, 256
    %v3296 = vpop.permute.xlu0 %3295
    %v3297 = vlaneseq
    %v3298 = vshrl.u32 %v3297, 7
    %v3299 = vsub.s32 3, %v3298
    %v3300 = vrot.slane %v3162, %v3299
    %3302 = vbcast.lane.b32.xlu0 %v3300, 256
    %v3303 = vpop.permute.xlu0 %3302
    %v3304 = vlaneseq
    %v3305 = vshrl.u32 %v3304, 7
    %v3306 = vsub.s32 4, %v3305
    %v3307 = vrot.slane %v3162, %v3306
    %3309 = vbcast.lane.b32.xlu0 %v3307, 256
    %v3310 = vpop.permute.xlu0 %3309
    %v3311 = vlaneseq
    %v3312 = vshrl.u32 %v3311, 7
    %v3313 = vsub.s32 5, %v3312
    %v3314 = vrot.slane %v3162, %v3313
    %3316 = vbcast.lane.b32.xlu0 %v3314, 256
    %v3317 = vpop.permute.xlu0 %3316
    %v3318 = vlaneseq
    %v3319 = vshrl.u32 %v3318, 7
    %v3320 = vsub.s32 6, %v3319
    %v3321 = vrot.slane %v3162, %v3320
    %3323 = vbcast.lane.b32.xlu0 %v3321, 256
    %v3324 = vpop.permute.xlu0 %3323
    %v3325 = vlaneseq
    %v3326 = vshrl.u32 %v3325, 7
    %v3327 = vsub.s32 7, %v3326
    %v3328 = vrot.slane %v3162, %v3327
    %3330 = vbcast.lane.b32.xlu0 %v3328, 256
    %v3331 = vpop.permute.xlu0 %3330
    %v3332 = vlaneseq
    %v3333 = vshrl.u32 %v3332, 7
    %v3334 = vsub.s32 0, %v3333
    %v3335 = vrot.slane %v3163, %v3334
    %3337 = vbcast.lane.b32.xlu0 %v3335, 256
    %v3338 = vpop.permute.xlu0 %3337
    %v3339 = vlaneseq
    %v3340 = vshrl.u32 %v3339, 7
    %v3341 = vsub.s32 1, %v3340
    %v3342 = vrot.slane %v3163, %v3341
    %3344 = vbcast.lane.b32.xlu0 %v3342, 256
    %v3345 = vpop.permute.xlu0 %3344
    %v3346 = vlaneseq
    %v3347 = vshrl.u32 %v3346, 7
    %v3348 = vsub.s32 2, %v3347
    %v3349 = vrot.slane %v3163, %v3348
    %3351 = vbcast.lane.b32.xlu0 %v3349, 256
    %v3352 = vpop.permute.xlu0 %3351
    %v3353 = vlaneseq
    %v3354 = vshrl.u32 %v3353, 7
    %v3355 = vsub.s32 3, %v3354
    %v3356 = vrot.slane %v3163, %v3355
    %3358 = vbcast.lane.b32.xlu0 %v3356, 256
    %v3359 = vpop.permute.xlu0 %3358
    %v3360 = vlaneseq
    %v3361 = vshrl.u32 %v3360, 7
    %v3362 = vsub.s32 4, %v3361
    %v3363 = vrot.slane %v3163, %v3362
    %3365 = vbcast.lane.b32.xlu0 %v3363, 256
    %v3366 = vpop.permute.xlu0 %3365
    %v3367 = vlaneseq
    %v3368 = vshrl.u32 %v3367, 7
    %v3369 = vsub.s32 5, %v3368
    %v3370 = vrot.slane %v3163, %v3369
    %3372 = vbcast.lane.b32.xlu0 %v3370, 256
    %v3373 = vpop.permute.xlu0 %3372
    %v3374 = vlaneseq
    %v3375 = vshrl.u32 %v3374, 7
    %v3376 = vsub.s32 6, %v3375
    %v3377 = vrot.slane %v3163, %v3376
    %3379 = vbcast.lane.b32.xlu0 %v3377, 256
    %v3380 = vpop.permute.xlu0 %3379
    %v3381 = vlaneseq
    %v3382 = vshrl.u32 %v3381, 7
    %v3383 = vsub.s32 7, %v3382
    %v3384 = vrot.slane %v3163, %v3383
    %3386 = vbcast.lane.b32.xlu0 %v3384, 256
    %v3387 = vpop.permute.xlu0 %3386
    %v3388 = vmul.f32 %v3170, %v92
    %v3389 = vmul.f32 %v3177, %v93
    %v3390 = vmul.f32 %v3184, %v94
    %v3391 = vmul.f32 %v3191, %v95
    %v3392 = vmul.f32 %v3198, %v96
    %v3393 = vmul.f32 %v3205, %v97
    %v3394 = vmul.f32 %v3212, %v98
    %v3395 = vmul.f32 %v3219, %v99
    %v3396 = vmul.f32 %v3226, %v92
    %v3397 = vmul.f32 %v3233, %v93
    %v3398 = vmul.f32 %v3240, %v94
    %v3399 = vmul.f32 %v3247, %v95
    %v3400 = vmul.f32 %v3254, %v96
    %v3401 = vmul.f32 %v3261, %v97
    %v3402 = vmul.f32 %v3268, %v98
    %v3403 = vmul.f32 %v3275, %v99
    %v3404 = vmul.f32 %v3282, %v92
    %v3405 = vmul.f32 %v3289, %v93
    %v3406 = vmul.f32 %v3296, %v94
    %v3407 = vmul.f32 %v3303, %v95
    %v3408 = vmul.f32 %v3310, %v96
    %v3409 = vmul.f32 %v3317, %v97
    %v3410 = vmul.f32 %v3324, %v98
    %v3411 = vmul.f32 %v3331, %v99
    %v3412 = vmul.f32 %v3338, %v92
    %v3413 = vmul.f32 %v3345, %v93
    %v3414 = vmul.f32 %v3352, %v94
    %v3415 = vmul.f32 %v3359, %v95
    %v3416 = vmul.f32 %v3366, %v96
    %v3417 = vmul.f32 %v3373, %v97
    %v3418 = vmul.f32 %v3380, %v98
    %v3419 = vmul.f32 %v3387, %v99
    %v3420 = vsel %vm606, %v3388, 0.0
    %v3421 = vrot.slane %v3420, 4
    %v3422 = vadd.f32 %v3420, %v3421
    %v3423 = vrot.slane %v3422, 2
    %v3424 = vadd.f32 %v3422, %v3423
    %v3425 = vrot.slane %v3424, 1
    %v3426 = vadd.f32 %v3424, %v3425
    %v3427 = vsel %vm606, %v3389, 0.0
    %v3428 = vrot.slane %v3427, 4
    %v3429 = vadd.f32 %v3427, %v3428
    %v3430 = vrot.slane %v3429, 2
    %v3431 = vadd.f32 %v3429, %v3430
    %v3432 = vrot.slane %v3431, 1
    %v3433 = vadd.f32 %v3431, %v3432
    %v3434 = vsel %vm606, %v3390, 0.0
    %v3435 = vrot.slane %v3434, 4
    %v3436 = vadd.f32 %v3434, %v3435
    %v3437 = vrot.slane %v3436, 2
    %v3438 = vadd.f32 %v3436, %v3437
    %v3439 = vrot.slane %v3438, 1
    %v3440 = vadd.f32 %v3438, %v3439
    %v3441 = vsel %vm606, %v3391, 0.0
    %v3442 = vrot.slane %v3441, 4
    %v3443 = vadd.f32 %v3441, %v3442
    %v3444 = vrot.slane %v3443, 2
    %v3445 = vadd.f32 %v3443, %v3444
    %v3446 = vrot.slane %v3445, 1
    %v3447 = vadd.f32 %v3445, %v3446
    %v3448 = vsel %vm606, %v3392, 0.0
    %v3449 = vrot.slane %v3448, 4
    %v3450 = vadd.f32 %v3448, %v3449
    %v3451 = vrot.slane %v3450, 2
    %v3452 = vadd.f32 %v3450, %v3451
    %v3453 = vrot.slane %v3452, 1
    %v3454 = vadd.f32 %v3452, %v3453
    %v3455 = vsel %vm606, %v3393, 0.0
    %v3456 = vrot.slane %v3455, 4
    %v3457 = vadd.f32 %v3455, %v3456
    %v3458 = vrot.slane %v3457, 2
    %v3459 = vadd.f32 %v3457, %v3458
    %v3460 = vrot.slane %v3459, 1
    %v3461 = vadd.f32 %v3459, %v3460
    %v3462 = vsel %vm606, %v3394, 0.0
    %v3463 = vrot.slane %v3462, 4
    %v3464 = vadd.f32 %v3462, %v3463
    %v3465 = vrot.slane %v3464, 2
    %v3466 = vadd.f32 %v3464, %v3465
    %v3467 = vrot.slane %v3466, 1
    %v3468 = vadd.f32 %v3466, %v3467
    %v3469 = vsel %vm606, %v3395, 0.0
    %v3470 = vrot.slane %v3469, 4
    %v3471 = vadd.f32 %v3469, %v3470
    %v3472 = vrot.slane %v3471, 2
    %v3473 = vadd.f32 %v3471, %v3472
    %v3474 = vrot.slane %v3473, 1
    %v3475 = vadd.f32 %v3473, %v3474
    %v3476 = vsel %vm606, %v3396, 0.0
    %v3477 = vrot.slane %v3476, 4
    %v3478 = vadd.f32 %v3476, %v3477
    %v3479 = vrot.slane %v3478, 2
    %v3480 = vadd.f32 %v3478, %v3479
    %v3481 = vrot.slane %v3480, 1
    %v3482 = vadd.f32 %v3480, %v3481
    %v3483 = vsel %vm606, %v3397, 0.0
    %v3484 = vrot.slane %v3483, 4
    %v3485 = vadd.f32 %v3483, %v3484
    %v3486 = vrot.slane %v3485, 2
    %v3487 = vadd.f32 %v3485, %v3486
    %v3488 = vrot.slane %v3487, 1
    %v3489 = vadd.f32 %v3487, %v3488
    %v3490 = vsel %vm606, %v3398, 0.0
    %v3491 = vrot.slane %v3490, 4
    %v3492 = vadd.f32 %v3490, %v3491
    %v3493 = vrot.slane %v3492, 2
    %v3494 = vadd.f32 %v3492, %v3493
    %v3495 = vrot.slane %v3494, 1
    %v3496 = vadd.f32 %v3494, %v3495
    %v3497 = vsel %vm606, %v3399, 0.0
    %v3498 = vrot.slane %v3497, 4
    %v3499 = vadd.f32 %v3497, %v3498
    %v3500 = vrot.slane %v3499, 2
    %v3501 = vadd.f32 %v3499, %v3500
    %v3502 = vrot.slane %v3501, 1
    %v3503 = vadd.f32 %v3501, %v3502
    %v3504 = vsel %vm606, %v3400, 0.0
    %v3505 = vrot.slane %v3504, 4
    %v3506 = vadd.f32 %v3504, %v3505
    %v3507 = vrot.slane %v3506, 2
    %v3508 = vadd.f32 %v3506, %v3507
    %v3509 = vrot.slane %v3508, 1
    %v3510 = vadd.f32 %v3508, %v3509
    %v3511 = vsel %vm606, %v3401, 0.0
    %v3512 = vrot.slane %v3511, 4
    %v3513 = vadd.f32 %v3511, %v3512
    %v3514 = vrot.slane %v3513, 2
    %v3515 = vadd.f32 %v3513, %v3514
    %v3516 = vrot.slane %v3515, 1
    %v3517 = vadd.f32 %v3515, %v3516
    %v3518 = vsel %vm606, %v3402, 0.0
    %v3519 = vrot.slane %v3518, 4
    %v3520 = vadd.f32 %v3518, %v3519
    %v3521 = vrot.slane %v3520, 2
    %v3522 = vadd.f32 %v3520, %v3521
    %v3523 = vrot.slane %v3522, 1
    %v3524 = vadd.f32 %v3522, %v3523
    %v3525 = vsel %vm606, %v3403, 0.0
    %v3526 = vrot.slane %v3525, 4
    %v3527 = vadd.f32 %v3525, %v3526
    %v3528 = vrot.slane %v3527, 2
    %v3529 = vadd.f32 %v3527, %v3528
    %v3530 = vrot.slane %v3529, 1
    %v3531 = vadd.f32 %v3529, %v3530
    %v3532 = vsel %vm606, %v3404, 0.0
    %v3533 = vrot.slane %v3532, 4
    %v3534 = vadd.f32 %v3532, %v3533
    %v3535 = vrot.slane %v3534, 2
    %v3536 = vadd.f32 %v3534, %v3535
    %v3537 = vrot.slane %v3536, 1
    %v3538 = vadd.f32 %v3536, %v3537
    %v3539 = vsel %vm606, %v3405, 0.0
    %v3540 = vrot.slane %v3539, 4
    %v3541 = vadd.f32 %v3539, %v3540
    %v3542 = vrot.slane %v3541, 2
    %v3543 = vadd.f32 %v3541, %v3542
    %v3544 = vrot.slane %v3543, 1
    %v3545 = vadd.f32 %v3543, %v3544
    %v3546 = vsel %vm606, %v3406, 0.0
    %v3547 = vrot.slane %v3546, 4
    %v3548 = vadd.f32 %v3546, %v3547
    %v3549 = vrot.slane %v3548, 2
    %v3550 = vadd.f32 %v3548, %v3549
    %v3551 = vrot.slane %v3550, 1
    %v3552 = vadd.f32 %v3550, %v3551
    %v3553 = vsel %vm606, %v3407, 0.0
    %v3554 = vrot.slane %v3553, 4
    %v3555 = vadd.f32 %v3553, %v3554
    %v3556 = vrot.slane %v3555, 2
    %v3557 = vadd.f32 %v3555, %v3556
    %v3558 = vrot.slane %v3557, 1
    %v3559 = vadd.f32 %v3557, %v3558
    %v3560 = vsel %vm606, %v3408, 0.0
    %v3561 = vrot.slane %v3560, 4
    %v3562 = vadd.f32 %v3560, %v3561
    %v3563 = vrot.slane %v3562, 2
    %v3564 = vadd.f32 %v3562, %v3563
    %v3565 = vrot.slane %v3564, 1
    %v3566 = vadd.f32 %v3564, %v3565
    %v3567 = vsel %vm606, %v3409, 0.0
    %v3568 = vrot.slane %v3567, 4
    %v3569 = vadd.f32 %v3567, %v3568
    %v3570 = vrot.slane %v3569, 2
    %v3571 = vadd.f32 %v3569, %v3570
    %v3572 = vrot.slane %v3571, 1
    %v3573 = vadd.f32 %v3571, %v3572
    %v3574 = vsel %vm606, %v3410, 0.0
    %v3575 = vrot.slane %v3574, 4
    %v3576 = vadd.f32 %v3574, %v3575
    %v3577 = vrot.slane %v3576, 2
    %v3578 = vadd.f32 %v3576, %v3577
    %v3579 = vrot.slane %v3578, 1
    %v3580 = vadd.f32 %v3578, %v3579
    %v3581 = vsel %vm606, %v3411, 0.0
    %v3582 = vrot.slane %v3581, 4
    %v3583 = vadd.f32 %v3581, %v3582
    %v3584 = vrot.slane %v3583, 2
    %v3585 = vadd.f32 %v3583, %v3584
    %v3586 = vrot.slane %v3585, 1
    %v3587 = vadd.f32 %v3585, %v3586
    %v3588 = vsel %vm606, %v3412, 0.0
    %v3589 = vrot.slane %v3588, 4
    %v3590 = vadd.f32 %v3588, %v3589
    %v3591 = vrot.slane %v3590, 2
    %v3592 = vadd.f32 %v3590, %v3591
    %v3593 = vrot.slane %v3592, 1
    %v3594 = vadd.f32 %v3592, %v3593
    %v3595 = vsel %vm606, %v3413, 0.0
    %v3596 = vrot.slane %v3595, 4
    %v3597 = vadd.f32 %v3595, %v3596
    %v3598 = vrot.slane %v3597, 2
    %v3599 = vadd.f32 %v3597, %v3598
    %v3600 = vrot.slane %v3599, 1
    %v3601 = vadd.f32 %v3599, %v3600
    %v3602 = vsel %vm606, %v3414, 0.0
    %v3603 = vrot.slane %v3602, 4
    %v3604 = vadd.f32 %v3602, %v3603
    %v3605 = vrot.slane %v3604, 2
    %v3606 = vadd.f32 %v3604, %v3605
    %v3607 = vrot.slane %v3606, 1
    %v3608 = vadd.f32 %v3606, %v3607
    %v3609 = vsel %vm606, %v3415, 0.0
    %v3610 = vrot.slane %v3609, 4
    %v3611 = vadd.f32 %v3609, %v3610
    %v3612 = vrot.slane %v3611, 2
    %v3613 = vadd.f32 %v3611, %v3612
    %v3614 = vrot.slane %v3613, 1
    %v3615 = vadd.f32 %v3613, %v3614
    %v3616 = vsel %vm606, %v3416, 0.0
    %v3617 = vrot.slane %v3616, 4
    %v3618 = vadd.f32 %v3616, %v3617
    %v3619 = vrot.slane %v3618, 2
    %v3620 = vadd.f32 %v3618, %v3619
    %v3621 = vrot.slane %v3620, 1
    %v3622 = vadd.f32 %v3620, %v3621
    %v3623 = vsel %vm606, %v3417, 0.0
    %v3624 = vrot.slane %v3623, 4
    %v3625 = vadd.f32 %v3623, %v3624
    %v3626 = vrot.slane %v3625, 2
    %v3627 = vadd.f32 %v3625, %v3626
    %v3628 = vrot.slane %v3627, 1
    %v3629 = vadd.f32 %v3627, %v3628
    %v3630 = vsel %vm606, %v3418, 0.0
    %v3631 = vrot.slane %v3630, 4
    %v3632 = vadd.f32 %v3630, %v3631
    %v3633 = vrot.slane %v3632, 2
    %v3634 = vadd.f32 %v3632, %v3633
    %v3635 = vrot.slane %v3634, 1
    %v3636 = vadd.f32 %v3634, %v3635
    %v3637 = vsel %vm606, %v3419, 0.0
    %v3638 = vrot.slane %v3637, 4
    %v3639 = vadd.f32 %v3637, %v3638
    %v3640 = vrot.slane %v3639, 2
    %v3641 = vadd.f32 %v3639, %v3640
    %v3642 = vrot.slane %v3641, 1
    %v3643 = vadd.f32 %v3641, %v3642
    %3644 = vrot.lane.b32.xlu0 %v208, 64
    %v3645 = vpop.permute.xlu0 %3644
    %v3655 = vsel %vm747, %v3433, %v3426
    %v3656 = vsel %vm749, %v3440, %v3655
    %v3657 = vsel %vm751, %v3447, %v3656
    %v3658 = vsel %vm753, %v3454, %v3657
    %v3659 = vsel %vm755, %v3461, %v3658
    %v3660 = vsel %vm757, %v3468, %v3659
    %v3661 = vsel %vm759, %v3475, %v3660
    %v3664 = vsel %vm606, %v3160, 0
    %3666 = vmatprep.subr.mxu0 0.0
    %3667 = vmatpush1.msra.mxu0 0.0
    %3668 = vmatprep.subr.mxu0 0.0
    %3669 = vmatpush1.msra.mxu0 0.0
    %3670 = vmatprep.subr.mxu0 0.0
    %3671 = vmatpush1.msra.mxu0 0.0
    %3672 = vmatprep.subr.mxu0 0.0
    %3673 = vmatpush1.msra.mxu0 0.0
    %3674 = vmatprep.subr.mxu0 0.0
    %3675 = vmatpush1.msra.mxu0 0.0
    %3676 = vmatprep.subr.mxu0 0.0
    %3677 = vmatpush1.msra.mxu0 0.0
    %3678 = vmatprep.subr.mxu0 0.0
    %3679 = vmatpush1.msra.mxu0 0.0
    %3680 = vmatprep.subr.mxu0 0.0
    %3681 = vmatpush1.msra.mxu0 0.0
    %3682 = vmatprep.subr.mxu0 0.0
    %3683 = vmatpush1.msra.mxu0 0.0
    %3684 = vmatprep.subr.mxu0 0.0
    %3685 = vmatpush1.msra.mxu0 0.0
    %3686 = vmatprep.subr.mxu0 0.0
    %3687 = vmatpush1.msra.mxu0 0.0
    %3688 = vmatprep.subr.mxu0 0.0
    %3689 = vmatpush1.msra.mxu0 0.0
    %3690 = vmatprep.subr.mxu0 0.0
    %3691 = vmatpush1.msra.mxu0 0.0
    %3692 = vmatprep.subr.mxu0 0.0
    %3693 = vmatpush1.msra.mxu0 0.0
    %3694 = vmatprep.subr.mxu0 0.0
    %3695 = vmatpush1.msra.mxu0 0.0
    %3696 = vmatprep.subr.mxu0 0.0
    %3697 = vmatpush1.msra.mxu0 %v3645
    %3698 = vmatprep.subr.mxu0 0.0
    %3699 = vmatpush2.msra.mxu0 0.0
    %3700 = vmatprep.subr.mxu0 0.0
    %3701 = vmatpush2.msra.mxu0 0.0
    %3702 = vmatprep.subr.mxu0 0.0
    %3703 = vmatpush2.msra.mxu0 0.0
    %3704 = vmatprep.subr.mxu0 0.0
    %3705 = vmatpush2.msra.mxu0 0.0
    %3706 = vmatprep.subr.mxu0 0.0
    %3707 = vmatpush2.msra.mxu0 0.0
    %3708 = vmatprep.subr.mxu0 0.0
    %3709 = vmatpush2.msra.mxu0 0.0
    %3710 = vmatprep.subr.mxu0 0.0
    %3711 = vmatpush2.msra.mxu0 0.0
    %3712 = vmatprep.subr.mxu0 0.0
    %3713 = vmatpush2.msra.mxu0 0.0
    %3714 = vmatprep.subr.mxu0 0.0
    %3715 = vmatpush2.msra.mxu0 0.0
    %3716 = vmatprep.subr.mxu0 0.0
    %3717 = vmatpush2.msra.mxu0 0.0
    %3718 = vmatprep.subr.mxu0 0.0
    %3719 = vmatpush2.msra.mxu0 0.0
    %3720 = vmatprep.subr.mxu0 0.0
    %3721 = vmatpush2.msra.mxu0 0.0
    %3722 = vmatprep.subr.mxu0 0.0
    %3723 = vmatpush2.msra.mxu0 0.0
    %3724 = vmatprep.subr.mxu0 0.0
    %3725 = vmatpush2.msra.mxu0 0.0
    %3726 = vmatprep.subr.mxu0 0.0
    %3727 = vmatpush2.msra.mxu0 0.0
    %3728 = vmatprep.subr.mxu0 0.0
    %3729 = vmatpush2.msra.mxu0 0.0
    %3730 = vmatprep.mubr.f32.mxu0 0.0
    %3731 = vmatmul.mubr.f32.gmra.mxu0 %v3664
    %v3732 = vpop.f32.mrf.mxu0
    %v3733 = vadd.f32 %v3661, %v3732
    %v3734 = vpop.f32.mrf.mxu0
    %3735 = vdwg.mxu0
    %3736 = vrot.lane.b32.xlu0 %v2127, 64
    %v3737 = vpop.permute.xlu0 %3736
    %v3747 = vsel %vm747, %v3489, %v3482
    %v3748 = vsel %vm749, %v3496, %v3747
    %v3749 = vsel %vm751, %v3503, %v3748
    %v3750 = vsel %vm753, %v3510, %v3749
    %v3751 = vsel %vm755, %v3517, %v3750
    %v3752 = vsel %vm757, %v3524, %v3751
    %v3753 = vsel %vm759, %v3531, %v3752
    %v3756 = vsel %vm606, %v3161, 0
    %3758 = vmatprep.subr.mxu0 0.0
    %3759 = vmatpush1.msra.mxu0 0.0
    %3760 = vmatprep.subr.mxu0 0.0
    %3761 = vmatpush1.msra.mxu0 0.0
    %3762 = vmatprep.subr.mxu0 0.0
    %3763 = vmatpush1.msra.mxu0 0.0
    %3764 = vmatprep.subr.mxu0 0.0
    %3765 = vmatpush1.msra.mxu0 0.0
    %3766 = vmatprep.subr.mxu0 0.0
    %3767 = vmatpush1.msra.mxu0 0.0
    %3768 = vmatprep.subr.mxu0 0.0
    %3769 = vmatpush1.msra.mxu0 0.0
    %3770 = vmatprep.subr.mxu0 0.0
    %3771 = vmatpush1.msra.mxu0 0.0
    %3772 = vmatprep.subr.mxu0 0.0
    %3773 = vmatpush1.msra.mxu0 0.0
    %3774 = vmatprep.subr.mxu0 0.0
    %3775 = vmatpush1.msra.mxu0 0.0
    %3776 = vmatprep.subr.mxu0 0.0
    %3777 = vmatpush1.msra.mxu0 0.0
    %3778 = vmatprep.subr.mxu0 0.0
    %3779 = vmatpush1.msra.mxu0 0.0
    %3780 = vmatprep.subr.mxu0 0.0
    %3781 = vmatpush1.msra.mxu0 0.0
    %3782 = vmatprep.subr.mxu0 0.0
    %3783 = vmatpush1.msra.mxu0 0.0
    %3784 = vmatprep.subr.mxu0 0.0
    %3785 = vmatpush1.msra.mxu0 0.0
    %3786 = vmatprep.subr.mxu0 0.0
    %3787 = vmatpush1.msra.mxu0 0.0
    %3788 = vmatprep.subr.mxu0 0.0
    %3789 = vmatpush1.msra.mxu0 %v3737
    %3790 = vmatprep.subr.mxu0 0.0
    %3791 = vmatpush2.msra.mxu0 0.0
    %3792 = vmatprep.subr.mxu0 0.0
    %3793 = vmatpush2.msra.mxu0 0.0
    %3794 = vmatprep.subr.mxu0 0.0
    %3795 = vmatpush2.msra.mxu0 0.0
    %3796 = vmatprep.subr.mxu0 0.0
    %3797 = vmatpush2.msra.mxu0 0.0
    %3798 = vmatprep.subr.mxu0 0.0
    %3799 = vmatpush2.msra.mxu0 0.0
    %3800 = vmatprep.subr.mxu0 0.0
    %3801 = vmatpush2.msra.mxu0 0.0
    %3802 = vmatprep.subr.mxu0 0.0
    %3803 = vmatpush2.msra.mxu0 0.0
    %3804 = vmatprep.subr.mxu0 0.0
    %3805 = vmatpush2.msra.mxu0 0.0
    %3806 = vmatprep.subr.mxu0 0.0
    %3807 = vmatpush2.msra.mxu0 0.0
    %3808 = vmatprep.subr.mxu0 0.0
    %3809 = vmatpush2.msra.mxu0 0.0
    %3810 = vmatprep.subr.mxu0 0.0
    %3811 = vmatpush2.msra.mxu0 0.0
    %3812 = vmatprep.subr.mxu0 0.0
    %3813 = vmatpush2.msra.mxu0 0.0
    %3814 = vmatprep.subr.mxu0 0.0
    %3815 = vmatpush2.msra.mxu0 0.0
    %3816 = vmatprep.subr.mxu0 0.0
    %3817 = vmatpush2.msra.mxu0 0.0
    %3818 = vmatprep.subr.mxu0 0.0
    %3819 = vmatpush2.msra.mxu0 0.0
    %3820 = vmatprep.subr.mxu0 0.0
    %3821 = vmatpush2.msra.mxu0 0.0
    %3822 = vmatprep.mubr.f32.mxu0 0.0
    %3823 = vmatmul.mubr.f32.gmra.mxu0 %v3756
    %v3824 = vpop.f32.mrf.mxu0
    %v3825 = vadd.f32 %v3753, %v3824
    %v3826 = vpop.f32.mrf.mxu0
    %3827 = vdwg.mxu0
    %3828 = vrot.lane.b32.xlu0 %v2129, 64
    %v3829 = vpop.permute.xlu0 %3828
    %v3839 = vsel %vm747, %v3545, %v3538
    %v3840 = vsel %vm749, %v3552, %v3839
    %v3841 = vsel %vm751, %v3559, %v3840
    %v3842 = vsel %vm753, %v3566, %v3841
    %v3843 = vsel %vm755, %v3573, %v3842
    %v3844 = vsel %vm757, %v3580, %v3843
    %v3845 = vsel %vm759, %v3587, %v3844
    %v3848 = vsel %vm606, %v3162, 0
    %3850 = vmatprep.subr.mxu0 0.0
    %3851 = vmatpush1.msra.mxu0 0.0
    %3852 = vmatprep.subr.mxu0 0.0
    %3853 = vmatpush1.msra.mxu0 0.0
    %3854 = vmatprep.subr.mxu0 0.0
    %3855 = vmatpush1.msra.mxu0 0.0
    %3856 = vmatprep.subr.mxu0 0.0
    %3857 = vmatpush1.msra.mxu0 0.0
    %3858 = vmatprep.subr.mxu0 0.0
    %3859 = vmatpush1.msra.mxu0 0.0
    %3860 = vmatprep.subr.mxu0 0.0
    %3861 = vmatpush1.msra.mxu0 0.0
    %3862 = vmatprep.subr.mxu0 0.0
    %3863 = vmatpush1.msra.mxu0 0.0
    %3864 = vmatprep.subr.mxu0 0.0
    %3865 = vmatpush1.msra.mxu0 0.0
    %3866 = vmatprep.subr.mxu0 0.0
    %3867 = vmatpush1.msra.mxu0 0.0
    %3868 = vmatprep.subr.mxu0 0.0
    %3869 = vmatpush1.msra.mxu0 0.0
    %3870 = vmatprep.subr.mxu0 0.0
    %3871 = vmatpush1.msra.mxu0 0.0
    %3872 = vmatprep.subr.mxu0 0.0
    %3873 = vmatpush1.msra.mxu0 0.0
    %3874 = vmatprep.subr.mxu0 0.0
    %3875 = vmatpush1.msra.mxu0 0.0
    %3876 = vmatprep.subr.mxu0 0.0
    %3877 = vmatpush1.msra.mxu0 0.0
    %3878 = vmatprep.subr.mxu0 0.0
    %3879 = vmatpush1.msra.mxu0 0.0
    %3880 = vmatprep.subr.mxu0 0.0
    %3881 = vmatpush1.msra.mxu0 %v3829
    %3882 = vmatprep.subr.mxu0 0.0
    %3883 = vmatpush2.msra.mxu0 0.0
    %3884 = vmatprep.subr.mxu0 0.0
    %3885 = vmatpush2.msra.mxu0 0.0
    %3886 = vmatprep.subr.mxu0 0.0
    %3887 = vmatpush2.msra.mxu0 0.0
    %3888 = vmatprep.subr.mxu0 0.0
    %3889 = vmatpush2.msra.mxu0 0.0
    %3890 = vmatprep.subr.mxu0 0.0
    %3891 = vmatpush2.msra.mxu0 0.0
    %3892 = vmatprep.subr.mxu0 0.0
    %3893 = vmatpush2.msra.mxu0 0.0
    %3894 = vmatprep.subr.mxu0 0.0
    %3895 = vmatpush2.msra.mxu0 0.0
    %3896 = vmatprep.subr.mxu0 0.0
    %3897 = vmatpush2.msra.mxu0 0.0
    %3898 = vmatprep.subr.mxu0 0.0
    %3899 = vmatpush2.msra.mxu0 0.0
    %3900 = vmatprep.subr.mxu0 0.0
    %3901 = vmatpush2.msra.mxu0 0.0
    %3902 = vmatprep.subr.mxu0 0.0
    %3903 = vmatpush2.msra.mxu0 0.0
    %3904 = vmatprep.subr.mxu0 0.0
    %3905 = vmatpush2.msra.mxu0 0.0
    %3906 = vmatprep.subr.mxu0 0.0
    %3907 = vmatpush2.msra.mxu0 0.0
    %3908 = vmatprep.subr.mxu0 0.0
    %3909 = vmatpush2.msra.mxu0 0.0
    %3910 = vmatprep.subr.mxu0 0.0
    %3911 = vmatpush2.msra.mxu0 0.0
    %3912 = vmatprep.subr.mxu0 0.0
    %3913 = vmatpush2.msra.mxu0 0.0
    %3914 = vmatprep.mubr.f32.mxu0 0.0
    %3915 = vmatmul.mubr.f32.gmra.mxu0 %v3848
    %v3916 = vpop.f32.mrf.mxu0
    %v3917 = vadd.f32 %v3845, %v3916
    %v3918 = vpop.f32.mrf.mxu0
    %3919 = vdwg.mxu0
    %3920 = vrot.lane.b32.xlu0 %v2131, 64
    %v3921 = vpop.permute.xlu0 %3920
    %v3931 = vsel %vm747, %v3601, %v3594
    %v3932 = vsel %vm749, %v3608, %v3931
    %v3933 = vsel %vm751, %v3615, %v3932
    %v3934 = vsel %vm753, %v3622, %v3933
    %v3935 = vsel %vm755, %v3629, %v3934
    %v3936 = vsel %vm757, %v3636, %v3935
    %v3937 = vsel %vm759, %v3643, %v3936
    %v3940 = vsel %vm606, %v3163, 0
    %3942 = vmatprep.subr.mxu0 0.0
    %3943 = vmatpush1.msra.mxu0 0.0
    %3944 = vmatprep.subr.mxu0 0.0
    %3945 = vmatpush1.msra.mxu0 0.0
    %3946 = vmatprep.subr.mxu0 0.0
    %3947 = vmatpush1.msra.mxu0 0.0
    %3948 = vmatprep.subr.mxu0 0.0
    %3949 = vmatpush1.msra.mxu0 0.0
    %3950 = vmatprep.subr.mxu0 0.0
    %3951 = vmatpush1.msra.mxu0 0.0
    %3952 = vmatprep.subr.mxu0 0.0
    %3953 = vmatpush1.msra.mxu0 0.0
    %3954 = vmatprep.subr.mxu0 0.0
    %3955 = vmatpush1.msra.mxu0 0.0
    %3956 = vmatprep.subr.mxu0 0.0
    %3957 = vmatpush1.msra.mxu0 0.0
    %3958 = vmatprep.subr.mxu0 0.0
    %3959 = vmatpush1.msra.mxu0 0.0
    %3960 = vmatprep.subr.mxu0 0.0
    %3961 = vmatpush1.msra.mxu0 0.0
    %3962 = vmatprep.subr.mxu0 0.0
    %3963 = vmatpush1.msra.mxu0 0.0
    %3964 = vmatprep.subr.mxu0 0.0
    %3965 = vmatpush1.msra.mxu0 0.0
    %3966 = vmatprep.subr.mxu0 0.0
    %3967 = vmatpush1.msra.mxu0 0.0
    %3968 = vmatprep.subr.mxu0 0.0
    %3969 = vmatpush1.msra.mxu0 0.0
    %3970 = vmatprep.subr.mxu0 0.0
    %3971 = vmatpush1.msra.mxu0 0.0
    %3972 = vmatprep.subr.mxu0 0.0
    %3973 = vmatpush1.msra.mxu0 %v3921
    %3974 = vmatprep.subr.mxu0 0.0
    %3975 = vmatpush2.msra.mxu0 0.0
    %3976 = vmatprep.subr.mxu0 0.0
    %3977 = vmatpush2.msra.mxu0 0.0
    %3978 = vmatprep.subr.mxu0 0.0
    %3979 = vmatpush2.msra.mxu0 0.0
    %3980 = vmatprep.subr.mxu0 0.0
    %3981 = vmatpush2.msra.mxu0 0.0
    %3982 = vmatprep.subr.mxu0 0.0
    %3983 = vmatpush2.msra.mxu0 0.0
    %3984 = vmatprep.subr.mxu0 0.0
    %3985 = vmatpush2.msra.mxu0 0.0
    %3986 = vmatprep.subr.mxu0 0.0
    %3987 = vmatpush2.msra.mxu0 0.0
    %3988 = vmatprep.subr.mxu0 0.0
    %3989 = vmatpush2.msra.mxu0 0.0
    %3990 = vmatprep.subr.mxu0 0.0
    %3991 = vmatpush2.msra.mxu0 0.0
    %3992 = vmatprep.subr.mxu0 0.0
    %3993 = vmatpush2.msra.mxu0 0.0
    %3994 = vmatprep.subr.mxu0 0.0
    %3995 = vmatpush2.msra.mxu0 0.0
    %3996 = vmatprep.subr.mxu0 0.0
    %3997 = vmatpush2.msra.mxu0 0.0
    %3998 = vmatprep.subr.mxu0 0.0
    %3999 = vmatpush2.msra.mxu0 0.0
    %4000 = vmatprep.subr.mxu0 0.0
    %4001 = vmatpush2.msra.mxu0 0.0
    %4002 = vmatprep.subr.mxu0 0.0
    %4003 = vmatpush2.msra.mxu0 0.0
    %4004 = vmatprep.subr.mxu0 0.0
    %4005 = vmatpush2.msra.mxu0 0.0
    %4006 = vmatprep.mubr.f32.mxu0 0.0
    %4007 = vmatmul.mubr.f32.gmra.mxu0 %v3940
    %v4008 = vpop.f32.mrf.mxu0
    %v4009 = vadd.f32 %v3937, %v4008
    %v4010 = vpop.f32.mrf.mxu0
    %4011 = vdwg.mxu0
    %4013 = vrot.lane.b32.xlu0 %v3825, 8
    %v4014 = vpop.permute.xlu0 %4013
    %4017 = vrot.lane.b32.xlu0 %v3917, 16
    %v4018 = vpop.permute.xlu0 %4017
    %4021 = vrot.lane.b32.xlu0 %v4009, 24
    %v4022 = vpop.permute.xlu0 %4021
    %v4024 = vsel %vm606, %v3733, %v4014
    %v4025 = vsel %vm2121, %v4024, %v4018
    %v4026 = vsel %vm2123, %v4025, %v4022
    %v4027 = vlaneseq
    %v4028 = vshrl.u32 %v4027, 7
    %v4029 = vsub.s32 1, %v4028
    %v4030 = vrot.slane %v124, %v4029
    %4035 = vrot.lane.b32.xlu0 %v108, 32
    %v4036 = vpop.permute.xlu0 %4035
    %4037 = vrot.lane.b32.xlu0 %v110, 32
    %v4038 = vpop.permute.xlu0 %4037
    %4039 = vrot.lane.b32.xlu0 %v112, 32
    %v4040 = vpop.permute.xlu0 %4039
    %4041 = vrot.lane.b32.xlu0 %v114, 32
    %v4042 = vpop.permute.xlu0 %4041
    %v4048 = vsel %vm129, %v2124, 0
    %v4051 = vsel %vm129, %v4026, 0
    %4053 = vmatprep.subr.mxu0 0.0
    %4054 = vmatpush1.msra.mxu0 0.0
    %4055 = vmatprep.subr.mxu0 0.0
    %4056 = vmatpush1.msra.mxu0 0.0
    %4057 = vmatprep.subr.mxu0 0.0
    %4058 = vmatpush1.msra.mxu0 0.0
    %4059 = vmatprep.subr.mxu0 0.0
    %4060 = vmatpush1.msra.mxu0 0.0
    %4061 = vmatprep.subr.mxu0 0.0
    %4062 = vmatpush1.msra.mxu0 0.0
    %4063 = vmatprep.subr.mxu0 0.0
    %4064 = vmatpush1.msra.mxu0 0.0
    %4065 = vmatprep.subr.mxu0 0.0
    %4066 = vmatpush1.msra.mxu0 0.0
    %4067 = vmatprep.subr.mxu0 0.0
    %4068 = vmatpush1.msra.mxu0 0.0
    %4069 = vmatprep.subr.mxu0 0.0
    %4070 = vmatpush1.msra.mxu0 0.0
    %4071 = vmatprep.subr.mxu0 0.0
    %4072 = vmatpush1.msra.mxu0 0.0
    %4073 = vmatprep.subr.mxu0 0.0
    %4074 = vmatpush1.msra.mxu0 0.0
    %4075 = vmatprep.subr.mxu0 0.0
    %4076 = vmatpush1.msra.mxu0 0.0
    %4077 = vmatprep.subr.mxu0 0.0
    %4078 = vmatpush1.msra.mxu0 %v4042
    %4079 = vmatprep.subr.mxu0 0.0
    %4080 = vmatpush1.msra.mxu0 %v4040
    %4081 = vmatprep.subr.mxu0 0.0
    %4082 = vmatpush1.msra.mxu0 %v4038
    %4083 = vmatprep.subr.mxu0 0.0
    %4084 = vmatpush1.msra.mxu0 %v4036
    %4085 = vmatprep.subr.mxu0 0.0
    %4086 = vmatpush2.msra.mxu0 0.0
    %4087 = vmatprep.subr.mxu0 0.0
    %4088 = vmatpush2.msra.mxu0 0.0
    %4089 = vmatprep.subr.mxu0 0.0
    %4090 = vmatpush2.msra.mxu0 0.0
    %4091 = vmatprep.subr.mxu0 0.0
    %4092 = vmatpush2.msra.mxu0 0.0
    %4093 = vmatprep.subr.mxu0 0.0
    %4094 = vmatpush2.msra.mxu0 0.0
    %4095 = vmatprep.subr.mxu0 0.0
    %4096 = vmatpush2.msra.mxu0 0.0
    %4097 = vmatprep.subr.mxu0 0.0
    %4098 = vmatpush2.msra.mxu0 0.0
    %4099 = vmatprep.subr.mxu0 0.0
    %4100 = vmatpush2.msra.mxu0 0.0
    %4101 = vmatprep.subr.mxu0 0.0
    %4102 = vmatpush2.msra.mxu0 0.0
    %4103 = vmatprep.subr.mxu0 0.0
    %4104 = vmatpush2.msra.mxu0 0.0
    %4105 = vmatprep.subr.mxu0 0.0
    %4106 = vmatpush2.msra.mxu0 0.0
    %4107 = vmatprep.subr.mxu0 0.0
    %4108 = vmatpush2.msra.mxu0 0.0
    %4109 = vmatprep.subr.mxu0 0.0
    %4110 = vmatpush2.msra.mxu0 0.0
    %4111 = vmatprep.subr.mxu0 0.0
    %4112 = vmatpush2.msra.mxu0 0.0
    %4113 = vmatprep.subr.mxu0 0.0
    %4114 = vmatpush2.msra.mxu0 0.0
    %4115 = vmatprep.subr.mxu0 0.0
    %4116 = vmatpush2.msra.mxu0 0.0
    %4117 = vmatprep.mubr.f32.mxu0 0.0
    %4118 = vmatmul.mubr.f32.gmra.mxu0 %v4048
    %v4119 = vpop.f32.mrf.mxu0
    %v4120 = vadd.f32 %v4030, %v4119
    %v4121 = vpop.f32.mrf.mxu0
    %4122 = vmatprep.mubr.f32.mxu0 0.0
    %4123 = vmatmul.mubr.f32.gmra.mxu0 %v4051
    %v4124 = vpop.f32.mrf.mxu0
    %v4125 = vadd.f32 %v4030, %v4124
    %v4126 = vpop.f32.mrf.mxu0
    %4127 = vdwg.mxu0
    %v4128 = vadd.f32 %v82, %v4120
    %v4129 = vadd.f32 %v83, %v4125
    %v4130 = vsel %vm129, %v4128, 0.0
    %4131 = vadd.xlane.f32.xlu0 %v4130
    %v4132 = vpop.xlane.xlu0 %4131
    %v4133 = vsel %vm129, %v4129, 0.0
    %4134 = vadd.xlane.f32.xlu0 %v4133
    %v4135 = vpop.xlane.xlu0 %4134
    %v4136 = vrcp.pop 32.0
    %v4137 = vmul.f32 %v4132, %v4136
    %v4138 = vmul.f32 %v4135, %v4136
    %v4139 = vsub.f32 %v4128, %v4137
    %v4140 = vsub.f32 %v4129, %v4138
    %v4141 = vmul.f32 %v4139, %v4139
    %v4142 = vmul.f32 %v4140, %v4140
    %v4143 = vsel %vm129, %v4141, 0.0
    %4144 = vadd.xlane.f32.xlu0 %v4143
    %v4145 = vpop.xlane.xlu0 %4144
    %v4146 = vsel %vm129, %v4142, 0.0
    %4147 = vadd.xlane.f32.xlu0 %v4146
    %v4148 = vpop.xlane.xlu0 %4147
    %v4149 = vmul.f32 %v4145, %v4136
    %v4150 = vmul.f32 %v4148, %v4136
    %v4151 = vadd.f32 %v4149, 1e-07
    %v4152 = vadd.f32 %v4150, 1e-07
    %v4153 = vrsqrt.pop %v4151
    %v4154 = vrsqrt.pop %v4152
    %v4155 = vmul.f32 %v4139, %v4153
    %v4156 = vmul.f32 %v4140, %v4154
    %v4157 = vlaneseq
    %v4158 = vshrl.u32 %v4157, 7
    %v4159 = vsub.s32 4, %v4158
    %v4160 = vrot.slane %v124, %v4159
    %v4161 = vmul.f32 %v4155, %v4160
    %v4162 = vmul.f32 %v4156, %v4160
    %v4163 = vlaneseq
    %v4164 = vshrl.u32 %v4163, 7
    %v4165 = vsub.s32 5, %v4164
    %v4166 = vrot.slane %v124, %v4165
    %v4167 = vadd.f32 %v4161, %v4166
    %v4168 = vadd.f32 %v4162, %v4166
    %v4169 = vlaneseq
    %v4170 = vshrl.u32 %v4169, 7
    %v4171 = vsub.s32 2, %v4170
    %v4172 = vrot.slane %v124, %v4171
    %v4174 = vsel %vm129, %v4167, 0
    %v4177 = vsel %vm129, %v4168, 0
    %4179 = vmatprep.subr.mxu0 0.0
    %4180 = vmatpush1.msra.mxu0 0.0
    %4181 = vmatprep.subr.mxu0 0.0
    %4182 = vmatpush1.msra.mxu0 0.0
    %4183 = vmatprep.subr.mxu0 0.0
    %4184 = vmatpush1.msra.mxu0 0.0
    %4185 = vmatprep.subr.mxu0 0.0
    %4186 = vmatpush1.msra.mxu0 0.0
    %4187 = vmatprep.subr.mxu0 0.0
    %4188 = vmatpush1.msra.mxu0 0.0
    %4189 = vmatprep.subr.mxu0 0.0
    %4190 = vmatpush1.msra.mxu0 0.0
    %4191 = vmatprep.subr.mxu0 0.0
    %4192 = vmatpush1.msra.mxu0 0.0
    %4193 = vmatprep.subr.mxu0 0.0
    %4194 = vmatpush1.msra.mxu0 0.0
    %4195 = vmatprep.subr.mxu0 0.0
    %4196 = vmatpush1.msra.mxu0 0.0
    %4197 = vmatprep.subr.mxu0 0.0
    %4198 = vmatpush1.msra.mxu0 0.0
    %4199 = vmatprep.subr.mxu0 0.0
    %4200 = vmatpush1.msra.mxu0 0.0
    %4201 = vmatprep.subr.mxu0 0.0
    %4202 = vmatpush1.msra.mxu0 0.0
    %4203 = vmatprep.subr.mxu0 0.0
    %4204 = vmatpush1.msra.mxu0 %v115
    %4205 = vmatprep.subr.mxu0 0.0
    %4206 = vmatpush1.msra.mxu0 %v113
    %4207 = vmatprep.subr.mxu0 0.0
    %4208 = vmatpush1.msra.mxu0 %v111
    %4209 = vmatprep.subr.mxu0 0.0
    %4210 = vmatpush1.msra.mxu0 %v109
    %4211 = vmatprep.subr.mxu0 0.0
    %4212 = vmatpush2.msra.mxu0 0.0
    %4213 = vmatprep.subr.mxu0 0.0
    %4214 = vmatpush2.msra.mxu0 0.0
    %4215 = vmatprep.subr.mxu0 0.0
    %4216 = vmatpush2.msra.mxu0 0.0
    %4217 = vmatprep.subr.mxu0 0.0
    %4218 = vmatpush2.msra.mxu0 0.0
    %4219 = vmatprep.subr.mxu0 0.0
    %4220 = vmatpush2.msra.mxu0 0.0
    %4221 = vmatprep.subr.mxu0 0.0
    %4222 = vmatpush2.msra.mxu0 0.0
    %4223 = vmatprep.subr.mxu0 0.0
    %4224 = vmatpush2.msra.mxu0 0.0
    %4225 = vmatprep.subr.mxu0 0.0
    %4226 = vmatpush2.msra.mxu0 0.0
    %4227 = vmatprep.subr.mxu0 0.0
    %4228 = vmatpush2.msra.mxu0 0.0
    %4229 = vmatprep.subr.mxu0 0.0
    %4230 = vmatpush2.msra.mxu0 0.0
    %4231 = vmatprep.subr.mxu0 0.0
    %4232 = vmatpush2.msra.mxu0 0.0
    %4233 = vmatprep.subr.mxu0 0.0
    %4234 = vmatpush2.msra.mxu0 0.0
    %4235 = vmatprep.subr.mxu0 0.0
    %4236 = vmatpush2.msra.mxu0 0.0
    %4237 = vmatprep.subr.mxu0 0.0
    %4238 = vmatpush2.msra.mxu0 0.0
    %4239 = vmatprep.subr.mxu0 0.0
    %4240 = vmatpush2.msra.mxu0 0.0
    %4241 = vmatprep.subr.mxu0 0.0
    %4242 = vmatpush2.msra.mxu0 0.0
    %4243 = vmatprep.mubr.f32.mxu0 0.0
    %4244 = vmatmul.mubr.f32.gmra.mxu0 %v4174
    %v4245 = vpop.f32.mrf.mxu0
    %v4246 = vadd.f32 %v4172, %v4245
    %v4247 = vpop.f32.mrf.mxu0
    %4248 = vmatprep.mubr.f32.mxu0 0.0
    %4249 = vmatmul.mubr.f32.gmra.mxu0 %v4177
    %v4250 = vpop.f32.mrf.mxu0
    %v4251 = vadd.f32 %v4172, %v4250
    %v4252 = vpop.f32.mrf.mxu0
    %4253 = vdwg.mxu0
    %v4254 = vmul.f32 %v4246, %v4246
    %v4255 = vmul.f32 %v4251, %v4251
    %v4256 = vmul.f32 %v4246, %v4254
    %v4257 = vmul.f32 %v4251, %v4255
    %v4258 = vmul.f32 %v4256, 0.044715
    %v4259 = vmul.f32 %v4257, 0.044715
    %v4260 = vadd.f32 %v4246, %v4258
    %v4261 = vadd.f32 %v4251, %v4259
    %v4262 = vmul.f32 %v4260, 0.7978846
    %v4263 = vmul.f32 %v4261, 0.7978846
    %v4264 = vtanh.pop %v4262
    %v4265 = vtanh.pop %v4263
    %v4266 = vadd.f32 %v4264, 1.0
    %v4267 = vadd.f32 %v4265, 1.0
    %v4268 = vmul.f32 %v4266, 0.5
    %v4269 = vmul.f32 %v4267, 0.5
    %v4270 = vmul.f32 %v4246, %v4268
    %v4271 = vmul.f32 %v4251, %v4269
    %v4272 = vlaneseq
    %v4273 = vshrl.u32 %v4272, 7
    %v4274 = vsub.s32 3, %v4273
    %v4275 = vrot.slane %v124, %v4274
    %vm4276 = vcmask 523264
    %v4278 = vsel %vm4276, %v4270, 0
    %v4281 = vsel %vm4276, %v4271, 0
    %4283 = vmatprep.subr.mxu0 0.0
    %4284 = vmatpush1.msra.mxu0 0.0
    %4285 = vmatprep.subr.mxu0 0.0
    %4286 = vmatpush1.msra.mxu0 0.0
    %4287 = vmatprep.subr.mxu0 0.0
    %4288 = vmatpush1.msra.mxu0 0.0
    %4289 = vmatprep.subr.mxu0 0.0
    %4290 = vmatpush1.msra.mxu0 0.0
    %4291 = vmatprep.subr.mxu0 0.0
    %4292 = vmatpush1.msra.mxu0 0.0
    %4293 = vmatprep.subr.mxu0 0.0
    %4294 = vmatpush1.msra.mxu0 0.0
    %4295 = vmatprep.subr.mxu0 0.0
    %4296 = vmatpush1.msra.mxu0 0.0
    %4297 = vmatprep.subr.mxu0 0.0
    %4298 = vmatpush1.msra.mxu0 0.0
    %4299 = vmatprep.subr.mxu0 0.0
    %4300 = vmatpush1.msra.mxu0 %v123
    %4301 = vmatprep.subr.mxu0 0.0
    %4302 = vmatpush1.msra.mxu0 %v122
    %4303 = vmatprep.subr.mxu0 0.0
    %4304 = vmatpush1.msra.mxu0 %v121
    %4305 = vmatprep.subr.mxu0 0.0
    %4306 = vmatpush1.msra.mxu0 %v120
    %4307 = vmatprep.subr.mxu0 0.0
    %4308 = vmatpush1.msra.mxu0 %v119
    %4309 = vmatprep.subr.mxu0 0.0
    %4310 = vmatpush1.msra.mxu0 %v118
    %4311 = vmatprep.subr.mxu0 0.0
    %4312 = vmatpush1.msra.mxu0 %v117
    %4313 = vmatprep.subr.mxu0 0.0
    %4314 = vmatpush1.msra.mxu0 %v116
    %4315 = vmatprep.subr.mxu0 0.0
    %4316 = vmatpush2.msra.mxu0 0.0
    %4317 = vmatprep.subr.mxu0 0.0
    %4318 = vmatpush2.msra.mxu0 0.0
    %4319 = vmatprep.subr.mxu0 0.0
    %4320 = vmatpush2.msra.mxu0 0.0
    %4321 = vmatprep.subr.mxu0 0.0
    %4322 = vmatpush2.msra.mxu0 0.0
    %4323 = vmatprep.subr.mxu0 0.0
    %4324 = vmatpush2.msra.mxu0 0.0
    %4325 = vmatprep.subr.mxu0 0.0
    %4326 = vmatpush2.msra.mxu0 0.0
    %4327 = vmatprep.subr.mxu0 0.0
    %4328 = vmatpush2.msra.mxu0 0.0
    %4329 = vmatprep.subr.mxu0 0.0
    %4330 = vmatpush2.msra.mxu0 0.0
    %4331 = vmatprep.subr.mxu0 0.0
    %4332 = vmatpush2.msra.mxu0 0.0
    %4333 = vmatprep.subr.mxu0 0.0
    %4334 = vmatpush2.msra.mxu0 0.0
    %4335 = vmatprep.subr.mxu0 0.0
    %4336 = vmatpush2.msra.mxu0 0.0
    %4337 = vmatprep.subr.mxu0 0.0
    %4338 = vmatpush2.msra.mxu0 0.0
    %4339 = vmatprep.subr.mxu0 0.0
    %4340 = vmatpush2.msra.mxu0 0.0
    %4341 = vmatprep.subr.mxu0 0.0
    %4342 = vmatpush2.msra.mxu0 0.0
    %4343 = vmatprep.subr.mxu0 0.0
    %4344 = vmatpush2.msra.mxu0 0.0
    %4345 = vmatprep.subr.mxu0 0.0
    %4346 = vmatpush2.msra.mxu0 0.0
    %4347 = vmatprep.mubr.f32.mxu0 0.0
    %4348 = vmatmul.mubr.f32.gmra.mxu0 %v4278
    %v4349 = vpop.f32.mrf.mxu0
    %v4350 = vadd.f32 %v4275, %v4349
    %v4351 = vpop.f32.mrf.mxu0
    %4352 = vmatprep.mubr.f32.mxu0 0.0
    %4353 = vmatmul.mubr.f32.gmra.mxu0 %v4281
    %v4354 = vpop.f32.mrf.mxu0
    %v4355 = vadd.f32 %v4275, %v4354
    %v4356 = vpop.f32.mrf.mxu0
    %4357 = vdwg.mxu0
    %v4358 = vadd.f32 %v4167, %v4350
    %v4359 = vadd.f32 %v4168, %v4355
    %v4360 = vsel %vm129, %v4358, 0.0
    %4361 = vadd.xlane.f32.xlu0 %v4360
    %v4362 = vpop.xlane.xlu0 %4361
    %v4363 = vsel %vm129, %v4359, 0.0
    %4364 = vadd.xlane.f32.xlu0 %v4363
    %v4365 = vpop.xlane.xlu0 %4364
    %v4366 = vmul.f32 %v4362, %v4136
    %v4367 = vmul.f32 %v4365, %v4136
    %v4368 = vsub.f32 %v4358, %v4366
    %v4369 = vsub.f32 %v4359, %v4367
    %v4370 = vmul.f32 %v4368, %v4368
    %v4371 = vmul.f32 %v4369, %v4369
    %v4372 = vsel %vm129, %v4370, 0.0
    %4373 = vadd.xlane.f32.xlu0 %v4372
    %v4374 = vpop.xlane.xlu0 %4373
    %v4375 = vsel %vm129, %v4371, 0.0
    %4376 = vadd.xlane.f32.xlu0 %v4375
    %v4377 = vpop.xlane.xlu0 %4376
    %v4378 = vmul.f32 %v4374, %v4136
    %v4379 = vmul.f32 %v4377, %v4136
    %v4380 = vadd.f32 %v4378, 1e-07
    %v4381 = vadd.f32 %v4379, 1e-07
    %v4382 = vrsqrt.pop %v4380
    %v4383 = vrsqrt.pop %v4381
    %v4384 = vmul.f32 %v4368, %v4382
    %v4385 = vmul.f32 %v4369, %v4383
    %v4386 = vlaneseq
    %v4387 = vshrl.u32 %v4386, 7
    %v4388 = vsub.s32 6, %v4387
    %v4389 = vrot.slane %v124, %v4388
    %v4390 = vmul.f32 %v4384, %v4389
    %v4391 = vmul.f32 %v4385, %v4389
    %v4392 = vlaneseq
    %v4393 = vshrl.u32 %v4392, 7
    %v4394 = vsub.s32 7, %v4393
    %v4395 = vrot.slane %v124, %v4394
    %v4396 = vadd.f32 %v4390, %v4395
    %v4397 = vadd.f32 %v4391, %v4395
    %s4398 = scalar_lea.vmem %s4, 64
    %v4399 = vld [vmem:[%s4398] sm:$0xff]
    %v4400 = vld [vmem:[%s4398 + $0x8] sm:$0xff]
    %v4401 = vld [vmem:[%s4398 + $0x10] sm:$0xff]
    %v4402 = vld [vmem:[%s4398 + $0x18] sm:$0xff]
    %v4403 = vld [vmem:[%s4398 + $0x20] sm:$0xff]
    %v4404 = vld [vmem:[%s4398 + $0x28] sm:$0xff]
    %v4405 = vld [vmem:[%s4398 + $0x30] sm:$0xff]
    %v4406 = vld [vmem:[%s4398 + $0x38] sm:$0xff]
    %s4407 = scalar_lea.vmem %s5, 64
    %v4408 = vld [vmem:[%s4407] sm:$0xff]
    %v4409 = vld [vmem:[%s4407 + $0x8] sm:$0xff]
    %v4410 = vld [vmem:[%s4407 + $0x10] sm:$0xff]
    %v4411 = vld [vmem:[%s4407 + $0x18] sm:$0xff]
    %v4412 = vld [vmem:[%s4407 + $0x20] sm:$0xff]
    %v4413 = vld [vmem:[%s4407 + $0x28] sm:$0xff]
    %v4414 = vld [vmem:[%s4407 + $0x30] sm:$0xff]
    %v4415 = vld [vmem:[%s4407 + $0x38] sm:$0xff]
    %s4416 = scalar_lea.vmem [#allocation8], 8
    %v4417 = vld [vmem:[%s4416] sm:$0xff]
    %v4418 = vlaneseq
    %v4419 = vshrl.u32 %v4418, 7
    %v4420 = vsub.s32 0, %v4419
    %v4421 = vrot.slane %v4417, %v4420
    %v4423 = vsel %vm129, %v4396, 0
    %v4426 = vsel %vm129, %v4397, 0
    %4428 = vmatprep.subr.mxu0 0.0
    %4429 = vmatpush1.msra.mxu0 0.0
    %4430 = vmatprep.subr.mxu0 0.0
    %4431 = vmatpush1.msra.mxu0 0.0
    %4432 = vmatprep.subr.mxu0 0.0
    %4433 = vmatpush1.msra.mxu0 0.0
    %4434 = vmatprep.subr.mxu0 0.0
    %4435 = vmatpush1.msra.mxu0 0.0
    %4436 = vmatprep.subr.mxu0 0.0
    %4437 = vmatpush1.msra.mxu0 0.0
    %4438 = vmatprep.subr.mxu0 0.0
    %4439 = vmatpush1.msra.mxu0 0.0
    %4440 = vmatprep.subr.mxu0 0.0
    %4441 = vmatpush1.msra.mxu0 0.0
    %4442 = vmatprep.subr.mxu0 0.0
    %4443 = vmatpush1.msra.mxu0 0.0
    %4444 = vmatprep.subr.mxu0 0.0
    %4445 = vmatpush1.msra.mxu0 0.0
    %4446 = vmatprep.subr.mxu0 0.0
    %4447 = vmatpush1.msra.mxu0 0.0
    %4448 = vmatprep.subr.mxu0 0.0
    %4449 = vmatpush1.msra.mxu0 0.0
    %4450 = vmatprep.subr.mxu0 0.0
    %4451 = vmatpush1.msra.mxu0 0.0
    %4452 = vmatprep.subr.mxu0 0.0
    %4453 = vmatpush1.msra.mxu0 %v4405
    %4454 = vmatprep.subr.mxu0 0.0
    %4455 = vmatpush1.msra.mxu0 %v4403
    %4456 = vmatprep.subr.mxu0 0.0
    %4457 = vmatpush1.msra.mxu0 %v4401
    %4458 = vmatprep.subr.mxu0 0.0
    %4459 = vmatpush1.msra.mxu0 %v4399
    %4460 = vmatprep.subr.mxu0 0.0
    %4461 = vmatpush2.msra.mxu0 0.0
    %4462 = vmatprep.subr.mxu0 0.0
    %4463 = vmatpush2.msra.mxu0 0.0
    %4464 = vmatprep.subr.mxu0 0.0
    %4465 = vmatpush2.msra.mxu0 0.0
    %4466 = vmatprep.subr.mxu0 0.0
    %4467 = vmatpush2.msra.mxu0 0.0
    %4468 = vmatprep.subr.mxu0 0.0
    %4469 = vmatpush2.msra.mxu0 0.0
    %4470 = vmatprep.subr.mxu0 0.0
    %4471 = vmatpush2.msra.mxu0 0.0
    %4472 = vmatprep.subr.mxu0 0.0
    %4473 = vmatpush2.msra.mxu0 0.0
    %4474 = vmatprep.subr.mxu0 0.0
    %4475 = vmatpush2.msra.mxu0 0.0
    %4476 = vmatprep.subr.mxu0 0.0
    %4477 = vmatpush2.msra.mxu0 0.0
    %4478 = vmatprep.subr.mxu0 0.0
    %4479 = vmatpush2.msra.mxu0 0.0
    %4480 = vmatprep.subr.mxu0 0.0
    %4481 = vmatpush2.msra.mxu0 0.0
    %4482 = vmatprep.subr.mxu0 0.0
    %4483 = vmatpush2.msra.mxu0 0.0
    %4484 = vmatprep.subr.mxu0 0.0
    %4485 = vmatpush2.msra.mxu0 0.0
    %4486 = vmatprep.subr.mxu0 0.0
    %4487 = vmatpush2.msra.mxu0 0.0
    %4488 = vmatprep.subr.mxu0 0.0
    %4489 = vmatpush2.msra.mxu0 0.0
    %4490 = vmatprep.subr.mxu0 0.0
    %4491 = vmatpush2.msra.mxu0 0.0
    %4492 = vmatprep.mubr.f32.mxu0 0.0
    %4493 = vmatmul.mubr.f32.gmra.mxu0 %v4423
    %v4494 = vpop.f32.mrf.mxu0
    %v4495 = vadd.f32 %v4421, %v4494
    %v4496 = vpop.f32.mrf.mxu0
    %4497 = vmatprep.mubr.f32.mxu0 0.0
    %4498 = vmatmul.mubr.f32.gmra.mxu0 %v4426
    %v4499 = vpop.f32.mrf.mxu0
    %v4500 = vadd.f32 %v4421, %v4499
    %v4501 = vpop.f32.mrf.mxu0
    %4502 = vdwg.mxu0
    %4504 = vrot.lane.b32.xlu0 %v4495, 120
    %v4505 = vpop.permute.xlu0 %4504
    %4506 = vrot.lane.b32.xlu0 %v4495, 112
    %v4507 = vpop.permute.xlu0 %4506
    %4508 = vrot.lane.b32.xlu0 %v4495, 104
    %v4509 = vpop.permute.xlu0 %4508
    %v4510 = vcombine.high %v4495, %v4495
    %v4512 = vunpack.c.l.s4 1966171168
    %v4513 = vunpack.c.0.s8 %v4512
    %v4514 = vlaneseq
    %v4515 = vshrl.u32 %v4514, 7
    %v4516 = vsub.s32 %v4513, %v4515
    %v4517 = vrot.slane %v4495, %v4516
    %v4519 = vunpack.c.l.s4 1966171168
    %v4520 = vunpack.c.0.s8 %v4519
    %v4521 = vlaneseq
    %v4522 = vshrl.u32 %v4521, 7
    %v4523 = vsub.s32 %v4520, %v4522
    %v4524 = vrot.slane %v4510, %v4523
    %v4525 = vcombine.high %v4517, %v4517
    %v4526 = vcombine.high %v4524, %v4524
    %v4528 = vunpack.c.l.s4 1966171168
    %v4529 = vunpack.c.0.s8 %v4528
    %v4530 = vlaneseq
    %v4531 = vshrl.u32 %v4530, 7
    %v4532 = vsub.s32 %v4529, %v4531
    %v4533 = vrot.slane %v4517, %v4532
    %v4535 = vunpack.c.l.s4 1966171168
    %v4536 = vunpack.c.0.s8 %v4535
    %v4537 = vlaneseq
    %v4538 = vshrl.u32 %v4537, 7
    %v4539 = vsub.s32 %v4536, %v4538
    %v4540 = vrot.slane %v4524, %v4539
    %v4542 = vunpack.c.l.s4 1966171168
    %v4543 = vunpack.c.0.s8 %v4542
    %v4544 = vlaneseq
    %v4545 = vshrl.u32 %v4544, 7
    %v4546 = vsub.s32 %v4543, %v4545
    %v4547 = vrot.slane %v4525, %v4546
    %v4549 = vunpack.c.l.s4 1966171168
    %v4550 = vunpack.c.0.s8 %v4549
    %v4551 = vlaneseq
    %v4552 = vshrl.u32 %v4551, 7
    %v4553 = vsub.s32 %v4550, %v4552
    %v4554 = vrot.slane %v4526, %v4553
    %v4555 = vcombine.high %v4533, %v4533
    %v4556 = vcombine.high %v4540, %v4540
    %v4557 = vcombine.high %v4547, %v4547
    %v4558 = vcombine.high %v4554, %v4554
    %v4559 = vcombine.high %v4505, %v4505
    %v4561 = vunpack.c.l.s4 1966171168
    %v4562 = vunpack.c.0.s8 %v4561
    %v4563 = vlaneseq
    %v4564 = vshrl.u32 %v4563, 7
    %v4565 = vsub.s32 %v4562, %v4564
    %v4566 = vrot.slane %v4505, %v4565
    %v4568 = vunpack.c.l.s4 1966171168
    %v4569 = vunpack.c.0.s8 %v4568
    %v4570 = vlaneseq
    %v4571 = vshrl.u32 %v4570, 7
    %v4572 = vsub.s32 %v4569, %v4571
    %v4573 = vrot.slane %v4559, %v4572
    %v4574 = vcombine.high %v4566, %v4566
    %v4575 = vcombine.high %v4573, %v4573
    %v4577 = vunpack.c.l.s4 1966171168
    %v4578 = vunpack.c.0.s8 %v4577
    %v4579 = vlaneseq
    %v4580 = vshrl.u32 %v4579, 7
    %v4581 = vsub.s32 %v4578, %v4580
    %v4582 = vrot.slane %v4566, %v4581
    %v4584 = vunpack.c.l.s4 1966171168
    %v4585 = vunpack.c.0.s8 %v4584
    %v4586 = vlaneseq
    %v4587 = vshrl.u32 %v4586, 7
    %v4588 = vsub.s32 %v4585, %v4587
    %v4589 = vrot.slane %v4573, %v4588
    %v4591 = vunpack.c.l.s4 1966171168
    %v4592 = vunpack.c.0.s8 %v4591
    %v4593 = vlaneseq
    %v4594 = vshrl.u32 %v4593, 7
    %v4595 = vsub.s32 %v4592, %v4594
    %v4596 = vrot.slane %v4574, %v4595
    %v4598 = vunpack.c.l.s4 1966171168
    %v4599 = vunpack.c.0.s8 %v4598
    %v4600 = vlaneseq
    %v4601 = vshrl.u32 %v4600, 7
    %v4602 = vsub.s32 %v4599, %v4601
    %v4603 = vrot.slane %v4575, %v4602
    %v4604 = vcombine.high %v4582, %v4582
    %v4605 = vcombine.high %v4589, %v4589
    %v4606 = vcombine.high %v4596, %v4596
    %v4607 = vcombine.high %v4603, %v4603
    %v4608 = vcombine.high %v4507, %v4507
    %v4610 = vunpack.c.l.s4 1966171168
    %v4611 = vunpack.c.0.s8 %v4610
    %v4612 = vlaneseq
    %v4613 = vshrl.u32 %v4612, 7
    %v4614 = vsub.s32 %v4611, %v4613
    %v4615 = vrot.slane %v4507, %v4614
    %v4617 = vunpack.c.l.s4 1966171168
    %v4618 = vunpack.c.0.s8 %v4617
    %v4619 = vlaneseq
    %v4620 = vshrl.u32 %v4619, 7
    %v4621 = vsub.s32 %v4618, %v4620
    %v4622 = vrot.slane %v4608, %v4621
    %v4623 = vcombine.high %v4615, %v4615
    %v4624 = vcombine.high %v4622, %v4622
    %v4626 = vunpack.c.l.s4 1966171168
    %v4627 = vunpack.c.0.s8 %v4626
    %v4628 = vlaneseq
    %v4629 = vshrl.u32 %v4628, 7
    %v4630 = vsub.s32 %v4627, %v4629
    %v4631 = vrot.slane %v4615, %v4630
    %v4633 = vunpack.c.l.s4 1966171168
    %v4634 = vunpack.c.0.s8 %v4633
    %v4635 = vlaneseq
    %v4636 = vshrl.u32 %v4635, 7
    %v4637 = vsub.s32 %v4634, %v4636
    %v4638 = vrot.slane %v4622, %v4637
    %v4640 = vunpack.c.l.s4 1966171168
    %v4641 = vunpack.c.0.s8 %v4640
    %v4642 = vlaneseq
    %v4643 = vshrl.u32 %v4642, 7
    %v4644 = vsub.s32 %v4641, %v4643
    %v4645 = vrot.slane %v4623, %v4644
    %v4647 = vunpack.c.l.s4 1966171168
    %v4648 = vunpack.c.0.s8 %v4647
    %v4649 = vlaneseq
    %v4650 = vshrl.u32 %v4649, 7
    %v4651 = vsub.s32 %v4648, %v4650
    %v4652 = vrot.slane %v4624, %v4651
    %v4653 = vcombine.high %v4631, %v4631
    %v4654 = vcombine.high %v4638, %v4638
    %v4655 = vcombine.high %v4645, %v4645
    %v4656 = vcombine.high %v4652, %v4652
    %v4657 = vcombine.high %v4509, %v4509
    %v4659 = vunpack.c.l.s4 1966171168
    %v4660 = vunpack.c.0.s8 %v4659
    %v4661 = vlaneseq
    %v4662 = vshrl.u32 %v4661, 7
    %v4663 = vsub.s32 %v4660, %v4662
    %v4664 = vrot.slane %v4509, %v4663
    %v4666 = vunpack.c.l.s4 1966171168
    %v4667 = vunpack.c.0.s8 %v4666
    %v4668 = vlaneseq
    %v4669 = vshrl.u32 %v4668, 7
    %v4670 = vsub.s32 %v4667, %v4669
    %v4671 = vrot.slane %v4657, %v4670
    %v4672 = vcombine.high %v4664, %v4664
    %v4673 = vcombine.high %v4671, %v4671
    %v4675 = vunpack.c.l.s4 1966171168
    %v4676 = vunpack.c.0.s8 %v4675
    %v4677 = vlaneseq
    %v4678 = vshrl.u32 %v4677, 7
    %v4679 = vsub.s32 %v4676, %v4678
    %v4680 = vrot.slane %v4664, %v4679
    %v4682 = vunpack.c.l.s4 1966171168
    %v4683 = vunpack.c.0.s8 %v4682
    %v4684 = vlaneseq
    %v4685 = vshrl.u32 %v4684, 7
    %v4686 = vsub.s32 %v4683, %v4685
    %v4687 = vrot.slane %v4671, %v4686
    %v4689 = vunpack.c.l.s4 1966171168
    %v4690 = vunpack.c.0.s8 %v4689
    %v4691 = vlaneseq
    %v4692 = vshrl.u32 %v4691, 7
    %v4693 = vsub.s32 %v4690, %v4692
    %v4694 = vrot.slane %v4672, %v4693
    %v4696 = vunpack.c.l.s4 1966171168
    %v4697 = vunpack.c.0.s8 %v4696
    %v4698 = vlaneseq
    %v4699 = vshrl.u32 %v4698, 7
    %v4700 = vsub.s32 %v4697, %v4699
    %v4701 = vrot.slane %v4673, %v4700
    %v4702 = vcombine.high %v4680, %v4680
    %v4703 = vcombine.high %v4687, %v4687
    %v4704 = vcombine.high %v4694, %v4694
    %v4705 = vcombine.high %v4701, %v4701
    %v4706 = vlaneseq
    %v4707 = vshrl.u32 %v4706, 7
    %v4708 = vsub.s32 0, %v4707
    %v4709 = vrot.slane %v4533, %v4708
    %v4710 = vlaneseq
    %v4711 = vshrl.u32 %v4710, 7
    %v4712 = vsub.s32 0, %v4711
    %v4713 = vrot.slane %v4547, %v4712
    %v4714 = vlaneseq
    %v4715 = vshrl.u32 %v4714, 7
    %v4716 = vsub.s32 0, %v4715
    %v4717 = vrot.slane %v4555, %v4716
    %v4718 = vlaneseq
    %v4719 = vshrl.u32 %v4718, 7
    %v4720 = vsub.s32 0, %v4719
    %v4721 = vrot.slane %v4557, %v4720
    %v4722 = vlaneseq
    %v4723 = vshrl.u32 %v4722, 7
    %v4724 = vsub.s32 0, %v4723
    %v4725 = vrot.slane %v4540, %v4724
    %v4726 = vlaneseq
    %v4727 = vshrl.u32 %v4726, 7
    %v4728 = vsub.s32 0, %v4727
    %v4729 = vrot.slane %v4554, %v4728
    %v4730 = vlaneseq
    %v4731 = vshrl.u32 %v4730, 7
    %v4732 = vsub.s32 0, %v4731
    %v4733 = vrot.slane %v4556, %v4732
    %v4734 = vlaneseq
    %v4735 = vshrl.u32 %v4734, 7
    %v4736 = vsub.s32 0, %v4735
    %v4737 = vrot.slane %v4558, %v4736
    %v4738 = vlaneseq
    %v4739 = vshrl.u32 %v4738, 7
    %v4740 = vsub.s32 0, %v4739
    %v4741 = vrot.slane %v4582, %v4740
    %v4742 = vlaneseq
    %v4743 = vshrl.u32 %v4742, 7
    %v4744 = vsub.s32 0, %v4743
    %v4745 = vrot.slane %v4596, %v4744
    %v4746 = vlaneseq
    %v4747 = vshrl.u32 %v4746, 7
    %v4748 = vsub.s32 0, %v4747
    %v4749 = vrot.slane %v4604, %v4748
    %v4750 = vlaneseq
    %v4751 = vshrl.u32 %v4750, 7
    %v4752 = vsub.s32 0, %v4751
    %v4753 = vrot.slane %v4606, %v4752
    %v4754 = vlaneseq
    %v4755 = vshrl.u32 %v4754, 7
    %v4756 = vsub.s32 0, %v4755
    %v4757 = vrot.slane %v4589, %v4756
    %v4758 = vlaneseq
    %v4759 = vshrl.u32 %v4758, 7
    %v4760 = vsub.s32 0, %v4759
    %v4761 = vrot.slane %v4603, %v4760
    %v4762 = vlaneseq
    %v4763 = vshrl.u32 %v4762, 7
    %v4764 = vsub.s32 0, %v4763
    %v4765 = vrot.slane %v4605, %v4764
    %v4766 = vlaneseq
    %v4767 = vshrl.u32 %v4766, 7
    %v4768 = vsub.s32 0, %v4767
    %v4769 = vrot.slane %v4607, %v4768
    %v4770 = vlaneseq
    %v4771 = vshrl.u32 %v4770, 7
    %v4772 = vsub.s32 0, %v4771
    %v4773 = vrot.slane %v4631, %v4772
    %v4774 = vlaneseq
    %v4775 = vshrl.u32 %v4774, 7
    %v4776 = vsub.s32 0, %v4775
    %v4777 = vrot.slane %v4645, %v4776
    %v4778 = vlaneseq
    %v4779 = vshrl.u32 %v4778, 7
    %v4780 = vsub.s32 0, %v4779
    %v4781 = vrot.slane %v4653, %v4780
    %v4782 = vlaneseq
    %v4783 = vshrl.u32 %v4782, 7
    %v4784 = vsub.s32 0, %v4783
    %v4785 = vrot.slane %v4655, %v4784
    %v4786 = vlaneseq
    %v4787 = vshrl.u32 %v4786, 7
    %v4788 = vsub.s32 0, %v4787
    %v4789 = vrot.slane %v4638, %v4788
    %v4790 = vlaneseq
    %v4791 = vshrl.u32 %v4790, 7
    %v4792 = vsub.s32 0, %v4791
    %v4793 = vrot.slane %v4652, %v4792
    %v4794 = vlaneseq
    %v4795 = vshrl.u32 %v4794, 7
    %v4796 = vsub.s32 0, %v4795
    %v4797 = vrot.slane %v4654, %v4796
    %v4798 = vlaneseq
    %v4799 = vshrl.u32 %v4798, 7
    %v4800 = vsub.s32 0, %v4799
    %v4801 = vrot.slane %v4656, %v4800
    %v4802 = vlaneseq
    %v4803 = vshrl.u32 %v4802, 7
    %v4804 = vsub.s32 0, %v4803
    %v4805 = vrot.slane %v4680, %v4804
    %v4806 = vlaneseq
    %v4807 = vshrl.u32 %v4806, 7
    %v4808 = vsub.s32 0, %v4807
    %v4809 = vrot.slane %v4694, %v4808
    %v4810 = vlaneseq
    %v4811 = vshrl.u32 %v4810, 7
    %v4812 = vsub.s32 0, %v4811
    %v4813 = vrot.slane %v4702, %v4812
    %v4814 = vlaneseq
    %v4815 = vshrl.u32 %v4814, 7
    %v4816 = vsub.s32 0, %v4815
    %v4817 = vrot.slane %v4704, %v4816
    %v4818 = vlaneseq
    %v4819 = vshrl.u32 %v4818, 7
    %v4820 = vsub.s32 0, %v4819
    %v4821 = vrot.slane %v4687, %v4820
    %v4822 = vlaneseq
    %v4823 = vshrl.u32 %v4822, 7
    %v4824 = vsub.s32 0, %v4823
    %v4825 = vrot.slane %v4701, %v4824
    %v4826 = vlaneseq
    %v4827 = vshrl.u32 %v4826, 7
    %v4828 = vsub.s32 0, %v4827
    %v4829 = vrot.slane %v4703, %v4828
    %v4830 = vlaneseq
    %v4831 = vshrl.u32 %v4830, 7
    %v4832 = vsub.s32 0, %v4831
    %v4833 = vrot.slane %v4705, %v4832
    %v4866 = vmul.f32 %v4709, %v84
    %v4867 = vmul.f32 %v4713, %v85
    %v4868 = vmul.f32 %v4717, %v86
    %v4869 = vmul.f32 %v4721, %v87
    %v4870 = vmul.f32 %v4725, %v88
    %v4871 = vmul.f32 %v4729, %v89
    %v4872 = vmul.f32 %v4733, %v90
    %v4873 = vmul.f32 %v4737, %v91
    %v4874 = vmul.f32 %v4741, %v84
    %v4875 = vmul.f32 %v4745, %v85
    %v4876 = vmul.f32 %v4749, %v86
    %v4877 = vmul.f32 %v4753, %v87
    %v4878 = vmul.f32 %v4757, %v88
    %v4879 = vmul.f32 %v4761, %v89
    %v4880 = vmul.f32 %v4765, %v90
    %v4881 = vmul.f32 %v4769, %v91
    %v4882 = vmul.f32 %v4773, %v84
    %v4883 = vmul.f32 %v4777, %v85
    %v4884 = vmul.f32 %v4781, %v86
    %v4885 = vmul.f32 %v4785, %v87
    %v4886 = vmul.f32 %v4789, %v88
    %v4887 = vmul.f32 %v4793, %v89
    %v4888 = vmul.f32 %v4797, %v90
    %v4889 = vmul.f32 %v4801, %v91
    %v4890 = vmul.f32 %v4805, %v84
    %v4891 = vmul.f32 %v4809, %v85
    %v4892 = vmul.f32 %v4813, %v86
    %v4893 = vmul.f32 %v4817, %v87
    %v4894 = vmul.f32 %v4821, %v88
    %v4895 = vmul.f32 %v4825, %v89
    %v4896 = vmul.f32 %v4829, %v90
    %v4897 = vmul.f32 %v4833, %v91
    %v4898 = vsel %vm606, %v4866, 0.0
    %4899 = vadd.xlane.f32.xlu0 %v4898
    %v4900 = vpop.xlane.xlu0 %4899
    %v4901 = vsel %vm606, %v4867, 0.0
    %4902 = vadd.xlane.f32.xlu0 %v4901
    %v4903 = vpop.xlane.xlu0 %4902
    %v4904 = vsel %vm606, %v4868, 0.0
    %4905 = vadd.xlane.f32.xlu0 %v4904
    %v4906 = vpop.xlane.xlu0 %4905
    %v4907 = vsel %vm606, %v4869, 0.0
    %4908 = vadd.xlane.f32.xlu0 %v4907
    %v4909 = vpop.xlane.xlu0 %4908
    %v4910 = vsel %vm606, %v4870, 0.0
    %4911 = vadd.xlane.f32.xlu0 %v4910
    %v4912 = vpop.xlane.xlu0 %4911
    %v4913 = vsel %vm606, %v4871, 0.0
    %4914 = vadd.xlane.f32.xlu0 %v4913
    %v4915 = vpop.xlane.xlu0 %4914
    %v4916 = vsel %vm606, %v4872, 0.0
    %4917 = vadd.xlane.f32.xlu0 %v4916
    %v4918 = vpop.xlane.xlu0 %4917
    %v4919 = vsel %vm606, %v4873, 0.0
    %4920 = vadd.xlane.f32.xlu0 %v4919
    %v4921 = vpop.xlane.xlu0 %4920
    %v4922 = vsel %vm606, %v4874, 0.0
    %4923 = vadd.xlane.f32.xlu0 %v4922
    %v4924 = vpop.xlane.xlu0 %4923
    %v4925 = vsel %vm606, %v4875, 0.0
    %4926 = vadd.xlane.f32.xlu0 %v4925
    %v4927 = vpop.xlane.xlu0 %4926
    %v4928 = vsel %vm606, %v4876, 0.0
    %4929 = vadd.xlane.f32.xlu0 %v4928
    %v4930 = vpop.xlane.xlu0 %4929
    %v4931 = vsel %vm606, %v4877, 0.0
    %4932 = vadd.xlane.f32.xlu0 %v4931
    %v4933 = vpop.xlane.xlu0 %4932
    %v4934 = vsel %vm606, %v4878, 0.0
    %4935 = vadd.xlane.f32.xlu0 %v4934
    %v4936 = vpop.xlane.xlu0 %4935
    %v4937 = vsel %vm606, %v4879, 0.0
    %4938 = vadd.xlane.f32.xlu0 %v4937
    %v4939 = vpop.xlane.xlu0 %4938
    %v4940 = vsel %vm606, %v4880, 0.0
    %4941 = vadd.xlane.f32.xlu0 %v4940
    %v4942 = vpop.xlane.xlu0 %4941
    %v4943 = vsel %vm606, %v4881, 0.0
    %4944 = vadd.xlane.f32.xlu0 %v4943
    %v4945 = vpop.xlane.xlu0 %4944
    %v4946 = vsel %vm606, %v4882, 0.0
    %4947 = vadd.xlane.f32.xlu0 %v4946
    %v4948 = vpop.xlane.xlu0 %4947
    %v4949 = vsel %vm606, %v4883, 0.0
    %4950 = vadd.xlane.f32.xlu0 %v4949
    %v4951 = vpop.xlane.xlu0 %4950
    %v4952 = vsel %vm606, %v4884, 0.0
    %4953 = vadd.xlane.f32.xlu0 %v4952
    %v4954 = vpop.xlane.xlu0 %4953
    %v4955 = vsel %vm606, %v4885, 0.0
    %4956 = vadd.xlane.f32.xlu0 %v4955
    %v4957 = vpop.xlane.xlu0 %4956
    %v4958 = vsel %vm606, %v4886, 0.0
    %4959 = vadd.xlane.f32.xlu0 %v4958
    %v4960 = vpop.xlane.xlu0 %4959
    %v4961 = vsel %vm606, %v4887, 0.0
    %4962 = vadd.xlane.f32.xlu0 %v4961
    %v4963 = vpop.xlane.xlu0 %4962
    %v4964 = vsel %vm606, %v4888, 0.0
    %4965 = vadd.xlane.f32.xlu0 %v4964
    %v4966 = vpop.xlane.xlu0 %4965
    %v4967 = vsel %vm606, %v4889, 0.0
    %4968 = vadd.xlane.f32.xlu0 %v4967
    %v4969 = vpop.xlane.xlu0 %4968
    %v4970 = vsel %vm606, %v4890, 0.0
    %4971 = vadd.xlane.f32.xlu0 %v4970
    %v4972 = vpop.xlane.xlu0 %4971
    %v4973 = vsel %vm606, %v4891, 0.0
    %4974 = vadd.xlane.f32.xlu0 %v4973
    %v4975 = vpop.xlane.xlu0 %4974
    %v4976 = vsel %vm606, %v4892, 0.0
    %4977 = vadd.xlane.f32.xlu0 %v4976
    %v4978 = vpop.xlane.xlu0 %4977
    %v4979 = vsel %vm606, %v4893, 0.0
    %4980 = vadd.xlane.f32.xlu0 %v4979
    %v4981 = vpop.xlane.xlu0 %4980
    %v4982 = vsel %vm606, %v4894, 0.0
    %4983 = vadd.xlane.f32.xlu0 %v4982
    %v4984 = vpop.xlane.xlu0 %4983
    %v4985 = vsel %vm606, %v4895, 0.0
    %4986 = vadd.xlane.f32.xlu0 %v4985
    %v4987 = vpop.xlane.xlu0 %4986
    %v4988 = vsel %vm606, %v4896, 0.0
    %4989 = vadd.xlane.f32.xlu0 %v4988
    %v4990 = vpop.xlane.xlu0 %4989
    %v4991 = vsel %vm606, %v4897, 0.0
    %4992 = vadd.xlane.f32.xlu0 %v4991
    %v4993 = vpop.xlane.xlu0 %4992
    %4994 = vrot.lane.b32.xlu0 %v4495, 96
    %v4995 = vpop.permute.xlu0 %4994
    %v5004 = vlaneseq
    %v5005 = vshrl.u32 %v5004, 7
    %v5006 = vsub.s32 %v714, %v5005
    %v5007 = vrot.slane %v4900, %v5006
    %v5008 = vlaneseq
    %v5009 = vshrl.u32 %v5008, 7
    %v5010 = vsub.s32 %v714, %v5009
    %v5011 = vrot.slane %v4903, %v5010
    %v5012 = vlaneseq
    %v5013 = vshrl.u32 %v5012, 7
    %v5014 = vsub.s32 %v714, %v5013
    %v5015 = vrot.slane %v4906, %v5014
    %v5016 = vlaneseq
    %v5017 = vshrl.u32 %v5016, 7
    %v5018 = vsub.s32 %v714, %v5017
    %v5019 = vrot.slane %v4909, %v5018
    %v5020 = vlaneseq
    %v5021 = vshrl.u32 %v5020, 7
    %v5022 = vsub.s32 %v714, %v5021
    %v5023 = vrot.slane %v4912, %v5022
    %v5024 = vlaneseq
    %v5025 = vshrl.u32 %v5024, 7
    %v5026 = vsub.s32 %v714, %v5025
    %v5027 = vrot.slane %v4915, %v5026
    %v5028 = vlaneseq
    %v5029 = vshrl.u32 %v5028, 7
    %v5030 = vsub.s32 %v714, %v5029
    %v5031 = vrot.slane %v4918, %v5030
    %v5032 = vlaneseq
    %v5033 = vshrl.u32 %v5032, 7
    %v5034 = vsub.s32 %v714, %v5033
    %v5035 = vrot.slane %v4921, %v5034
    %v5036 = vsel %vm747, %v5011, %v5007
    %v5037 = vsel %vm749, %v5015, %v5036
    %v5038 = vsel %vm751, %v5019, %v5037
    %v5039 = vsel %vm753, %v5023, %v5038
    %v5040 = vsel %vm755, %v5027, %v5039
    %v5041 = vsel %vm757, %v5031, %v5040
    %v5042 = vsel %vm759, %v5035, %v5041
    %v5044 = vsel %vm606, %v4495, 0
    %v5046 = vsel %vm606, %v4995, 0
    %5048 = vmatprep.subr.mxu0 0.0
    %5049 = vmatpush1.xpose.msra.mxu0 0.0
    %5050 = vmatprep.subr.mxu0 0.0
    %5051 = vmatpush1.xpose.msra.mxu0 0.0
    %5052 = vmatprep.subr.mxu0 0.0
    %5053 = vmatpush1.xpose.msra.mxu0 0.0
    %5054 = vmatprep.subr.mxu0 0.0
    %5055 = vmatpush1.xpose.msra.mxu0 0.0
    %5056 = vmatprep.subr.mxu0 0.0
    %5057 = vmatpush1.xpose.msra.mxu0 0.0
    %5058 = vmatprep.subr.mxu0 0.0
    %5059 = vmatpush1.xpose.msra.mxu0 0.0
    %5060 = vmatprep.subr.mxu0 0.0
    %5061 = vmatpush1.xpose.msra.mxu0 0.0
    %5062 = vmatprep.subr.mxu0 0.0
    %5063 = vmatpush1.xpose.msra.mxu0 0.0
    %5064 = vmatprep.subr.mxu0 0.0
    %5065 = vmatpush1.xpose.msra.mxu0 0.0
    %5066 = vmatprep.subr.mxu0 0.0
    %5067 = vmatpush1.xpose.msra.mxu0 0.0
    %5068 = vmatprep.subr.mxu0 0.0
    %5069 = vmatpush1.xpose.msra.mxu0 0.0
    %5070 = vmatprep.subr.mxu0 0.0
    %5071 = vmatpush1.xpose.msra.mxu0 0.0
    %5072 = vmatprep.subr.mxu0 0.0
    %5073 = vmatpush1.xpose.msra.mxu0 0.0
    %5074 = vmatprep.subr.mxu0 0.0
    %5075 = vmatpush1.xpose.msra.mxu0 0.0
    %5076 = vmatprep.subr.mxu0 0.0
    %5077 = vmatpush1.xpose.msra.mxu0 0.0
    %5078 = vmatprep.subr.mxu0 0.0
    %5079 = vmatpush1.xpose.msra.mxu0 %v5046
    %5080 = vmatprep.subr.mxu0 0.0
    %5081 = vmatpush2.xpose.msra.mxu0 0.0
    %5082 = vmatprep.subr.mxu0 0.0
    %5083 = vmatpush2.xpose.msra.mxu0 0.0
    %5084 = vmatprep.subr.mxu0 0.0
    %5085 = vmatpush2.xpose.msra.mxu0 0.0
    %5086 = vmatprep.subr.mxu0 0.0
    %5087 = vmatpush2.xpose.msra.mxu0 0.0
    %5088 = vmatprep.subr.mxu0 0.0
    %5089 = vmatpush2.xpose.msra.mxu0 0.0
    %5090 = vmatprep.subr.mxu0 0.0
    %5091 = vmatpush2.xpose.msra.mxu0 0.0
    %5092 = vmatprep.subr.mxu0 0.0
    %5093 = vmatpush2.xpose.msra.mxu0 0.0
    %5094 = vmatprep.subr.mxu0 0.0
    %5095 = vmatpush2.xpose.msra.mxu0 0.0
    %5096 = vmatprep.subr.mxu0 0.0
    %5097 = vmatpush2.xpose.msra.mxu0 0.0
    %5098 = vmatprep.subr.mxu0 0.0
    %5099 = vmatpush2.xpose.msra.mxu0 0.0
    %5100 = vmatprep.subr.mxu0 0.0
    %5101 = vmatpush2.xpose.msra.mxu0 0.0
    %5102 = vmatprep.subr.mxu0 0.0
    %5103 = vmatpush2.xpose.msra.mxu0 0.0
    %5104 = vmatprep.subr.mxu0 0.0
    %5105 = vmatpush2.xpose.msra.mxu0 0.0
    %5106 = vmatprep.subr.mxu0 0.0
    %5107 = vmatpush2.xpose.msra.mxu0 0.0
    %5108 = vmatprep.subr.mxu0 0.0
    %5109 = vmatpush2.xpose.msra.mxu0 0.0
    %5110 = vmatprep.subr.mxu0 0.0
    %5111 = vmatpush2.xpose.msra.mxu0 0.0
    %5112 = vmatprep.mubr.f32.mxu0 0.0
    %5113 = vmatmul.mubr.f32.gmra.mxu0 %v5044
    %v5114 = vpop.f32.mrf.mxu0
    %v5115 = vadd.f32 %v5042, %v5114
    %v5116 = vpop.f32.mrf.mxu0
    %5117 = vdwg.mxu0
    %5118 = vrot.lane.b32.xlu0 %v4505, 96
    %v5119 = vpop.permute.xlu0 %5118
    %v5128 = vlaneseq
    %v5129 = vshrl.u32 %v5128, 7
    %v5130 = vsub.s32 %v714, %v5129
    %v5131 = vrot.slane %v4924, %v5130
    %v5132 = vlaneseq
    %v5133 = vshrl.u32 %v5132, 7
    %v5134 = vsub.s32 %v714, %v5133
    %v5135 = vrot.slane %v4927, %v5134
    %v5136 = vlaneseq
    %v5137 = vshrl.u32 %v5136, 7
    %v5138 = vsub.s32 %v714, %v5137
    %v5139 = vrot.slane %v4930, %v5138
    %v5140 = vlaneseq
    %v5141 = vshrl.u32 %v5140, 7
    %v5142 = vsub.s32 %v714, %v5141
    %v5143 = vrot.slane %v4933, %v5142
    %v5144 = vlaneseq
    %v5145 = vshrl.u32 %v5144, 7
    %v5146 = vsub.s32 %v714, %v5145
    %v5147 = vrot.slane %v4936, %v5146
    %v5148 = vlaneseq
    %v5149 = vshrl.u32 %v5148, 7
    %v5150 = vsub.s32 %v714, %v5149
    %v5151 = vrot.slane %v4939, %v5150
    %v5152 = vlaneseq
    %v5153 = vshrl.u32 %v5152, 7
    %v5154 = vsub.s32 %v714, %v5153
    %v5155 = vrot.slane %v4942, %v5154
    %v5156 = vlaneseq
    %v5157 = vshrl.u32 %v5156, 7
    %v5158 = vsub.s32 %v714, %v5157
    %v5159 = vrot.slane %v4945, %v5158
    %v5160 = vsel %vm747, %v5135, %v5131
    %v5161 = vsel %vm749, %v5139, %v5160
    %v5162 = vsel %vm751, %v5143, %v5161
    %v5163 = vsel %vm753, %v5147, %v5162
    %v5164 = vsel %vm755, %v5151, %v5163
    %v5165 = vsel %vm757, %v5155, %v5164
    %v5166 = vsel %vm759, %v5159, %v5165
    %v5168 = vsel %vm606, %v4505, 0
    %v5170 = vsel %vm606, %v5119, 0
    %5172 = vmatprep.subr.mxu0 0.0
    %5173 = vmatpush1.xpose.msra.mxu0 0.0
    %5174 = vmatprep.subr.mxu0 0.0
    %5175 = vmatpush1.xpose.msra.mxu0 0.0
    %5176 = vmatprep.subr.mxu0 0.0
    %5177 = vmatpush1.xpose.msra.mxu0 0.0
    %5178 = vmatprep.subr.mxu0 0.0
    %5179 = vmatpush1.xpose.msra.mxu0 0.0
    %5180 = vmatprep.subr.mxu0 0.0
    %5181 = vmatpush1.xpose.msra.mxu0 0.0
    %5182 = vmatprep.subr.mxu0 0.0
    %5183 = vmatpush1.xpose.msra.mxu0 0.0
    %5184 = vmatprep.subr.mxu0 0.0
    %5185 = vmatpush1.xpose.msra.mxu0 0.0
    %5186 = vmatprep.subr.mxu0 0.0
    %5187 = vmatpush1.xpose.msra.mxu0 0.0
    %5188 = vmatprep.subr.mxu0 0.0
    %5189 = vmatpush1.xpose.msra.mxu0 0.0
    %5190 = vmatprep.subr.mxu0 0.0
    %5191 = vmatpush1.xpose.msra.mxu0 0.0
    %5192 = vmatprep.subr.mxu0 0.0
    %5193 = vmatpush1.xpose.msra.mxu0 0.0
    %5194 = vmatprep.subr.mxu0 0.0
    %5195 = vmatpush1.xpose.msra.mxu0 0.0
    %5196 = vmatprep.subr.mxu0 0.0
    %5197 = vmatpush1.xpose.msra.mxu0 0.0
    %5198 = vmatprep.subr.mxu0 0.0
    %5199 = vmatpush1.xpose.msra.mxu0 0.0
    %5200 = vmatprep.subr.mxu0 0.0
    %5201 = vmatpush1.xpose.msra.mxu0 0.0
    %5202 = vmatprep.subr.mxu0 0.0
    %5203 = vmatpush1.xpose.msra.mxu0 %v5170
    %5204 = vmatprep.subr.mxu0 0.0
    %5205 = vmatpush2.xpose.msra.mxu0 0.0
    %5206 = vmatprep.subr.mxu0 0.0
    %5207 = vmatpush2.xpose.msra.mxu0 0.0
    %5208 = vmatprep.subr.mxu0 0.0
    %5209 = vmatpush2.xpose.msra.mxu0 0.0
    %5210 = vmatprep.subr.mxu0 0.0
    %5211 = vmatpush2.xpose.msra.mxu0 0.0
    %5212 = vmatprep.subr.mxu0 0.0
    %5213 = vmatpush2.xpose.msra.mxu0 0.0
    %5214 = vmatprep.subr.mxu0 0.0
    %5215 = vmatpush2.xpose.msra.mxu0 0.0
    %5216 = vmatprep.subr.mxu0 0.0
    %5217 = vmatpush2.xpose.msra.mxu0 0.0
    %5218 = vmatprep.subr.mxu0 0.0
    %5219 = vmatpush2.xpose.msra.mxu0 0.0
    %5220 = vmatprep.subr.mxu0 0.0
    %5221 = vmatpush2.xpose.msra.mxu0 0.0
    %5222 = vmatprep.subr.mxu0 0.0
    %5223 = vmatpush2.xpose.msra.mxu0 0.0
    %5224 = vmatprep.subr.mxu0 0.0
    %5225 = vmatpush2.xpose.msra.mxu0 0.0
    %5226 = vmatprep.subr.mxu0 0.0
    %5227 = vmatpush2.xpose.msra.mxu0 0.0
    %5228 = vmatprep.subr.mxu0 0.0
    %5229 = vmatpush2.xpose.msra.mxu0 0.0
    %5230 = vmatprep.subr.mxu0 0.0
    %5231 = vmatpush2.xpose.msra.mxu0 0.0
    %5232 = vmatprep.subr.mxu0 0.0
    %5233 = vmatpush2.xpose.msra.mxu0 0.0
    %5234 = vmatprep.subr.mxu0 0.0
    %5235 = vmatpush2.xpose.msra.mxu0 0.0
    %5236 = vmatprep.mubr.f32.mxu0 0.0
    %5237 = vmatmul.mubr.f32.gmra.mxu0 %v5168
    %v5238 = vpop.f32.mrf.mxu0
    %v5239 = vadd.f32 %v5166, %v5238
    %v5240 = vpop.f32.mrf.mxu0
    %5241 = vdwg.mxu0
    %5242 = vrot.lane.b32.xlu0 %v4507, 96
    %v5243 = vpop.permute.xlu0 %5242
    %v5252 = vlaneseq
    %v5253 = vshrl.u32 %v5252, 7
    %v5254 = vsub.s32 %v714, %v5253
    %v5255 = vrot.slane %v4948, %v5254
    %v5256 = vlaneseq
    %v5257 = vshrl.u32 %v5256, 7
    %v5258 = vsub.s32 %v714, %v5257
    %v5259 = vrot.slane %v4951, %v5258
    %v5260 = vlaneseq
    %v5261 = vshrl.u32 %v5260, 7
    %v5262 = vsub.s32 %v714, %v5261
    %v5263 = vrot.slane %v4954, %v5262
    %v5264 = vlaneseq
    %v5265 = vshrl.u32 %v5264, 7
    %v5266 = vsub.s32 %v714, %v5265
    %v5267 = vrot.slane %v4957, %v5266
    %v5268 = vlaneseq
    %v5269 = vshrl.u32 %v5268, 7
    %v5270 = vsub.s32 %v714, %v5269
    %v5271 = vrot.slane %v4960, %v5270
    %v5272 = vlaneseq
    %v5273 = vshrl.u32 %v5272, 7
    %v5274 = vsub.s32 %v714, %v5273
    %v5275 = vrot.slane %v4963, %v5274
    %v5276 = vlaneseq
    %v5277 = vshrl.u32 %v5276, 7
    %v5278 = vsub.s32 %v714, %v5277
    %v5279 = vrot.slane %v4966, %v5278
    %v5280 = vlaneseq
    %v5281 = vshrl.u32 %v5280, 7
    %v5282 = vsub.s32 %v714, %v5281
    %v5283 = vrot.slane %v4969, %v5282
    %v5284 = vsel %vm747, %v5259, %v5255
    %v5285 = vsel %vm749, %v5263, %v5284
    %v5286 = vsel %vm751, %v5267, %v5285
    %v5287 = vsel %vm753, %v5271, %v5286
    %v5288 = vsel %vm755, %v5275, %v5287
    %v5289 = vsel %vm757, %v5279, %v5288
    %v5290 = vsel %vm759, %v5283, %v5289
    %v5292 = vsel %vm606, %v4507, 0
    %v5294 = vsel %vm606, %v5243, 0
    %5296 = vmatprep.subr.mxu0 0.0
    %5297 = vmatpush1.xpose.msra.mxu0 0.0
    %5298 = vmatprep.subr.mxu0 0.0
    %5299 = vmatpush1.xpose.msra.mxu0 0.0
    %5300 = vmatprep.subr.mxu0 0.0
    %5301 = vmatpush1.xpose.msra.mxu0 0.0
    %5302 = vmatprep.subr.mxu0 0.0
    %5303 = vmatpush1.xpose.msra.mxu0 0.0
    %5304 = vmatprep.subr.mxu0 0.0
    %5305 = vmatpush1.xpose.msra.mxu0 0.0
    %5306 = vmatprep.subr.mxu0 0.0
    %5307 = vmatpush1.xpose.msra.mxu0 0.0
    %5308 = vmatprep.subr.mxu0 0.0
    %5309 = vmatpush1.xpose.msra.mxu0 0.0
    %5310 = vmatprep.subr.mxu0 0.0
    %5311 = vmatpush1.xpose.msra.mxu0 0.0
    %5312 = vmatprep.subr.mxu0 0.0
    %5313 = vmatpush1.xpose.msra.mxu0 0.0
    %5314 = vmatprep.subr.mxu0 0.0
    %5315 = vmatpush1.xpose.msra.mxu0 0.0
    %5316 = vmatprep.subr.mxu0 0.0
    %5317 = vmatpush1.xpose.msra.mxu0 0.0
    %5318 = vmatprep.subr.mxu0 0.0
    %5319 = vmatpush1.xpose.msra.mxu0 0.0
    %5320 = vmatprep.subr.mxu0 0.0
    %5321 = vmatpush1.xpose.msra.mxu0 0.0
    %5322 = vmatprep.subr.mxu0 0.0
    %5323 = vmatpush1.xpose.msra.mxu0 0.0
    %5324 = vmatprep.subr.mxu0 0.0
    %5325 = vmatpush1.xpose.msra.mxu0 0.0
    %5326 = vmatprep.subr.mxu0 0.0
    %5327 = vmatpush1.xpose.msra.mxu0 %v5294
    %5328 = vmatprep.subr.mxu0 0.0
    %5329 = vmatpush2.xpose.msra.mxu0 0.0
    %5330 = vmatprep.subr.mxu0 0.0
    %5331 = vmatpush2.xpose.msra.mxu0 0.0
    %5332 = vmatprep.subr.mxu0 0.0
    %5333 = vmatpush2.xpose.msra.mxu0 0.0
    %5334 = vmatprep.subr.mxu0 0.0
    %5335 = vmatpush2.xpose.msra.mxu0 0.0
    %5336 = vmatprep.subr.mxu0 0.0
    %5337 = vmatpush2.xpose.msra.mxu0 0.0
    %5338 = vmatprep.subr.mxu0 0.0
    %5339 = vmatpush2.xpose.msra.mxu0 0.0
    %5340 = vmatprep.subr.mxu0 0.0
    %5341 = vmatpush2.xpose.msra.mxu0 0.0
    %5342 = vmatprep.subr.mxu0 0.0
    %5343 = vmatpush2.xpose.msra.mxu0 0.0
    %5344 = vmatprep.subr.mxu0 0.0
    %5345 = vmatpush2.xpose.msra.mxu0 0.0
    %5346 = vmatprep.subr.mxu0 0.0
    %5347 = vmatpush2.xpose.msra.mxu0 0.0
    %5348 = vmatprep.subr.mxu0 0.0
    %5349 = vmatpush2.xpose.msra.mxu0 0.0
    %5350 = vmatprep.subr.mxu0 0.0
    %5351 = vmatpush2.xpose.msra.mxu0 0.0
    %5352 = vmatprep.subr.mxu0 0.0
    %5353 = vmatpush2.xpose.msra.mxu0 0.0
    %5354 = vmatprep.subr.mxu0 0.0
    %5355 = vmatpush2.xpose.msra.mxu0 0.0
    %5356 = vmatprep.subr.mxu0 0.0
    %5357 = vmatpush2.xpose.msra.mxu0 0.0
    %5358 = vmatprep.subr.mxu0 0.0
    %5359 = vmatpush2.xpose.msra.mxu0 0.0
    %5360 = vmatprep.mubr.f32.mxu0 0.0
    %5361 = vmatmul.mubr.f32.gmra.mxu0 %v5292
    %v5362 = vpop.f32.mrf.mxu0
    %v5363 = vadd.f32 %v5290, %v5362
    %v5364 = vpop.f32.mrf.mxu0
    %5365 = vdwg.mxu0
    %5366 = vrot.lane.b32.xlu0 %v4509, 96
    %v5367 = vpop.permute.xlu0 %5366
    %v5376 = vlaneseq
    %v5377 = vshrl.u32 %v5376, 7
    %v5378 = vsub.s32 %v714, %v5377
    %v5379 = vrot.slane %v4972, %v5378
    %v5380 = vlaneseq
    %v5381 = vshrl.u32 %v5380, 7
    %v5382 = vsub.s32 %v714, %v5381
    %v5383 = vrot.slane %v4975, %v5382
    %v5384 = vlaneseq
    %v5385 = vshrl.u32 %v5384, 7
    %v5386 = vsub.s32 %v714, %v5385
    %v5387 = vrot.slane %v4978, %v5386
    %v5388 = vlaneseq
    %v5389 = vshrl.u32 %v5388, 7
    %v5390 = vsub.s32 %v714, %v5389
    %v5391 = vrot.slane %v4981, %v5390
    %v5392 = vlaneseq
    %v5393 = vshrl.u32 %v5392, 7
    %v5394 = vsub.s32 %v714, %v5393
    %v5395 = vrot.slane %v4984, %v5394
    %v5396 = vlaneseq
    %v5397 = vshrl.u32 %v5396, 7
    %v5398 = vsub.s32 %v714, %v5397
    %v5399 = vrot.slane %v4987, %v5398
    %v5400 = vlaneseq
    %v5401 = vshrl.u32 %v5400, 7
    %v5402 = vsub.s32 %v714, %v5401
    %v5403 = vrot.slane %v4990, %v5402
    %v5404 = vlaneseq
    %v5405 = vshrl.u32 %v5404, 7
    %v5406 = vsub.s32 %v714, %v5405
    %v5407 = vrot.slane %v4993, %v5406
    %v5408 = vsel %vm747, %v5383, %v5379
    %v5409 = vsel %vm749, %v5387, %v5408
    %v5410 = vsel %vm751, %v5391, %v5409
    %v5411 = vsel %vm753, %v5395, %v5410
    %v5412 = vsel %vm755, %v5399, %v5411
    %v5413 = vsel %vm757, %v5403, %v5412
    %v5414 = vsel %vm759, %v5407, %v5413
    %v5416 = vsel %vm606, %v4509, 0
    %v5418 = vsel %vm606, %v5367, 0
    %5420 = vmatprep.subr.mxu0 0.0
    %5421 = vmatpush1.xpose.msra.mxu0 0.0
    %5422 = vmatprep.subr.mxu0 0.0
    %5423 = vmatpush1.xpose.msra.mxu0 0.0
    %5424 = vmatprep.subr.mxu0 0.0
    %5425 = vmatpush1.xpose.msra.mxu0 0.0
    %5426 = vmatprep.subr.mxu0 0.0
    %5427 = vmatpush1.xpose.msra.mxu0 0.0
    %5428 = vmatprep.subr.mxu0 0.0
    %5429 = vmatpush1.xpose.msra.mxu0 0.0
    %5430 = vmatprep.subr.mxu0 0.0
    %5431 = vmatpush1.xpose.msra.mxu0 0.0
    %5432 = vmatprep.subr.mxu0 0.0
    %5433 = vmatpush1.xpose.msra.mxu0 0.0
    %5434 = vmatprep.subr.mxu0 0.0
    %5435 = vmatpush1.xpose.msra.mxu0 0.0
    %5436 = vmatprep.subr.mxu0 0.0
    %5437 = vmatpush1.xpose.msra.mxu0 0.0
    %5438 = vmatprep.subr.mxu0 0.0
    %5439 = vmatpush1.xpose.msra.mxu0 0.0
    %5440 = vmatprep.subr.mxu0 0.0
    %5441 = vmatpush1.xpose.msra.mxu0 0.0
    %5442 = vmatprep.subr.mxu0 0.0
    %5443 = vmatpush1.xpose.msra.mxu0 0.0
    %5444 = vmatprep.subr.mxu0 0.0
    %5445 = vmatpush1.xpose.msra.mxu0 0.0
    %5446 = vmatprep.subr.mxu0 0.0
    %5447 = vmatpush1.xpose.msra.mxu0 0.0
    %5448 = vmatprep.subr.mxu0 0.0
    %5449 = vmatpush1.xpose.msra.mxu0 0.0
    %5450 = vmatprep.subr.mxu0 0.0
    %5451 = vmatpush1.xpose.msra.mxu0 %v5418
    %5452 = vmatprep.subr.mxu0 0.0
    %5453 = vmatpush2.xpose.msra.mxu0 0.0
    %5454 = vmatprep.subr.mxu0 0.0
    %5455 = vmatpush2.xpose.msra.mxu0 0.0
    %5456 = vmatprep.subr.mxu0 0.0
    %5457 = vmatpush2.xpose.msra.mxu0 0.0
    %5458 = vmatprep.subr.mxu0 0.0
    %5459 = vmatpush2.xpose.msra.mxu0 0.0
    %5460 = vmatprep.subr.mxu0 0.0
    %5461 = vmatpush2.xpose.msra.mxu0 0.0
    %5462 = vmatprep.subr.mxu0 0.0
    %5463 = vmatpush2.xpose.msra.mxu0 0.0
    %5464 = vmatprep.subr.mxu0 0.0
    %5465 = vmatpush2.xpose.msra.mxu0 0.0
    %5466 = vmatprep.subr.mxu0 0.0
    %5467 = vmatpush2.xpose.msra.mxu0 0.0
    %5468 = vmatprep.subr.mxu0 0.0
    %5469 = vmatpush2.xpose.msra.mxu0 0.0
    %5470 = vmatprep.subr.mxu0 0.0
    %5471 = vmatpush2.xpose.msra.mxu0 0.0
    %5472 = vmatprep.subr.mxu0 0.0
    %5473 = vmatpush2.xpose.msra.mxu0 0.0
    %5474 = vmatprep.subr.mxu0 0.0
    %5475 = vmatpush2.xpose.msra.mxu0 0.0
    %5476 = vmatprep.subr.mxu0 0.0
    %5477 = vmatpush2.xpose.msra.mxu0 0.0
    %5478 = vmatprep.subr.mxu0 0.0
    %5479 = vmatpush2.xpose.msra.mxu0 0.0
    %5480 = vmatprep.subr.mxu0 0.0
    %5481 = vmatpush2.xpose.msra.mxu0 0.0
    %5482 = vmatprep.subr.mxu0 0.0
    %5483 = vmatpush2.xpose.msra.mxu0 0.0
    %5484 = vmatprep.mubr.f32.mxu0 0.0
    %5485 = vmatmul.mubr.f32.gmra.mxu0 %v5416
    %v5486 = vpop.f32.mrf.mxu0
    %v5487 = vadd.f32 %v5414, %v5486
    %v5488 = vpop.f32.mrf.mxu0
    %5489 = vdwg.mxu0
    %v5490 = vmul.f32 %v5115, 0.35355338
    %v5491 = vmul.f32 %v5239, 0.35355338
    %v5492 = vmul.f32 %v5363, 0.35355338
    %v5493 = vmul.f32 %v5487, 0.35355338
    %v5494 = vadd.f32 %v5490, %v100
    %v5495 = vadd.f32 %v5491, %v101
    %v5496 = vadd.f32 %v5492, %v102
    %v5497 = vadd.f32 %v5493, %v103
    %v5498 = vsel %vm606, %v5494, -inf
    %5499 = vmax.xlane.f32.xlu0 %v5498
    %v5500 = vpop.xlane.xlu0 %5499
    %v5501 = vsel %vm606, %v5495, -inf
    %5502 = vmax.xlane.f32.xlu0 %v5501
    %v5503 = vpop.xlane.xlu0 %5502
    %v5504 = vsel %vm606, %v5496, -inf
    %5505 = vmax.xlane.f32.xlu0 %v5504
    %v5506 = vpop.xlane.xlu0 %5505
    %v5507 = vsel %vm606, %v5497, -inf
    %5508 = vmax.xlane.f32.xlu0 %v5507
    %v5509 = vpop.xlane.xlu0 %5508
    %v5510 = vsub.f32 %v5494, %v5500
    %v5511 = vsub.f32 %v5495, %v5503
    %v5512 = vsub.f32 %v5496, %v5506
    %v5513 = vsub.f32 %v5497, %v5509
    %v5514 = vmul.f32 %v5510, 1.442695
    %v5515 = vpow.pop %v5514
    %v5516 = vmul.f32 %v5511, 1.442695
    %v5517 = vpow.pop %v5516
    %v5518 = vmul.f32 %v5512, 1.442695
    %v5519 = vpow.pop %v5518
    %v5520 = vmul.f32 %v5513, 1.442695
    %v5521 = vpow.pop %v5520
    %v5522 = vsel %vm606, %v5515, 0.0
    %5523 = vadd.xlane.f32.xlu0 %v5522
    %v5524 = vpop.xlane.xlu0 %5523
    %v5525 = vsel %vm606, %v5517, 0.0
    %5526 = vadd.xlane.f32.xlu0 %v5525
    %v5527 = vpop.xlane.xlu0 %5526
    %v5528 = vsel %vm606, %v5519, 0.0
    %5529 = vadd.xlane.f32.xlu0 %v5528
    %v5530 = vpop.xlane.xlu0 %5529
    %v5531 = vsel %vm606, %v5521, 0.0
    %5532 = vadd.xlane.f32.xlu0 %v5531
    %v5533 = vpop.xlane.xlu0 %5532
    %v5534 = vrcp.pop %v5524
    %v5535 = vrcp.pop %v5527
    %v5536 = vrcp.pop %v5530
    %v5537 = vrcp.pop %v5533
    %v5538 = vmul.f32 %v5515, %v5534
    %v5539 = vmul.f32 %v5517, %v5535
    %v5540 = vmul.f32 %v5519, %v5536
    %v5541 = vmul.f32 %v5521, %v5537
    %v5542 = vlaneseq
    %v5543 = vshrl.u32 %v5542, 7
    %v5544 = vsub.s32 0, %v5543
    %v5545 = vrot.slane %v5538, %v5544
    %5547 = vbcast.lane.b32.xlu0 %v5545, 256
    %v5548 = vpop.permute.xlu0 %5547
    %v5549 = vlaneseq
    %v5550 = vshrl.u32 %v5549, 7
    %v5551 = vsub.s32 1, %v5550
    %v5552 = vrot.slane %v5538, %v5551
    %5554 = vbcast.lane.b32.xlu0 %v5552, 256
    %v5555 = vpop.permute.xlu0 %5554
    %v5556 = vlaneseq
    %v5557 = vshrl.u32 %v5556, 7
    %v5558 = vsub.s32 2, %v5557
    %v5559 = vrot.slane %v5538, %v5558
    %5561 = vbcast.lane.b32.xlu0 %v5559, 256
    %v5562 = vpop.permute.xlu0 %5561
    %v5563 = vlaneseq
    %v5564 = vshrl.u32 %v5563, 7
    %v5565 = vsub.s32 3, %v5564
    %v5566 = vrot.slane %v5538, %v5565
    %5568 = vbcast.lane.b32.xlu0 %v5566, 256
    %v5569 = vpop.permute.xlu0 %5568
    %v5570 = vlaneseq
    %v5571 = vshrl.u32 %v5570, 7
    %v5572 = vsub.s32 4, %v5571
    %v5573 = vrot.slane %v5538, %v5572
    %5575 = vbcast.lane.b32.xlu0 %v5573, 256
    %v5576 = vpop.permute.xlu0 %5575
    %v5577 = vlaneseq
    %v5578 = vshrl.u32 %v5577, 7
    %v5579 = vsub.s32 5, %v5578
    %v5580 = vrot.slane %v5538, %v5579
    %5582 = vbcast.lane.b32.xlu0 %v5580, 256
    %v5583 = vpop.permute.xlu0 %5582
    %v5584 = vlaneseq
    %v5585 = vshrl.u32 %v5584, 7
    %v5586 = vsub.s32 6, %v5585
    %v5587 = vrot.slane %v5538, %v5586
    %5589 = vbcast.lane.b32.xlu0 %v5587, 256
    %v5590 = vpop.permute.xlu0 %5589
    %v5591 = vlaneseq
    %v5592 = vshrl.u32 %v5591, 7
    %v5593 = vsub.s32 7, %v5592
    %v5594 = vrot.slane %v5538, %v5593
    %5596 = vbcast.lane.b32.xlu0 %v5594, 256
    %v5597 = vpop.permute.xlu0 %5596
    %v5598 = vlaneseq
    %v5599 = vshrl.u32 %v5598, 7
    %v5600 = vsub.s32 0, %v5599
    %v5601 = vrot.slane %v5539, %v5600
    %5603 = vbcast.lane.b32.xlu0 %v5601, 256
    %v5604 = vpop.permute.xlu0 %5603
    %v5605 = vlaneseq
    %v5606 = vshrl.u32 %v5605, 7
    %v5607 = vsub.s32 1, %v5606
    %v5608 = vrot.slane %v5539, %v5607
    %5610 = vbcast.lane.b32.xlu0 %v5608, 256
    %v5611 = vpop.permute.xlu0 %5610
    %v5612 = vlaneseq
    %v5613 = vshrl.u32 %v5612, 7
    %v5614 = vsub.s32 2, %v5613
    %v5615 = vrot.slane %v5539, %v5614
    %5617 = vbcast.lane.b32.xlu0 %v5615, 256
    %v5618 = vpop.permute.xlu0 %5617
    %v5619 = vlaneseq
    %v5620 = vshrl.u32 %v5619, 7
    %v5621 = vsub.s32 3, %v5620
    %v5622 = vrot.slane %v5539, %v5621
    %5624 = vbcast.lane.b32.xlu0 %v5622, 256
    %v5625 = vpop.permute.xlu0 %5624
    %v5626 = vlaneseq
    %v5627 = vshrl.u32 %v5626, 7
    %v5628 = vsub.s32 4, %v5627
    %v5629 = vrot.slane %v5539, %v5628
    %5631 = vbcast.lane.b32.xlu0 %v5629, 256
    %v5632 = vpop.permute.xlu0 %5631
    %v5633 = vlaneseq
    %v5634 = vshrl.u32 %v5633, 7
    %v5635 = vsub.s32 5, %v5634
    %v5636 = vrot.slane %v5539, %v5635
    %5638 = vbcast.lane.b32.xlu0 %v5636, 256
    %v5639 = vpop.permute.xlu0 %5638
    %v5640 = vlaneseq
    %v5641 = vshrl.u32 %v5640, 7
    %v5642 = vsub.s32 6, %v5641
    %v5643 = vrot.slane %v5539, %v5642
    %5645 = vbcast.lane.b32.xlu0 %v5643, 256
    %v5646 = vpop.permute.xlu0 %5645
    %v5647 = vlaneseq
    %v5648 = vshrl.u32 %v5647, 7
    %v5649 = vsub.s32 7, %v5648
    %v5650 = vrot.slane %v5539, %v5649
    %5652 = vbcast.lane.b32.xlu0 %v5650, 256
    %v5653 = vpop.permute.xlu0 %5652
    %v5654 = vlaneseq
    %v5655 = vshrl.u32 %v5654, 7
    %v5656 = vsub.s32 0, %v5655
    %v5657 = vrot.slane %v5540, %v5656
    %5659 = vbcast.lane.b32.xlu0 %v5657, 256
    %v5660 = vpop.permute.xlu0 %5659
    %v5661 = vlaneseq
    %v5662 = vshrl.u32 %v5661, 7
    %v5663 = vsub.s32 1, %v5662
    %v5664 = vrot.slane %v5540, %v5663
    %5666 = vbcast.lane.b32.xlu0 %v5664, 256
    %v5667 = vpop.permute.xlu0 %5666
    %v5668 = vlaneseq
    %v5669 = vshrl.u32 %v5668, 7
    %v5670 = vsub.s32 2, %v5669
    %v5671 = vrot.slane %v5540, %v5670
    %5673 = vbcast.lane.b32.xlu0 %v5671, 256
    %v5674 = vpop.permute.xlu0 %5673
    %v5675 = vlaneseq
    %v5676 = vshrl.u32 %v5675, 7
    %v5677 = vsub.s32 3, %v5676
    %v5678 = vrot.slane %v5540, %v5677
    %5680 = vbcast.lane.b32.xlu0 %v5678, 256
    %v5681 = vpop.permute.xlu0 %5680
    %v5682 = vlaneseq
    %v5683 = vshrl.u32 %v5682, 7
    %v5684 = vsub.s32 4, %v5683
    %v5685 = vrot.slane %v5540, %v5684
    %5687 = vbcast.lane.b32.xlu0 %v5685, 256
    %v5688 = vpop.permute.xlu0 %5687
    %v5689 = vlaneseq
    %v5690 = vshrl.u32 %v5689, 7
    %v5691 = vsub.s32 5, %v5690
    %v5692 = vrot.slane %v5540, %v5691
    %5694 = vbcast.lane.b32.xlu0 %v5692, 256
    %v5695 = vpop.permute.xlu0 %5694
    %v5696 = vlaneseq
    %v5697 = vshrl.u32 %v5696, 7
    %v5698 = vsub.s32 6, %v5697
    %v5699 = vrot.slane %v5540, %v5698
    %5701 = vbcast.lane.b32.xlu0 %v5699, 256
    %v5702 = vpop.permute.xlu0 %5701
    %v5703 = vlaneseq
    %v5704 = vshrl.u32 %v5703, 7
    %v5705 = vsub.s32 7, %v5704
    %v5706 = vrot.slane %v5540, %v5705
    %5708 = vbcast.lane.b32.xlu0 %v5706, 256
    %v5709 = vpop.permute.xlu0 %5708
    %v5710 = vlaneseq
    %v5711 = vshrl.u32 %v5710, 7
    %v5712 = vsub.s32 0, %v5711
    %v5713 = vrot.slane %v5541, %v5712
    %5715 = vbcast.lane.b32.xlu0 %v5713, 256
    %v5716 = vpop.permute.xlu0 %5715
    %v5717 = vlaneseq
    %v5718 = vshrl.u32 %v5717, 7
    %v5719 = vsub.s32 1, %v5718
    %v5720 = vrot.slane %v5541, %v5719
    %5722 = vbcast.lane.b32.xlu0 %v5720, 256
    %v5723 = vpop.permute.xlu0 %5722
    %v5724 = vlaneseq
    %v5725 = vshrl.u32 %v5724, 7
    %v5726 = vsub.s32 2, %v5725
    %v5727 = vrot.slane %v5541, %v5726
    %5729 = vbcast.lane.b32.xlu0 %v5727, 256
    %v5730 = vpop.permute.xlu0 %5729
    %v5731 = vlaneseq
    %v5732 = vshrl.u32 %v5731, 7
    %v5733 = vsub.s32 3, %v5732
    %v5734 = vrot.slane %v5541, %v5733
    %5736 = vbcast.lane.b32.xlu0 %v5734, 256
    %v5737 = vpop.permute.xlu0 %5736
    %v5738 = vlaneseq
    %v5739 = vshrl.u32 %v5738, 7
    %v5740 = vsub.s32 4, %v5739
    %v5741 = vrot.slane %v5541, %v5740
    %5743 = vbcast.lane.b32.xlu0 %v5741, 256
    %v5744 = vpop.permute.xlu0 %5743
    %v5745 = vlaneseq
    %v5746 = vshrl.u32 %v5745, 7
    %v5747 = vsub.s32 5, %v5746
    %v5748 = vrot.slane %v5541, %v5747
    %5750 = vbcast.lane.b32.xlu0 %v5748, 256
    %v5751 = vpop.permute.xlu0 %5750
    %v5752 = vlaneseq
    %v5753 = vshrl.u32 %v5752, 7
    %v5754 = vsub.s32 6, %v5753
    %v5755 = vrot.slane %v5541, %v5754
    %5757 = vbcast.lane.b32.xlu0 %v5755, 256
    %v5758 = vpop.permute.xlu0 %5757
    %v5759 = vlaneseq
    %v5760 = vshrl.u32 %v5759, 7
    %v5761 = vsub.s32 7, %v5760
    %v5762 = vrot.slane %v5541, %v5761
    %5764 = vbcast.lane.b32.xlu0 %v5762, 256
    %v5765 = vpop.permute.xlu0 %5764
    %v5766 = vmul.f32 %v5548, %v92
    %v5767 = vmul.f32 %v5555, %v93
    %v5768 = vmul.f32 %v5562, %v94
    %v5769 = vmul.f32 %v5569, %v95
    %v5770 = vmul.f32 %v5576, %v96
    %v5771 = vmul.f32 %v5583, %v97
    %v5772 = vmul.f32 %v5590, %v98
    %v5773 = vmul.f32 %v5597, %v99
    %v5774 = vmul.f32 %v5604, %v92
    %v5775 = vmul.f32 %v5611, %v93
    %v5776 = vmul.f32 %v5618, %v94
    %v5777 = vmul.f32 %v5625, %v95
    %v5778 = vmul.f32 %v5632, %v96
    %v5779 = vmul.f32 %v5639, %v97
    %v5780 = vmul.f32 %v5646, %v98
    %v5781 = vmul.f32 %v5653, %v99
    %v5782 = vmul.f32 %v5660, %v92
    %v5783 = vmul.f32 %v5667, %v93
    %v5784 = vmul.f32 %v5674, %v94
    %v5785 = vmul.f32 %v5681, %v95
    %v5786 = vmul.f32 %v5688, %v96
    %v5787 = vmul.f32 %v5695, %v97
    %v5788 = vmul.f32 %v5702, %v98
    %v5789 = vmul.f32 %v5709, %v99
    %v5790 = vmul.f32 %v5716, %v92
    %v5791 = vmul.f32 %v5723, %v93
    %v5792 = vmul.f32 %v5730, %v94
    %v5793 = vmul.f32 %v5737, %v95
    %v5794 = vmul.f32 %v5744, %v96
    %v5795 = vmul.f32 %v5751, %v97
    %v5796 = vmul.f32 %v5758, %v98
    %v5797 = vmul.f32 %v5765, %v99
    %v5798 = vsel %vm606, %v5766, 0.0
    %v5799 = vrot.slane %v5798, 4
    %v5800 = vadd.f32 %v5798, %v5799
    %v5801 = vrot.slane %v5800, 2
    %v5802 = vadd.f32 %v5800, %v5801
    %v5803 = vrot.slane %v5802, 1
    %v5804 = vadd.f32 %v5802, %v5803
    %v5805 = vsel %vm606, %v5767, 0.0
    %v5806 = vrot.slane %v5805, 4
    %v5807 = vadd.f32 %v5805, %v5806
    %v5808 = vrot.slane %v5807, 2
    %v5809 = vadd.f32 %v5807, %v5808
    %v5810 = vrot.slane %v5809, 1
    %v5811 = vadd.f32 %v5809, %v5810
    %v5812 = vsel %vm606, %v5768, 0.0
    %v5813 = vrot.slane %v5812, 4
    %v5814 = vadd.f32 %v5812, %v5813
    %v5815 = vrot.slane %v5814, 2
    %v5816 = vadd.f32 %v5814, %v5815
    %v5817 = vrot.slane %v5816, 1
    %v5818 = vadd.f32 %v5816, %v5817
    %v5819 = vsel %vm606, %v5769, 0.0
    %v5820 = vrot.slane %v5819, 4
    %v5821 = vadd.f32 %v5819, %v5820
    %v5822 = vrot.slane %v5821, 2
    %v5823 = vadd.f32 %v5821, %v5822
    %v5824 = vrot.slane %v5823, 1
    %v5825 = vadd.f32 %v5823, %v5824
    %v5826 = vsel %vm606, %v5770, 0.0
    %v5827 = vrot.slane %v5826, 4
    %v5828 = vadd.f32 %v5826, %v5827
    %v5829 = vrot.slane %v5828, 2
    %v5830 = vadd.f32 %v5828, %v5829
    %v5831 = vrot.slane %v5830, 1
    %v5832 = vadd.f32 %v5830, %v5831
    %v5833 = vsel %vm606, %v5771, 0.0
    %v5834 = vrot.slane %v5833, 4
    %v5835 = vadd.f32 %v5833, %v5834
    %v5836 = vrot.slane %v5835, 2
    %v5837 = vadd.f32 %v5835, %v5836
    %v5838 = vrot.slane %v5837, 1
    %v5839 = vadd.f32 %v5837, %v5838
    %v5840 = vsel %vm606, %v5772, 0.0
    %v5841 = vrot.slane %v5840, 4
    %v5842 = vadd.f32 %v5840, %v5841
    %v5843 = vrot.slane %v5842, 2
    %v5844 = vadd.f32 %v5842, %v5843
    %v5845 = vrot.slane %v5844, 1
    %v5846 = vadd.f32 %v5844, %v5845
    %v5847 = vsel %vm606, %v5773, 0.0
    %v5848 = vrot.slane %v5847, 4
    %v5849 = vadd.f32 %v5847, %v5848
    %v5850 = vrot.slane %v5849, 2
    %v5851 = vadd.f32 %v5849, %v5850
    %v5852 = vrot.slane %v5851, 1
    %v5853 = vadd.f32 %v5851, %v5852
    %v5854 = vsel %vm606, %v5774, 0.0
    %v5855 = vrot.slane %v5854, 4
    %v5856 = vadd.f32 %v5854, %v5855
    %v5857 = vrot.slane %v5856, 2
    %v5858 = vadd.f32 %v5856, %v5857
    %v5859 = vrot.slane %v5858, 1
    %v5860 = vadd.f32 %v5858, %v5859
    %v5861 = vsel %vm606, %v5775, 0.0
    %v5862 = vrot.slane %v5861, 4
    %v5863 = vadd.f32 %v5861, %v5862
    %v5864 = vrot.slane %v5863, 2
    %v5865 = vadd.f32 %v5863, %v5864
    %v5866 = vrot.slane %v5865, 1
    %v5867 = vadd.f32 %v5865, %v5866
    %v5868 = vsel %vm606, %v5776, 0.0
    %v5869 = vrot.slane %v5868, 4
    %v5870 = vadd.f32 %v5868, %v5869
    %v5871 = vrot.slane %v5870, 2
    %v5872 = vadd.f32 %v5870, %v5871
    %v5873 = vrot.slane %v5872, 1
    %v5874 = vadd.f32 %v5872, %v5873
    %v5875 = vsel %vm606, %v5777, 0.0
    %v5876 = vrot.slane %v5875, 4
    %v5877 = vadd.f32 %v5875, %v5876
    %v5878 = vrot.slane %v5877, 2
    %v5879 = vadd.f32 %v5877, %v5878
    %v5880 = vrot.slane %v5879, 1
    %v5881 = vadd.f32 %v5879, %v5880
    %v5882 = vsel %vm606, %v5778, 0.0
    %v5883 = vrot.slane %v5882, 4
    %v5884 = vadd.f32 %v5882, %v5883
    %v5885 = vrot.slane %v5884, 2
    %v5886 = vadd.f32 %v5884, %v5885
    %v5887 = vrot.slane %v5886, 1
    %v5888 = vadd.f32 %v5886, %v5887
    %v5889 = vsel %vm606, %v5779, 0.0
    %v5890 = vrot.slane %v5889, 4
    %v5891 = vadd.f32 %v5889, %v5890
    %v5892 = vrot.slane %v5891, 2
    %v5893 = vadd.f32 %v5891, %v5892
    %v5894 = vrot.slane %v5893, 1
    %v5895 = vadd.f32 %v5893, %v5894
    %v5896 = vsel %vm606, %v5780, 0.0
    %v5897 = vrot.slane %v5896, 4
    %v5898 = vadd.f32 %v5896, %v5897
    %v5899 = vrot.slane %v5898, 2
    %v5900 = vadd.f32 %v5898, %v5899
    %v5901 = vrot.slane %v5900, 1
    %v5902 = vadd.f32 %v5900, %v5901
    %v5903 = vsel %vm606, %v5781, 0.0
    %v5904 = vrot.slane %v5903, 4
    %v5905 = vadd.f32 %v5903, %v5904
    %v5906 = vrot.slane %v5905, 2
    %v5907 = vadd.f32 %v5905, %v5906
    %v5908 = vrot.slane %v5907, 1
    %v5909 = vadd.f32 %v5907, %v5908
    %v5910 = vsel %vm606, %v5782, 0.0
    %v5911 = vrot.slane %v5910, 4
    %v5912 = vadd.f32 %v5910, %v5911
    %v5913 = vrot.slane %v5912, 2
    %v5914 = vadd.f32 %v5912, %v5913
    %v5915 = vrot.slane %v5914, 1
    %v5916 = vadd.f32 %v5914, %v5915
    %v5917 = vsel %vm606, %v5783, 0.0
    %v5918 = vrot.slane %v5917, 4
    %v5919 = vadd.f32 %v5917, %v5918
    %v5920 = vrot.slane %v5919, 2
    %v5921 = vadd.f32 %v5919, %v5920
    %v5922 = vrot.slane %v5921, 1
    %v5923 = vadd.f32 %v5921, %v5922
    %v5924 = vsel %vm606, %v5784, 0.0
    %v5925 = vrot.slane %v5924, 4
    %v5926 = vadd.f32 %v5924, %v5925
    %v5927 = vrot.slane %v5926, 2
    %v5928 = vadd.f32 %v5926, %v5927
    %v5929 = vrot.slane %v5928, 1
    %v5930 = vadd.f32 %v5928, %v5929
    %v5931 = vsel %vm606, %v5785, 0.0
    %v5932 = vrot.slane %v5931, 4
    %v5933 = vadd.f32 %v5931, %v5932
    %v5934 = vrot.slane %v5933, 2
    %v5935 = vadd.f32 %v5933, %v5934
    %v5936 = vrot.slane %v5935, 1
    %v5937 = vadd.f32 %v5935, %v5936
    %v5938 = vsel %vm606, %v5786, 0.0
    %v5939 = vrot.slane %v5938, 4
    %v5940 = vadd.f32 %v5938, %v5939
    %v5941 = vrot.slane %v5940, 2
    %v5942 = vadd.f32 %v5940, %v5941
    %v5943 = vrot.slane %v5942, 1
    %v5944 = vadd.f32 %v5942, %v5943
    %v5945 = vsel %vm606, %v5787, 0.0
    %v5946 = vrot.slane %v5945, 4
    %v5947 = vadd.f32 %v5945, %v5946
    %v5948 = vrot.slane %v5947, 2
    %v5949 = vadd.f32 %v5947, %v5948
    %v5950 = vrot.slane %v5949, 1
    %v5951 = vadd.f32 %v5949, %v5950
    %v5952 = vsel %vm606, %v5788, 0.0
    %v5953 = vrot.slane %v5952, 4
    %v5954 = vadd.f32 %v5952, %v5953
    %v5955 = vrot.slane %v5954, 2
    %v5956 = vadd.f32 %v5954, %v5955
    %v5957 = vrot.slane %v5956, 1
    %v5958 = vadd.f32 %v5956, %v5957
    %v5959 = vsel %vm606, %v5789, 0.0
    %v5960 = vrot.slane %v5959, 4
    %v5961 = vadd.f32 %v5959, %v5960
    %v5962 = vrot.slane %v5961, 2
    %v5963 = vadd.f32 %v5961, %v5962
    %v5964 = vrot.slane %v5963, 1
    %v5965 = vadd.f32 %v5963, %v5964
    %v5966 = vsel %vm606, %v5790, 0.0
    %v5967 = vrot.slane %v5966, 4
    %v5968 = vadd.f32 %v5966, %v5967
    %v5969 = vrot.slane %v5968, 2
    %v5970 = vadd.f32 %v5968, %v5969
    %v5971 = vrot.slane %v5970, 1
    %v5972 = vadd.f32 %v5970, %v5971
    %v5973 = vsel %vm606, %v5791, 0.0
    %v5974 = vrot.slane %v5973, 4
    %v5975 = vadd.f32 %v5973, %v5974
    %v5976 = vrot.slane %v5975, 2
    %v5977 = vadd.f32 %v5975, %v5976
    %v5978 = vrot.slane %v5977, 1
    %v5979 = vadd.f32 %v5977, %v5978
    %v5980 = vsel %vm606, %v5792, 0.0
    %v5981 = vrot.slane %v5980, 4
    %v5982 = vadd.f32 %v5980, %v5981
    %v5983 = vrot.slane %v5982, 2
    %v5984 = vadd.f32 %v5982, %v5983
    %v5985 = vrot.slane %v5984, 1
    %v5986 = vadd.f32 %v5984, %v5985
    %v5987 = vsel %vm606, %v5793, 0.0
    %v5988 = vrot.slane %v5987, 4
    %v5989 = vadd.f32 %v5987, %v5988
    %v5990 = vrot.slane %v5989, 2
    %v5991 = vadd.f32 %v5989, %v5990
    %v5992 = vrot.slane %v5991, 1
    %v5993 = vadd.f32 %v5991, %v5992
    %v5994 = vsel %vm606, %v5794, 0.0
    %v5995 = vrot.slane %v5994, 4
    %v5996 = vadd.f32 %v5994, %v5995
    %v5997 = vrot.slane %v5996, 2
    %v5998 = vadd.f32 %v5996, %v5997
    %v5999 = vrot.slane %v5998, 1
    %v6000 = vadd.f32 %v5998, %v5999
    %v6001 = vsel %vm606, %v5795, 0.0
    %v6002 = vrot.slane %v6001, 4
    %v6003 = vadd.f32 %v6001, %v6002
    %v6004 = vrot.slane %v6003, 2
    %v6005 = vadd.f32 %v6003, %v6004
    %v6006 = vrot.slane %v6005, 1
    %v6007 = vadd.f32 %v6005, %v6006
    %v6008 = vsel %vm606, %v5796, 0.0
    %v6009 = vrot.slane %v6008, 4
    %v6010 = vadd.f32 %v6008, %v6009
    %v6011 = vrot.slane %v6010, 2
    %v6012 = vadd.f32 %v6010, %v6011
    %v6013 = vrot.slane %v6012, 1
    %v6014 = vadd.f32 %v6012, %v6013
    %v6015 = vsel %vm606, %v5797, 0.0
    %v6016 = vrot.slane %v6015, 4
    %v6017 = vadd.f32 %v6015, %v6016
    %v6018 = vrot.slane %v6017, 2
    %v6019 = vadd.f32 %v6017, %v6018
    %v6020 = vrot.slane %v6019, 1
    %v6021 = vadd.f32 %v6019, %v6020
    %6022 = vrot.lane.b32.xlu0 %v4495, 64
    %v6023 = vpop.permute.xlu0 %6022
    %v6033 = vsel %vm747, %v5811, %v5804
    %v6034 = vsel %vm749, %v5818, %v6033
    %v6035 = vsel %vm751, %v5825, %v6034
    %v6036 = vsel %vm753, %v5832, %v6035
    %v6037 = vsel %vm755, %v5839, %v6036
    %v6038 = vsel %vm757, %v5846, %v6037
    %v6039 = vsel %vm759, %v5853, %v6038
    %v6042 = vsel %vm606, %v5538, 0
    %6044 = vmatprep.subr.mxu0 0.0
    %6045 = vmatpush1.msra.mxu0 0.0
    %6046 = vmatprep.subr.mxu0 0.0
    %6047 = vmatpush1.msra.mxu0 0.0
    %6048 = vmatprep.subr.mxu0 0.0
    %6049 = vmatpush1.msra.mxu0 0.0
    %6050 = vmatprep.subr.mxu0 0.0
    %6051 = vmatpush1.msra.mxu0 0.0
    %6052 = vmatprep.subr.mxu0 0.0
    %6053 = vmatpush1.msra.mxu0 0.0
    %6054 = vmatprep.subr.mxu0 0.0
    %6055 = vmatpush1.msra.mxu0 0.0
    %6056 = vmatprep.subr.mxu0 0.0
    %6057 = vmatpush1.msra.mxu0 0.0
    %6058 = vmatprep.subr.mxu0 0.0
    %6059 = vmatpush1.msra.mxu0 0.0
    %6060 = vmatprep.subr.mxu0 0.0
    %6061 = vmatpush1.msra.mxu0 0.0
    %6062 = vmatprep.subr.mxu0 0.0
    %6063 = vmatpush1.msra.mxu0 0.0
    %6064 = vmatprep.subr.mxu0 0.0
    %6065 = vmatpush1.msra.mxu0 0.0
    %6066 = vmatprep.subr.mxu0 0.0
    %6067 = vmatpush1.msra.mxu0 0.0
    %6068 = vmatprep.subr.mxu0 0.0
    %6069 = vmatpush1.msra.mxu0 0.0
    %6070 = vmatprep.subr.mxu0 0.0
    %6071 = vmatpush1.msra.mxu0 0.0
    %6072 = vmatprep.subr.mxu0 0.0
    %6073 = vmatpush1.msra.mxu0 0.0
    %6074 = vmatprep.subr.mxu0 0.0
    %6075 = vmatpush1.msra.mxu0 %v6023
    %6076 = vmatprep.subr.mxu0 0.0
    %6077 = vmatpush2.msra.mxu0 0.0
    %6078 = vmatprep.subr.mxu0 0.0
    %6079 = vmatpush2.msra.mxu0 0.0
    %6080 = vmatprep.subr.mxu0 0.0
    %6081 = vmatpush2.msra.mxu0 0.0
    %6082 = vmatprep.subr.mxu0 0.0
    %6083 = vmatpush2.msra.mxu0 0.0
    %6084 = vmatprep.subr.mxu0 0.0
    %6085 = vmatpush2.msra.mxu0 0.0
    %6086 = vmatprep.subr.mxu0 0.0
    %6087 = vmatpush2.msra.mxu0 0.0
    %6088 = vmatprep.subr.mxu0 0.0
    %6089 = vmatpush2.msra.mxu0 0.0
    %6090 = vmatprep.subr.mxu0 0.0
    %6091 = vmatpush2.msra.mxu0 0.0
    %6092 = vmatprep.subr.mxu0 0.0
    %6093 = vmatpush2.msra.mxu0 0.0
    %6094 = vmatprep.subr.mxu0 0.0
    %6095 = vmatpush2.msra.mxu0 0.0
    %6096 = vmatprep.subr.mxu0 0.0
    %6097 = vmatpush2.msra.mxu0 0.0
    %6098 = vmatprep.subr.mxu0 0.0
    %6099 = vmatpush2.msra.mxu0 0.0
    %6100 = vmatprep.subr.mxu0 0.0
    %6101 = vmatpush2.msra.mxu0 0.0
    %6102 = vmatprep.subr.mxu0 0.0
    %6103 = vmatpush2.msra.mxu0 0.0
    %6104 = vmatprep.subr.mxu0 0.0
    %6105 = vmatpush2.msra.mxu0 0.0
    %6106 = vmatprep.subr.mxu0 0.0
    %6107 = vmatpush2.msra.mxu0 0.0
    %6108 = vmatprep.mubr.f32.mxu0 0.0
    %6109 = vmatmul.mubr.f32.gmra.mxu0 %v6042
    %v6110 = vpop.f32.mrf.mxu0
    %v6111 = vadd.f32 %v6039, %v6110
    %v6112 = vpop.f32.mrf.mxu0
    %6113 = vdwg.mxu0
    %6114 = vrot.lane.b32.xlu0 %v4505, 64
    %v6115 = vpop.permute.xlu0 %6114
    %v6125 = vsel %vm747, %v5867, %v5860
    %v6126 = vsel %vm749, %v5874, %v6125
    %v6127 = vsel %vm751, %v5881, %v6126
    %v6128 = vsel %vm753, %v5888, %v6127
    %v6129 = vsel %vm755, %v5895, %v6128
    %v6130 = vsel %vm757, %v5902, %v6129
    %v6131 = vsel %vm759, %v5909, %v6130
    %v6134 = vsel %vm606, %v5539, 0
    %6136 = vmatprep.subr.mxu0 0.0
    %6137 = vmatpush1.msra.mxu0 0.0
    %6138 = vmatprep.subr.mxu0 0.0
    %6139 = vmatpush1.msra.mxu0 0.0
    %6140 = vmatprep.subr.mxu0 0.0
    %6141 = vmatpush1.msra.mxu0 0.0
    %6142 = vmatprep.subr.mxu0 0.0
    %6143 = vmatpush1.msra.mxu0 0.0
    %6144 = vmatprep.subr.mxu0 0.0
    %6145 = vmatpush1.msra.mxu0 0.0
    %6146 = vmatprep.subr.mxu0 0.0
    %6147 = vmatpush1.msra.mxu0 0.0
    %6148 = vmatprep.subr.mxu0 0.0
    %6149 = vmatpush1.msra.mxu0 0.0
    %6150 = vmatprep.subr.mxu0 0.0
    %6151 = vmatpush1.msra.mxu0 0.0
    %6152 = vmatprep.subr.mxu0 0.0
    %6153 = vmatpush1.msra.mxu0 0.0
    %6154 = vmatprep.subr.mxu0 0.0
    %6155 = vmatpush1.msra.mxu0 0.0
    %6156 = vmatprep.subr.mxu0 0.0
    %6157 = vmatpush1.msra.mxu0 0.0
    %6158 = vmatprep.subr.mxu0 0.0
    %6159 = vmatpush1.msra.mxu0 0.0
    %6160 = vmatprep.subr.mxu0 0.0
    %6161 = vmatpush1.msra.mxu0 0.0
    %6162 = vmatprep.subr.mxu0 0.0
    %6163 = vmatpush1.msra.mxu0 0.0
    %6164 = vmatprep.subr.mxu0 0.0
    %6165 = vmatpush1.msra.mxu0 0.0
    %6166 = vmatprep.subr.mxu0 0.0
    %6167 = vmatpush1.msra.mxu0 %v6115
    %6168 = vmatprep.subr.mxu0 0.0
    %6169 = vmatpush2.msra.mxu0 0.0
    %6170 = vmatprep.subr.mxu0 0.0
    %6171 = vmatpush2.msra.mxu0 0.0
    %6172 = vmatprep.subr.mxu0 0.0
    %6173 = vmatpush2.msra.mxu0 0.0
    %6174 = vmatprep.subr.mxu0 0.0
    %6175 = vmatpush2.msra.mxu0 0.0
    %6176 = vmatprep.subr.mxu0 0.0
    %6177 = vmatpush2.msra.mxu0 0.0
    %6178 = vmatprep.subr.mxu0 0.0
    %6179 = vmatpush2.msra.mxu0 0.0
    %6180 = vmatprep.subr.mxu0 0.0
    %6181 = vmatpush2.msra.mxu0 0.0
    %6182 = vmatprep.subr.mxu0 0.0
    %6183 = vmatpush2.msra.mxu0 0.0
    %6184 = vmatprep.subr.mxu0 0.0
    %6185 = vmatpush2.msra.mxu0 0.0
    %6186 = vmatprep.subr.mxu0 0.0
    %6187 = vmatpush2.msra.mxu0 0.0
    %6188 = vmatprep.subr.mxu0 0.0
    %6189 = vmatpush2.msra.mxu0 0.0
    %6190 = vmatprep.subr.mxu0 0.0
    %6191 = vmatpush2.msra.mxu0 0.0
    %6192 = vmatprep.subr.mxu0 0.0
    %6193 = vmatpush2.msra.mxu0 0.0
    %6194 = vmatprep.subr.mxu0 0.0
    %6195 = vmatpush2.msra.mxu0 0.0
    %6196 = vmatprep.subr.mxu0 0.0
    %6197 = vmatpush2.msra.mxu0 0.0
    %6198 = vmatprep.subr.mxu0 0.0
    %6199 = vmatpush2.msra.mxu0 0.0
    %6200 = vmatprep.mubr.f32.mxu0 0.0
    %6201 = vmatmul.mubr.f32.gmra.mxu0 %v6134
    %v6202 = vpop.f32.mrf.mxu0
    %v6203 = vadd.f32 %v6131, %v6202
    %v6204 = vpop.f32.mrf.mxu0
    %6205 = vdwg.mxu0
    %6206 = vrot.lane.b32.xlu0 %v4507, 64
    %v6207 = vpop.permute.xlu0 %6206
    %v6217 = vsel %vm747, %v5923, %v5916
    %v6218 = vsel %vm749, %v5930, %v6217
    %v6219 = vsel %vm751, %v5937, %v6218
    %v6220 = vsel %vm753, %v5944, %v6219
    %v6221 = vsel %vm755, %v5951, %v6220
    %v6222 = vsel %vm757, %v5958, %v6221
    %v6223 = vsel %vm759, %v5965, %v6222
    %v6226 = vsel %vm606, %v5540, 0
    %6228 = vmatprep.subr.mxu0 0.0
    %6229 = vmatpush1.msra.mxu0 0.0
    %6230 = vmatprep.subr.mxu0 0.0
    %6231 = vmatpush1.msra.mxu0 0.0
    %6232 = vmatprep.subr.mxu0 0.0
    %6233 = vmatpush1.msra.mxu0 0.0
    %6234 = vmatprep.subr.mxu0 0.0
    %6235 = vmatpush1.msra.mxu0 0.0
    %6236 = vmatprep.subr.mxu0 0.0
    %6237 = vmatpush1.msra.mxu0 0.0
    %6238 = vmatprep.subr.mxu0 0.0
    %6239 = vmatpush1.msra.mxu0 0.0
    %6240 = vmatprep.subr.mxu0 0.0
    %6241 = vmatpush1.msra.mxu0 0.0
    %6242 = vmatprep.subr.mxu0 0.0
    %6243 = vmatpush1.msra.mxu0 0.0
    %6244 = vmatprep.subr.mxu0 0.0
    %6245 = vmatpush1.msra.mxu0 0.0
    %6246 = vmatprep.subr.mxu0 0.0
    %6247 = vmatpush1.msra.mxu0 0.0
    %6248 = vmatprep.subr.mxu0 0.0
    %6249 = vmatpush1.msra.mxu0 0.0
    %6250 = vmatprep.subr.mxu0 0.0
    %6251 = vmatpush1.msra.mxu0 0.0
    %6252 = vmatprep.subr.mxu0 0.0
    %6253 = vmatpush1.msra.mxu0 0.0
    %6254 = vmatprep.subr.mxu0 0.0
    %6255 = vmatpush1.msra.mxu0 0.0
    %6256 = vmatprep.subr.mxu0 0.0
    %6257 = vmatpush1.msra.mxu0 0.0
    %6258 = vmatprep.subr.mxu0 0.0
    %6259 = vmatpush1.msra.mxu0 %v6207
    %6260 = vmatprep.subr.mxu0 0.0
    %6261 = vmatpush2.msra.mxu0 0.0
    %6262 = vmatprep.subr.mxu0 0.0
    %6263 = vmatpush2.msra.mxu0 0.0
    %6264 = vmatprep.subr.mxu0 0.0
    %6265 = vmatpush2.msra.mxu0 0.0
    %6266 = vmatprep.subr.mxu0 0.0
    %6267 = vmatpush2.msra.mxu0 0.0
    %6268 = vmatprep.subr.mxu0 0.0
    %6269 = vmatpush2.msra.mxu0 0.0
    %6270 = vmatprep.subr.mxu0 0.0
    %6271 = vmatpush2.msra.mxu0 0.0
    %6272 = vmatprep.subr.mxu0 0.0
    %6273 = vmatpush2.msra.mxu0 0.0
    %6274 = vmatprep.subr.mxu0 0.0
    %6275 = vmatpush2.msra.mxu0 0.0
    %6276 = vmatprep.subr.mxu0 0.0
    %6277 = vmatpush2.msra.mxu0 0.0
    %6278 = vmatprep.subr.mxu0 0.0
    %6279 = vmatpush2.msra.mxu0 0.0
    %6280 = vmatprep.subr.mxu0 0.0
    %6281 = vmatpush2.msra.mxu0 0.0
    %6282 = vmatprep.subr.mxu0 0.0
    %6283 = vmatpush2.msra.mxu0 0.0
    %6284 = vmatprep.subr.mxu0 0.0
    %6285 = vmatpush2.msra.mxu0 0.0
    %6286 = vmatprep.subr.mxu0 0.0
    %6287 = vmatpush2.msra.mxu0 0.0
    %6288 = vmatprep.subr.mxu0 0.0
    %6289 = vmatpush2.msra.mxu0 0.0
    %6290 = vmatprep.subr.mxu0 0.0
    %6291 = vmatpush2.msra.mxu0 0.0
    %6292 = vmatprep.mubr.f32.mxu0 0.0
    %6293 = vmatmul.mubr.f32.gmra.mxu0 %v6226
    %v6294 = vpop.f32.mrf.mxu0
    %v6295 = vadd.f32 %v6223, %v6294
    %v6296 = vpop.f32.mrf.mxu0
    %6297 = vdwg.mxu0
    %6298 = vrot.lane.b32.xlu0 %v4509, 64
    %v6299 = vpop.permute.xlu0 %6298
    %v6309 = vsel %vm747, %v5979, %v5972
    %v6310 = vsel %vm749, %v5986, %v6309
    %v6311 = vsel %vm751, %v5993, %v6310
    %v6312 = vsel %vm753, %v6000, %v6311
    %v6313 = vsel %vm755, %v6007, %v6312
    %v6314 = vsel %vm757, %v6014, %v6313
    %v6315 = vsel %vm759, %v6021, %v6314
    %v6318 = vsel %vm606, %v5541, 0
    %6320 = vmatprep.subr.mxu0 0.0
    %6321 = vmatpush1.msra.mxu0 0.0
    %6322 = vmatprep.subr.mxu0 0.0
    %6323 = vmatpush1.msra.mxu0 0.0
    %6324 = vmatprep.subr.mxu0 0.0
    %6325 = vmatpush1.msra.mxu0 0.0
    %6326 = vmatprep.subr.mxu0 0.0
    %6327 = vmatpush1.msra.mxu0 0.0
    %6328 = vmatprep.subr.mxu0 0.0
    %6329 = vmatpush1.msra.mxu0 0.0
    %6330 = vmatprep.subr.mxu0 0.0
    %6331 = vmatpush1.msra.mxu0 0.0
    %6332 = vmatprep.subr.mxu0 0.0
    %6333 = vmatpush1.msra.mxu0 0.0
    %6334 = vmatprep.subr.mxu0 0.0
    %6335 = vmatpush1.msra.mxu0 0.0
    %6336 = vmatprep.subr.mxu0 0.0
    %6337 = vmatpush1.msra.mxu0 0.0
    %6338 = vmatprep.subr.mxu0 0.0
    %6339 = vmatpush1.msra.mxu0 0.0
    %6340 = vmatprep.subr.mxu0 0.0
    %6341 = vmatpush1.msra.mxu0 0.0
    %6342 = vmatprep.subr.mxu0 0.0
    %6343 = vmatpush1.msra.mxu0 0.0
    %6344 = vmatprep.subr.mxu0 0.0
    %6345 = vmatpush1.msra.mxu0 0.0
    %6346 = vmatprep.subr.mxu0 0.0
    %6347 = vmatpush1.msra.mxu0 0.0
    %6348 = vmatprep.subr.mxu0 0.0
    %6349 = vmatpush1.msra.mxu0 0.0
    %6350 = vmatprep.subr.mxu0 0.0
    %6351 = vmatpush1.msra.mxu0 %v6299
    %6352 = vmatprep.subr.mxu0 0.0
    %6353 = vmatpush2.msra.mxu0 0.0
    %6354 = vmatprep.subr.mxu0 0.0
    %6355 = vmatpush2.msra.mxu0 0.0
    %6356 = vmatprep.subr.mxu0 0.0
    %6357 = vmatpush2.msra.mxu0 0.0
    %6358 = vmatprep.subr.mxu0 0.0
    %6359 = vmatpush2.msra.mxu0 0.0
    %6360 = vmatprep.subr.mxu0 0.0
    %6361 = vmatpush2.msra.mxu0 0.0
    %6362 = vmatprep.subr.mxu0 0.0
    %6363 = vmatpush2.msra.mxu0 0.0
    %6364 = vmatprep.subr.mxu0 0.0
    %6365 = vmatpush2.msra.mxu0 0.0
    %6366 = vmatprep.subr.mxu0 0.0
    %6367 = vmatpush2.msra.mxu0 0.0
    %6368 = vmatprep.subr.mxu0 0.0
    %6369 = vmatpush2.msra.mxu0 0.0
    %6370 = vmatprep.subr.mxu0 0.0
    %6371 = vmatpush2.msra.mxu0 0.0
    %6372 = vmatprep.subr.mxu0 0.0
    %6373 = vmatpush2.msra.mxu0 0.0
    %6374 = vmatprep.subr.mxu0 0.0
    %6375 = vmatpush2.msra.mxu0 0.0
    %6376 = vmatprep.subr.mxu0 0.0
    %6377 = vmatpush2.msra.mxu0 0.0
    %6378 = vmatprep.subr.mxu0 0.0
    %6379 = vmatpush2.msra.mxu0 0.0
    %6380 = vmatprep.subr.mxu0 0.0
    %6381 = vmatpush2.msra.mxu0 0.0
    %6382 = vmatprep.subr.mxu0 0.0
    %6383 = vmatpush2.msra.mxu0 0.0
    %6384 = vmatprep.mubr.f32.mxu0 0.0
    %6385 = vmatmul.mubr.f32.gmra.mxu0 %v6318
    %v6386 = vpop.f32.mrf.mxu0
    %v6387 = vadd.f32 %v6315, %v6386
    %v6388 = vpop.f32.mrf.mxu0
    %6389 = vdwg.mxu0
    %6391 = vrot.lane.b32.xlu0 %v6203, 8
    %v6392 = vpop.permute.xlu0 %6391
    %6395 = vrot.lane.b32.xlu0 %v6295, 16
    %v6396 = vpop.permute.xlu0 %6395
    %6399 = vrot.lane.b32.xlu0 %v6387, 24
    %v6400 = vpop.permute.xlu0 %6399
    %v6402 = vsel %vm606, %v6111, %v6392
    %v6403 = vsel %vm2121, %v6402, %v6396
    %v6404 = vsel %vm2123, %v6403, %v6400
    %6406 = vrot.lane.b32.xlu0 %v4500, 120
    %v6407 = vpop.permute.xlu0 %6406
    %6408 = vrot.lane.b32.xlu0 %v4500, 112
    %v6409 = vpop.permute.xlu0 %6408
    %6410 = vrot.lane.b32.xlu0 %v4500, 104
    %v6411 = vpop.permute.xlu0 %6410
    %v6412 = vcombine.high %v4500, %v4500
    %v6414 = vunpack.c.l.s4 1966171168
    %v6415 = vunpack.c.0.s8 %v6414
    %v6416 = vlaneseq
    %v6417 = vshrl.u32 %v6416, 7
    %v6418 = vsub.s32 %v6415, %v6417
    %v6419 = vrot.slane %v4500, %v6418
    %v6421 = vunpack.c.l.s4 1966171168
    %v6422 = vunpack.c.0.s8 %v6421
    %v6423 = vlaneseq
    %v6424 = vshrl.u32 %v6423, 7
    %v6425 = vsub.s32 %v6422, %v6424
    %v6426 = vrot.slane %v6412, %v6425
    %v6427 = vcombine.high %v6419, %v6419
    %v6428 = vcombine.high %v6426, %v6426
    %v6430 = vunpack.c.l.s4 1966171168
    %v6431 = vunpack.c.0.s8 %v6430
    %v6432 = vlaneseq
    %v6433 = vshrl.u32 %v6432, 7
    %v6434 = vsub.s32 %v6431, %v6433
    %v6435 = vrot.slane %v6419, %v6434
    %v6437 = vunpack.c.l.s4 1966171168
    %v6438 = vunpack.c.0.s8 %v6437
    %v6439 = vlaneseq
    %v6440 = vshrl.u32 %v6439, 7
    %v6441 = vsub.s32 %v6438, %v6440
    %v6442 = vrot.slane %v6426, %v6441
    %v6444 = vunpack.c.l.s4 1966171168
    %v6445 = vunpack.c.0.s8 %v6444
    %v6446 = vlaneseq
    %v6447 = vshrl.u32 %v6446, 7
    %v6448 = vsub.s32 %v6445, %v6447
    %v6449 = vrot.slane %v6427, %v6448
    %v6451 = vunpack.c.l.s4 1966171168
    %v6452 = vunpack.c.0.s8 %v6451
    %v6453 = vlaneseq
    %v6454 = vshrl.u32 %v6453, 7
    %v6455 = vsub.s32 %v6452, %v6454
    %v6456 = vrot.slane %v6428, %v6455
    %v6457 = vcombine.high %v6435, %v6435
    %v6458 = vcombine.high %v6442, %v6442
    %v6459 = vcombine.high %v6449, %v6449
    %v6460 = vcombine.high %v6456, %v6456
    %v6461 = vcombine.high %v6407, %v6407
    %v6463 = vunpack.c.l.s4 1966171168
    %v6464 = vunpack.c.0.s8 %v6463
    %v6465 = vlaneseq
    %v6466 = vshrl.u32 %v6465, 7
    %v6467 = vsub.s32 %v6464, %v6466
    %v6468 = vrot.slane %v6407, %v6467
    %v6470 = vunpack.c.l.s4 1966171168
    %v6471 = vunpack.c.0.s8 %v6470
    %v6472 = vlaneseq
    %v6473 = vshrl.u32 %v6472, 7
    %v6474 = vsub.s32 %v6471, %v6473
    %v6475 = vrot.slane %v6461, %v6474
    %v6476 = vcombine.high %v6468, %v6468
    %v6477 = vcombine.high %v6475, %v6475
    %v6479 = vunpack.c.l.s4 1966171168
    %v6480 = vunpack.c.0.s8 %v6479
    %v6481 = vlaneseq
    %v6482 = vshrl.u32 %v6481, 7
    %v6483 = vsub.s32 %v6480, %v6482
    %v6484 = vrot.slane %v6468, %v6483
    %v6486 = vunpack.c.l.s4 1966171168
    %v6487 = vunpack.c.0.s8 %v6486
    %v6488 = vlaneseq
    %v6489 = vshrl.u32 %v6488, 7
    %v6490 = vsub.s32 %v6487, %v6489
    %v6491 = vrot.slane %v6475, %v6490
    %v6493 = vunpack.c.l.s4 1966171168
    %v6494 = vunpack.c.0.s8 %v6493
    %v6495 = vlaneseq
    %v6496 = vshrl.u32 %v6495, 7
    %v6497 = vsub.s32 %v6494, %v6496
    %v6498 = vrot.slane %v6476, %v6497
    %v6500 = vunpack.c.l.s4 1966171168
    %v6501 = vunpack.c.0.s8 %v6500
    %v6502 = vlaneseq
    %v6503 = vshrl.u32 %v6502, 7
    %v6504 = vsub.s32 %v6501, %v6503
    %v6505 = vrot.slane %v6477, %v6504
    %v6506 = vcombine.high %v6484, %v6484
    %v6507 = vcombine.high %v6491, %v6491
    %v6508 = vcombine.high %v6498, %v6498
    %v6509 = vcombine.high %v6505, %v6505
    %v6510 = vcombine.high %v6409, %v6409
    %v6512 = vunpack.c.l.s4 1966171168
    %v6513 = vunpack.c.0.s8 %v6512
    %v6514 = vlaneseq
    %v6515 = vshrl.u32 %v6514, 7
    %v6516 = vsub.s32 %v6513, %v6515
    %v6517 = vrot.slane %v6409, %v6516
    %v6519 = vunpack.c.l.s4 1966171168
    %v6520 = vunpack.c.0.s8 %v6519
    %v6521 = vlaneseq
    %v6522 = vshrl.u32 %v6521, 7
    %v6523 = vsub.s32 %v6520, %v6522
    %v6524 = vrot.slane %v6510, %v6523
    %v6525 = vcombine.high %v6517, %v6517
    %v6526 = vcombine.high %v6524, %v6524
    %v6528 = vunpack.c.l.s4 1966171168
    %v6529 = vunpack.c.0.s8 %v6528
    %v6530 = vlaneseq
    %v6531 = vshrl.u32 %v6530, 7
    %v6532 = vsub.s32 %v6529, %v6531
    %v6533 = vrot.slane %v6517, %v6532
    %v6535 = vunpack.c.l.s4 1966171168
    %v6536 = vunpack.c.0.s8 %v6535
    %v6537 = vlaneseq
    %v6538 = vshrl.u32 %v6537, 7
    %v6539 = vsub.s32 %v6536, %v6538
    %v6540 = vrot.slane %v6524, %v6539
    %v6542 = vunpack.c.l.s4 1966171168
    %v6543 = vunpack.c.0.s8 %v6542
    %v6544 = vlaneseq
    %v6545 = vshrl.u32 %v6544, 7
    %v6546 = vsub.s32 %v6543, %v6545
    %v6547 = vrot.slane %v6525, %v6546
    %v6549 = vunpack.c.l.s4 1966171168
    %v6550 = vunpack.c.0.s8 %v6549
    %v6551 = vlaneseq
    %v6552 = vshrl.u32 %v6551, 7
    %v6553 = vsub.s32 %v6550, %v6552
    %v6554 = vrot.slane %v6526, %v6553
    %v6555 = vcombine.high %v6533, %v6533
    %v6556 = vcombine.high %v6540, %v6540
    %v6557 = vcombine.high %v6547, %v6547
    %v6558 = vcombine.high %v6554, %v6554
    %v6559 = vcombine.high %v6411, %v6411
    %v6561 = vunpack.c.l.s4 1966171168
    %v6562 = vunpack.c.0.s8 %v6561
    %v6563 = vlaneseq
    %v6564 = vshrl.u32 %v6563, 7
    %v6565 = vsub.s32 %v6562, %v6564
    %v6566 = vrot.slane %v6411, %v6565
    %v6568 = vunpack.c.l.s4 1966171168
    %v6569 = vunpack.c.0.s8 %v6568
    %v6570 = vlaneseq
    %v6571 = vshrl.u32 %v6570, 7
    %v6572 = vsub.s32 %v6569, %v6571
    %v6573 = vrot.slane %v6559, %v6572
    %v6574 = vcombine.high %v6566, %v6566
    %v6575 = vcombine.high %v6573, %v6573
    %v6577 = vunpack.c.l.s4 1966171168
    %v6578 = vunpack.c.0.s8 %v6577
    %v6579 = vlaneseq
    %v6580 = vshrl.u32 %v6579, 7
    %v6581 = vsub.s32 %v6578, %v6580
    %v6582 = vrot.slane %v6566, %v6581
    %v6584 = vunpack.c.l.s4 1966171168
    %v6585 = vunpack.c.0.s8 %v6584
    %v6586 = vlaneseq
    %v6587 = vshrl.u32 %v6586, 7
    %v6588 = vsub.s32 %v6585, %v6587
    %v6589 = vrot.slane %v6573, %v6588
    %v6591 = vunpack.c.l.s4 1966171168
    %v6592 = vunpack.c.0.s8 %v6591
    %v6593 = vlaneseq
    %v6594 = vshrl.u32 %v6593, 7
    %v6595 = vsub.s32 %v6592, %v6594
    %v6596 = vrot.slane %v6574, %v6595
    %v6598 = vunpack.c.l.s4 1966171168
    %v6599 = vunpack.c.0.s8 %v6598
    %v6600 = vlaneseq
    %v6601 = vshrl.u32 %v6600, 7
    %v6602 = vsub.s32 %v6599, %v6601
    %v6603 = vrot.slane %v6575, %v6602
    %v6604 = vcombine.high %v6582, %v6582
    %v6605 = vcombine.high %v6589, %v6589
    %v6606 = vcombine.high %v6596, %v6596
    %v6607 = vcombine.high %v6603, %v6603
    %v6608 = vlaneseq
    %v6609 = vshrl.u32 %v6608, 7
    %v6610 = vsub.s32 0, %v6609
    %v6611 = vrot.slane %v6435, %v6610
    %v6612 = vlaneseq
    %v6613 = vshrl.u32 %v6612, 7
    %v6614 = vsub.s32 0, %v6613
    %v6615 = vrot.slane %v6449, %v6614
    %v6616 = vlaneseq
    %v6617 = vshrl.u32 %v6616, 7
    %v6618 = vsub.s32 0, %v6617
    %v6619 = vrot.slane %v6457, %v6618
    %v6620 = vlaneseq
    %v6621 = vshrl.u32 %v6620, 7
    %v6622 = vsub.s32 0, %v6621
    %v6623 = vrot.slane %v6459, %v6622
    %v6624 = vlaneseq
    %v6625 = vshrl.u32 %v6624, 7
    %v6626 = vsub.s32 0, %v6625
    %v6627 = vrot.slane %v6442, %v6626
    %v6628 = vlaneseq
    %v6629 = vshrl.u32 %v6628, 7
    %v6630 = vsub.s32 0, %v6629
    %v6631 = vrot.slane %v6456, %v6630
    %v6632 = vlaneseq
    %v6633 = vshrl.u32 %v6632, 7
    %v6634 = vsub.s32 0, %v6633
    %v6635 = vrot.slane %v6458, %v6634
    %v6636 = vlaneseq
    %v6637 = vshrl.u32 %v6636, 7
    %v6638 = vsub.s32 0, %v6637
    %v6639 = vrot.slane %v6460, %v6638
    %v6640 = vlaneseq
    %v6641 = vshrl.u32 %v6640, 7
    %v6642 = vsub.s32 0, %v6641
    %v6643 = vrot.slane %v6484, %v6642
    %v6644 = vlaneseq
    %v6645 = vshrl.u32 %v6644, 7
    %v6646 = vsub.s32 0, %v6645
    %v6647 = vrot.slane %v6498, %v6646
    %v6648 = vlaneseq
    %v6649 = vshrl.u32 %v6648, 7
    %v6650 = vsub.s32 0, %v6649
    %v6651 = vrot.slane %v6506, %v6650
    %v6652 = vlaneseq
    %v6653 = vshrl.u32 %v6652, 7
    %v6654 = vsub.s32 0, %v6653
    %v6655 = vrot.slane %v6508, %v6654
    %v6656 = vlaneseq
    %v6657 = vshrl.u32 %v6656, 7
    %v6658 = vsub.s32 0, %v6657
    %v6659 = vrot.slane %v6491, %v6658
    %v6660 = vlaneseq
    %v6661 = vshrl.u32 %v6660, 7
    %v6662 = vsub.s32 0, %v6661
    %v6663 = vrot.slane %v6505, %v6662
    %v6664 = vlaneseq
    %v6665 = vshrl.u32 %v6664, 7
    %v6666 = vsub.s32 0, %v6665
    %v6667 = vrot.slane %v6507, %v6666
    %v6668 = vlaneseq
    %v6669 = vshrl.u32 %v6668, 7
    %v6670 = vsub.s32 0, %v6669
    %v6671 = vrot.slane %v6509, %v6670
    %v6672 = vlaneseq
    %v6673 = vshrl.u32 %v6672, 7
    %v6674 = vsub.s32 0, %v6673
    %v6675 = vrot.slane %v6533, %v6674
    %v6676 = vlaneseq
    %v6677 = vshrl.u32 %v6676, 7
    %v6678 = vsub.s32 0, %v6677
    %v6679 = vrot.slane %v6547, %v6678
    %v6680 = vlaneseq
    %v6681 = vshrl.u32 %v6680, 7
    %v6682 = vsub.s32 0, %v6681
    %v6683 = vrot.slane %v6555, %v6682
    %v6684 = vlaneseq
    %v6685 = vshrl.u32 %v6684, 7
    %v6686 = vsub.s32 0, %v6685
    %v6687 = vrot.slane %v6557, %v6686
    %v6688 = vlaneseq
    %v6689 = vshrl.u32 %v6688, 7
    %v6690 = vsub.s32 0, %v6689
    %v6691 = vrot.slane %v6540, %v6690
    %v6692 = vlaneseq
    %v6693 = vshrl.u32 %v6692, 7
    %v6694 = vsub.s32 0, %v6693
    %v6695 = vrot.slane %v6554, %v6694
    %v6696 = vlaneseq
    %v6697 = vshrl.u32 %v6696, 7
    %v6698 = vsub.s32 0, %v6697
    %v6699 = vrot.slane %v6556, %v6698
    %v6700 = vlaneseq
    %v6701 = vshrl.u32 %v6700, 7
    %v6702 = vsub.s32 0, %v6701
    %v6703 = vrot.slane %v6558, %v6702
    %v6704 = vlaneseq
    %v6705 = vshrl.u32 %v6704, 7
    %v6706 = vsub.s32 0, %v6705
    %v6707 = vrot.slane %v6582, %v6706
    %v6708 = vlaneseq
    %v6709 = vshrl.u32 %v6708, 7
    %v6710 = vsub.s32 0, %v6709
    %v6711 = vrot.slane %v6596, %v6710
    %v6712 = vlaneseq
    %v6713 = vshrl.u32 %v6712, 7
    %v6714 = vsub.s32 0, %v6713
    %v6715 = vrot.slane %v6604, %v6714
    %v6716 = vlaneseq
    %v6717 = vshrl.u32 %v6716, 7
    %v6718 = vsub.s32 0, %v6717
    %v6719 = vrot.slane %v6606, %v6718
    %v6720 = vlaneseq
    %v6721 = vshrl.u32 %v6720, 7
    %v6722 = vsub.s32 0, %v6721
    %v6723 = vrot.slane %v6589, %v6722
    %v6724 = vlaneseq
    %v6725 = vshrl.u32 %v6724, 7
    %v6726 = vsub.s32 0, %v6725
    %v6727 = vrot.slane %v6603, %v6726
    %v6728 = vlaneseq
    %v6729 = vshrl.u32 %v6728, 7
    %v6730 = vsub.s32 0, %v6729
    %v6731 = vrot.slane %v6605, %v6730
    %v6732 = vlaneseq
    %v6733 = vshrl.u32 %v6732, 7
    %v6734 = vsub.s32 0, %v6733
    %v6735 = vrot.slane %v6607, %v6734
    %v6768 = vmul.f32 %v6611, %v84
    %v6769 = vmul.f32 %v6615, %v85
    %v6770 = vmul.f32 %v6619, %v86
    %v6771 = vmul.f32 %v6623, %v87
    %v6772 = vmul.f32 %v6627, %v88
    %v6773 = vmul.f32 %v6631, %v89
    %v6774 = vmul.f32 %v6635, %v90
    %v6775 = vmul.f32 %v6639, %v91
    %v6776 = vmul.f32 %v6643, %v84
    %v6777 = vmul.f32 %v6647, %v85
    %v6778 = vmul.f32 %v6651, %v86
    %v6779 = vmul.f32 %v6655, %v87
    %v6780 = vmul.f32 %v6659, %v88
    %v6781 = vmul.f32 %v6663, %v89
    %v6782 = vmul.f32 %v6667, %v90
    %v6783 = vmul.f32 %v6671, %v91
    %v6784 = vmul.f32 %v6675, %v84
    %v6785 = vmul.f32 %v6679, %v85
    %v6786 = vmul.f32 %v6683, %v86
    %v6787 = vmul.f32 %v6687, %v87
    %v6788 = vmul.f32 %v6691, %v88
    %v6789 = vmul.f32 %v6695, %v89
    %v6790 = vmul.f32 %v6699, %v90
    %v6791 = vmul.f32 %v6703, %v91
    %v6792 = vmul.f32 %v6707, %v84
    %v6793 = vmul.f32 %v6711, %v85
    %v6794 = vmul.f32 %v6715, %v86
    %v6795 = vmul.f32 %v6719, %v87
    %v6796 = vmul.f32 %v6723, %v88
    %v6797 = vmul.f32 %v6727, %v89
    %v6798 = vmul.f32 %v6731, %v90
    %v6799 = vmul.f32 %v6735, %v91
    %v6800 = vsel %vm606, %v6768, 0.0
    %6801 = vadd.xlane.f32.xlu0 %v6800
    %v6802 = vpop.xlane.xlu0 %6801
    %v6803 = vsel %vm606, %v6769, 0.0
    %6804 = vadd.xlane.f32.xlu0 %v6803
    %v6805 = vpop.xlane.xlu0 %6804
    %v6806 = vsel %vm606, %v6770, 0.0
    %6807 = vadd.xlane.f32.xlu0 %v6806
    %v6808 = vpop.xlane.xlu0 %6807
    %v6809 = vsel %vm606, %v6771, 0.0
    %6810 = vadd.xlane.f32.xlu0 %v6809
    %v6811 = vpop.xlane.xlu0 %6810
    %v6812 = vsel %vm606, %v6772, 0.0
    %6813 = vadd.xlane.f32.xlu0 %v6812
    %v6814 = vpop.xlane.xlu0 %6813
    %v6815 = vsel %vm606, %v6773, 0.0
    %6816 = vadd.xlane.f32.xlu0 %v6815
    %v6817 = vpop.xlane.xlu0 %6816
    %v6818 = vsel %vm606, %v6774, 0.0
    %6819 = vadd.xlane.f32.xlu0 %v6818
    %v6820 = vpop.xlane.xlu0 %6819
    %v6821 = vsel %vm606, %v6775, 0.0
    %6822 = vadd.xlane.f32.xlu0 %v6821
    %v6823 = vpop.xlane.xlu0 %6822
    %v6824 = vsel %vm606, %v6776, 0.0
    %6825 = vadd.xlane.f32.xlu0 %v6824
    %v6826 = vpop.xlane.xlu0 %6825
    %v6827 = vsel %vm606, %v6777, 0.0
    %6828 = vadd.xlane.f32.xlu0 %v6827
    %v6829 = vpop.xlane.xlu0 %6828
    %v6830 = vsel %vm606, %v6778, 0.0
    %6831 = vadd.xlane.f32.xlu0 %v6830
    %v6832 = vpop.xlane.xlu0 %6831
    %v6833 = vsel %vm606, %v6779, 0.0
    %6834 = vadd.xlane.f32.xlu0 %v6833
    %v6835 = vpop.xlane.xlu0 %6834
    %v6836 = vsel %vm606, %v6780, 0.0
    %6837 = vadd.xlane.f32.xlu0 %v6836
    %v6838 = vpop.xlane.xlu0 %6837
    %v6839 = vsel %vm606, %v6781, 0.0
    %6840 = vadd.xlane.f32.xlu0 %v6839
    %v6841 = vpop.xlane.xlu0 %6840
    %v6842 = vsel %vm606, %v6782, 0.0
    %6843 = vadd.xlane.f32.xlu0 %v6842
    %v6844 = vpop.xlane.xlu0 %6843
    %v6845 = vsel %vm606, %v6783, 0.0
    %6846 = vadd.xlane.f32.xlu0 %v6845
    %v6847 = vpop.xlane.xlu0 %6846
    %v6848 = vsel %vm606, %v6784, 0.0
    %6849 = vadd.xlane.f32.xlu0 %v6848
    %v6850 = vpop.xlane.xlu0 %6849
    %v6851 = vsel %vm606, %v6785, 0.0
    %6852 = vadd.xlane.f32.xlu0 %v6851
    %v6853 = vpop.xlane.xlu0 %6852
    %v6854 = vsel %vm606, %v6786, 0.0
    %6855 = vadd.xlane.f32.xlu0 %v6854
    %v6856 = vpop.xlane.xlu0 %6855
    %v6857 = vsel %vm606, %v6787, 0.0
    %6858 = vadd.xlane.f32.xlu0 %v6857
    %v6859 = vpop.xlane.xlu0 %6858
    %v6860 = vsel %vm606, %v6788, 0.0
    %6861 = vadd.xlane.f32.xlu0 %v6860
    %v6862 = vpop.xlane.xlu0 %6861
    %v6863 = vsel %vm606, %v6789, 0.0
    %6864 = vadd.xlane.f32.xlu0 %v6863
    %v6865 = vpop.xlane.xlu0 %6864
    %v6866 = vsel %vm606, %v6790, 0.0
    %6867 = vadd.xlane.f32.xlu0 %v6866
    %v6868 = vpop.xlane.xlu0 %6867
    %v6869 = vsel %vm606, %v6791, 0.0
    %6870 = vadd.xlane.f32.xlu0 %v6869
    %v6871 = vpop.xlane.xlu0 %6870
    %v6872 = vsel %vm606, %v6792, 0.0
    %6873 = vadd.xlane.f32.xlu0 %v6872
    %v6874 = vpop.xlane.xlu0 %6873
    %v6875 = vsel %vm606, %v6793, 0.0
    %6876 = vadd.xlane.f32.xlu0 %v6875
    %v6877 = vpop.xlane.xlu0 %6876
    %v6878 = vsel %vm606, %v6794, 0.0
    %6879 = vadd.xlane.f32.xlu0 %v6878
    %v6880 = vpop.xlane.xlu0 %6879
    %v6881 = vsel %vm606, %v6795, 0.0
    %6882 = vadd.xlane.f32.xlu0 %v6881
    %v6883 = vpop.xlane.xlu0 %6882
    %v6884 = vsel %vm606, %v6796, 0.0
    %6885 = vadd.xlane.f32.xlu0 %v6884
    %v6886 = vpop.xlane.xlu0 %6885
    %v6887 = vsel %vm606, %v6797, 0.0
    %6888 = vadd.xlane.f32.xlu0 %v6887
    %v6889 = vpop.xlane.xlu0 %6888
    %v6890 = vsel %vm606, %v6798, 0.0
    %6891 = vadd.xlane.f32.xlu0 %v6890
    %v6892 = vpop.xlane.xlu0 %6891
    %v6893 = vsel %vm606, %v6799, 0.0
    %6894 = vadd.xlane.f32.xlu0 %v6893
    %v6895 = vpop.xlane.xlu0 %6894
    %6896 = vrot.lane.b32.xlu0 %v4500, 96
    %v6897 = vpop.permute.xlu0 %6896
    %v6906 = vlaneseq
    %v6907 = vshrl.u32 %v6906, 7
    %v6908 = vsub.s32 %v714, %v6907
    %v6909 = vrot.slane %v6802, %v6908
    %v6910 = vlaneseq
    %v6911 = vshrl.u32 %v6910, 7
    %v6912 = vsub.s32 %v714, %v6911
    %v6913 = vrot.slane %v6805, %v6912
    %v6914 = vlaneseq
    %v6915 = vshrl.u32 %v6914, 7
    %v6916 = vsub.s32 %v714, %v6915
    %v6917 = vrot.slane %v6808, %v6916
    %v6918 = vlaneseq
    %v6919 = vshrl.u32 %v6918, 7
    %v6920 = vsub.s32 %v714, %v6919
    %v6921 = vrot.slane %v6811, %v6920
    %v6922 = vlaneseq
    %v6923 = vshrl.u32 %v6922, 7
    %v6924 = vsub.s32 %v714, %v6923
    %v6925 = vrot.slane %v6814, %v6924
    %v6926 = vlaneseq
    %v6927 = vshrl.u32 %v6926, 7
    %v6928 = vsub.s32 %v714, %v6927
    %v6929 = vrot.slane %v6817, %v6928
    %v6930 = vlaneseq
    %v6931 = vshrl.u32 %v6930, 7
    %v6932 = vsub.s32 %v714, %v6931
    %v6933 = vrot.slane %v6820, %v6932
    %v6934 = vlaneseq
    %v6935 = vshrl.u32 %v6934, 7
    %v6936 = vsub.s32 %v714, %v6935
    %v6937 = vrot.slane %v6823, %v6936
    %v6938 = vsel %vm747, %v6913, %v6909
    %v6939 = vsel %vm749, %v6917, %v6938
    %v6940 = vsel %vm751, %v6921, %v6939
    %v6941 = vsel %vm753, %v6925, %v6940
    %v6942 = vsel %vm755, %v6929, %v6941
    %v6943 = vsel %vm757, %v6933, %v6942
    %v6944 = vsel %vm759, %v6937, %v6943
    %v6946 = vsel %vm606, %v4500, 0
    %v6948 = vsel %vm606, %v6897, 0
    %6950 = vmatprep.subr.mxu0 0.0
    %6951 = vmatpush1.xpose.msra.mxu0 0.0
    %6952 = vmatprep.subr.mxu0 0.0
    %6953 = vmatpush1.xpose.msra.mxu0 0.0
    %6954 = vmatprep.subr.mxu0 0.0
    %6955 = vmatpush1.xpose.msra.mxu0 0.0
    %6956 = vmatprep.subr.mxu0 0.0
    %6957 = vmatpush1.xpose.msra.mxu0 0.0
    %6958 = vmatprep.subr.mxu0 0.0
    %6959 = vmatpush1.xpose.msra.mxu0 0.0
    %6960 = vmatprep.subr.mxu0 0.0
    %6961 = vmatpush1.xpose.msra.mxu0 0.0
    %6962 = vmatprep.subr.mxu0 0.0
    %6963 = vmatpush1.xpose.msra.mxu0 0.0
    %6964 = vmatprep.subr.mxu0 0.0
    %6965 = vmatpush1.xpose.msra.mxu0 0.0
    %6966 = vmatprep.subr.mxu0 0.0
    %6967 = vmatpush1.xpose.msra.mxu0 0.0
    %6968 = vmatprep.subr.mxu0 0.0
    %6969 = vmatpush1.xpose.msra.mxu0 0.0
    %6970 = vmatprep.subr.mxu0 0.0
    %6971 = vmatpush1.xpose.msra.mxu0 0.0
    %6972 = vmatprep.subr.mxu0 0.0
    %6973 = vmatpush1.xpose.msra.mxu0 0.0
    %6974 = vmatprep.subr.mxu0 0.0
    %6975 = vmatpush1.xpose.msra.mxu0 0.0
    %6976 = vmatprep.subr.mxu0 0.0
    %6977 = vmatpush1.xpose.msra.mxu0 0.0
    %6978 = vmatprep.subr.mxu0 0.0
    %6979 = vmatpush1.xpose.msra.mxu0 0.0
    %6980 = vmatprep.subr.mxu0 0.0
    %6981 = vmatpush1.xpose.msra.mxu0 %v6948
    %6982 = vmatprep.subr.mxu0 0.0
    %6983 = vmatpush2.xpose.msra.mxu0 0.0
    %6984 = vmatprep.subr.mxu0 0.0
    %6985 = vmatpush2.xpose.msra.mxu0 0.0
    %6986 = vmatprep.subr.mxu0 0.0
    %6987 = vmatpush2.xpose.msra.mxu0 0.0
    %6988 = vmatprep.subr.mxu0 0.0
    %6989 = vmatpush2.xpose.msra.mxu0 0.0
    %6990 = vmatprep.subr.mxu0 0.0
    %6991 = vmatpush2.xpose.msra.mxu0 0.0
    %6992 = vmatprep.subr.mxu0 0.0
    %6993 = vmatpush2.xpose.msra.mxu0 0.0
    %6994 = vmatprep.subr.mxu0 0.0
    %6995 = vmatpush2.xpose.msra.mxu0 0.0
    %6996 = vmatprep.subr.mxu0 0.0
    %6997 = vmatpush2.xpose.msra.mxu0 0.0
    %6998 = vmatprep.subr.mxu0 0.0
    %6999 = vmatpush2.xpose.msra.mxu0 0.0
    %7000 = vmatprep.subr.mxu0 0.0
    %7001 = vmatpush2.xpose.msra.mxu0 0.0
    %7002 = vmatprep.subr.mxu0 0.0
    %7003 = vmatpush2.xpose.msra.mxu0 0.0
    %7004 = vmatprep.subr.mxu0 0.0
    %7005 = vmatpush2.xpose.msra.mxu0 0.0
    %7006 = vmatprep.subr.mxu0 0.0
    %7007 = vmatpush2.xpose.msra.mxu0 0.0
    %7008 = vmatprep.subr.mxu0 0.0
    %7009 = vmatpush2.xpose.msra.mxu0 0.0
    %7010 = vmatprep.subr.mxu0 0.0
    %7011 = vmatpush2.xpose.msra.mxu0 0.0
    %7012 = vmatprep.subr.mxu0 0.0
    %7013 = vmatpush2.xpose.msra.mxu0 0.0
    %7014 = vmatprep.mubr.f32.mxu0 0.0
    %7015 = vmatmul.mubr.f32.gmra.mxu0 %v6946
    %v7016 = vpop.f32.mrf.mxu0
    %v7017 = vadd.f32 %v6944, %v7016
    %v7018 = vpop.f32.mrf.mxu0
    %7019 = vdwg.mxu0
    %7020 = vrot.lane.b32.xlu0 %v6407, 96
    %v7021 = vpop.permute.xlu0 %7020
    %v7030 = vlaneseq
    %v7031 = vshrl.u32 %v7030, 7
    %v7032 = vsub.s32 %v714, %v7031
    %v7033 = vrot.slane %v6826, %v7032
    %v7034 = vlaneseq
    %v7035 = vshrl.u32 %v7034, 7
    %v7036 = vsub.s32 %v714, %v7035
    %v7037 = vrot.slane %v6829, %v7036
    %v7038 = vlaneseq
    %v7039 = vshrl.u32 %v7038, 7
    %v7040 = vsub.s32 %v714, %v7039
    %v7041 = vrot.slane %v6832, %v7040
    %v7042 = vlaneseq
    %v7043 = vshrl.u32 %v7042, 7
    %v7044 = vsub.s32 %v714, %v7043
    %v7045 = vrot.slane %v6835, %v7044
    %v7046 = vlaneseq
    %v7047 = vshrl.u32 %v7046, 7
    %v7048 = vsub.s32 %v714, %v7047
    %v7049 = vrot.slane %v6838, %v7048
    %v7050 = vlaneseq
    %v7051 = vshrl.u32 %v7050, 7
    %v7052 = vsub.s32 %v714, %v7051
    %v7053 = vrot.slane %v6841, %v7052
    %v7054 = vlaneseq
    %v7055 = vshrl.u32 %v7054, 7
    %v7056 = vsub.s32 %v714, %v7055
    %v7057 = vrot.slane %v6844, %v7056
    %v7058 = vlaneseq
    %v7059 = vshrl.u32 %v7058, 7
    %v7060 = vsub.s32 %v714, %v7059
    %v7061 = vrot.slane %v6847, %v7060
    %v7062 = vsel %vm747, %v7037, %v7033
    %v7063 = vsel %vm749, %v7041, %v7062
    %v7064 = vsel %vm751, %v7045, %v7063
    %v7065 = vsel %vm753, %v7049, %v7064
    %v7066 = vsel %vm755, %v7053, %v7065
    %v7067 = vsel %vm757, %v7057, %v7066
    %v7068 = vsel %vm759, %v7061, %v7067
    %v7070 = vsel %vm606, %v6407, 0
    %v7072 = vsel %vm606, %v7021, 0
    %7074 = vmatprep.subr.mxu0 0.0
    %7075 = vmatpush1.xpose.msra.mxu0 0.0
    %7076 = vmatprep.subr.mxu0 0.0
    %7077 = vmatpush1.xpose.msra.mxu0 0.0
    %7078 = vmatprep.subr.mxu0 0.0
    %7079 = vmatpush1.xpose.msra.mxu0 0.0
    %7080 = vmatprep.subr.mxu0 0.0
    %7081 = vmatpush1.xpose.msra.mxu0 0.0
    %7082 = vmatprep.subr.mxu0 0.0
    %7083 = vmatpush1.xpose.msra.mxu0 0.0
    %7084 = vmatprep.subr.mxu0 0.0
    %7085 = vmatpush1.xpose.msra.mxu0 0.0
    %7086 = vmatprep.subr.mxu0 0.0
    %7087 = vmatpush1.xpose.msra.mxu0 0.0
    %7088 = vmatprep.subr.mxu0 0.0
    %7089 = vmatpush1.xpose.msra.mxu0 0.0
    %7090 = vmatprep.subr.mxu0 0.0
    %7091 = vmatpush1.xpose.msra.mxu0 0.0
    %7092 = vmatprep.subr.mxu0 0.0
    %7093 = vmatpush1.xpose.msra.mxu0 0.0
    %7094 = vmatprep.subr.mxu0 0.0
    %7095 = vmatpush1.xpose.msra.mxu0 0.0
    %7096 = vmatprep.subr.mxu0 0.0
    %7097 = vmatpush1.xpose.msra.mxu0 0.0
    %7098 = vmatprep.subr.mxu0 0.0
    %7099 = vmatpush1.xpose.msra.mxu0 0.0
    %7100 = vmatprep.subr.mxu0 0.0
    %7101 = vmatpush1.xpose.msra.mxu0 0.0
    %7102 = vmatprep.subr.mxu0 0.0
    %7103 = vmatpush1.xpose.msra.mxu0 0.0
    %7104 = vmatprep.subr.mxu0 0.0
    %7105 = vmatpush1.xpose.msra.mxu0 %v7072
    %7106 = vmatprep.subr.mxu0 0.0
    %7107 = vmatpush2.xpose.msra.mxu0 0.0
    %7108 = vmatprep.subr.mxu0 0.0
    %7109 = vmatpush2.xpose.msra.mxu0 0.0
    %7110 = vmatprep.subr.mxu0 0.0
    %7111 = vmatpush2.xpose.msra.mxu0 0.0
    %7112 = vmatprep.subr.mxu0 0.0
    %7113 = vmatpush2.xpose.msra.mxu0 0.0
    %7114 = vmatprep.subr.mxu0 0.0
    %7115 = vmatpush2.xpose.msra.mxu0 0.0
    %7116 = vmatprep.subr.mxu0 0.0
    %7117 = vmatpush2.xpose.msra.mxu0 0.0
    %7118 = vmatprep.subr.mxu0 0.0
    %7119 = vmatpush2.xpose.msra.mxu0 0.0
    %7120 = vmatprep.subr.mxu0 0.0
    %7121 = vmatpush2.xpose.msra.mxu0 0.0
    %7122 = vmatprep.subr.mxu0 0.0
    %7123 = vmatpush2.xpose.msra.mxu0 0.0
    %7124 = vmatprep.subr.mxu0 0.0
    %7125 = vmatpush2.xpose.msra.mxu0 0.0
    %7126 = vmatprep.subr.mxu0 0.0
    %7127 = vmatpush2.xpose.msra.mxu0 0.0
    %7128 = vmatprep.subr.mxu0 0.0
    %7129 = vmatpush2.xpose.msra.mxu0 0.0
    %7130 = vmatprep.subr.mxu0 0.0
    %7131 = vmatpush2.xpose.msra.mxu0 0.0
    %7132 = vmatprep.subr.mxu0 0.0
    %7133 = vmatpush2.xpose.msra.mxu0 0.0
    %7134 = vmatprep.subr.mxu0 0.0
    %7135 = vmatpush2.xpose.msra.mxu0 0.0
    %7136 = vmatprep.subr.mxu0 0.0
    %7137 = vmatpush2.xpose.msra.mxu0 0.0
    %7138 = vmatprep.mubr.f32.mxu0 0.0
    %7139 = vmatmul.mubr.f32.gmra.mxu0 %v7070
    %v7140 = vpop.f32.mrf.mxu0
    %v7141 = vadd.f32 %v7068, %v7140
    %v7142 = vpop.f32.mrf.mxu0
    %7143 = vdwg.mxu0
    %7144 = vrot.lane.b32.xlu0 %v6409, 96
    %v7145 = vpop.permute.xlu0 %7144
    %v7154 = vlaneseq
    %v7155 = vshrl.u32 %v7154, 7
    %v7156 = vsub.s32 %v714, %v7155
    %v7157 = vrot.slane %v6850, %v7156
    %v7158 = vlaneseq
    %v7159 = vshrl.u32 %v7158, 7
    %v7160 = vsub.s32 %v714, %v7159
    %v7161 = vrot.slane %v6853, %v7160
    %v7162 = vlaneseq
    %v7163 = vshrl.u32 %v7162, 7
    %v7164 = vsub.s32 %v714, %v7163
    %v7165 = vrot.slane %v6856, %v7164
    %v7166 = vlaneseq
    %v7167 = vshrl.u32 %v7166, 7
    %v7168 = vsub.s32 %v714, %v7167
    %v7169 = vrot.slane %v6859, %v7168
    %v7170 = vlaneseq
    %v7171 = vshrl.u32 %v7170, 7
    %v7172 = vsub.s32 %v714, %v7171
    %v7173 = vrot.slane %v6862, %v7172
    %v7174 = vlaneseq
    %v7175 = vshrl.u32 %v7174, 7
    %v7176 = vsub.s32 %v714, %v7175
    %v7177 = vrot.slane %v6865, %v7176
    %v7178 = vlaneseq
    %v7179 = vshrl.u32 %v7178, 7
    %v7180 = vsub.s32 %v714, %v7179
    %v7181 = vrot.slane %v6868, %v7180
    %v7182 = vlaneseq
    %v7183 = vshrl.u32 %v7182, 7
    %v7184 = vsub.s32 %v714, %v7183
    %v7185 = vrot.slane %v6871, %v7184
    %v7186 = vsel %vm747, %v7161, %v7157
    %v7187 = vsel %vm749, %v7165, %v7186
    %v7188 = vsel %vm751, %v7169, %v7187
    %v7189 = vsel %vm753, %v7173, %v7188
    %v7190 = vsel %vm755, %v7177, %v7189
    %v7191 = vsel %vm757, %v7181, %v7190
    %v7192 = vsel %vm759, %v7185, %v7191
    %v7194 = vsel %vm606, %v6409, 0
    %v7196 = vsel %vm606, %v7145, 0
    %7198 = vmatprep.subr.mxu0 0.0
    %7199 = vmatpush1.xpose.msra.mxu0 0.0
    %7200 = vmatprep.subr.mxu0 0.0
    %7201 = vmatpush1.xpose.msra.mxu0 0.0
    %7202 = vmatprep.subr.mxu0 0.0
    %7203 = vmatpush1.xpose.msra.mxu0 0.0
    %7204 = vmatprep.subr.mxu0 0.0
    %7205 = vmatpush1.xpose.msra.mxu0 0.0
    %7206 = vmatprep.subr.mxu0 0.0
    %7207 = vmatpush1.xpose.msra.mxu0 0.0
    %7208 = vmatprep.subr.mxu0 0.0
    %7209 = vmatpush1.xpose.msra.mxu0 0.0
    %7210 = vmatprep.subr.mxu0 0.0
    %7211 = vmatpush1.xpose.msra.mxu0 0.0
    %7212 = vmatprep.subr.mxu0 0.0
    %7213 = vmatpush1.xpose.msra.mxu0 0.0
    %7214 = vmatprep.subr.mxu0 0.0
    %7215 = vmatpush1.xpose.msra.mxu0 0.0
    %7216 = vmatprep.subr.mxu0 0.0
    %7217 = vmatpush1.xpose.msra.mxu0 0.0
    %7218 = vmatprep.subr.mxu0 0.0
    %7219 = vmatpush1.xpose.msra.mxu0 0.0
    %7220 = vmatprep.subr.mxu0 0.0
    %7221 = vmatpush1.xpose.msra.mxu0 0.0
    %7222 = vmatprep.subr.mxu0 0.0
    %7223 = vmatpush1.xpose.msra.mxu0 0.0
    %7224 = vmatprep.subr.mxu0 0.0
    %7225 = vmatpush1.xpose.msra.mxu0 0.0
    %7226 = vmatprep.subr.mxu0 0.0
    %7227 = vmatpush1.xpose.msra.mxu0 0.0
    %7228 = vmatprep.subr.mxu0 0.0
    %7229 = vmatpush1.xpose.msra.mxu0 %v7196
    %7230 = vmatprep.subr.mxu0 0.0
    %7231 = vmatpush2.xpose.msra.mxu0 0.0
    %7232 = vmatprep.subr.mxu0 0.0
    %7233 = vmatpush2.xpose.msra.mxu0 0.0
    %7234 = vmatprep.subr.mxu0 0.0
    %7235 = vmatpush2.xpose.msra.mxu0 0.0
    %7236 = vmatprep.subr.mxu0 0.0
    %7237 = vmatpush2.xpose.msra.mxu0 0.0
    %7238 = vmatprep.subr.mxu0 0.0
    %7239 = vmatpush2.xpose.msra.mxu0 0.0
    %7240 = vmatprep.subr.mxu0 0.0
    %7241 = vmatpush2.xpose.msra.mxu0 0.0
    %7242 = vmatprep.subr.mxu0 0.0
    %7243 = vmatpush2.xpose.msra.mxu0 0.0
    %7244 = vmatprep.subr.mxu0 0.0
    %7245 = vmatpush2.xpose.msra.mxu0 0.0
    %7246 = vmatprep.subr.mxu0 0.0
    %7247 = vmatpush2.xpose.msra.mxu0 0.0
    %7248 = vmatprep.subr.mxu0 0.0
    %7249 = vmatpush2.xpose.msra.mxu0 0.0
    %7250 = vmatprep.subr.mxu0 0.0
    %7251 = vmatpush2.xpose.msra.mxu0 0.0
    %7252 = vmatprep.subr.mxu0 0.0
    %7253 = vmatpush2.xpose.msra.mxu0 0.0
    %7254 = vmatprep.subr.mxu0 0.0
    %7255 = vmatpush2.xpose.msra.mxu0 0.0
    %7256 = vmatprep.subr.mxu0 0.0
    %7257 = vmatpush2.xpose.msra.mxu0 0.0
    %7258 = vmatprep.subr.mxu0 0.0
    %7259 = vmatpush2.xpose.msra.mxu0 0.0
    %7260 = vmatprep.subr.mxu0 0.0
    %7261 = vmatpush2.xpose.msra.mxu0 0.0
    %7262 = vmatprep.mubr.f32.mxu0 0.0
    %7263 = vmatmul.mubr.f32.gmra.mxu0 %v7194
    %v7264 = vpop.f32.mrf.mxu0
    %v7265 = vadd.f32 %v7192, %v7264
    %v7266 = vpop.f32.mrf.mxu0
    %7267 = vdwg.mxu0
    %7268 = vrot.lane.b32.xlu0 %v6411, 96
    %v7269 = vpop.permute.xlu0 %7268
    %v7278 = vlaneseq
    %v7279 = vshrl.u32 %v7278, 7
    %v7280 = vsub.s32 %v714, %v7279
    %v7281 = vrot.slane %v6874, %v7280
    %v7282 = vlaneseq
    %v7283 = vshrl.u32 %v7282, 7
    %v7284 = vsub.s32 %v714, %v7283
    %v7285 = vrot.slane %v6877, %v7284
    %v7286 = vlaneseq
    %v7287 = vshrl.u32 %v7286, 7
    %v7288 = vsub.s32 %v714, %v7287
    %v7289 = vrot.slane %v6880, %v7288
    %v7290 = vlaneseq
    %v7291 = vshrl.u32 %v7290, 7
    %v7292 = vsub.s32 %v714, %v7291
    %v7293 = vrot.slane %v6883, %v7292
    %v7294 = vlaneseq
    %v7295 = vshrl.u32 %v7294, 7
    %v7296 = vsub.s32 %v714, %v7295
    %v7297 = vrot.slane %v6886, %v7296
    %v7298 = vlaneseq
    %v7299 = vshrl.u32 %v7298, 7
    %v7300 = vsub.s32 %v714, %v7299
    %v7301 = vrot.slane %v6889, %v7300
    %v7302 = vlaneseq
    %v7303 = vshrl.u32 %v7302, 7
    %v7304 = vsub.s32 %v714, %v7303
    %v7305 = vrot.slane %v6892, %v7304
    %v7306 = vlaneseq
    %v7307 = vshrl.u32 %v7306, 7
    %v7308 = vsub.s32 %v714, %v7307
    %v7309 = vrot.slane %v6895, %v7308
    %v7310 = vsel %vm747, %v7285, %v7281
    %v7311 = vsel %vm749, %v7289, %v7310
    %v7312 = vsel %vm751, %v7293, %v7311
    %v7313 = vsel %vm753, %v7297, %v7312
    %v7314 = vsel %vm755, %v7301, %v7313
    %v7315 = vsel %vm757, %v7305, %v7314
    %v7316 = vsel %vm759, %v7309, %v7315
    %v7318 = vsel %vm606, %v6411, 0
    %v7320 = vsel %vm606, %v7269, 0
    %7322 = vmatprep.subr.mxu0 0.0
    %7323 = vmatpush1.xpose.msra.mxu0 0.0
    %7324 = vmatprep.subr.mxu0 0.0
    %7325 = vmatpush1.xpose.msra.mxu0 0.0
    %7326 = vmatprep.subr.mxu0 0.0
    %7327 = vmatpush1.xpose.msra.mxu0 0.0
    %7328 = vmatprep.subr.mxu0 0.0
    %7329 = vmatpush1.xpose.msra.mxu0 0.0
    %7330 = vmatprep.subr.mxu0 0.0
    %7331 = vmatpush1.xpose.msra.mxu0 0.0
    %7332 = vmatprep.subr.mxu0 0.0
    %7333 = vmatpush1.xpose.msra.mxu0 0.0
    %7334 = vmatprep.subr.mxu0 0.0
    %7335 = vmatpush1.xpose.msra.mxu0 0.0
    %7336 = vmatprep.subr.mxu0 0.0
    %7337 = vmatpush1.xpose.msra.mxu0 0.0
    %7338 = vmatprep.subr.mxu0 0.0
    %7339 = vmatpush1.xpose.msra.mxu0 0.0
    %7340 = vmatprep.subr.mxu0 0.0
    %7341 = vmatpush1.xpose.msra.mxu0 0.0
    %7342 = vmatprep.subr.mxu0 0.0
    %7343 = vmatpush1.xpose.msra.mxu0 0.0
    %7344 = vmatprep.subr.mxu0 0.0
    %7345 = vmatpush1.xpose.msra.mxu0 0.0
    %7346 = vmatprep.subr.mxu0 0.0
    %7347 = vmatpush1.xpose.msra.mxu0 0.0
    %7348 = vmatprep.subr.mxu0 0.0
    %7349 = vmatpush1.xpose.msra.mxu0 0.0
    %7350 = vmatprep.subr.mxu0 0.0
    %7351 = vmatpush1.xpose.msra.mxu0 0.0
    %7352 = vmatprep.subr.mxu0 0.0
    %7353 = vmatpush1.xpose.msra.mxu0 %v7320
    %7354 = vmatprep.subr.mxu0 0.0
    %7355 = vmatpush2.xpose.msra.mxu0 0.0
    %7356 = vmatprep.subr.mxu0 0.0
    %7357 = vmatpush2.xpose.msra.mxu0 0.0
    %7358 = vmatprep.subr.mxu0 0.0
    %7359 = vmatpush2.xpose.msra.mxu0 0.0
    %7360 = vmatprep.subr.mxu0 0.0
    %7361 = vmatpush2.xpose.msra.mxu0 0.0
    %7362 = vmatprep.subr.mxu0 0.0
    %7363 = vmatpush2.xpose.msra.mxu0 0.0
    %7364 = vmatprep.subr.mxu0 0.0
    %7365 = vmatpush2.xpose.msra.mxu0 0.0
    %7366 = vmatprep.subr.mxu0 0.0
    %7367 = vmatpush2.xpose.msra.mxu0 0.0
    %7368 = vmatprep.subr.mxu0 0.0
    %7369 = vmatpush2.xpose.msra.mxu0 0.0
    %7370 = vmatprep.subr.mxu0 0.0
    %7371 = vmatpush2.xpose.msra.mxu0 0.0
    %7372 = vmatprep.subr.mxu0 0.0
    %7373 = vmatpush2.xpose.msra.mxu0 0.0
    %7374 = vmatprep.subr.mxu0 0.0
    %7375 = vmatpush2.xpose.msra.mxu0 0.0
    %7376 = vmatprep.subr.mxu0 0.0
    %7377 = vmatpush2.xpose.msra.mxu0 0.0
    %7378 = vmatprep.subr.mxu0 0.0
    %7379 = vmatpush2.xpose.msra.mxu0 0.0
    %7380 = vmatprep.subr.mxu0 0.0
    %7381 = vmatpush2.xpose.msra.mxu0 0.0
    %7382 = vmatprep.subr.mxu0 0.0
    %7383 = vmatpush2.xpose.msra.mxu0 0.0
    %7384 = vmatprep.subr.mxu0 0.0
    %7385 = vmatpush2.xpose.msra.mxu0 0.0
    %7386 = vmatprep.mubr.f32.mxu0 0.0
    %7387 = vmatmul.mubr.f32.gmra.mxu0 %v7318
    %v7388 = vpop.f32.mrf.mxu0
    %v7389 = vadd.f32 %v7316, %v7388
    %v7390 = vpop.f32.mrf.mxu0
    %7391 = vdwg.mxu0
    %v7392 = vmul.f32 %v7017, 0.35355338
    %v7393 = vmul.f32 %v7141, 0.35355338
    %v7394 = vmul.f32 %v7265, 0.35355338
    %v7395 = vmul.f32 %v7389, 0.35355338
    %v7396 = vadd.f32 %v7392, %v104
    %v7397 = vadd.f32 %v7393, %v105
    %v7398 = vadd.f32 %v7394, %v106
    %v7399 = vadd.f32 %v7395, %v107
    %v7400 = vsel %vm606, %v7396, -inf
    %7401 = vmax.xlane.f32.xlu0 %v7400
    %v7402 = vpop.xlane.xlu0 %7401
    %v7403 = vsel %vm606, %v7397, -inf
    %7404 = vmax.xlane.f32.xlu0 %v7403
    %v7405 = vpop.xlane.xlu0 %7404
    %v7406 = vsel %vm606, %v7398, -inf
    %7407 = vmax.xlane.f32.xlu0 %v7406
    %v7408 = vpop.xlane.xlu0 %7407
    %v7409 = vsel %vm606, %v7399, -inf
    %7410 = vmax.xlane.f32.xlu0 %v7409
    %v7411 = vpop.xlane.xlu0 %7410
    %v7412 = vsub.f32 %v7396, %v7402
    %v7413 = vsub.f32 %v7397, %v7405
    %v7414 = vsub.f32 %v7398, %v7408
    %v7415 = vsub.f32 %v7399, %v7411
    %v7416 = vmul.f32 %v7412, 1.442695
    %v7417 = vpow.pop %v7416
    %v7418 = vmul.f32 %v7413, 1.442695
    %v7419 = vpow.pop %v7418
    %v7420 = vmul.f32 %v7414, 1.442695
    %v7421 = vpow.pop %v7420
    %v7422 = vmul.f32 %v7415, 1.442695
    %v7423 = vpow.pop %v7422
    %v7424 = vsel %vm606, %v7417, 0.0
    %7425 = vadd.xlane.f32.xlu0 %v7424
    %v7426 = vpop.xlane.xlu0 %7425
    %v7427 = vsel %vm606, %v7419, 0.0
    %7428 = vadd.xlane.f32.xlu0 %v7427
    %v7429 = vpop.xlane.xlu0 %7428
    %v7430 = vsel %vm606, %v7421, 0.0
    %7431 = vadd.xlane.f32.xlu0 %v7430
    %v7432 = vpop.xlane.xlu0 %7431
    %v7433 = vsel %vm606, %v7423, 0.0
    %7434 = vadd.xlane.f32.xlu0 %v7433
    %v7435 = vpop.xlane.xlu0 %7434
    %v7436 = vrcp.pop %v7426
    %v7437 = vrcp.pop %v7429
    %v7438 = vrcp.pop %v7432
    %v7439 = vrcp.pop %v7435
    %v7440 = vmul.f32 %v7417, %v7436
    %v7441 = vmul.f32 %v7419, %v7437
    %v7442 = vmul.f32 %v7421, %v7438
    %v7443 = vmul.f32 %v7423, %v7439
    %v7444 = vlaneseq
    %v7445 = vshrl.u32 %v7444, 7
    %v7446 = vsub.s32 0, %v7445
    %v7447 = vrot.slane %v7440, %v7446
    %7449 = vbcast.lane.b32.xlu0 %v7447, 256
    %v7450 = vpop.permute.xlu0 %7449
    %v7451 = vlaneseq
    %v7452 = vshrl.u32 %v7451, 7
    %v7453 = vsub.s32 1, %v7452
    %v7454 = vrot.slane %v7440, %v7453
    %7456 = vbcast.lane.b32.xlu0 %v7454, 256
    %v7457 = vpop.permute.xlu0 %7456
    %v7458 = vlaneseq
    %v7459 = vshrl.u32 %v7458, 7
    %v7460 = vsub.s32 2, %v7459
    %v7461 = vrot.slane %v7440, %v7460
    %7463 = vbcast.lane.b32.xlu0 %v7461, 256
    %v7464 = vpop.permute.xlu0 %7463
    %v7465 = vlaneseq
    %v7466 = vshrl.u32 %v7465, 7
    %v7467 = vsub.s32 3, %v7466
    %v7468 = vrot.slane %v7440, %v7467
    %7470 = vbcast.lane.b32.xlu0 %v7468, 256
    %v7471 = vpop.permute.xlu0 %7470
    %v7472 = vlaneseq
    %v7473 = vshrl.u32 %v7472, 7
    %v7474 = vsub.s32 4, %v7473
    %v7475 = vrot.slane %v7440, %v7474
    %7477 = vbcast.lane.b32.xlu0 %v7475, 256
    %v7478 = vpop.permute.xlu0 %7477
    %v7479 = vlaneseq
    %v7480 = vshrl.u32 %v7479, 7
    %v7481 = vsub.s32 5, %v7480
    %v7482 = vrot.slane %v7440, %v7481
    %7484 = vbcast.lane.b32.xlu0 %v7482, 256
    %v7485 = vpop.permute.xlu0 %7484
    %v7486 = vlaneseq
    %v7487 = vshrl.u32 %v7486, 7
    %v7488 = vsub.s32 6, %v7487
    %v7489 = vrot.slane %v7440, %v7488
    %7491 = vbcast.lane.b32.xlu0 %v7489, 256
    %v7492 = vpop.permute.xlu0 %7491
    %v7493 = vlaneseq
    %v7494 = vshrl.u32 %v7493, 7
    %v7495 = vsub.s32 7, %v7494
    %v7496 = vrot.slane %v7440, %v7495
    %7498 = vbcast.lane.b32.xlu0 %v7496, 256
    %v7499 = vpop.permute.xlu0 %7498
    %v7500 = vlaneseq
    %v7501 = vshrl.u32 %v7500, 7
    %v7502 = vsub.s32 0, %v7501
    %v7503 = vrot.slane %v7441, %v7502
    %7505 = vbcast.lane.b32.xlu0 %v7503, 256
    %v7506 = vpop.permute.xlu0 %7505
    %v7507 = vlaneseq
    %v7508 = vshrl.u32 %v7507, 7
    %v7509 = vsub.s32 1, %v7508
    %v7510 = vrot.slane %v7441, %v7509
    %7512 = vbcast.lane.b32.xlu0 %v7510, 256
    %v7513 = vpop.permute.xlu0 %7512
    %v7514 = vlaneseq
    %v7515 = vshrl.u32 %v7514, 7
    %v7516 = vsub.s32 2, %v7515
    %v7517 = vrot.slane %v7441, %v7516
    %7519 = vbcast.lane.b32.xlu0 %v7517, 256
    %v7520 = vpop.permute.xlu0 %7519
    %v7521 = vlaneseq
    %v7522 = vshrl.u32 %v7521, 7
    %v7523 = vsub.s32 3, %v7522
    %v7524 = vrot.slane %v7441, %v7523
    %7526 = vbcast.lane.b32.xlu0 %v7524, 256
    %v7527 = vpop.permute.xlu0 %7526
    %v7528 = vlaneseq
    %v7529 = vshrl.u32 %v7528, 7
    %v7530 = vsub.s32 4, %v7529
    %v7531 = vrot.slane %v7441, %v7530
    %7533 = vbcast.lane.b32.xlu0 %v7531, 256
    %v7534 = vpop.permute.xlu0 %7533
    %v7535 = vlaneseq
    %v7536 = vshrl.u32 %v7535, 7
    %v7537 = vsub.s32 5, %v7536
    %v7538 = vrot.slane %v7441, %v7537
    %7540 = vbcast.lane.b32.xlu0 %v7538, 256
    %v7541 = vpop.permute.xlu0 %7540
    %v7542 = vlaneseq
    %v7543 = vshrl.u32 %v7542, 7
    %v7544 = vsub.s32 6, %v7543
    %v7545 = vrot.slane %v7441, %v7544
    %7547 = vbcast.lane.b32.xlu0 %v7545, 256
    %v7548 = vpop.permute.xlu0 %7547
    %v7549 = vlaneseq
    %v7550 = vshrl.u32 %v7549, 7
    %v7551 = vsub.s32 7, %v7550
    %v7552 = vrot.slane %v7441, %v7551
    %7554 = vbcast.lane.b32.xlu0 %v7552, 256
    %v7555 = vpop.permute.xlu0 %7554
    %v7556 = vlaneseq
    %v7557 = vshrl.u32 %v7556, 7
    %v7558 = vsub.s32 0, %v7557
    %v7559 = vrot.slane %v7442, %v7558
    %7561 = vbcast.lane.b32.xlu0 %v7559, 256
    %v7562 = vpop.permute.xlu0 %7561
    %v7563 = vlaneseq
    %v7564 = vshrl.u32 %v7563, 7
    %v7565 = vsub.s32 1, %v7564
    %v7566 = vrot.slane %v7442, %v7565
    %7568 = vbcast.lane.b32.xlu0 %v7566, 256
    %v7569 = vpop.permute.xlu0 %7568
    %v7570 = vlaneseq
    %v7571 = vshrl.u32 %v7570, 7
    %v7572 = vsub.s32 2, %v7571
    %v7573 = vrot.slane %v7442, %v7572
    %7575 = vbcast.lane.b32.xlu0 %v7573, 256
    %v7576 = vpop.permute.xlu0 %7575
    %v7577 = vlaneseq
    %v7578 = vshrl.u32 %v7577, 7
    %v7579 = vsub.s32 3, %v7578
    %v7580 = vrot.slane %v7442, %v7579
    %7582 = vbcast.lane.b32.xlu0 %v7580, 256
    %v7583 = vpop.permute.xlu0 %7582
    %v7584 = vlaneseq
    %v7585 = vshrl.u32 %v7584, 7
    %v7586 = vsub.s32 4, %v7585
    %v7587 = vrot.slane %v7442, %v7586
    %7589 = vbcast.lane.b32.xlu0 %v7587, 256
    %v7590 = vpop.permute.xlu0 %7589
    %v7591 = vlaneseq
    %v7592 = vshrl.u32 %v7591, 7
    %v7593 = vsub.s32 5, %v7592
    %v7594 = vrot.slane %v7442, %v7593
    %7596 = vbcast.lane.b32.xlu0 %v7594, 256
    %v7597 = vpop.permute.xlu0 %7596
    %v7598 = vlaneseq
    %v7599 = vshrl.u32 %v7598, 7
    %v7600 = vsub.s32 6, %v7599
    %v7601 = vrot.slane %v7442, %v7600
    %7603 = vbcast.lane.b32.xlu0 %v7601, 256
    %v7604 = vpop.permute.xlu0 %7603
    %v7605 = vlaneseq
    %v7606 = vshrl.u32 %v7605, 7
    %v7607 = vsub.s32 7, %v7606
    %v7608 = vrot.slane %v7442, %v7607
    %7610 = vbcast.lane.b32.xlu0 %v7608, 256
    %v7611 = vpop.permute.xlu0 %7610
    %v7612 = vlaneseq
    %v7613 = vshrl.u32 %v7612, 7
    %v7614 = vsub.s32 0, %v7613
    %v7615 = vrot.slane %v7443, %v7614
    %7617 = vbcast.lane.b32.xlu0 %v7615, 256
    %v7618 = vpop.permute.xlu0 %7617
    %v7619 = vlaneseq
    %v7620 = vshrl.u32 %v7619, 7
    %v7621 = vsub.s32 1, %v7620
    %v7622 = vrot.slane %v7443, %v7621
    %7624 = vbcast.lane.b32.xlu0 %v7622, 256
    %v7625 = vpop.permute.xlu0 %7624
    %v7626 = vlaneseq
    %v7627 = vshrl.u32 %v7626, 7
    %v7628 = vsub.s32 2, %v7627
    %v7629 = vrot.slane %v7443, %v7628
    %7631 = vbcast.lane.b32.xlu0 %v7629, 256
    %v7632 = vpop.permute.xlu0 %7631
    %v7633 = vlaneseq
    %v7634 = vshrl.u32 %v7633, 7
    %v7635 = vsub.s32 3, %v7634
    %v7636 = vrot.slane %v7443, %v7635
    %7638 = vbcast.lane.b32.xlu0 %v7636, 256
    %v7639 = vpop.permute.xlu0 %7638
    %v7640 = vlaneseq
    %v7641 = vshrl.u32 %v7640, 7
    %v7642 = vsub.s32 4, %v7641
    %v7643 = vrot.slane %v7443, %v7642
    %7645 = vbcast.lane.b32.xlu0 %v7643, 256
    %v7646 = vpop.permute.xlu0 %7645
    %v7647 = vlaneseq
    %v7648 = vshrl.u32 %v7647, 7
    %v7649 = vsub.s32 5, %v7648
    %v7650 = vrot.slane %v7443, %v7649
    %7652 = vbcast.lane.b32.xlu0 %v7650, 256
    %v7653 = vpop.permute.xlu0 %7652
    %v7654 = vlaneseq
    %v7655 = vshrl.u32 %v7654, 7
    %v7656 = vsub.s32 6, %v7655
    %v7657 = vrot.slane %v7443, %v7656
    %7659 = vbcast.lane.b32.xlu0 %v7657, 256
    %v7660 = vpop.permute.xlu0 %7659
    %v7661 = vlaneseq
    %v7662 = vshrl.u32 %v7661, 7
    %v7663 = vsub.s32 7, %v7662
    %v7664 = vrot.slane %v7443, %v7663
    %7666 = vbcast.lane.b32.xlu0 %v7664, 256
    %v7667 = vpop.permute.xlu0 %7666
    %v7668 = vmul.f32 %v7450, %v92
    %v7669 = vmul.f32 %v7457, %v93
    %v7670 = vmul.f32 %v7464, %v94
    %v7671 = vmul.f32 %v7471, %v95
    %v7672 = vmul.f32 %v7478, %v96
    %v7673 = vmul.f32 %v7485, %v97
    %v7674 = vmul.f32 %v7492, %v98
    %v7675 = vmul.f32 %v7499, %v99
    %v7676 = vmul.f32 %v7506, %v92
    %v7677 = vmul.f32 %v7513, %v93
    %v7678 = vmul.f32 %v7520, %v94
    %v7679 = vmul.f32 %v7527, %v95
    %v7680 = vmul.f32 %v7534, %v96
    %v7681 = vmul.f32 %v7541, %v97
    %v7682 = vmul.f32 %v7548, %v98
    %v7683 = vmul.f32 %v7555, %v99
    %v7684 = vmul.f32 %v7562, %v92
    %v7685 = vmul.f32 %v7569, %v93
    %v7686 = vmul.f32 %v7576, %v94
    %v7687 = vmul.f32 %v7583, %v95
    %v7688 = vmul.f32 %v7590, %v96
    %v7689 = vmul.f32 %v7597, %v97
    %v7690 = vmul.f32 %v7604, %v98
    %v7691 = vmul.f32 %v7611, %v99
    %v7692 = vmul.f32 %v7618, %v92
    %v7693 = vmul.f32 %v7625, %v93
    %v7694 = vmul.f32 %v7632, %v94
    %v7695 = vmul.f32 %v7639, %v95
    %v7696 = vmul.f32 %v7646, %v96
    %v7697 = vmul.f32 %v7653, %v97
    %v7698 = vmul.f32 %v7660, %v98
    %v7699 = vmul.f32 %v7667, %v99
    %v7700 = vsel %vm606, %v7668, 0.0
    %v7701 = vrot.slane %v7700, 4
    %v7702 = vadd.f32 %v7700, %v7701
    %v7703 = vrot.slane %v7702, 2
    %v7704 = vadd.f32 %v7702, %v7703
    %v7705 = vrot.slane %v7704, 1
    %v7706 = vadd.f32 %v7704, %v7705
    %v7707 = vsel %vm606, %v7669, 0.0
    %v7708 = vrot.slane %v7707, 4
    %v7709 = vadd.f32 %v7707, %v7708
    %v7710 = vrot.slane %v7709, 2
    %v7711 = vadd.f32 %v7709, %v7710
    %v7712 = vrot.slane %v7711, 1
    %v7713 = vadd.f32 %v7711, %v7712
    %v7714 = vsel %vm606, %v7670, 0.0
    %v7715 = vrot.slane %v7714, 4
    %v7716 = vadd.f32 %v7714, %v7715
    %v7717 = vrot.slane %v7716, 2
    %v7718 = vadd.f32 %v7716, %v7717
    %v7719 = vrot.slane %v7718, 1
    %v7720 = vadd.f32 %v7718, %v7719
    %v7721 = vsel %vm606, %v7671, 0.0
    %v7722 = vrot.slane %v7721, 4
    %v7723 = vadd.f32 %v7721, %v7722
    %v7724 = vrot.slane %v7723, 2
    %v7725 = vadd.f32 %v7723, %v7724
    %v7726 = vrot.slane %v7725, 1
    %v7727 = vadd.f32 %v7725, %v7726
    %v7728 = vsel %vm606, %v7672, 0.0
    %v7729 = vrot.slane %v7728, 4
    %v7730 = vadd.f32 %v7728, %v7729
    %v7731 = vrot.slane %v7730, 2
    %v7732 = vadd.f32 %v7730, %v7731
    %v7733 = vrot.slane %v7732, 1
    %v7734 = vadd.f32 %v7732, %v7733
    %v7735 = vsel %vm606, %v7673, 0.0
    %v7736 = vrot.slane %v7735, 4
    %v7737 = vadd.f32 %v7735, %v7736
    %v7738 = vrot.slane %v7737, 2
    %v7739 = vadd.f32 %v7737, %v7738
    %v7740 = vrot.slane %v7739, 1
    %v7741 = vadd.f32 %v7739, %v7740
    %v7742 = vsel %vm606, %v7674, 0.0
    %v7743 = vrot.slane %v7742, 4
    %v7744 = vadd.f32 %v7742, %v7743
    %v7745 = vrot.slane %v7744, 2
    %v7746 = vadd.f32 %v7744, %v7745
    %v7747 = vrot.slane %v7746, 1
    %v7748 = vadd.f32 %v7746, %v7747
    %v7749 = vsel %vm606, %v7675, 0.0
    %v7750 = vrot.slane %v7749, 4
    %v7751 = vadd.f32 %v7749, %v7750
    %v7752 = vrot.slane %v7751, 2
    %v7753 = vadd.f32 %v7751, %v7752
    %v7754 = vrot.slane %v7753, 1
    %v7755 = vadd.f32 %v7753, %v7754
    %v7756 = vsel %vm606, %v7676, 0.0
    %v7757 = vrot.slane %v7756, 4
    %v7758 = vadd.f32 %v7756, %v7757
    %v7759 = vrot.slane %v7758, 2
    %v7760 = vadd.f32 %v7758, %v7759
    %v7761 = vrot.slane %v7760, 1
    %v7762 = vadd.f32 %v7760, %v7761
    %v7763 = vsel %vm606, %v7677, 0.0
    %v7764 = vrot.slane %v7763, 4
    %v7765 = vadd.f32 %v7763, %v7764
    %v7766 = vrot.slane %v7765, 2
    %v7767 = vadd.f32 %v7765, %v7766
    %v7768 = vrot.slane %v7767, 1
    %v7769 = vadd.f32 %v7767, %v7768
    %v7770 = vsel %vm606, %v7678, 0.0
    %v7771 = vrot.slane %v7770, 4
    %v7772 = vadd.f32 %v7770, %v7771
    %v7773 = vrot.slane %v7772, 2
    %v7774 = vadd.f32 %v7772, %v7773
    %v7775 = vrot.slane %v7774, 1
    %v7776 = vadd.f32 %v7774, %v7775
    %v7777 = vsel %vm606, %v7679, 0.0
    %v7778 = vrot.slane %v7777, 4
    %v7779 = vadd.f32 %v7777, %v7778
    %v7780 = vrot.slane %v7779, 2
    %v7781 = vadd.f32 %v7779, %v7780
    %v7782 = vrot.slane %v7781, 1
    %v7783 = vadd.f32 %v7781, %v7782
    %v7784 = vsel %vm606, %v7680, 0.0
    %v7785 = vrot.slane %v7784, 4
    %v7786 = vadd.f32 %v7784, %v7785
    %v7787 = vrot.slane %v7786, 2
    %v7788 = vadd.f32 %v7786, %v7787
    %v7789 = vrot.slane %v7788, 1
    %v7790 = vadd.f32 %v7788, %v7789
    %v7791 = vsel %vm606, %v7681, 0.0
    %v7792 = vrot.slane %v7791, 4
    %v7793 = vadd.f32 %v7791, %v7792
    %v7794 = vrot.slane %v7793, 2
    %v7795 = vadd.f32 %v7793, %v7794
    %v7796 = vrot.slane %v7795, 1
    %v7797 = vadd.f32 %v7795, %v7796
    %v7798 = vsel %vm606, %v7682, 0.0
    %v7799 = vrot.slane %v7798, 4
    %v7800 = vadd.f32 %v7798, %v7799
    %v7801 = vrot.slane %v7800, 2
    %v7802 = vadd.f32 %v7800, %v7801
    %v7803 = vrot.slane %v7802, 1
    %v7804 = vadd.f32 %v7802, %v7803
    %v7805 = vsel %vm606, %v7683, 0.0
    %v7806 = vrot.slane %v7805, 4
    %v7807 = vadd.f32 %v7805, %v7806
    %v7808 = vrot.slane %v7807, 2
    %v7809 = vadd.f32 %v7807, %v7808
    %v7810 = vrot.slane %v7809, 1
    %v7811 = vadd.f32 %v7809, %v7810
    %v7812 = vsel %vm606, %v7684, 0.0
    %v7813 = vrot.slane %v7812, 4
    %v7814 = vadd.f32 %v7812, %v7813
    %v7815 = vrot.slane %v7814, 2
    %v7816 = vadd.f32 %v7814, %v7815
    %v7817 = vrot.slane %v7816, 1
    %v7818 = vadd.f32 %v7816, %v7817
    %v7819 = vsel %vm606, %v7685, 0.0
    %v7820 = vrot.slane %v7819, 4
    %v7821 = vadd.f32 %v7819, %v7820
    %v7822 = vrot.slane %v7821, 2
    %v7823 = vadd.f32 %v7821, %v7822
    %v7824 = vrot.slane %v7823, 1
    %v7825 = vadd.f32 %v7823, %v7824
    %v7826 = vsel %vm606, %v7686, 0.0
    %v7827 = vrot.slane %v7826, 4
    %v7828 = vadd.f32 %v7826, %v7827
    %v7829 = vrot.slane %v7828, 2
    %v7830 = vadd.f32 %v7828, %v7829
    %v7831 = vrot.slane %v7830, 1
    %v7832 = vadd.f32 %v7830, %v7831
    %v7833 = vsel %vm606, %v7687, 0.0
    %v7834 = vrot.slane %v7833, 4
    %v7835 = vadd.f32 %v7833, %v7834
    %v7836 = vrot.slane %v7835, 2
    %v7837 = vadd.f32 %v7835, %v7836
    %v7838 = vrot.slane %v7837, 1
    %v7839 = vadd.f32 %v7837, %v7838
    %v7840 = vsel %vm606, %v7688, 0.0
    %v7841 = vrot.slane %v7840, 4
    %v7842 = vadd.f32 %v7840, %v7841
    %v7843 = vrot.slane %v7842, 2
    %v7844 = vadd.f32 %v7842, %v7843
    %v7845 = vrot.slane %v7844, 1
    %v7846 = vadd.f32 %v7844, %v7845
    %v7847 = vsel %vm606, %v7689, 0.0
    %v7848 = vrot.slane %v7847, 4
    %v7849 = vadd.f32 %v7847, %v7848
    %v7850 = vrot.slane %v7849, 2
    %v7851 = vadd.f32 %v7849, %v7850
    %v7852 = vrot.slane %v7851, 1
    %v7853 = vadd.f32 %v7851, %v7852
    %v7854 = vsel %vm606, %v7690, 0.0
    %v7855 = vrot.slane %v7854, 4
    %v7856 = vadd.f32 %v7854, %v7855
    %v7857 = vrot.slane %v7856, 2
    %v7858 = vadd.f32 %v7856, %v7857
    %v7859 = vrot.slane %v7858, 1
    %v7860 = vadd.f32 %v7858, %v7859
    %v7861 = vsel %vm606, %v7691, 0.0
    %v7862 = vrot.slane %v7861, 4
    %v7863 = vadd.f32 %v7861, %v7862
    %v7864 = vrot.slane %v7863, 2
    %v7865 = vadd.f32 %v7863, %v7864
    %v7866 = vrot.slane %v7865, 1
    %v7867 = vadd.f32 %v7865, %v7866
    %v7868 = vsel %vm606, %v7692, 0.0
    %v7869 = vrot.slane %v7868, 4
    %v7870 = vadd.f32 %v7868, %v7869
    %v7871 = vrot.slane %v7870, 2
    %v7872 = vadd.f32 %v7870, %v7871
    %v7873 = vrot.slane %v7872, 1
    %v7874 = vadd.f32 %v7872, %v7873
    %v7875 = vsel %vm606, %v7693, 0.0
    %v7876 = vrot.slane %v7875, 4
    %v7877 = vadd.f32 %v7875, %v7876
    %v7878 = vrot.slane %v7877, 2
    %v7879 = vadd.f32 %v7877, %v7878
    %v7880 = vrot.slane %v7879, 1
    %v7881 = vadd.f32 %v7879, %v7880
    %v7882 = vsel %vm606, %v7694, 0.0
    %v7883 = vrot.slane %v7882, 4
    %v7884 = vadd.f32 %v7882, %v7883
    %v7885 = vrot.slane %v7884, 2
    %v7886 = vadd.f32 %v7884, %v7885
    %v7887 = vrot.slane %v7886, 1
    %v7888 = vadd.f32 %v7886, %v7887
    %v7889 = vsel %vm606, %v7695, 0.0
    %v7890 = vrot.slane %v7889, 4
    %v7891 = vadd.f32 %v7889, %v7890
    %v7892 = vrot.slane %v7891, 2
    %v7893 = vadd.f32 %v7891, %v7892
    %v7894 = vrot.slane %v7893, 1
    %v7895 = vadd.f32 %v7893, %v7894
    %v7896 = vsel %vm606, %v7696, 0.0
    %v7897 = vrot.slane %v7896, 4
    %v7898 = vadd.f32 %v7896, %v7897
    %v7899 = vrot.slane %v7898, 2
    %v7900 = vadd.f32 %v7898, %v7899
    %v7901 = vrot.slane %v7900, 1
    %v7902 = vadd.f32 %v7900, %v7901
    %v7903 = vsel %vm606, %v7697, 0.0
    %v7904 = vrot.slane %v7903, 4
    %v7905 = vadd.f32 %v7903, %v7904
    %v7906 = vrot.slane %v7905, 2
    %v7907 = vadd.f32 %v7905, %v7906
    %v7908 = vrot.slane %v7907, 1
    %v7909 = vadd.f32 %v7907, %v7908
    %v7910 = vsel %vm606, %v7698, 0.0
    %v7911 = vrot.slane %v7910, 4
    %v7912 = vadd.f32 %v7910, %v7911
    %v7913 = vrot.slane %v7912, 2
    %v7914 = vadd.f32 %v7912, %v7913
    %v7915 = vrot.slane %v7914, 1
    %v7916 = vadd.f32 %v7914, %v7915
    %v7917 = vsel %vm606, %v7699, 0.0
    %v7918 = vrot.slane %v7917, 4
    %v7919 = vadd.f32 %v7917, %v7918
    %v7920 = vrot.slane %v7919, 2
    %v7921 = vadd.f32 %v7919, %v7920
    %v7922 = vrot.slane %v7921, 1
    %v7923 = vadd.f32 %v7921, %v7922
    %7924 = vrot.lane.b32.xlu0 %v4500, 64
    %v7925 = vpop.permute.xlu0 %7924
    %v7935 = vsel %vm747, %v7713, %v7706
    %v7936 = vsel %vm749, %v7720, %v7935
    %v7937 = vsel %vm751, %v7727, %v7936
    %v7938 = vsel %vm753, %v7734, %v7937
    %v7939 = vsel %vm755, %v7741, %v7938
    %v7940 = vsel %vm757, %v7748, %v7939
    %v7941 = vsel %vm759, %v7755, %v7940
    %v7944 = vsel %vm606, %v7440, 0
    %7946 = vmatprep.subr.mxu0 0.0
    %7947 = vmatpush1.msra.mxu0 0.0
    %7948 = vmatprep.subr.mxu0 0.0
    %7949 = vmatpush1.msra.mxu0 0.0
    %7950 = vmatprep.subr.mxu0 0.0
    %7951 = vmatpush1.msra.mxu0 0.0
    %7952 = vmatprep.subr.mxu0 0.0
    %7953 = vmatpush1.msra.mxu0 0.0
    %7954 = vmatprep.subr.mxu0 0.0
    %7955 = vmatpush1.msra.mxu0 0.0
    %7956 = vmatprep.subr.mxu0 0.0
    %7957 = vmatpush1.msra.mxu0 0.0
    %7958 = vmatprep.subr.mxu0 0.0
    %7959 = vmatpush1.msra.mxu0 0.0
    %7960 = vmatprep.subr.mxu0 0.0
    %7961 = vmatpush1.msra.mxu0 0.0
    %7962 = vmatprep.subr.mxu0 0.0
    %7963 = vmatpush1.msra.mxu0 0.0
    %7964 = vmatprep.subr.mxu0 0.0
    %7965 = vmatpush1.msra.mxu0 0.0
    %7966 = vmatprep.subr.mxu0 0.0
    %7967 = vmatpush1.msra.mxu0 0.0
    %7968 = vmatprep.subr.mxu0 0.0
    %7969 = vmatpush1.msra.mxu0 0.0
    %7970 = vmatprep.subr.mxu0 0.0
    %7971 = vmatpush1.msra.mxu0 0.0
    %7972 = vmatprep.subr.mxu0 0.0
    %7973 = vmatpush1.msra.mxu0 0.0
    %7974 = vmatprep.subr.mxu0 0.0
    %7975 = vmatpush1.msra.mxu0 0.0
    %7976 = vmatprep.subr.mxu0 0.0
    %7977 = vmatpush1.msra.mxu0 %v7925
    %7978 = vmatprep.subr.mxu0 0.0
    %7979 = vmatpush2.msra.mxu0 0.0
    %7980 = vmatprep.subr.mxu0 0.0
    %7981 = vmatpush2.msra.mxu0 0.0
    %7982 = vmatprep.subr.mxu0 0.0
    %7983 = vmatpush2.msra.mxu0 0.0
    %7984 = vmatprep.subr.mxu0 0.0
    %7985 = vmatpush2.msra.mxu0 0.0
    %7986 = vmatprep.subr.mxu0 0.0
    %7987 = vmatpush2.msra.mxu0 0.0
    %7988 = vmatprep.subr.mxu0 0.0
    %7989 = vmatpush2.msra.mxu0 0.0
    %7990 = vmatprep.subr.mxu0 0.0
    %7991 = vmatpush2.msra.mxu0 0.0
    %7992 = vmatprep.subr.mxu0 0.0
    %7993 = vmatpush2.msra.mxu0 0.0
    %7994 = vmatprep.subr.mxu0 0.0
    %7995 = vmatpush2.msra.mxu0 0.0
    %7996 = vmatprep.subr.mxu0 0.0
    %7997 = vmatpush2.msra.mxu0 0.0
    %7998 = vmatprep.subr.mxu0 0.0
    %7999 = vmatpush2.msra.mxu0 0.0
    %8000 = vmatprep.subr.mxu0 0.0
    %8001 = vmatpush2.msra.mxu0 0.0
    %8002 = vmatprep.subr.mxu0 0.0
    %8003 = vmatpush2.msra.mxu0 0.0
    %8004 = vmatprep.subr.mxu0 0.0
    %8005 = vmatpush2.msra.mxu0 0.0
    %8006 = vmatprep.subr.mxu0 0.0
    %8007 = vmatpush2.msra.mxu0 0.0
    %8008 = vmatprep.subr.mxu0 0.0
    %8009 = vmatpush2.msra.mxu0 0.0
    %8010 = vmatprep.mubr.f32.mxu0 0.0
    %8011 = vmatmul.mubr.f32.gmra.mxu0 %v7944
    %v8012 = vpop.f32.mrf.mxu0
    %v8013 = vadd.f32 %v7941, %v8012
    %v8014 = vpop.f32.mrf.mxu0
    %8015 = vdwg.mxu0
    %8016 = vrot.lane.b32.xlu0 %v6407, 64
    %v8017 = vpop.permute.xlu0 %8016
    %v8027 = vsel %vm747, %v7769, %v7762
    %v8028 = vsel %vm749, %v7776, %v8027
    %v8029 = vsel %vm751, %v7783, %v8028
    %v8030 = vsel %vm753, %v7790, %v8029
    %v8031 = vsel %vm755, %v7797, %v8030
    %v8032 = vsel %vm757, %v7804, %v8031
    %v8033 = vsel %vm759, %v7811, %v8032
    %v8036 = vsel %vm606, %v7441, 0
    %8038 = vmatprep.subr.mxu0 0.0
    %8039 = vmatpush1.msra.mxu0 0.0
    %8040 = vmatprep.subr.mxu0 0.0
    %8041 = vmatpush1.msra.mxu0 0.0
    %8042 = vmatprep.subr.mxu0 0.0
    %8043 = vmatpush1.msra.mxu0 0.0
    %8044 = vmatprep.subr.mxu0 0.0
    %8045 = vmatpush1.msra.mxu0 0.0
    %8046 = vmatprep.subr.mxu0 0.0
    %8047 = vmatpush1.msra.mxu0 0.0
    %8048 = vmatprep.subr.mxu0 0.0
    %8049 = vmatpush1.msra.mxu0 0.0
    %8050 = vmatprep.subr.mxu0 0.0
    %8051 = vmatpush1.msra.mxu0 0.0
    %8052 = vmatprep.subr.mxu0 0.0
    %8053 = vmatpush1.msra.mxu0 0.0
    %8054 = vmatprep.subr.mxu0 0.0
    %8055 = vmatpush1.msra.mxu0 0.0
    %8056 = vmatprep.subr.mxu0 0.0
    %8057 = vmatpush1.msra.mxu0 0.0
    %8058 = vmatprep.subr.mxu0 0.0
    %8059 = vmatpush1.msra.mxu0 0.0
    %8060 = vmatprep.subr.mxu0 0.0
    %8061 = vmatpush1.msra.mxu0 0.0
    %8062 = vmatprep.subr.mxu0 0.0
    %8063 = vmatpush1.msra.mxu0 0.0
    %8064 = vmatprep.subr.mxu0 0.0
    %8065 = vmatpush1.msra.mxu0 0.0
    %8066 = vmatprep.subr.mxu0 0.0
    %8067 = vmatpush1.msra.mxu0 0.0
    %8068 = vmatprep.subr.mxu0 0.0
    %8069 = vmatpush1.msra.mxu0 %v8017
    %8070 = vmatprep.subr.mxu0 0.0
    %8071 = vmatpush2.msra.mxu0 0.0
    %8072 = vmatprep.subr.mxu0 0.0
    %8073 = vmatpush2.msra.mxu0 0.0
    %8074 = vmatprep.subr.mxu0 0.0
    %8075 = vmatpush2.msra.mxu0 0.0
    %8076 = vmatprep.subr.mxu0 0.0
    %8077 = vmatpush2.msra.mxu0 0.0
    %8078 = vmatprep.subr.mxu0 0.0
    %8079 = vmatpush2.msra.mxu0 0.0
    %8080 = vmatprep.subr.mxu0 0.0
    %8081 = vmatpush2.msra.mxu0 0.0
    %8082 = vmatprep.subr.mxu0 0.0
    %8083 = vmatpush2.msra.mxu0 0.0
    %8084 = vmatprep.subr.mxu0 0.0
    %8085 = vmatpush2.msra.mxu0 0.0
    %8086 = vmatprep.subr.mxu0 0.0
    %8087 = vmatpush2.msra.mxu0 0.0
    %8088 = vmatprep.subr.mxu0 0.0
    %8089 = vmatpush2.msra.mxu0 0.0
    %8090 = vmatprep.subr.mxu0 0.0
    %8091 = vmatpush2.msra.mxu0 0.0
    %8092 = vmatprep.subr.mxu0 0.0
    %8093 = vmatpush2.msra.mxu0 0.0
    %8094 = vmatprep.subr.mxu0 0.0
    %8095 = vmatpush2.msra.mxu0 0.0
    %8096 = vmatprep.subr.mxu0 0.0
    %8097 = vmatpush2.msra.mxu0 0.0
    %8098 = vmatprep.subr.mxu0 0.0
    %8099 = vmatpush2.msra.mxu0 0.0
    %8100 = vmatprep.subr.mxu0 0.0
    %8101 = vmatpush2.msra.mxu0 0.0
    %8102 = vmatprep.mubr.f32.mxu0 0.0
    %8103 = vmatmul.mubr.f32.gmra.mxu0 %v8036
    %v8104 = vpop.f32.mrf.mxu0
    %v8105 = vadd.f32 %v8033, %v8104
    %v8106 = vpop.f32.mrf.mxu0
    %8107 = vdwg.mxu0
    %8108 = vrot.lane.b32.xlu0 %v6409, 64
    %v8109 = vpop.permute.xlu0 %8108
    %v8119 = vsel %vm747, %v7825, %v7818
    %v8120 = vsel %vm749, %v7832, %v8119
    %v8121 = vsel %vm751, %v7839, %v8120
    %v8122 = vsel %vm753, %v7846, %v8121
    %v8123 = vsel %vm755, %v7853, %v8122
    %v8124 = vsel %vm757, %v7860, %v8123
    %v8125 = vsel %vm759, %v7867, %v8124
    %v8128 = vsel %vm606, %v7442, 0
    %8130 = vmatprep.subr.mxu0 0.0
    %8131 = vmatpush1.msra.mxu0 0.0
    %8132 = vmatprep.subr.mxu0 0.0
    %8133 = vmatpush1.msra.mxu0 0.0
    %8134 = vmatprep.subr.mxu0 0.0
    %8135 = vmatpush1.msra.mxu0 0.0
    %8136 = vmatprep.subr.mxu0 0.0
    %8137 = vmatpush1.msra.mxu0 0.0
    %8138 = vmatprep.subr.mxu0 0.0
    %8139 = vmatpush1.msra.mxu0 0.0
    %8140 = vmatprep.subr.mxu0 0.0
    %8141 = vmatpush1.msra.mxu0 0.0
    %8142 = vmatprep.subr.mxu0 0.0
    %8143 = vmatpush1.msra.mxu0 0.0
    %8144 = vmatprep.subr.mxu0 0.0
    %8145 = vmatpush1.msra.mxu0 0.0
    %8146 = vmatprep.subr.mxu0 0.0
    %8147 = vmatpush1.msra.mxu0 0.0
    %8148 = vmatprep.subr.mxu0 0.0
    %8149 = vmatpush1.msra.mxu0 0.0
    %8150 = vmatprep.subr.mxu0 0.0
    %8151 = vmatpush1.msra.mxu0 0.0
    %8152 = vmatprep.subr.mxu0 0.0
    %8153 = vmatpush1.msra.mxu0 0.0
    %8154 = vmatprep.subr.mxu0 0.0
    %8155 = vmatpush1.msra.mxu0 0.0
    %8156 = vmatprep.subr.mxu0 0.0
    %8157 = vmatpush1.msra.mxu0 0.0
    %8158 = vmatprep.subr.mxu0 0.0
    %8159 = vmatpush1.msra.mxu0 0.0
    %8160 = vmatprep.subr.mxu0 0.0
    %8161 = vmatpush1.msra.mxu0 %v8109
    %8162 = vmatprep.subr.mxu0 0.0
    %8163 = vmatpush2.msra.mxu0 0.0
    %8164 = vmatprep.subr.mxu0 0.0
    %8165 = vmatpush2.msra.mxu0 0.0
    %8166 = vmatprep.subr.mxu0 0.0
    %8167 = vmatpush2.msra.mxu0 0.0
    %8168 = vmatprep.subr.mxu0 0.0
    %8169 = vmatpush2.msra.mxu0 0.0
    %8170 = vmatprep.subr.mxu0 0.0
    %8171 = vmatpush2.msra.mxu0 0.0
    %8172 = vmatprep.subr.mxu0 0.0
    %8173 = vmatpush2.msra.mxu0 0.0
    %8174 = vmatprep.subr.mxu0 0.0
    %8175 = vmatpush2.msra.mxu0 0.0
    %8176 = vmatprep.subr.mxu0 0.0
    %8177 = vmatpush2.msra.mxu0 0.0
    %8178 = vmatprep.subr.mxu0 0.0
    %8179 = vmatpush2.msra.mxu0 0.0
    %8180 = vmatprep.subr.mxu0 0.0
    %8181 = vmatpush2.msra.mxu0 0.0
    %8182 = vmatprep.subr.mxu0 0.0
    %8183 = vmatpush2.msra.mxu0 0.0
    %8184 = vmatprep.subr.mxu0 0.0
    %8185 = vmatpush2.msra.mxu0 0.0
    %8186 = vmatprep.subr.mxu0 0.0
    %8187 = vmatpush2.msra.mxu0 0.0
    %8188 = vmatprep.subr.mxu0 0.0
    %8189 = vmatpush2.msra.mxu0 0.0
    %8190 = vmatprep.subr.mxu0 0.0
    %8191 = vmatpush2.msra.mxu0 0.0
    %8192 = vmatprep.subr.mxu0 0.0
    %8193 = vmatpush2.msra.mxu0 0.0
    %8194 = vmatprep.mubr.f32.mxu0 0.0
    %8195 = vmatmul.mubr.f32.gmra.mxu0 %v8128
    %v8196 = vpop.f32.mrf.mxu0
    %v8197 = vadd.f32 %v8125, %v8196
    %v8198 = vpop.f32.mrf.mxu0
    %8199 = vdwg.mxu0
    %8200 = vrot.lane.b32.xlu0 %v6411, 64
    %v8201 = vpop.permute.xlu0 %8200
    %v8211 = vsel %vm747, %v7881, %v7874
    %v8212 = vsel %vm749, %v7888, %v8211
    %v8213 = vsel %vm751, %v7895, %v8212
    %v8214 = vsel %vm753, %v7902, %v8213
    %v8215 = vsel %vm755, %v7909, %v8214
    %v8216 = vsel %vm757, %v7916, %v8215
    %v8217 = vsel %vm759, %v7923, %v8216
    %v8220 = vsel %vm606, %v7443, 0
    %8222 = vmatprep.subr.mxu0 0.0
    %8223 = vmatpush1.msra.mxu0 0.0
    %8224 = vmatprep.subr.mxu0 0.0
    %8225 = vmatpush1.msra.mxu0 0.0
    %8226 = vmatprep.subr.mxu0 0.0
    %8227 = vmatpush1.msra.mxu0 0.0
    %8228 = vmatprep.subr.mxu0 0.0
    %8229 = vmatpush1.msra.mxu0 0.0
    %8230 = vmatprep.subr.mxu0 0.0
    %8231 = vmatpush1.msra.mxu0 0.0
    %8232 = vmatprep.subr.mxu0 0.0
    %8233 = vmatpush1.msra.mxu0 0.0
    %8234 = vmatprep.subr.mxu0 0.0
    %8235 = vmatpush1.msra.mxu0 0.0
    %8236 = vmatprep.subr.mxu0 0.0
    %8237 = vmatpush1.msra.mxu0 0.0
    %8238 = vmatprep.subr.mxu0 0.0
    %8239 = vmatpush1.msra.mxu0 0.0
    %8240 = vmatprep.subr.mxu0 0.0
    %8241 = vmatpush1.msra.mxu0 0.0
    %8242 = vmatprep.subr.mxu0 0.0
    %8243 = vmatpush1.msra.mxu0 0.0
    %8244 = vmatprep.subr.mxu0 0.0
    %8245 = vmatpush1.msra.mxu0 0.0
    %8246 = vmatprep.subr.mxu0 0.0
    %8247 = vmatpush1.msra.mxu0 0.0
    %8248 = vmatprep.subr.mxu0 0.0
    %8249 = vmatpush1.msra.mxu0 0.0
    %8250 = vmatprep.subr.mxu0 0.0
    %8251 = vmatpush1.msra.mxu0 0.0
    %8252 = vmatprep.subr.mxu0 0.0
    %8253 = vmatpush1.msra.mxu0 %v8201
    %8254 = vmatprep.subr.mxu0 0.0
    %8255 = vmatpush2.msra.mxu0 0.0
    %8256 = vmatprep.subr.mxu0 0.0
    %8257 = vmatpush2.msra.mxu0 0.0
    %8258 = vmatprep.subr.mxu0 0.0
    %8259 = vmatpush2.msra.mxu0 0.0
    %8260 = vmatprep.subr.mxu0 0.0
    %8261 = vmatpush2.msra.mxu0 0.0
    %8262 = vmatprep.subr.mxu0 0.0
    %8263 = vmatpush2.msra.mxu0 0.0
    %8264 = vmatprep.subr.mxu0 0.0
    %8265 = vmatpush2.msra.mxu0 0.0
    %8266 = vmatprep.subr.mxu0 0.0
    %8267 = vmatpush2.msra.mxu0 0.0
    %8268 = vmatprep.subr.mxu0 0.0
    %8269 = vmatpush2.msra.mxu0 0.0
    %8270 = vmatprep.subr.mxu0 0.0
    %8271 = vmatpush2.msra.mxu0 0.0
    %8272 = vmatprep.subr.mxu0 0.0
    %8273 = vmatpush2.msra.mxu0 0.0
    %8274 = vmatprep.subr.mxu0 0.0
    %8275 = vmatpush2.msra.mxu0 0.0
    %8276 = vmatprep.subr.mxu0 0.0
    %8277 = vmatpush2.msra.mxu0 0.0
    %8278 = vmatprep.subr.mxu0 0.0
    %8279 = vmatpush2.msra.mxu0 0.0
    %8280 = vmatprep.subr.mxu0 0.0
    %8281 = vmatpush2.msra.mxu0 0.0
    %8282 = vmatprep.subr.mxu0 0.0
    %8283 = vmatpush2.msra.mxu0 0.0
    %8284 = vmatprep.subr.mxu0 0.0
    %8285 = vmatpush2.msra.mxu0 0.0
    %8286 = vmatprep.mubr.f32.mxu0 0.0
    %8287 = vmatmul.mubr.f32.gmra.mxu0 %v8220
    %v8288 = vpop.f32.mrf.mxu0
    %v8289 = vadd.f32 %v8217, %v8288
    %v8290 = vpop.f32.mrf.mxu0
    %8291 = vdwg.mxu0
    %8293 = vrot.lane.b32.xlu0 %v8105, 8
    %v8294 = vpop.permute.xlu0 %8293
    %8297 = vrot.lane.b32.xlu0 %v8197, 16
    %v8298 = vpop.permute.xlu0 %8297
    %8301 = vrot.lane.b32.xlu0 %v8289, 24
    %v8302 = vpop.permute.xlu0 %8301
    %v8304 = vsel %vm606, %v8013, %v8294
    %v8305 = vsel %vm2121, %v8304, %v8298
    %v8306 = vsel %vm2123, %v8305, %v8302
    %v8307 = vlaneseq
    %v8308 = vshrl.u32 %v8307, 7
    %v8309 = vsub.s32 1, %v8308
    %v8310 = vrot.slane %v4417, %v8309
    %8315 = vrot.lane.b32.xlu0 %v4399, 32
    %v8316 = vpop.permute.xlu0 %8315
    %8317 = vrot.lane.b32.xlu0 %v4401, 32
    %v8318 = vpop.permute.xlu0 %8317
    %8319 = vrot.lane.b32.xlu0 %v4403, 32
    %v8320 = vpop.permute.xlu0 %8319
    %8321 = vrot.lane.b32.xlu0 %v4405, 32
    %v8322 = vpop.permute.xlu0 %8321
    %v8328 = vsel %vm129, %v6404, 0
    %v8331 = vsel %vm129, %v8306, 0
    %8333 = vmatprep.subr.mxu0 0.0
    %8334 = vmatpush1.msra.mxu0 0.0
    %8335 = vmatprep.subr.mxu0 0.0
    %8336 = vmatpush1.msra.mxu0 0.0
    %8337 = vmatprep.subr.mxu0 0.0
    %8338 = vmatpush1.msra.mxu0 0.0
    %8339 = vmatprep.subr.mxu0 0.0
    %8340 = vmatpush1.msra.mxu0 0.0
    %8341 = vmatprep.subr.mxu0 0.0
    %8342 = vmatpush1.msra.mxu0 0.0
    %8343 = vmatprep.subr.mxu0 0.0
    %8344 = vmatpush1.msra.mxu0 0.0
    %8345 = vmatprep.subr.mxu0 0.0
    %8346 = vmatpush1.msra.mxu0 0.0
    %8347 = vmatprep.subr.mxu0 0.0
    %8348 = vmatpush1.msra.mxu0 0.0
    %8349 = vmatprep.subr.mxu0 0.0
    %8350 = vmatpush1.msra.mxu0 0.0
    %8351 = vmatprep.subr.mxu0 0.0
    %8352 = vmatpush1.msra.mxu0 0.0
    %8353 = vmatprep.subr.mxu0 0.0
    %8354 = vmatpush1.msra.mxu0 0.0
    %8355 = vmatprep.subr.mxu0 0.0
    %8356 = vmatpush1.msra.mxu0 0.0
    %8357 = vmatprep.subr.mxu0 0.0
    %8358 = vmatpush1.msra.mxu0 %v8322
    %8359 = vmatprep.subr.mxu0 0.0
    %8360 = vmatpush1.msra.mxu0 %v8320
    %8361 = vmatprep.subr.mxu0 0.0
    %8362 = vmatpush1.msra.mxu0 %v8318
    %8363 = vmatprep.subr.mxu0 0.0
    %8364 = vmatpush1.msra.mxu0 %v8316
    %8365 = vmatprep.subr.mxu0 0.0
    %8366 = vmatpush2.msra.mxu0 0.0
    %8367 = vmatprep.subr.mxu0 0.0
    %8368 = vmatpush2.msra.mxu0 0.0
    %8369 = vmatprep.subr.mxu0 0.0
    %8370 = vmatpush2.msra.mxu0 0.0
    %8371 = vmatprep.subr.mxu0 0.0
    %8372 = vmatpush2.msra.mxu0 0.0
    %8373 = vmatprep.subr.mxu0 0.0
    %8374 = vmatpush2.msra.mxu0 0.0
    %8375 = vmatprep.subr.mxu0 0.0
    %8376 = vmatpush2.msra.mxu0 0.0
    %8377 = vmatprep.subr.mxu0 0.0
    %8378 = vmatpush2.msra.mxu0 0.0
    %8379 = vmatprep.subr.mxu0 0.0
    %8380 = vmatpush2.msra.mxu0 0.0
    %8381 = vmatprep.subr.mxu0 0.0
    %8382 = vmatpush2.msra.mxu0 0.0
    %8383 = vmatprep.subr.mxu0 0.0
    %8384 = vmatpush2.msra.mxu0 0.0
    %8385 = vmatprep.subr.mxu0 0.0
    %8386 = vmatpush2.msra.mxu0 0.0
    %8387 = vmatprep.subr.mxu0 0.0
    %8388 = vmatpush2.msra.mxu0 0.0
    %8389 = vmatprep.subr.mxu0 0.0
    %8390 = vmatpush2.msra.mxu0 0.0
    %8391 = vmatprep.subr.mxu0 0.0
    %8392 = vmatpush2.msra.mxu0 0.0
    %8393 = vmatprep.subr.mxu0 0.0
    %8394 = vmatpush2.msra.mxu0 0.0
    %8395 = vmatprep.subr.mxu0 0.0
    %8396 = vmatpush2.msra.mxu0 0.0
    %8397 = vmatprep.mubr.f32.mxu0 0.0
    %8398 = vmatmul.mubr.f32.gmra.mxu0 %v8328
    %v8399 = vpop.f32.mrf.mxu0
    %v8400 = vadd.f32 %v8310, %v8399
    %v8401 = vpop.f32.mrf.mxu0
    %8402 = vmatprep.mubr.f32.mxu0 0.0
    %8403 = vmatmul.mubr.f32.gmra.mxu0 %v8331
    %v8404 = vpop.f32.mrf.mxu0
    %v8405 = vadd.f32 %v8310, %v8404
    %v8406 = vpop.f32.mrf.mxu0
    %8407 = vdwg.mxu0
    %v8408 = vadd.f32 %v4396, %v8400
    %v8409 = vadd.f32 %v4397, %v8405
    %v8410 = vsel %vm129, %v8408, 0.0
    %8411 = vadd.xlane.f32.xlu0 %v8410
    %v8412 = vpop.xlane.xlu0 %8411
    %v8413 = vsel %vm129, %v8409, 0.0
    %8414 = vadd.xlane.f32.xlu0 %v8413
    %v8415 = vpop.xlane.xlu0 %8414
    %v8416 = vmul.f32 %v8412, %v4136
    %v8417 = vmul.f32 %v8415, %v4136
    %v8418 = vsub.f32 %v8408, %v8416
    %v8419 = vsub.f32 %v8409, %v8417
    %v8420 = vmul.f32 %v8418, %v8418
    %v8421 = vmul.f32 %v8419, %v8419
    %v8422 = vsel %vm129, %v8420, 0.0
    %8423 = vadd.xlane.f32.xlu0 %v8422
    %v8424 = vpop.xlane.xlu0 %8423
    %v8425 = vsel %vm129, %v8421, 0.0
    %8426 = vadd.xlane.f32.xlu0 %v8425
    %v8427 = vpop.xlane.xlu0 %8426
    %v8428 = vmul.f32 %v8424, %v4136
    %v8429 = vmul.f32 %v8427, %v4136
    %v8430 = vadd.f32 %v8428, 1e-07
    %v8431 = vadd.f32 %v8429, 1e-07
    %v8432 = vrsqrt.pop %v8430
    %v8433 = vrsqrt.pop %v8431
    %v8434 = vmul.f32 %v8418, %v8432
    %v8435 = vmul.f32 %v8419, %v8433
    %v8436 = vlaneseq
    %v8437 = vshrl.u32 %v8436, 7
    %v8438 = vsub.s32 4, %v8437
    %v8439 = vrot.slane %v4417, %v8438
    %v8440 = vmul.f32 %v8434, %v8439
    %v8441 = vmul.f32 %v8435, %v8439
    %v8442 = vlaneseq
    %v8443 = vshrl.u32 %v8442, 7
    %v8444 = vsub.s32 5, %v8443
    %v8445 = vrot.slane %v4417, %v8444
    %v8446 = vadd.f32 %v8440, %v8445
    %v8447 = vadd.f32 %v8441, %v8445
    %v8448 = vlaneseq
    %v8449 = vshrl.u32 %v8448, 7
    %v8450 = vsub.s32 2, %v8449
    %v8451 = vrot.slane %v4417, %v8450
    %v8453 = vsel %vm129, %v8446, 0
    %v8456 = vsel %vm129, %v8447, 0
    %8458 = vmatprep.subr.mxu0 0.0
    %8459 = vmatpush1.msra.mxu0 0.0
    %8460 = vmatprep.subr.mxu0 0.0
    %8461 = vmatpush1.msra.mxu0 0.0
    %8462 = vmatprep.subr.mxu0 0.0
    %8463 = vmatpush1.msra.mxu0 0.0
    %8464 = vmatprep.subr.mxu0 0.0
    %8465 = vmatpush1.msra.mxu0 0.0
    %8466 = vmatprep.subr.mxu0 0.0
    %8467 = vmatpush1.msra.mxu0 0.0
    %8468 = vmatprep.subr.mxu0 0.0
    %8469 = vmatpush1.msra.mxu0 0.0
    %8470 = vmatprep.subr.mxu0 0.0
    %8471 = vmatpush1.msra.mxu0 0.0
    %8472 = vmatprep.subr.mxu0 0.0
    %8473 = vmatpush1.msra.mxu0 0.0
    %8474 = vmatprep.subr.mxu0 0.0
    %8475 = vmatpush1.msra.mxu0 0.0
    %8476 = vmatprep.subr.mxu0 0.0
    %8477 = vmatpush1.msra.mxu0 0.0
    %8478 = vmatprep.subr.mxu0 0.0
    %8479 = vmatpush1.msra.mxu0 0.0
    %8480 = vmatprep.subr.mxu0 0.0
    %8481 = vmatpush1.msra.mxu0 0.0
    %8482 = vmatprep.subr.mxu0 0.0
    %8483 = vmatpush1.msra.mxu0 %v4406
    %8484 = vmatprep.subr.mxu0 0.0
    %8485 = vmatpush1.msra.mxu0 %v4404
    %8486 = vmatprep.subr.mxu0 0.0
    %8487 = vmatpush1.msra.mxu0 %v4402
    %8488 = vmatprep.subr.mxu0 0.0
    %8489 = vmatpush1.msra.mxu0 %v4400
    %8490 = vmatprep.subr.mxu0 0.0
    %8491 = vmatpush2.msra.mxu0 0.0
    %8492 = vmatprep.subr.mxu0 0.0
    %8493 = vmatpush2.msra.mxu0 0.0
    %8494 = vmatprep.subr.mxu0 0.0
    %8495 = vmatpush2.msra.mxu0 0.0
    %8496 = vmatprep.subr.mxu0 0.0
    %8497 = vmatpush2.msra.mxu0 0.0
    %8498 = vmatprep.subr.mxu0 0.0
    %8499 = vmatpush2.msra.mxu0 0.0
    %8500 = vmatprep.subr.mxu0 0.0
    %8501 = vmatpush2.msra.mxu0 0.0
    %8502 = vmatprep.subr.mxu0 0.0
    %8503 = vmatpush2.msra.mxu0 0.0
    %8504 = vmatprep.subr.mxu0 0.0
    %8505 = vmatpush2.msra.mxu0 0.0
    %8506 = vmatprep.subr.mxu0 0.0
    %8507 = vmatpush2.msra.mxu0 0.0
    %8508 = vmatprep.subr.mxu0 0.0
    %8509 = vmatpush2.msra.mxu0 0.0
    %8510 = vmatprep.subr.mxu0 0.0
    %8511 = vmatpush2.msra.mxu0 0.0
    %8512 = vmatprep.subr.mxu0 0.0
    %8513 = vmatpush2.msra.mxu0 0.0
    %8514 = vmatprep.subr.mxu0 0.0
    %8515 = vmatpush2.msra.mxu0 0.0
    %8516 = vmatprep.subr.mxu0 0.0
    %8517 = vmatpush2.msra.mxu0 0.0
    %8518 = vmatprep.subr.mxu0 0.0
    %8519 = vmatpush2.msra.mxu0 0.0
    %8520 = vmatprep.subr.mxu0 0.0
    %8521 = vmatpush2.msra.mxu0 0.0
    %8522 = vmatprep.mubr.f32.mxu0 0.0
    %8523 = vmatmul.mubr.f32.gmra.mxu0 %v8453
    %v8524 = vpop.f32.mrf.mxu0
    %v8525 = vadd.f32 %v8451, %v8524
    %v8526 = vpop.f32.mrf.mxu0
    %8527 = vmatprep.mubr.f32.mxu0 0.0
    %8528 = vmatmul.mubr.f32.gmra.mxu0 %v8456
    %v8529 = vpop.f32.mrf.mxu0
    %v8530 = vadd.f32 %v8451, %v8529
    %v8531 = vpop.f32.mrf.mxu0
    %8532 = vdwg.mxu0
    %v8533 = vmul.f32 %v8525, %v8525
    %v8534 = vmul.f32 %v8530, %v8530
    %v8535 = vmul.f32 %v8525, %v8533
    %v8536 = vmul.f32 %v8530, %v8534
    %v8537 = vmul.f32 %v8535, 0.044715
    %v8538 = vmul.f32 %v8536, 0.044715
    %v8539 = vadd.f32 %v8525, %v8537
    %v8540 = vadd.f32 %v8530, %v8538
    %v8541 = vmul.f32 %v8539, 0.7978846
    %v8542 = vmul.f32 %v8540, 0.7978846
    %v8543 = vtanh.pop %v8541
    %v8544 = vtanh.pop %v8542
    %v8545 = vadd.f32 %v8543, 1.0
    %v8546 = vadd.f32 %v8544, 1.0
    %v8547 = vmul.f32 %v8545, 0.5
    %v8548 = vmul.f32 %v8546, 0.5
    %v8549 = vmul.f32 %v8525, %v8547
    %v8550 = vmul.f32 %v8530, %v8548
    %v8551 = vlaneseq
    %v8552 = vshrl.u32 %v8551, 7
    %v8553 = vsub.s32 3, %v8552
    %v8554 = vrot.slane %v4417, %v8553
    %v8556 = vsel %vm4276, %v8549, 0
    %v8559 = vsel %vm4276, %v8550, 0
    %8561 = vmatprep.subr.mxu0 0.0
    %8562 = vmatpush1.msra.mxu0 0.0
    %8563 = vmatprep.subr.mxu0 0.0
    %8564 = vmatpush1.msra.mxu0 0.0
    %8565 = vmatprep.subr.mxu0 0.0
    %8566 = vmatpush1.msra.mxu0 0.0
    %8567 = vmatprep.subr.mxu0 0.0
    %8568 = vmatpush1.msra.mxu0 0.0
    %8569 = vmatprep.subr.mxu0 0.0
    %8570 = vmatpush1.msra.mxu0 0.0
    %8571 = vmatprep.subr.mxu0 0.0
    %8572 = vmatpush1.msra.mxu0 0.0
    %8573 = vmatprep.subr.mxu0 0.0
    %8574 = vmatpush1.msra.mxu0 0.0
    %8575 = vmatprep.subr.mxu0 0.0
    %8576 = vmatpush1.msra.mxu0 0.0
    %8577 = vmatprep.subr.mxu0 0.0
    %8578 = vmatpush1.msra.mxu0 %v4415
    %8579 = vmatprep.subr.mxu0 0.0
    %8580 = vmatpush1.msra.mxu0 %v4414
    %8581 = vmatprep.subr.mxu0 0.0
    %8582 = vmatpush1.msra.mxu0 %v4413
    %8583 = vmatprep.subr.mxu0 0.0
    %8584 = vmatpush1.msra.mxu0 %v4412
    %8585 = vmatprep.subr.mxu0 0.0
    %8586 = vmatpush1.msra.mxu0 %v4411
    %8587 = vmatprep.subr.mxu0 0.0
    %8588 = vmatpush1.msra.mxu0 %v4410
    %8589 = vmatprep.subr.mxu0 0.0
    %8590 = vmatpush1.msra.mxu0 %v4409
    %8591 = vmatprep.subr.mxu0 0.0
    %8592 = vmatpush1.msra.mxu0 %v4408
    %8593 = vmatprep.subr.mxu0 0.0
    %8594 = vmatpush2.msra.mxu0 0.0
    %8595 = vmatprep.subr.mxu0 0.0
    %8596 = vmatpush2.msra.mxu0 0.0
    %8597 = vmatprep.subr.mxu0 0.0
    %8598 = vmatpush2.msra.mxu0 0.0
    %8599 = vmatprep.subr.mxu0 0.0
    %8600 = vmatpush2.msra.mxu0 0.0
    %8601 = vmatprep.subr.mxu0 0.0
    %8602 = vmatpush2.msra.mxu0 0.0
    %8603 = vmatprep.subr.mxu0 0.0
    %8604 = vmatpush2.msra.mxu0 0.0
    %8605 = vmatprep.subr.mxu0 0.0
    %8606 = vmatpush2.msra.mxu0 0.0
    %8607 = vmatprep.subr.mxu0 0.0
    %8608 = vmatpush2.msra.mxu0 0.0
    %8609 = vmatprep.subr.mxu0 0.0
    %8610 = vmatpush2.msra.mxu0 0.0
    %8611 = vmatprep.subr.mxu0 0.0
    %8612 = vmatpush2.msra.mxu0 0.0
    %8613 = vmatprep.subr.mxu0 0.0
    %8614 = vmatpush2.msra.mxu0 0.0
    %8615 = vmatprep.subr.mxu0 0.0
    %8616 = vmatpush2.msra.mxu0 0.0
    %8617 = vmatprep.subr.mxu0 0.0
    %8618 = vmatpush2.msra.mxu0 0.0
    %8619 = vmatprep.subr.mxu0 0.0
    %8620 = vmatpush2.msra.mxu0 0.0
    %8621 = vmatprep.subr.mxu0 0.0
    %8622 = vmatpush2.msra.mxu0 0.0
    %8623 = vmatprep.subr.mxu0 0.0
    %8624 = vmatpush2.msra.mxu0 0.0
    %8625 = vmatprep.mubr.f32.mxu0 0.0
    %8626 = vmatmul.mubr.f32.gmra.mxu0 %v8556
    %v8627 = vpop.f32.mrf.mxu0
    %v8628 = vadd.f32 %v8554, %v8627
    %v8629 = vpop.f32.mrf.mxu0
    %8630 = vmatprep.mubr.f32.mxu0 0.0
    %8631 = vmatmul.mubr.f32.gmra.mxu0 %v8559
    %v8632 = vpop.f32.mrf.mxu0
    %v8633 = vadd.f32 %v8554, %v8632
    %v8634 = vpop.f32.mrf.mxu0
    %8635 = vdwg.mxu0
    %v8636 = vadd.f32 %v8446, %v8628
    %v8637 = vadd.f32 %v8447, %v8633
    %v8638 = vsel %vm129, %v8636, 0.0
    %8639 = vadd.xlane.f32.xlu0 %v8638
    %v8640 = vpop.xlane.xlu0 %8639
    %v8641 = vsel %vm129, %v8637, 0.0
    %8642 = vadd.xlane.f32.xlu0 %v8641
    %v8643 = vpop.xlane.xlu0 %8642
    %v8644 = vmul.f32 %v8640, %v4136
    %v8645 = vmul.f32 %v8643, %v4136
    %v8646 = vsub.f32 %v8636, %v8644
    %v8647 = vsub.f32 %v8637, %v8645
    %v8648 = vmul.f32 %v8646, %v8646
    %v8649 = vmul.f32 %v8647, %v8647
    %v8650 = vsel %vm129, %v8648, 0.0
    %8651 = vadd.xlane.f32.xlu0 %v8650
    %v8652 = vpop.xlane.xlu0 %8651
    %v8653 = vsel %vm129, %v8649, 0.0
    %8654 = vadd.xlane.f32.xlu0 %v8653
    %v8655 = vpop.xlane.xlu0 %8654
    %v8656 = vmul.f32 %v8652, %v4136
    %v8657 = vmul.f32 %v8655, %v4136
    %v8658 = vadd.f32 %v8656, 1e-07
    %v8659 = vadd.f32 %v8657, 1e-07
    %v8660 = vrsqrt.pop %v8658
    %v8661 = vrsqrt.pop %v8659
    %v8662 = vmul.f32 %v8646, %v8660
    %v8663 = vmul.f32 %v8647, %v8661
    %v8664 = vlaneseq
    %v8665 = vshrl.u32 %v8664, 7
    %v8666 = vsub.s32 6, %v8665
    %v8667 = vrot.slane %v4417, %v8666
    %v8668 = vmul.f32 %v8662, %v8667
    %v8669 = vmul.f32 %v8663, %v8667
    %v8670 = vlaneseq
    %v8671 = vshrl.u32 %v8670, 7
    %v8672 = vsub.s32 7, %v8671
    %v8673 = vrot.slane %v4417, %v8672
    %v8674 = vadd.f32 %v8668, %v8673
    %v8675 = vadd.f32 %v8669, %v8673
    %8676 = vst.msk [vmem:[#allocation10] sm:$0xff] %vm129, %v8674
    %8677 = vst.msk [vmem:[#allocation10 + $0x8] sm:$0xff] %vm129, %v8675
    // Predicated region
    $region46: #{encoder_forward.1} parent=1 // pred_check
      _
    $region47: #{encoder_forward.1} parent=1 // pred_check_branch
      %8679 = sbr.rel (0) target = $region49
    $region48: #{encoder_forward.1} parent=1 // pred_region
      %s8681 = ssub.s32 256, 256
      %8682 = vsyncadd [#allocation4], %s8681
      %s8683 = sshll.u32 [#allocation10], 4
      %s8684 = int_to_ptr.vmem [resolvable:$true] %s8683
      %8689 = dma.vmem_to_hbm [thread:$0]  %s8684, 256, %s7, [#allocation4], 128, 128, 8
    $region49: #{encoder_forward.1} parent=1 // pred_fallthru
      _
    // Predicated region
    $region50: #{encoder_forward.1} parent=1 // pred_check
      _
    $region51: #{encoder_forward.1} parent=1 // pred_check_branch
      %8691 = sbr.rel (0) target = $region53
    $region52: #{encoder_forward.1} parent=1 // pred_region
      %8692 = dma.done [#allocation4], 256
    $region53: #{encoder_forward.1} parent=1 // pred_fallthru
      _
    %8693 = vsyncpa [#allocation3], 1
    %8694 = vsyncpa [#allocation6], 1
    %8695 = vsyncpa [#allocation9], 1
    %8696 = vsyncpa [#allocation4], 1

</llo_original>
